<compile_context>
chip_gen: v5e
topology: v5e:2x2
jax: 0.10.0
libtpu: 0.0.40
codegen_flags: <defaults>
</compile_context>

<pallas_src>
import functools

import jax
import jax.numpy as jnp
from jax import lax
from jax.experimental import pallas as pl
from jax.experimental.pallas import tpu as pltpu


def _round_up(x, m):
    return ((x + m - 1) // m) * m


def _rvq_kernel(x_ref, cb_ref, e2h_ref, qout_ref, idx_ref, sse_ref, *, fused_argmax):
    """One token tile through all Q residual quantizer layers.

    x_ref:    (TM, D)   f32  token tile (residual stream input)
    cb_ref:   (Q, D, E) f32  per-quantizer codebooks (resident across the grid)
    e2h_ref:  (Q, 1, E) f32  0.5 * ||embed||^2 per code (precomputed in wrapper)
    qout_ref: (TM, D)   f32  summed quantized output tile
    idx_ref:  (Q, TM)   i32  codebook indices (quantizer-major, lane-dense stores)
    sse_ref:  (Q, TM)   f32  per-token squared error (loss partials)
    """
    TM, D = x_ref.shape
    Q, _, E = cb_ref.shape

    # Hoisted iota, shared by every unrolled quantizer step.
    iota_e = lax.broadcasted_iota(jnp.int32, (TM, E), 1)

    residual0 = x_ref[...].astype(jnp.float32)
    residual = residual0

    # Q is a small static constant -> fully unrolled loop: static codebook slices,
    # static output-row writes, full visibility for the LLO scheduler.
    for q in range(Q):
        embed = cb_ref[q]        # (D, E)
        e2h = e2h_ref[q]         # (1, E)

        # argmin_e ||r - e||^2 == argmax_e (r.e - 0.5||e||^2); the 0.5 is folded
        # into the precomputed e2h so only one (TM, E) VPU pass remains.
        score = jnp.dot(residual, embed, preferred_element_type=jnp.float32) - e2h

        if fused_argmax:
            idx2d = jnp.argmax(score, axis=1, keepdims=True).astype(jnp.int32)   # (TM,1)
        else:
            # Two-pass fallback: max, then first index attaining it.
            max_val = jnp.max(score, axis=1, keepdims=True)
            idx2d = jnp.min(
                jnp.where(score == max_val, iota_e, E), axis=1, keepdims=True
            ).astype(jnp.int32)

        # Gather codebook vectors via one-hot matmul (MXU-friendly, exact).
        onehot = (iota_e == idx2d).astype(jnp.float32)                            # (TM,E)
        quantized = lax.dot_general(
            onehot, embed,
            dimension_numbers=(((1,), (1,)), ((), ())),
            preferred_element_type=jnp.float32,
        )                                                                         # (TM,D)

        new_residual = residual - quantized
        sse2d = jnp.sum(new_residual * new_residual, axis=1, keepdims=True)       # (TM,1)

        idx_ref[q:q + 1, :] = idx2d.reshape(1, TM)
        sse_ref[q:q + 1, :] = sse2d.reshape(1, TM)
        residual = new_residual

    # quant_out == x - final residual (no running quant accumulator carried).
    qout_ref[...] = (residual0 - residual).astype(qout_ref.dtype)


def _vmem_budget_bytes():
    """Generation-aware VMEM budget (v5e/v6e: 128 MiB, v7x: 64 MiB per core)."""
    try:
        cap = int(pltpu.get_tpu_info().vmem_capacity_bytes)
    except Exception:          # interpret mode / very old runtimes
        cap = 64 << 20
    return min(int(cap * 0.8), 100 << 20)


def _pick_token_tile(T, D, E, Q, vmem_budget):
    """Largest 128*2^k token tile that fits VMEM and keeps >= 2 grid tiles."""
    # Resident codebook + e2h; assume default double-buffering (conservative).
    resident = 2 * (Q * D * E + Q * E) * 4
    # Per-token bytes: double-buffered x & qout tiles, double-buffered idx & sse
    # rows, plus in-kernel f32 working set (score/onehot ~2E, residual stream ~4D).
    per_token = (2 * (2 * D + 2 * Q) + (2 * E + 4 * D)) * 4
    avail = max(vmem_budget - resident, 1 << 20)
    tm = 128
    while tm < 4096 and (2 * tm) * per_token <= avail:
        tm *= 2
    # Keep at least 2 tiles when the token count allows, so the "parallel" token
    # axis can shard across v7x's two TensorCores (harmless on v5e/v6e).
    while tm > 128 and -(-T // tm) < 2:
        tm //= 2
    return tm


def _build_rvq_call(T_pad, TM, D, E, Q, *, fused_argmax, single_buffer_resident,
                    vmem_limit, cost):
    kernel = functools.partial(_rvq_kernel, fused_argmax=fused_argmax)

    if single_buffer_resident:
        # Constant-index_map blocks never revolve -> one buffer is enough
        # (halves the codebook's VMEM footprint; matters most on v7x's 64 MiB).
        cb_spec = pl.BlockSpec((Q, D, E), lambda i: (0, 0, 0),
                               pipeline_mode=pl.Buffered(1))
        e2_spec = pl.BlockSpec((Q, 1, E), lambda i: (0, 0, 0),
                               pipeline_mode=pl.Buffered(1))
    else:
        cb_spec = pl.BlockSpec((Q, D, E), lambda i: (0, 0, 0))
        e2_spec = pl.BlockSpec((Q, 1, E), lambda i: (0, 0, 0))

    return pl.pallas_call(
        kernel,
        out_shape=(
            jax.ShapeDtypeStruct((T_pad, D), jnp.float32),
            jax.ShapeDtypeStruct((Q, T_pad), jnp.int32),
            jax.ShapeDtypeStruct((Q, T_pad), jnp.float32),
        ),
        grid_spec=pltpu.PrefetchScalarGridSpec(
            num_scalar_prefetch=0,
            grid=(T_pad // TM,),
            in_specs=[
                pl.BlockSpec((TM, D), lambda i: (i, 0)),
                cb_spec,
                e2_spec,
            ],
            out_specs=[
                pl.BlockSpec((TM, D), lambda i: (i, 0)),
                pl.BlockSpec((Q, TM), lambda i: (0, i)),
                pl.BlockSpec((Q, TM), lambda i: (0, i)),
            ],
        ),
        compiler_params=pltpu.CompilerParams(
            dimension_semantics=("parallel",),
            vmem_limit_bytes=vmem_limit,
        ),
        cost_estimate=cost,
    )


def residual_vq_forward(x, codebooks, commitment=1.0):
    """x: (B, N, D) float32; codebooks: (Q, D, E) float32.

    Returns (quantized_output (B, N, D), indices (Q, B, N) int32, losses (Q,) f32).
    """
    B, N, D = x.shape
    Q, Dc, E = codebooks.shape
    assert Dc == D
    T = B * N

    vmem_limit = _vmem_budget_bytes()
    TM = _pick_token_tile(T, D, E, Q, vmem_limit)
    T_pad = _round_up(T, TM)

    x_flat = x.reshape(T, D).astype(jnp.float32)
    if T_pad != T:
        # TODO(synk): padded rows still run the full Q loop (sliced off below).
        x_flat = jnp.pad(x_flat, ((0, T_pad - T), (0, 0)))

    cb = codebooks.astype(jnp.float32)
    e2h = 0.5 * jnp.sum(cb * cb, axis=1, keepdims=True)   # (Q, 1, E), computed once

    flops = 4 * Q * T_pad * E * D                         # two (T,E,D) matmuls / quantizer
    bytes_accessed = 4 * (x_flat.size + cb.size + e2h.size + T_pad * D + 2 * Q * T_pad)
    cost = pl.CostEstimate(flops=int(flops), transcendentals=0,
                           bytes_accessed=int(bytes_accessed))

    # Probe the most optimized configuration first (fused argmax reduction and a
    # single-buffered resident codebook); fall back to guaranteed-supported
    # variants if this JAX/Mosaic version rejects either feature.
    configs = (
        dict(fused_argmax=True, single_buffer_resident=True),
        dict(fused_argmax=True, single_buffer_resident=False),
        dict(fused_argmax=False, single_buffer_resident=False),
    )
    qout = idx = sse = None
    for i, cfg in enumerate(configs):
        try:
            call = _build_rvq_call(T_pad, TM, D, E, Q, vmem_limit=vmem_limit,
                                   cost=cost, **cfg)
            qout, idx, sse = call(x_flat, cb, e2h)
            break
        except Exception:                    # lowering feature probe
            if i == len(configs) - 1:
                raise

    qout = qout[:T].reshape(B, N, D)
    indices = idx[:, :T].reshape(Q, B, N)    # already quantizer-major: no transpose
    losses = (sse[:, :T].sum(axis=1) / (T * D)) * commitment
    return qout, indices, losses


def _reference(x, codebooks, commitment=1.0):
    B, N, D = x.shape
    Q = codebooks.shape[0]
    residual = x.reshape(-1, D).astype(jnp.float32)
    qout = jnp.zeros_like(residual)
    idxs, losses = [], []
    for q in range(Q):
        embed = codebooks[q]
        dist = (embed ** 2).sum(0, keepdims=True) - 2.0 * (residual @ embed)
        idx = jnp.argmin(dist, axis=1).astype(jnp.int32)
        quant = embed.T[idx]
        losses.append(jnp.mean((quant - residual) ** 2) * commitment)
        idxs.append(idx)
        qout = qout + quant
        residual = residual - quant
    return (qout.reshape(B, N, D),
            jnp.stack(idxs).reshape(Q, B, N),
            jnp.stack(losses))


if __name__ == "__main__":
    # Small, deterministic synthetic setup.
    num_quantizers = 4   # Q
    n_embed = 256        # codebook size E
    dim = 32             # feature dim D
    batch, seq = 2, 64   # T = 128 tokens

    key = jax.random.PRNGKey(0)
    kx, kc = jax.random.split(key)
    x = jax.random.normal(kx, (batch, seq, dim), dtype=jnp.float32)
    # VectorQuantize.__init__: embed = torch.randn(dim, n_embed) -> (Q, D, E) stacked
    codebooks = jax.random.normal(kc, (num_quantizers, dim, n_embed), dtype=jnp.float32)

    qout, indices, losses = residual_vq_forward(x, codebooks)
    jax.block_until_ready((qout, indices, losses))

    # Sanity check against a pure-JAX reference.
    rq, ri, rl = _reference(x, codebooks)
    assert jnp.allclose(qout, rq, atol=1e-4, rtol=1e-4)
    assert jnp.array_equal(indices, ri)
    assert jnp.allclose(losses, rl, atol=1e-4, rtol=1e-4)

    print("KERNEL_OK")
</pallas_src>

<mosaic_0001>
module attributes {stable_mosaic.version = 11 : i64} {
  func.func @_rvq_kernel(%arg0: i32, %arg1: memref<128x32xf32, #tpu.memory_space<vmem>>, %arg2: memref<4x32x256xf32, #tpu.memory_space<vmem>>, %arg3: memref<4x1x256xf32, #tpu.memory_space<vmem>>, %arg4: memref<128x32xf32, #tpu.memory_space<vmem>>, %arg5: memref<4x128xi32, #tpu.memory_space<vmem>>, %arg6: memref<4x128xf32, #tpu.memory_space<vmem>>) attributes {dimension_semantics = [#tpu.dimension_semantics<parallel>], iteration_bounds = array<i64: 1>, scalar_prefetch = 0 : i64, scratch_operands = 0 : i64, tpu.core_type = #tpu.core_type<tc>, window_params = [{transform_indices = @transform_0, window_bounds = array<i64: 128, 32>}, {pipeline_mode = #tpu.pipeline_mode<synchronous>, transform_indices = @transform_1, window_bounds = array<i64: 4, 32, 256>}, {pipeline_mode = #tpu.pipeline_mode<synchronous>, transform_indices = @transform_2, window_bounds = array<i64: 4, 1, 256>}, {transform_indices = @transform_3, window_bounds = array<i64: 128, 32>}, {transform_indices = @transform_4, window_bounds = array<i64: 4, 128>}, {transform_indices = @transform_5, window_bounds = array<i64: 4, 128>}]} {
    %0 = tpu.iota {dimensions = array<i32: 1>} : vector<128x256xi32>
    %c0 = arith.constant 0 : index
    %c0_0 = arith.constant 0 : index
    %1 = vector.load %arg1[%c0, %c0_0] : memref<128x32xf32, #tpu.memory_space<vmem>>, vector<128x32xf32>
    %c0_1 = arith.constant 0 : index
    %c0_2 = arith.constant 0 : index
    %c0_3 = arith.constant 0 : index
    %2 = vector.load %arg2[%c0_1, %c0_2, %c0_3] : memref<4x32x256xf32, #tpu.memory_space<vmem>>, vector<1x32x256xf32>
    %3 = vector.shape_cast %2 : vector<1x32x256xf32> to vector<32x256xf32>
    %c0_4 = arith.constant 0 : index
    %c0_5 = arith.constant 0 : index
    %c0_6 = arith.constant 0 : index
    %4 = vector.load %arg3[%c0_4, %c0_5, %c0_6] : memref<4x1x256xf32, #tpu.memory_space<vmem>>, vector<1x1x256xf32>
    %5 = vector.shape_cast %4 : vector<1x1x256xf32> to vector<1x256xf32>
    %cst = arith.constant dense<0.000000e+00> : vector<128x256xf32>
    %6 = tpu.matmul %1, %3, %cst {dimension_numbers = #tpu.dot_dimension_numbers<[1], [0], [0], [1], [0, 0, 1, 1], [], []>} : vector<128x32xf32>, vector<32x256xf32>, vector<128x256xf32> -> vector<128x256xf32>
    %7 = vector.broadcast %5 : vector<1x256xf32> to vector<128x256xf32>
    %8 = arith.subf %6, %7 : vector<128x256xf32>
    %9 = tpu.reduce_index %8 {axis = 1 : i32, kind = #tpu.reduction_kind<arg_max>} : vector<128x256xf32> -> vector<128xi32>
    %10 = vector.shape_cast %9 : vector<128xi32> to vector<128x1xi32>
    %11 = vector.broadcast %10 : vector<128x1xi32> to vector<128x256xi32>
    %12 = arith.cmpi eq, %0, %11 : vector<128x256xi32>
    %13 = arith.extui %12 : vector<128x256xi1> to vector<128x256xi32>
    %14 = arith.sitofp %13 : vector<128x256xi32> to vector<128x256xf32>
    %cst_7 = arith.constant dense<0.000000e+00> : vector<128x32xf32>
    %15 = tpu.matmul %14, %3, %cst_7 {dimension_numbers = #tpu.dot_dimension_numbers<[1], [1], [0], [0], [0, 0, 1, 0], [], []>} : vector<128x256xf32>, vector<32x256xf32>, vector<128x32xf32> -> vector<128x32xf32>
    %16 = arith.subf %1, %15 : vector<128x32xf32>
    %17 = arith.mulf %16, %16 : vector<128x32xf32>
    %cst_8 = arith.constant dense<0.000000e+00> : vector<128xf32>
    %18 = vector.multi_reduction <add>, %17, %cst_8 [1] : vector<128x32xf32> to vector<128xf32>
    %19 = vector.shape_cast %18 : vector<128xf32> to vector<128x1xf32>
    %20 = vector.shape_cast %10 : vector<128x1xi32> to vector<1x128xi32>
    %c0_9 = arith.constant 0 : index
    %c0_10 = arith.constant 0 : index
    %21 = vector.load %arg5[%c0_9, %c0_10] : memref<4x128xi32, #tpu.memory_space<vmem>>, vector<1x128xi32>
    tpu.vector_store %arg5[%c0_9, %c0_10], %20 {strides = array<i32>} : memref<4x128xi32, #tpu.memory_space<vmem>>, vector<1x128xi32>,
    %22 = vector.shape_cast %19 : vector<128x1xf32> to vector<1x128xf32>
    %c0_11 = arith.constant 0 : index
    %c0_12 = arith.constant 0 : index
    %23 = vector.load %arg6[%c0_11, %c0_12] : memref<4x128xf32, #tpu.memory_space<vmem>>, vector<1x128xf32>
    tpu.vector_store %arg6[%c0_11, %c0_12], %22 {strides = array<i32>} : memref<4x128xf32, #tpu.memory_space<vmem>>, vector<1x128xf32>,
    %c1 = arith.constant 1 : index
    %c0_13 = arith.constant 0 : index
    %c0_14 = arith.constant 0 : index
    %24 = vector.load %arg2[%c1, %c0_13, %c0_14] : memref<4x32x256xf32, #tpu.memory_space<vmem>>, vector<1x32x256xf32>
    %25 = vector.shape_cast %24 : vector<1x32x256xf32> to vector<32x256xf32>
    %c1_15 = arith.constant 1 : index
    %c0_16 = arith.constant 0 : index
    %c0_17 = arith.constant 0 : index
    %26 = vector.load %arg3[%c1_15, %c0_16, %c0_17] : memref<4x1x256xf32, #tpu.memory_space<vmem>>, vector<1x1x256xf32>
    %27 = vector.shape_cast %26 : vector<1x1x256xf32> to vector<1x256xf32>
    %cst_18 = arith.constant dense<0.000000e+00> : vector<128x256xf32>
    %28 = tpu.matmul %16, %25, %cst_18 {dimension_numbers = #tpu.dot_dimension_numbers<[1], [0], [0], [1], [0, 0, 1, 1], [], []>} : vector<128x32xf32>, vector<32x256xf32>, vector<128x256xf32> -> vector<128x256xf32>
    %29 = vector.broadcast %27 : vector<1x256xf32> to vector<128x256xf32>
    %30 = arith.subf %28, %29 : vector<128x256xf32>
    %31 = tpu.reduce_index %30 {axis = 1 : i32, kind = #tpu.reduction_kind<arg_max>} : vector<128x256xf32> -> vector<128xi32>
    %32 = vector.shape_cast %31 : vector<128xi32> to vector<128x1xi32>
    %33 = vector.broadcast %32 : vector<128x1xi32> to vector<128x256xi32>
    %34 = arith.cmpi eq, %0, %33 : vector<128x256xi32>
    %35 = arith.extui %34 : vector<128x256xi1> to vector<128x256xi32>
    %36 = arith.sitofp %35 : vector<128x256xi32> to vector<128x256xf32>
    %cst_19 = arith.constant dense<0.000000e+00> : vector<128x32xf32>
    %37 = tpu.matmul %36, %25, %cst_19 {dimension_numbers = #tpu.dot_dimension_numbers<[1], [1], [0], [0], [0, 0, 1, 0], [], []>} : vector<128x256xf32>, vector<32x256xf32>, vector<128x32xf32> -> vector<128x32xf32>
    %38 = arith.subf %16, %37 : vector<128x32xf32>
    %39 = arith.mulf %38, %38 : vector<128x32xf32>
    %cst_20 = arith.constant dense<0.000000e+00> : vector<128xf32>
    %40 = vector.multi_reduction <add>, %39, %cst_20 [1] : vector<128x32xf32> to vector<128xf32>
    %41 = vector.shape_cast %40 : vector<128xf32> to vector<128x1xf32>
    %42 = vector.shape_cast %32 : vector<128x1xi32> to vector<1x128xi32>
    %c1_21 = arith.constant 1 : index
    %c0_22 = arith.constant 0 : index
    %43 = vector.load %arg5[%c1_21, %c0_22] : memref<4x128xi32, #tpu.memory_space<vmem>>, vector<1x128xi32>
    tpu.vector_store %arg5[%c1_21, %c0_22], %42 {strides = array<i32>} : memref<4x128xi32, #tpu.memory_space<vmem>>, vector<1x128xi32>,
    %44 = vector.shape_cast %41 : vector<128x1xf32> to vector<1x128xf32>
    %c1_23 = arith.constant 1 : index
    %c0_24 = arith.constant 0 : index
    %45 = vector.load %arg6[%c1_23, %c0_24] : memref<4x128xf32, #tpu.memory_space<vmem>>, vector<1x128xf32>
    tpu.vector_store %arg6[%c1_23, %c0_24], %44 {strides = array<i32>} : memref<4x128xf32, #tpu.memory_space<vmem>>, vector<1x128xf32>,
    %c2 = arith.constant 2 : index
    %c0_25 = arith.constant 0 : index
    %c0_26 = arith.constant 0 : index
    %46 = vector.load %arg2[%c2, %c0_25, %c0_26] : memref<4x32x256xf32, #tpu.memory_space<vmem>>, vector<1x32x256xf32>
    %47 = vector.shape_cast %46 : vector<1x32x256xf32> to vector<32x256xf32>
    %c2_27 = arith.constant 2 : index
    %c0_28 = arith.constant 0 : index
    %c0_29 = arith.constant 0 : index
    %48 = vector.load %arg3[%c2_27, %c0_28, %c0_29] : memref<4x1x256xf32, #tpu.memory_space<vmem>>, vector<1x1x256xf32>
    %49 = vector.shape_cast %48 : vector<1x1x256xf32> to vector<1x256xf32>
    %cst_30 = arith.constant dense<0.000000e+00> : vector<128x256xf32>
    %50 = tpu.matmul %38, %47, %cst_30 {dimension_numbers = #tpu.dot_dimension_numbers<[1], [0], [0], [1], [0, 0, 1, 1], [], []>} : vector<128x32xf32>, vector<32x256xf32>, vector<128x256xf32> -> vector<128x256xf32>
    %51 = vector.broadcast %49 : vector<1x256xf32> to vector<128x256xf32>
    %52 = arith.subf %50, %51 : vector<128x256xf32>
    %53 = tpu.reduce_index %52 {axis = 1 : i32, kind = #tpu.reduction_kind<arg_max>} : vector<128x256xf32> -> vector<128xi32>
    %54 = vector.shape_cast %53 : vector<128xi32> to vector<128x1xi32>
    %55 = vector.broadcast %54 : vector<128x1xi32> to vector<128x256xi32>
    %56 = arith.cmpi eq, %0, %55 : vector<128x256xi32>
    %57 = arith.extui %56 : vector<128x256xi1> to vector<128x256xi32>
    %58 = arith.sitofp %57 : vector<128x256xi32> to vector<128x256xf32>
    %cst_31 = arith.constant dense<0.000000e+00> : vector<128x32xf32>
    %59 = tpu.matmul %58, %47, %cst_31 {dimension_numbers = #tpu.dot_dimension_numbers<[1], [1], [0], [0], [0, 0, 1, 0], [], []>} : vector<128x256xf32>, vector<32x256xf32>, vector<128x32xf32> -> vector<128x32xf32>
    %60 = arith.subf %38, %59 : vector<128x32xf32>
    %61 = arith.mulf %60, %60 : vector<128x32xf32>
    %cst_32 = arith.constant dense<0.000000e+00> : vector<128xf32>
    %62 = vector.multi_reduction <add>, %61, %cst_32 [1] : vector<128x32xf32> to vector<128xf32>
    %63 = vector.shape_cast %62 : vector<128xf32> to vector<128x1xf32>
    %64 = vector.shape_cast %54 : vector<128x1xi32> to vector<1x128xi32>
    %c2_33 = arith.constant 2 : index
    %c0_34 = arith.constant 0 : index
    %65 = vector.load %arg5[%c2_33, %c0_34] : memref<4x128xi32, #tpu.memory_space<vmem>>, vector<1x128xi32>
    tpu.vector_store %arg5[%c2_33, %c0_34], %64 {strides = array<i32>} : memref<4x128xi32, #tpu.memory_space<vmem>>, vector<1x128xi32>,
    %66 = vector.shape_cast %63 : vector<128x1xf32> to vector<1x128xf32>
    %c2_35 = arith.constant 2 : index
    %c0_36 = arith.constant 0 : index
    %67 = vector.load %arg6[%c2_35, %c0_36] : memref<4x128xf32, #tpu.memory_space<vmem>>, vector<1x128xf32>
    tpu.vector_store %arg6[%c2_35, %c0_36], %66 {strides = array<i32>} : memref<4x128xf32, #tpu.memory_space<vmem>>, vector<1x128xf32>,
    %c3 = arith.constant 3 : index
    %c0_37 = arith.constant 0 : index
    %c0_38 = arith.constant 0 : index
    %68 = vector.load %arg2[%c3, %c0_37, %c0_38] : memref<4x32x256xf32, #tpu.memory_space<vmem>>, vector<1x32x256xf32>
    %69 = vector.shape_cast %68 : vector<1x32x256xf32> to vector<32x256xf32>
    %c3_39 = arith.constant 3 : index
    %c0_40 = arith.constant 0 : index
    %c0_41 = arith.constant 0 : index
    %70 = vector.load %arg3[%c3_39, %c0_40, %c0_41] : memref<4x1x256xf32, #tpu.memory_space<vmem>>, vector<1x1x256xf32>
    %71 = vector.shape_cast %70 : vector<1x1x256xf32> to vector<1x256xf32>
    %cst_42 = arith.constant dense<0.000000e+00> : vector<128x256xf32>
    %72 = tpu.matmul %60, %69, %cst_42 {dimension_numbers = #tpu.dot_dimension_numbers<[1], [0], [0], [1], [0, 0, 1, 1], [], []>} : vector<128x32xf32>, vector<32x256xf32>, vector<128x256xf32> -> vector<128x256xf32>
    %73 = vector.broadcast %71 : vector<1x256xf32> to vector<128x256xf32>
    %74 = arith.subf %72, %73 : vector<128x256xf32>
    %75 = tpu.reduce_index %74 {axis = 1 : i32, kind = #tpu.reduction_kind<arg_max>} : vector<128x256xf32> -> vector<128xi32>
    %76 = vector.shape_cast %75 : vector<128xi32> to vector<128x1xi32>
    %77 = vector.broadcast %76 : vector<128x1xi32> to vector<128x256xi32>
    %78 = arith.cmpi eq, %0, %77 : vector<128x256xi32>
    %79 = arith.extui %78 : vector<128x256xi1> to vector<128x256xi32>
    %80 = arith.sitofp %79 : vector<128x256xi32> to vector<128x256xf32>
    %cst_43 = arith.constant dense<0.000000e+00> : vector<128x32xf32>
    %81 = tpu.matmul %80, %69, %cst_43 {dimension_numbers = #tpu.dot_dimension_numbers<[1], [1], [0], [0], [0, 0, 1, 0], [], []>} : vector<128x256xf32>, vector<32x256xf32>, vector<128x32xf32> -> vector<128x32xf32>
    %82 = arith.subf %60, %81 : vector<128x32xf32>
    %83 = arith.mulf %82, %82 : vector<128x32xf32>
    %cst_44 = arith.constant dense<0.000000e+00> : vector<128xf32>
    %84 = vector.multi_reduction <add>, %83, %cst_44 [1] : vector<128x32xf32> to vector<128xf32>
    %85 = vector.shape_cast %84 : vector<128xf32> to vector<128x1xf32>
    %86 = vector.shape_cast %76 : vector<128x1xi32> to vector<1x128xi32>
    %c3_45 = arith.constant 3 : index
    %c0_46 = arith.constant 0 : index
    %87 = vector.load %arg5[%c3_45, %c0_46] : memref<4x128xi32, #tpu.memory_space<vmem>>, vector<1x128xi32>
    tpu.vector_store %arg5[%c3_45, %c0_46], %86 {strides = array<i32>} : memref<4x128xi32, #tpu.memory_space<vmem>>, vector<1x128xi32>,
    %88 = vector.shape_cast %85 : vector<128x1xf32> to vector<1x128xf32>
    %c3_47 = arith.constant 3 : index
    %c0_48 = arith.constant 0 : index
    %89 = vector.load %arg6[%c3_47, %c0_48] : memref<4x128xf32, #tpu.memory_space<vmem>>, vector<1x128xf32>
    tpu.vector_store %arg6[%c3_47, %c0_48], %88 {strides = array<i32>} : memref<4x128xf32, #tpu.memory_space<vmem>>, vector<1x128xf32>,
    %90 = arith.subf %1, %82 : vector<128x32xf32>
    %c0_49 = arith.constant 0 : index
    %c0_50 = arith.constant 0 : index
    %91 = vector.load %arg4[%c0_49, %c0_50] : memref<128x32xf32, #tpu.memory_space<vmem>>, vector<128x32xf32>
    tpu.vector_store %arg4[%c0_49, %c0_50], %90 {strides = array<i32>} : memref<128x32xf32, #tpu.memory_space<vmem>>, vector<128x32xf32>,
    return
  }
  func.func @transform_0(%arg0: i32) -> (i32, i32) {
    %c0_i32 = arith.constant 0 : i32
    %c0_i32_0 = arith.constant 0 : i32
    return %arg0, %c0_i32 : i32, i32
  }
  func.func @transform_1(%arg0: i32) -> (i32, i32, i32) {
    %c0_i32 = arith.constant 0 : i32
    %c0_i32_0 = arith.constant 0 : i32
    %c0_i32_1 = arith.constant 0 : i32
    %c0_i32_2 = arith.constant 0 : i32
    return %c0_i32, %c0_i32_0, %c0_i32_1 : i32, i32, i32
  }
  func.func @transform_2(%arg0: i32) -> (i32, i32, i32) {
    %c0_i32 = arith.constant 0 : i32
    %c0_i32_0 = arith.constant 0 : i32
    %c0_i32_1 = arith.constant 0 : i32
    %c0_i32_2 = arith.constant 0 : i32
    return %c0_i32, %c0_i32_0, %c0_i32_1 : i32, i32, i32
  }
  func.func @transform_3(%arg0: i32) -> (i32, i32) {
    %c0_i32 = arith.constant 0 : i32
    %c0_i32_0 = arith.constant 0 : i32
    return %arg0, %c0_i32 : i32, i32
  }
  func.func @transform_4(%arg0: i32) -> (i32, i32) {
    %c0_i32 = arith.constant 0 : i32
    %c0_i32_0 = arith.constant 0 : i32
    return %c0_i32, %arg0 : i32, i32
  }
  func.func @transform_5(%arg0: i32) -> (i32, i32) {
    %c0_i32 = arith.constant 0 : i32
    %c0_i32_0 = arith.constant 0 : i32
    return %c0_i32, %arg0 : i32, i32
  }
}

module attributes {stable_mosaic.version = 11 : i64} {
  func.func @_rvq_kernel(%arg0: i32, %arg1: memref<128x32xf32, #tpu.memory_space<vmem>>, %arg2: memref<4x32x256xf32, #tpu.memory_space<vmem>>, %arg3: memref<4x1x256xf32, #tpu.memory_space<vmem>>, %arg4: memref<128x32xf32, #tpu.memory_space<vmem>>, %arg5: memref<4x128xi32, #tpu.memory_space<vmem>>, %arg6: memref<4x128xf32, #tpu.memory_space<vmem>>) attributes {dimension_semantics = [#tpu.dimension_semantics<parallel>], iteration_bounds = array<i64: 1>, scalar_prefetch = 0 : i64, scratch_operands = 0 : i64, tpu.core_type = #tpu.core_type<tc>, window_params = [{transform_indices = @transform_0, window_bounds = array<i64: 128, 32>}, {pipeline_mode = #tpu.pipeline_mode<synchronous>, transform_indices = @transform_1, window_bounds = array<i64: 4, 32, 256>}, {pipeline_mode = #tpu.pipeline_mode<synchronous>, transform_indices = @transform_2, window_bounds = array<i64: 4, 1, 256>}, {transform_indices = @transform_3, window_bounds = array<i64: 128, 32>}, {transform_indices = @transform_4, window_bounds = array<i64: 4, 128>}, {transform_indices = @transform_5, window_bounds = array<i64: 4, 128>}]} {
    %0 = tpu.iota {dimensions = array<i32: 1>} : vector<128x256xi32>
    %c0 = arith.constant 0 : index
    %c0_0 = arith.constant 0 : index
    %1 = vector.load %arg1[%c0, %c0_0] : memref<128x32xf32, #tpu.memory_space<vmem>>, vector<128x32xf32>
    %c0_1 = arith.constant 0 : index
    %c0_2 = arith.constant 0 : index
    %c0_3 = arith.constant 0 : index
    %2 = vector.load %arg2[%c0_1, %c0_2, %c0_3] : memref<4x32x256xf32, #tpu.memory_space<vmem>>, vector<1x32x256xf32>
    %3 = vector.shape_cast %2 : vector<1x32x256xf32> to vector<32x256xf32>
    %c0_4 = arith.constant 0 : index
    %c0_5 = arith.constant 0 : index
    %c0_6 = arith.constant 0 : index
    %4 = vector.load %arg3[%c0_4, %c0_5, %c0_6] : memref<4x1x256xf32, #tpu.memory_space<vmem>>, vector<1x1x256xf32>
    %5 = vector.shape_cast %4 : vector<1x1x256xf32> to vector<1x256xf32>
    %cst = arith.constant dense<0.000000e+00> : vector<128x256xf32>
    %6 = tpu.matmul %1, %3, %cst {dimension_numbers = #tpu.dot_dimension_numbers<[1], [0], [0], [1], [0, 0, 1, 1], [], []>} : vector<128x32xf32>, vector<32x256xf32>, vector<128x256xf32> -> vector<128x256xf32>
    %7 = vector.broadcast %5 : vector<1x256xf32> to vector<128x256xf32>
    %8 = arith.subf %6, %7 : vector<128x256xf32>
    %9 = tpu.reduce_index %8 {axis = 1 : i32, kind = #tpu.reduction_kind<arg_max>} : vector<128x256xf32> -> vector<128xi32>
    %10 = vector.shape_cast %9 : vector<128xi32> to vector<128x1xi32>
    %11 = vector.broadcast %10 : vector<128x1xi32> to vector<128x256xi32>
    %12 = arith.cmpi eq, %0, %11 : vector<128x256xi32>
    %13 = arith.extui %12 : vector<128x256xi1> to vector<128x256xi32>
    %14 = arith.sitofp %13 : vector<128x256xi32> to vector<128x256xf32>
    %cst_7 = arith.constant dense<0.000000e+00> : vector<128x32xf32>
    %15 = tpu.matmul %14, %3, %cst_7 {dimension_numbers = #tpu.dot_dimension_numbers<[1], [1], [0], [0], [0, 0, 1, 0], [], []>} : vector<128x256xf32>, vector<32x256xf32>, vector<128x32xf32> -> vector<128x32xf32>
    %16 = arith.subf %1, %15 : vector<128x32xf32>
    %17 = arith.mulf %16, %16 : vector<128x32xf32>
    %cst_8 = arith.constant dense<0.000000e+00> : vector<128xf32>
    %18 = vector.multi_reduction <add>, %17, %cst_8 [1] : vector<128x32xf32> to vector<128xf32>
    %19 = vector.shape_cast %18 : vector<128xf32> to vector<128x1xf32>
    %20 = vector.shape_cast %10 : vector<128x1xi32> to vector<1x128xi32>
    %c0_9 = arith.constant 0 : index
    %c0_10 = arith.constant 0 : index
    %21 = vector.load %arg5[%c0_9, %c0_10] : memref<4x128xi32, #tpu.memory_space<vmem>>, vector<1x128xi32>
    tpu.vector_store %arg5[%c0_9, %c0_10], %20 {strides = array<i32>} : memref<4x128xi32, #tpu.memory_space<vmem>>, vector<1x128xi32>,
    %22 = vector.shape_cast %19 : vector<128x1xf32> to vector<1x128xf32>
    %c0_11 = arith.constant 0 : index
    %c0_12 = arith.constant 0 : index
    %23 = vector.load %arg6[%c0_11, %c0_12] : memref<4x128xf32, #tpu.memory_space<vmem>>, vector<1x128xf32>
    tpu.vector_store %arg6[%c0_11, %c0_12], %22 {strides = array<i32>} : memref<4x128xf32, #tpu.memory_space<vmem>>, vector<1x128xf32>,
    %c1 = arith.constant 1 : index
    %c0_13 = arith.constant 0 : index
    %c0_14 = arith.constant 0 : index
    %24 = vector.load %arg2[%c1, %c0_13, %c0_14] : memref<4x32x256xf32, #tpu.memory_space<vmem>>, vector<1x32x256xf32>
    %25 = vector.shape_cast %24 : vector<1x32x256xf32> to vector<32x256xf32>
    %c1_15 = arith.constant 1 : index
    %c0_16 = arith.constant 0 : index
    %c0_17 = arith.constant 0 : index
    %26 = vector.load %arg3[%c1_15, %c0_16, %c0_17] : memref<4x1x256xf32, #tpu.memory_space<vmem>>, vector<1x1x256xf32>
    %27 = vector.shape_cast %26 : vector<1x1x256xf32> to vector<1x256xf32>
    %cst_18 = arith.constant dense<0.000000e+00> : vector<128x256xf32>
    %28 = tpu.matmul %16, %25, %cst_18 {dimension_numbers = #tpu.dot_dimension_numbers<[1], [0], [0], [1], [0, 0, 1, 1], [], []>} : vector<128x32xf32>, vector<32x256xf32>, vector<128x256xf32> -> vector<128x256xf32>
    %29 = vector.broadcast %27 : vector<1x256xf32> to vector<128x256xf32>
    %30 = arith.subf %28, %29 : vector<128x256xf32>
    %31 = tpu.reduce_index %30 {axis = 1 : i32, kind = #tpu.reduction_kind<arg_max>} : vector<128x256xf32> -> vector<128xi32>
    %32 = vector.shape_cast %31 : vector<128xi32> to vector<128x1xi32>
    %33 = vector.broadcast %32 : vector<128x1xi32> to vector<128x256xi32>
    %34 = arith.cmpi eq, %0, %33 : vector<128x256xi32>
    %35 = arith.extui %34 : vector<128x256xi1> to vector<128x256xi32>
    %36 = arith.sitofp %35 : vector<128x256xi32> to vector<128x256xf32>
    %cst_19 = arith.constant dense<0.000000e+00> : vector<128x32xf32>
    %37 = tpu.matmul %36, %25, %cst_19 {dimension_numbers = #tpu.dot_dimension_numbers<[1], [1], [0], [0], [0, 0, 1, 0], [], []>} : vector<128x256xf32>, vector<32x256xf32>, vector<128x32xf32> -> vector<128x32xf32>
    %38 = arith.subf %16, %37 : vector<128x32xf32>
    %39 = arith.mulf %38, %38 : vector<128x32xf32>
    %cst_20 = arith.constant dense<0.000000e+00> : vector<128xf32>
    %40 = vector.multi_reduction <add>, %39, %cst_20 [1] : vector<128x32xf32> to vector<128xf32>
    %41 = vector.shape_cast %40 : vector<128xf32> to vector<128x1xf32>
    %42 = vector.shape_cast %32 : vector<128x1xi32> to vector<1x128xi32>
    %c1_21 = arith.constant 1 : index
    %c0_22 = arith.constant 0 : index
    %43 = vector.load %arg5[%c1_21, %c0_22] : memref<4x128xi32, #tpu.memory_space<vmem>>, vector<1x128xi32>
    tpu.vector_store %arg5[%c1_21, %c0_22], %42 {strides = array<i32>} : memref<4x128xi32, #tpu.memory_space<vmem>>, vector<1x128xi32>,
    %44 = vector.shape_cast %41 : vector<128x1xf32> to vector<1x128xf32>
    %c1_23 = arith.constant 1 : index
    %c0_24 = arith.constant 0 : index
    %45 = vector.load %arg6[%c1_23, %c0_24] : memref<4x128xf32, #tpu.memory_space<vmem>>, vector<1x128xf32>
    tpu.vector_store %arg6[%c1_23, %c0_24], %44 {strides = array<i32>} : memref<4x128xf32, #tpu.memory_space<vmem>>, vector<1x128xf32>,
    %c2 = arith.constant 2 : index
    %c0_25 = arith.constant 0 : index
    %c0_26 = arith.constant 0 : index
    %46 = vector.load %arg2[%c2, %c0_25, %c0_26] : memref<4x32x256xf32, #tpu.memory_space<vmem>>, vector<1x32x256xf32>
    %47 = vector.shape_cast %46 : vector<1x32x256xf32> to vector<32x256xf32>
    %c2_27 = arith.constant 2 : index
    %c0_28 = arith.constant 0 : index
    %c0_29 = arith.constant 0 : index
    %48 = vector.load %arg3[%c2_27, %c0_28, %c0_29] : memref<4x1x256xf32, #tpu.memory_space<vmem>>, vector<1x1x256xf32>
    %49 = vector.shape_cast %48 : vector<1x1x256xf32> to vector<1x256xf32>
    %cst_30 = arith.constant dense<0.000000e+00> : vector<128x256xf32>
    %50 = tpu.matmul %38, %47, %cst_30 {dimension_numbers = #tpu.dot_dimension_numbers<[1], [0], [0], [1], [0, 0, 1, 1], [], []>} : vector<128x32xf32>, vector<32x256xf32>, vector<128x256xf32> -> vector<128x256xf32>
    %51 = vector.broadcast %49 : vector<1x256xf32> to vector<128x256xf32>
    %52 = arith.subf %50, %51 : vector<128x256xf32>
    %53 = tpu.reduce_index %52 {axis = 1 : i32, kind = #tpu.reduction_kind<arg_max>} : vector<128x256xf32> -> vector<128xi32>
    %54 = vector.shape_cast %53 : vector<128xi32> to vector<128x1xi32>
    %55 = vector.broadcast %54 : vector<128x1xi32> to vector<128x256xi32>
    %56 = arith.cmpi eq, %0, %55 : vector<128x256xi32>
    %57 = arith.extui %56 : vector<128x256xi1> to vector<128x256xi32>
    %58 = arith.sitofp %57 : vector<128x256xi32> to vector<128x256xf32>
    %cst_31 = arith.constant dense<0.000000e+00> : vector<128x32xf32>
    %59 = tpu.matmul %58, %47, %cst_31 {dimension_numbers = #tpu.dot_dimension_numbers<[1], [1], [0], [0], [0, 0, 1, 0], [], []>} : vector<128x256xf32>, vector<32x256xf32>, vector<128x32xf32> -> vector<128x32xf32>
    %60 = arith.subf %38, %59 : vector<128x32xf32>
    %61 = arith.mulf %60, %60 : vector<128x32xf32>
    %cst_32 = arith.constant dense<0.000000e+00> : vector<128xf32>
    %62 = vector.multi_reduction <add>, %61, %cst_32 [1] : vector<128x32xf32> to vector<128xf32>
    %63 = vector.shape_cast %62 : vector<128xf32> to vector<128x1xf32>
    %64 = vector.shape_cast %54 : vector<128x1xi32> to vector<1x128xi32>
    %c2_33 = arith.constant 2 : index
    %c0_34 = arith.constant 0 : index
    %65 = vector.load %arg5[%c2_33, %c0_34] : memref<4x128xi32, #tpu.memory_space<vmem>>, vector<1x128xi32>
    tpu.vector_store %arg5[%c2_33, %c0_34], %64 {strides = array<i32>} : memref<4x128xi32, #tpu.memory_space<vmem>>, vector<1x128xi32>,
    %66 = vector.shape_cast %63 : vector<128x1xf32> to vector<1x128xf32>
    %c2_35 = arith.constant 2 : index
    %c0_36 = arith.constant 0 : index
    %67 = vector.load %arg6[%c2_35, %c0_36] : memref<4x128xf32, #tpu.memory_space<vmem>>, vector<1x128xf32>
    tpu.vector_store %arg6[%c2_35, %c0_36], %66 {strides = array<i32>} : memref<4x128xf32, #tpu.memory_space<vmem>>, vector<1x128xf32>,
    %c3 = arith.constant 3 : index
    %c0_37 = arith.constant 0 : index
    %c0_38 = arith.constant 0 : index
    %68 = vector.load %arg2[%c3, %c0_37, %c0_38] : memref<4x32x256xf32, #tpu.memory_space<vmem>>, vector<1x32x256xf32>
    %69 = vector.shape_cast %68 : vector<1x32x256xf32> to vector<32x256xf32>
    %c3_39 = arith.constant 3 : index
    %c0_40 = arith.constant 0 : index
    %c0_41 = arith.constant 0 : index
    %70 = vector.load %arg3[%c3_39, %c0_40, %c0_41] : memref<4x1x256xf32, #tpu.memory_space<vmem>>, vector<1x1x256xf32>
    %71 = vector.shape_cast %70 : vector<1x1x256xf32> to vector<1x256xf32>
    %cst_42 = arith.constant dense<0.000000e+00> : vector<128x256xf32>
    %72 = tpu.matmul %60, %69, %cst_42 {dimension_numbers = #tpu.dot_dimension_numbers<[1], [0], [0], [1], [0, 0, 1, 1], [], []>} : vector<128x32xf32>, vector<32x256xf32>, vector<128x256xf32> -> vector<128x256xf32>
    %73 = vector.broadcast %71 : vector<1x256xf32> to vector<128x256xf32>
    %74 = arith.subf %72, %73 : vector<128x256xf32>
    %75 = tpu.reduce_index %74 {axis = 1 : i32, kind = #tpu.reduction_kind<arg_max>} : vector<128x256xf32> -> vector<128xi32>
    %76 = vector.shape_cast %75 : vector<128xi32> to vector<128x1xi32>
    %77 = vector.broadcast %76 : vector<128x1xi32> to vector<128x256xi32>
    %78 = arith.cmpi eq, %0, %77 : vector<128x256xi32>
    %79 = arith.extui %78 : vector<128x256xi1> to vector<128x256xi32>
    %80 = arith.sitofp %79 : vector<128x256xi32> to vector<128x256xf32>
    %cst_43 = arith.constant dense<0.000000e+00> : vector<128x32xf32>
    %81 = tpu.matmul %80, %69, %cst_43 {dimension_numbers = #tpu.dot_dimension_numbers<[1], [1], [0], [0], [0, 0, 1, 0], [], []>} : vector<128x256xf32>, vector<32x256xf32>, vector<128x32xf32> -> vector<128x32xf32>
    %82 = arith.subf %60, %81 : vector<128x32xf32>
    %83 = arith.mulf %82, %82 : vector<128x32xf32>
    %cst_44 = arith.constant dense<0.000000e+00> : vector<128xf32>
    %84 = vector.multi_reduction <add>, %83, %cst_44 [1] : vector<128x32xf32> to vector<128xf32>
    %85 = vector.shape_cast %84 : vector<128xf32> to vector<128x1xf32>
    %86 = vector.shape_cast %76 : vector<128x1xi32> to vector<1x128xi32>
    %c3_45 = arith.constant 3 : index
    %c0_46 = arith.constant 0 : index
    %87 = vector.load %arg5[%c3_45, %c0_46] : memref<4x128xi32, #tpu.memory_space<vmem>>, vector<1x128xi32>
    tpu.vector_store %arg5[%c3_45, %c0_46], %86 {strides = array<i32>} : memref<4x128xi32, #tpu.memory_space<vmem>>, vector<1x128xi32>,
    %88 = vector.shape_cast %85 : vector<128x1xf32> to vector<1x128xf32>
    %c3_47 = arith.constant 3 : index
    %c0_48 = arith.constant 0 : index
    %89 = vector.load %arg6[%c3_47, %c0_48] : memref<4x128xf32, #tpu.memory_space<vmem>>, vector<1x128xf32>
    tpu.vector_store %arg6[%c3_47, %c0_48], %88 {strides = array<i32>} : memref<4x128xf32, #tpu.memory_space<vmem>>, vector<1x128xf32>,
    %90 = arith.subf %1, %82 : vector<128x32xf32>
    %c0_49 = arith.constant 0 : index
    %c0_50 = arith.constant 0 : index
    %91 = vector.load %arg4[%c0_49, %c0_50] : memref<128x32xf32, #tpu.memory_space<vmem>>, vector<128x32xf32>
    tpu.vector_store %arg4[%c0_49, %c0_50], %90 {strides = array<i32>} : memref<128x32xf32, #tpu.memory_space<vmem>>, vector<128x32xf32>,
    return
  }
  func.func @transform_0(%arg0: i32) -> (i32, i32) {
    %c0_i32 = arith.constant 0 : i32
    %c0_i32_0 = arith.constant 0 : i32
    return %arg0, %c0_i32 : i32, i32
  }
  func.func @transform_1(%arg0: i32) -> (i32, i32, i32) {
    %c0_i32 = arith.constant 0 : i32
    %c0_i32_0 = arith.constant 0 : i32
    %c0_i32_1 = arith.constant 0 : i32
    %c0_i32_2 = arith.constant 0 : i32
    return %c0_i32, %c0_i32_0, %c0_i32_1 : i32, i32, i32
  }
  func.func @transform_2(%arg0: i32) -> (i32, i32, i32) {
    %c0_i32 = arith.constant 0 : i32
    %c0_i32_0 = arith.constant 0 : i32
    %c0_i32_1 = arith.constant 0 : i32
    %c0_i32_2 = arith.constant 0 : i32
    return %c0_i32, %c0_i32_0, %c0_i32_1 : i32, i32, i32
  }
  func.func @transform_3(%arg0: i32) -> (i32, i32) {
    %c0_i32 = arith.constant 0 : i32
    %c0_i32_0 = arith.constant 0 : i32
    return %arg0, %c0_i32 : i32, i32
  }
  func.func @transform_4(%arg0: i32) -> (i32, i32) {
    %c0_i32 = arith.constant 0 : i32
    %c0_i32_0 = arith.constant 0 : i32
    return %c0_i32, %arg0 : i32, i32
  }
  func.func @transform_5(%arg0: i32) -> (i32, i32) {
    %c0_i32 = arith.constant 0 : i32
    %c0_i32_0 = arith.constant 0 : i32
    return %c0_i32, %arg0 : i32, i32
  }
}

module attributes {stable_mosaic.version = 11 : i64} {
  func.func @_rvq_kernel(%arg0: i32, %arg1: memref<128x32xf32, #tpu.memory_space<vmem>>, %arg2: memref<4x32x256xf32, #tpu.memory_space<vmem>>, %arg3: memref<4x1x256xf32, #tpu.memory_space<vmem>>, %arg4: memref<128x32xf32, #tpu.memory_space<vmem>>, %arg5: memref<4x128xi32, #tpu.memory_space<vmem>>, %arg6: memref<4x128xf32, #tpu.memory_space<vmem>>) attributes {dimension_semantics = [#tpu.dimension_semantics<parallel>], iteration_bounds = array<i64: 1>, scalar_prefetch = 0 : i64, scratch_operands = 0 : i64, tpu.core_type = #tpu.core_type<tc>, window_params = [{transform_indices = @transform_0, window_bounds = array<i64: 128, 32>}, {pipeline_mode = #tpu.pipeline_mode<synchronous>, transform_indices = @transform_1, window_bounds = array<i64: 4, 32, 256>}, {pipeline_mode = #tpu.pipeline_mode<synchronous>, transform_indices = @transform_2, window_bounds = array<i64: 4, 1, 256>}, {transform_indices = @transform_3, window_bounds = array<i64: 128, 32>}, {transform_indices = @transform_4, window_bounds = array<i64: 4, 128>}, {transform_indices = @transform_5, window_bounds = array<i64: 4, 128>}]} {
    %0 = tpu.iota {dimensions = array<i32: 1>} : vector<128x256xi32>
    %c0 = arith.constant 0 : index
    %c0_0 = arith.constant 0 : index
    %1 = vector.load %arg1[%c0, %c0_0] : memref<128x32xf32, #tpu.memory_space<vmem>>, vector<128x32xf32>
    %c0_1 = arith.constant 0 : index
    %c0_2 = arith.constant 0 : index
    %c0_3 = arith.constant 0 : index
    %2 = vector.load %arg2[%c0_1, %c0_2, %c0_3] : memref<4x32x256xf32, #tpu.memory_space<vmem>>, vector<1x32x256xf32>
    %3 = vector.shape_cast %2 : vector<1x32x256xf32> to vector<32x256xf32>
    %c0_4 = arith.constant 0 : index
    %c0_5 = arith.constant 0 : index
    %c0_6 = arith.constant 0 : index
    %4 = vector.load %arg3[%c0_4, %c0_5, %c0_6] : memref<4x1x256xf32, #tpu.memory_space<vmem>>, vector<1x1x256xf32>
    %5 = vector.shape_cast %4 : vector<1x1x256xf32> to vector<1x256xf32>
    %cst = arith.constant dense<0.000000e+00> : vector<128x256xf32>
    %6 = tpu.matmul %1, %3, %cst {dimension_numbers = #tpu.dot_dimension_numbers<[1], [0], [0], [1], [0, 0, 1, 1], [], []>} : vector<128x32xf32>, vector<32x256xf32>, vector<128x256xf32> -> vector<128x256xf32>
    %7 = vector.broadcast %5 : vector<1x256xf32> to vector<128x256xf32>
    %8 = arith.subf %6, %7 : vector<128x256xf32>
    %cst_7 = arith.constant dense<0xFF800000> : vector<128xf32>
    %9 = vector.multi_reduction <maximumf>, %8, %cst_7 [1] : vector<128x256xf32> to vector<128xf32>
    %10 = vector.shape_cast %9 : vector<128xf32> to vector<128x1xf32>
    %11 = vector.broadcast %10 : vector<128x1xf32> to vector<128x256xf32>
    %12 = arith.cmpf oeq, %8, %11 : vector<128x256xf32>
    %c256_i32 = arith.constant 256 : i32
    %13 = vector.broadcast %c256_i32 : i32 to vector<128x256xi32>
    %14 = arith.select %12, %0, %13 : vector<128x256xi1>, vector<128x256xi32>
    %cst_8 = arith.constant dense<2147483647> : vector<128xi32>
    %15 = vector.multi_reduction <minsi>, %14, %cst_8 [1] : vector<128x256xi32> to vector<128xi32>
    %16 = vector.shape_cast %15 : vector<128xi32> to vector<128x1xi32>
    %17 = vector.broadcast %16 : vector<128x1xi32> to vector<128x256xi32>
    %18 = arith.cmpi eq, %0, %17 : vector<128x256xi32>
    %19 = arith.extui %18 : vector<128x256xi1> to vector<128x256xi32>
    %20 = arith.sitofp %19 : vector<128x256xi32> to vector<128x256xf32>
    %cst_9 = arith.constant dense<0.000000e+00> : vector<128x32xf32>
    %21 = tpu.matmul %20, %3, %cst_9 {dimension_numbers = #tpu.dot_dimension_numbers<[1], [1], [0], [0], [0, 0, 1, 0], [], []>} : vector<128x256xf32>, vector<32x256xf32>, vector<128x32xf32> -> vector<128x32xf32>
    %22 = arith.subf %1, %21 : vector<128x32xf32>
    %23 = arith.mulf %22, %22 : vector<128x32xf32>
    %cst_10 = arith.constant dense<0.000000e+00> : vector<128xf32>
    %24 = vector.multi_reduction <add>, %23, %cst_10 [1] : vector<128x32xf32> to vector<128xf32>
    %25 = vector.shape_cast %24 : vector<128xf32> to vector<128x1xf32>
    %26 = vector.shape_cast %16 : vector<128x1xi32> to vector<1x128xi32>
    %c0_11 = arith.constant 0 : index
    %c0_12 = arith.constant 0 : index
    %27 = vector.load %arg5[%c0_11, %c0_12] : memref<4x128xi32, #tpu.memory_space<vmem>>, vector<1x128xi32>
    tpu.vector_store %arg5[%c0_11, %c0_12], %26 {strides = array<i32>} : memref<4x128xi32, #tpu.memory_space<vmem>>, vector<1x128xi32>,
    %28 = vector.shape_cast %25 : vector<128x1xf32> to vector<1x128xf32>
    %c0_13 = arith.constant 0 : index
    %c0_14 = arith.constant 0 : index
    %29 = vector.load %arg6[%c0_13, %c0_14] : memref<4x128xf32, #tpu.memory_space<vmem>>, vector<1x128xf32>
    tpu.vector_store %arg6[%c0_13, %c0_14], %28 {strides = array<i32>} : memref<4x128xf32, #tpu.memory_space<vmem>>, vector<1x128xf32>,
    %c1 = arith.constant 1 : index
    %c0_15 = arith.constant 0 : index
    %c0_16 = arith.constant 0 : index
    %30 = vector.load %arg2[%c1, %c0_15, %c0_16] : memref<4x32x256xf32, #tpu.memory_space<vmem>>, vector<1x32x256xf32>
    %31 = vector.shape_cast %30 : vector<1x32x256xf32> to vector<32x256xf32>
    %c1_17 = arith.constant 1 : index
    %c0_18 = arith.constant 0 : index
    %c0_19 = arith.constant 0 : index
    %32 = vector.load %arg3[%c1_17, %c0_18, %c0_19] : memref<4x1x256xf32, #tpu.memory_space<vmem>>, vector<1x1x256xf32>
    %33 = vector.shape_cast %32 : vector<1x1x256xf32> to vector<1x256xf32>
    %cst_20 = arith.constant dense<0.000000e+00> : vector<128x256xf32>
    %34 = tpu.matmul %22, %31, %cst_20 {dimension_numbers = #tpu.dot_dimension_numbers<[1], [0], [0], [1], [0, 0, 1, 1], [], []>} : vector<128x32xf32>, vector<32x256xf32>, vector<128x256xf32> -> vector<128x256xf32>
    %35 = vector.broadcast %33 : vector<1x256xf32> to vector<128x256xf32>
    %36 = arith.subf %34, %35 : vector<128x256xf32>
    %cst_21 = arith.constant dense<0xFF800000> : vector<128xf32>
    %37 = vector.multi_reduction <maximumf>, %36, %cst_21 [1] : vector<128x256xf32> to vector<128xf32>
    %38 = vector.shape_cast %37 : vector<128xf32> to vector<128x1xf32>
    %39 = vector.broadcast %38 : vector<128x1xf32> to vector<128x256xf32>
    %40 = arith.cmpf oeq, %36, %39 : vector<128x256xf32>
    %c256_i32_22 = arith.constant 256 : i32
    %41 = vector.broadcast %c256_i32_22 : i32 to vector<128x256xi32>
    %42 = arith.select %40, %0, %41 : vector<128x256xi1>, vector<128x256xi32>
    %cst_23 = arith.constant dense<2147483647> : vector<128xi32>
    %43 = vector.multi_reduction <minsi>, %42, %cst_23 [1] : vector<128x256xi32> to vector<128xi32>
    %44 = vector.shape_cast %43 : vector<128xi32> to vector<128x1xi32>
    %45 = vector.broadcast %44 : vector<128x1xi32> to vector<128x256xi32>
    %46 = arith.cmpi eq, %0, %45 : vector<128x256xi32>
    %47 = arith.extui %46 : vector<128x256xi1> to vector<128x256xi32>
    %48 = arith.sitofp %47 : vector<128x256xi32> to vector<128x256xf32>
    %cst_24 = arith.constant dense<0.000000e+00> : vector<128x32xf32>
    %49 = tpu.matmul %48, %31, %cst_24 {dimension_numbers = #tpu.dot_dimension_numbers<[1], [1], [0], [0], [0, 0, 1, 0], [], []>} : vector<128x256xf32>, vector<32x256xf32>, vector<128x32xf32> -> vector<128x32xf32>
    %50 = arith.subf %22, %49 : vector<128x32xf32>
    %51 = arith.mulf %50, %50 : vector<128x32xf32>
    %cst_25 = arith.constant dense<0.000000e+00> : vector<128xf32>
    %52 = vector.multi_reduction <add>, %51, %cst_25 [1] : vector<128x32xf32> to vector<128xf32>
    %53 = vector.shape_cast %52 : vector<128xf32> to vector<128x1xf32>
    %54 = vector.shape_cast %44 : vector<128x1xi32> to vector<1x128xi32>
    %c1_26 = arith.constant 1 : index
    %c0_27 = arith.constant 0 : index
    %55 = vector.load %arg5[%c1_26, %c0_27] : memref<4x128xi32, #tpu.memory_space<vmem>>, vector<1x128xi32>
    tpu.vector_store %arg5[%c1_26, %c0_27], %54 {strides = array<i32>} : memref<4x128xi32, #tpu.memory_space<vmem>>, vector<1x128xi32>,
    %56 = vector.shape_cast %53 : vector<128x1xf32> to vector<1x128xf32>
    %c1_28 = arith.constant 1 : index
    %c0_29 = arith.constant 0 : index
    %57 = vector.load %arg6[%c1_28, %c0_29] : memref<4x128xf32, #tpu.memory_space<vmem>>, vector<1x128xf32>
    tpu.vector_store %arg6[%c1_28, %c0_29], %56 {strides = array<i32>} : memref<4x128xf32, #tpu.memory_space<vmem>>, vector<1x128xf32>,
    %c2 = arith.constant 2 : index
    %c0_30 = arith.constant 0 : index
    %c0_31 = arith.constant 0 : index
    %58 = vector.load %arg2[%c2, %c0_30, %c0_31] : memref<4x32x256xf32, #tpu.memory_space<vmem>>, vector<1x32x256xf32>
    %59 = vector.shape_cast %58 : vector<1x32x256xf32> to vector<32x256xf32>
    %c2_32 = arith.constant 2 : index
    %c0_33 = arith.constant 0 : index
    %c0_34 = arith.constant 0 : index
    %60 = vector.load %arg3[%c2_32, %c0_33, %c0_34] : memref<4x1x256xf32, #tpu.memory_space<vmem>>, vector<1x1x256xf32>
    %61 = vector.shape_cast %60 : vector<1x1x256xf32> to vector<1x256xf32>
    %cst_35 = arith.constant dense<0.000000e+00> : vector<128x256xf32>
    %62 = tpu.matmul %50, %59, %cst_35 {dimension_numbers = #tpu.dot_dimension_numbers<[1], [0], [0], [1], [0, 0, 1, 1], [], []>} : vector<128x32xf32>, vector<32x256xf32>, vector<128x256xf32> -> vector<128x256xf32>
    %63 = vector.broadcast %61 : vector<1x256xf32> to vector<128x256xf32>
    %64 = arith.subf %62, %63 : vector<128x256xf32>
    %cst_36 = arith.constant dense<0xFF800000> : vector<128xf32>
    %65 = vector.multi_reduction <maximumf>, %64, %cst_36 [1] : vector<128x256xf32> to vector<128xf32>
    %66 = vector.shape_cast %65 : vector<128xf32> to vector<128x1xf32>
    %67 = vector.broadcast %66 : vector<128x1xf32> to vector<128x256xf32>
    %68 = arith.cmpf oeq, %64, %67 : vector<128x256xf32>
    %c256_i32_37 = arith.constant 256 : i32
    %69 = vector.broadcast %c256_i32_37 : i32 to vector<128x256xi32>
    %70 = arith.select %68, %0, %69 : vector<128x256xi1>, vector<128x256xi32>
    %cst_38 = arith.constant dense<2147483647> : vector<128xi32>
    %71 = vector.multi_reduction <minsi>, %70, %cst_38 [1] : vector<128x256xi32> to vector<128xi32>
    %72 = vector.shape_cast %71 : vector<128xi32> to vector<128x1xi32>
    %73 = vector.broadcast %72 : vector<128x1xi32> to vector<128x256xi32>
    %74 = arith.cmpi eq, %0, %73 : vector<128x256xi32>
    %75 = arith.extui %74 : vector<128x256xi1> to vector<128x256xi32>
    %76 = arith.sitofp %75 : vector<128x256xi32> to vector<128x256xf32>
    %cst_39 = arith.constant dense<0.000000e+00> : vector<128x32xf32>
    %77 = tpu.matmul %76, %59, %cst_39 {dimension_numbers = #tpu.dot_dimension_numbers<[1], [1], [0], [0], [0, 0, 1, 0], [], []>} : vector<128x256xf32>, vector<32x256xf32>, vector<128x32xf32> -> vector<128x32xf32>
    %78 = arith.subf %50, %77 : vector<128x32xf32>
    %79 = arith.mulf %78, %78 : vector<128x32xf32>
    %cst_40 = arith.constant dense<0.000000e+00> : vector<128xf32>
    %80 = vector.multi_reduction <add>, %79, %cst_40 [1] : vector<128x32xf32> to vector<128xf32>
    %81 = vector.shape_cast %80 : vector<128xf32> to vector<128x1xf32>
    %82 = vector.shape_cast %72 : vector<128x1xi32> to vector<1x128xi32>
    %c2_41 = arith.constant 2 : index
    %c0_42 = arith.constant 0 : index
    %83 = vector.load %arg5[%c2_41, %c0_42] : memref<4x128xi32, #tpu.memory_space<vmem>>, vector<1x128xi32>
    tpu.vector_store %arg5[%c2_41, %c0_42], %82 {strides = array<i32>} : memref<4x128xi32, #tpu.memory_space<vmem>>, vector<1x128xi32>,
    %84 = vector.shape_cast %81 : vector<128x1xf32> to vector<1x128xf32>
    %c2_43 = arith.constant 2 : index
    %c0_44 = arith.constant 0 : index
    %85 = vector.load %arg6[%c2_43, %c0_44] : memref<4x128xf32, #tpu.memory_space<vmem>>, vector<1x128xf32>
    tpu.vector_store %arg6[%c2_43, %c0_44], %84 {strides = array<i32>} : memref<4x128xf32, #tpu.memory_space<vmem>>, vector<1x128xf32>,
    %c3 = arith.constant 3 : index
    %c0_45 = arith.constant 0 : index
    %c0_46 = arith.constant 0 : index
    %86 = vector.load %arg2[%c3, %c0_45, %c0_46] : memref<4x32x256xf32, #tpu.memory_space<vmem>>, vector<1x32x256xf32>
    %87 = vector.shape_cast %86 : vector<1x32x256xf32> to vector<32x256xf32>
    %c3_47 = arith.constant 3 : index
    %c0_48 = arith.constant 0 : index
    %c0_49 = arith.constant 0 : index
    %88 = vector.load %arg3[%c3_47, %c0_48, %c0_49] : memref<4x1x256xf32, #tpu.memory_space<vmem>>, vector<1x1x256xf32>
    %89 = vector.shape_cast %88 : vector<1x1x256xf32> to vector<1x256xf32>
    %cst_50 = arith.constant dense<0.000000e+00> : vector<128x256xf32>
    %90 = tpu.matmul %78, %87, %cst_50 {dimension_numbers = #tpu.dot_dimension_numbers<[1], [0], [0], [1], [0, 0, 1, 1], [], []>} : vector<128x32xf32>, vector<32x256xf32>, vector<128x256xf32> -> vector<128x256xf32>
    %91 = vector.broadcast %89 : vector<1x256xf32> to vector<128x256xf32>
    %92 = arith.subf %90, %91 : vector<128x256xf32>
    %cst_51 = arith.constant dense<0xFF800000> : vector<128xf32>
    %93 = vector.multi_reduction <maximumf>, %92, %cst_51 [1] : vector<128x256xf32> to vector<128xf32>
    %94 = vector.shape_cast %93 : vector<128xf32> to vector<128x1xf32>
    %95 = vector.broadcast %94 : vector<128x1xf32> to vector<128x256xf32>
    %96 = arith.cmpf oeq, %92, %95 : vector<128x256xf32>
    %c256_i32_52 = arith.constant 256 : i32
    %97 = vector.broadcast %c256_i32_52 : i32 to vector<128x256xi32>
    %98 = arith.select %96, %0, %97 : vector<128x256xi1>, vector<128x256xi32>
    %cst_53 = arith.constant dense<2147483647> : vector<128xi32>
    %99 = vector.multi_reduction <minsi>, %98, %cst_53 [1] : vector<128x256xi32> to vector<128xi32>
    %100 = vector.shape_cast %99 : vector<128xi32> to vector<128x1xi32>
    %101 = vector.broadcast %100 : vector<128x1xi32> to vector<128x256xi32>
    %102 = arith.cmpi eq, %0, %101 : vector<128x256xi32>
    %103 = arith.extui %102 : vector<128x256xi1> to vector<128x256xi32>
    %104 = arith.sitofp %103 : vector<128x256xi32> to vector<128x256xf32>
    %cst_54 = arith.constant dense<0.000000e+00> : vector<128x32xf32>
    %105 = tpu.matmul %104, %87, %cst_54 {dimension_numbers = #tpu.dot_dimension_numbers<[1], [1], [0], [0], [0, 0, 1, 0], [], []>} : vector<128x256xf32>, vector<32x256xf32>, vector<128x32xf32> -> vector<128x32xf32>
    %106 = arith.subf %78, %105 : vector<128x32xf32>
    %107 = arith.mulf %106, %106 : vector<128x32xf32>
    %cst_55 = arith.constant dense<0.000000e+00> : vector<128xf32>
    %108 = vector.multi_reduction <add>, %107, %cst_55 [1] : vector<128x32xf32> to vector<128xf32>
    %109 = vector.shape_cast %108 : vector<128xf32> to vector<128x1xf32>
    %110 = vector.shape_cast %100 : vector<128x1xi32> to vector<1x128xi32>
    %c3_56 = arith.constant 3 : index
    %c0_57 = arith.constant 0 : index
    %111 = vector.load %arg5[%c3_56, %c0_57] : memref<4x128xi32, #tpu.memory_space<vmem>>, vector<1x128xi32>
    tpu.vector_store %arg5[%c3_56, %c0_57], %110 {strides = array<i32>} : memref<4x128xi32, #tpu.memory_space<vmem>>, vector<1x128xi32>,
    %112 = vector.shape_cast %109 : vector<128x1xf32> to vector<1x128xf32>
    %c3_58 = arith.constant 3 : index
    %c0_59 = arith.constant 0 : index
    %113 = vector.load %arg6[%c3_58, %c0_59] : memref<4x128xf32, #tpu.memory_space<vmem>>, vector<1x128xf32>
    tpu.vector_store %arg6[%c3_58, %c0_59], %112 {strides = array<i32>} : memref<4x128xf32, #tpu.memory_space<vmem>>, vector<1x128xf32>,
    %114 = arith.subf %1, %106 : vector<128x32xf32>
    %c0_60 = arith.constant 0 : index
    %c0_61 = arith.constant 0 : index
    %115 = vector.load %arg4[%c0_60, %c0_61] : memref<128x32xf32, #tpu.memory_space<vmem>>, vector<128x32xf32>
    tpu.vector_store %arg4[%c0_60, %c0_61], %114 {strides = array<i32>} : memref<128x32xf32, #tpu.memory_space<vmem>>, vector<128x32xf32>,
    return
  }
  func.func @transform_0(%arg0: i32) -> (i32, i32) {
    %c0_i32 = arith.constant 0 : i32
    %c0_i32_0 = arith.constant 0 : i32
    return %arg0, %c0_i32 : i32, i32
  }
  func.func @transform_1(%arg0: i32) -> (i32, i32, i32) {
    %c0_i32 = arith.constant 0 : i32
    %c0_i32_0 = arith.constant 0 : i32
    %c0_i32_1 = arith.constant 0 : i32
    %c0_i32_2 = arith.constant 0 : i32
    return %c0_i32, %c0_i32_0, %c0_i32_1 : i32, i32, i32
  }
  func.func @transform_2(%arg0: i32) -> (i32, i32, i32) {
    %c0_i32 = arith.constant 0 : i32
    %c0_i32_0 = arith.constant 0 : i32
    %c0_i32_1 = arith.constant 0 : i32
    %c0_i32_2 = arith.constant 0 : i32
    return %c0_i32, %c0_i32_0, %c0_i32_1 : i32, i32, i32
  }
  func.func @transform_3(%arg0: i32) -> (i32, i32) {
    %c0_i32 = arith.constant 0 : i32
    %c0_i32_0 = arith.constant 0 : i32
    return %arg0, %c0_i32 : i32, i32
  }
  func.func @transform_4(%arg0: i32) -> (i32, i32) {
    %c0_i32 = arith.constant 0 : i32
    %c0_i32_0 = arith.constant 0 : i32
    return %c0_i32, %arg0 : i32, i32
  }
  func.func @transform_5(%arg0: i32) -> (i32, i32) {
    %c0_i32 = arith.constant 0 : i32
    %c0_i32_0 = arith.constant 0 : i32
    return %c0_i32, %arg0 : i32, i32
  }
}

</mosaic_0001>

<llo_original>
// kernel: tpu_custom_call.1
$region0: #{tpu_custom_call.1}
  #allocation0 [shape = 'u32[]', space=smem, size = 0x4, offset = 0x4, fixed_abs, tag = 'smem constant byte address 0x4 - core index']
  #allocation1 [shape = 'u32[72,128]{1,0:T(1,128)}', space=vmem, size = 0x9000, scoped, tag = 'internal scratch']
  %s0 = inlined_call_operand.vmem [shape: f32[128,32], index: 0, kind: input, shape index: {}]
  %s1 = inlined_call_operand.hbm [shape: f32[4,32,256], index: 1, kind: input, shape index: {}]
  %s2 = inlined_call_operand.vmem [shape: f32[4,1,256], index: 2, kind: input, shape index: {}]
  %s3 = inlined_call_operand.vmem [shape: f32[128,32], index: 3, kind: output, shape index: {0}]
  %s4 = inlined_call_operand.hbm [shape: s32[4,128], index: 4, kind: output, shape index: {1}]
  %s5 = inlined_call_operand.hbm [shape: f32[4,128], index: 5, kind: output, shape index: {2}]
  %6 = xla_tuple %s3, %s4, %s5
  %s7 = sld [smem:[#allocation0]]
  $region42: #{tpu_custom_call.1} parent=0
    _
  %s9 = ssub.s32 1, %s7
  %s10 = scalar_select 0, %s9, %s7
  $region1: #{tpu_custom_call.1} parent=0
    #allocation2 [shape = 'u8[131072]{0}', space=vmem, size = 0x20000, scoped, tag = 'input window, operand 1, single buffered']
    #allocation3 [shape = 's32[1]{0}', space=sflag, size = 0x4, scoped, tag = 'scoped memory for tpu_custom_call.1']
    #allocation4 [shape = 's32[1]{0}', space=sflag, size = 0x4, scoped, tag = 'scoped memory for tpu_custom_call.1']
    #allocation5 [shape = 'u8[2048]{0}', space=vmem, size = 0x800, scoped, tag = 'output window, operand 1, single buffered']
    #allocation6 [shape = 'u8[2048]{0}', space=vmem, size = 0x800, scoped, tag = 'output window, operand 2, single buffered']
    #allocation7 [shape = 's32[1]{0}', space=sflag, size = 0x4, scoped, tag = 'scoped memory for tpu_custom_call.1']
    %11 = vsyncpa [#allocation3], 0
    %12 = vsyncpa [#allocation4], 0
    %13 = vsyncpa [#allocation7], 0
    // Predicated region
    $region2: #{tpu_custom_call.1} parent=1 // pred_check
      _
    $region3: #{tpu_custom_call.1} parent=1 // pred_check_branch
      %15 = sbr.rel (0) target = $region5
    $region4: #{tpu_custom_call.1} parent=1 // pred_region
      _
    $region5: #{tpu_custom_call.1} parent=1 // pred_fallthru
      _
    // Predicated region
    $region6: #{tpu_custom_call.1} parent=1 // pred_check
      _
    $region7: #{tpu_custom_call.1} parent=1 // pred_check_branch
      %17 = sbr.rel (0) target = $region9
    $region8: #{tpu_custom_call.1} parent=1 // pred_region
      %19 = vsyncadd [#allocation3], 0
      %s20 = sshll.u32 %s1, 4
      %s21 = int_to_ptr.hbm [resolvable:$true] %s20
      %s22 = sshll.u32 [#allocation2], 4
      %s23 = int_to_ptr.vmem [resolvable:$true] %s22
      %28 = dma.hbm_to_vmem [thread:$0]  %s21, 4096, %s23, [#allocation3], 256, 256, 16
    $region9: #{tpu_custom_call.1} parent=1 // pred_fallthru
      _
    // Predicated region
    $region10: #{tpu_custom_call.1} parent=1 // pred_check
      _
    $region11: #{tpu_custom_call.1} parent=1 // pred_check_branch
      %30 = sbr.rel (0) target = $region13
    $region12: #{tpu_custom_call.1} parent=1 // pred_region
      _
    $region13: #{tpu_custom_call.1} parent=1 // pred_fallthru
      _
    // Predicated region
    $region14: #{tpu_custom_call.1} parent=1 // pred_check
      _
    $region15: #{tpu_custom_call.1} parent=1 // pred_check_branch
      %32 = sbr.rel (0) target = $region17
    $region16: #{tpu_custom_call.1} parent=1 // pred_region
      %34 = dma.done [#allocation3], 4096
    $region17: #{tpu_custom_call.1} parent=1 // pred_fallthru
      _
    %v35 = vlaneseq
    %v36 = vand.u32 %v35, 127
    %v37 = vadd.s32 %v36, 128
    %v38 = vld [vmem:[%s0] sm:$0xff]
    %v39 = vld [vmem:[%s0 + $0x8] sm:$0xff]
    %v40 = vld [vmem:[%s0 + $0x10] sm:$0xff]
    %v41 = vld [vmem:[%s0 + $0x18] sm:$0xff]
    %v42 = vld [vmem:[%s0 + $0x20] sm:$0xff]
    %v43 = vld [vmem:[%s0 + $0x28] sm:$0xff]
    %v44 = vld [vmem:[%s0 + $0x30] sm:$0xff]
    %v45 = vld [vmem:[%s0 + $0x38] sm:$0xff]
    %v46 = vld [vmem:[%s0 + $0x40] sm:$0xff]
    %v47 = vld [vmem:[%s0 + $0x48] sm:$0xff]
    %v48 = vld [vmem:[%s0 + $0x50] sm:$0xff]
    %v49 = vld [vmem:[%s0 + $0x58] sm:$0xff]
    %v50 = vld [vmem:[%s0 + $0x60] sm:$0xff]
    %v51 = vld [vmem:[%s0 + $0x68] sm:$0xff]
    %v52 = vld [vmem:[%s0 + $0x70] sm:$0xff]
    %v53 = vld [vmem:[%s0 + $0x78] sm:$0xff]
    %v54 = vld [vmem:[#allocation2] sm:$0xff]
    %v55 = vld [vmem:[#allocation2 + $0x8] sm:$0xff]
    %v56 = vld [vmem:[#allocation2 + $0x10] sm:$0xff]
    %v57 = vld [vmem:[#allocation2 + $0x18] sm:$0xff]
    %v58 = vld [vmem:[#allocation2 + $0x20] sm:$0xff]
    %v59 = vld [vmem:[#allocation2 + $0x28] sm:$0xff]
    %v60 = vld [vmem:[#allocation2 + $0x30] sm:$0xff]
    %v61 = vld [vmem:[#allocation2 + $0x38] sm:$0xff]
    %v62 = vld [vmem:[%s2] sm:$0x3]
    %vm63 = vcmask 261120
    %v65 = vsel %vm63, %v38, 0
    %v68 = vsel %vm63, %v39, 0
    %v71 = vsel %vm63, %v40, 0
    %v74 = vsel %vm63, %v41, 0
    %v77 = vsel %vm63, %v42, 0
    %v80 = vsel %vm63, %v43, 0
    %v83 = vsel %vm63, %v44, 0
    %v86 = vsel %vm63, %v45, 0
    %v89 = vsel %vm63, %v46, 0
    %v92 = vsel %vm63, %v47, 0
    %v95 = vsel %vm63, %v48, 0
    %v98 = vsel %vm63, %v49, 0
    %v101 = vsel %vm63, %v50, 0
    %v104 = vsel %vm63, %v51, 0
    %v107 = vsel %vm63, %v52, 0
    %v110 = vsel %vm63, %v53, 0
    %112 = vmatpush.msra.mxu0 0.0
    %113 = vmatpush.msra.mxu0 0.0
    %114 = vmatpush.msra.mxu0 0.0
    %115 = vmatpush.msra.mxu0 0.0
    %116 = vmatpush.msra.mxu0 0.0
    %117 = vmatpush.msra.mxu0 0.0
    %118 = vmatpush.msra.mxu0 0.0
    %119 = vmatpush.msra.mxu0 0.0
    %120 = vmatpush.msra.mxu0 0.0
    %121 = vmatpush.msra.mxu0 0.0
    %122 = vmatpush.msra.mxu0 0.0
    %123 = vmatpush.msra.mxu0 0.0
    %124 = vmatpush.msra.mxu0 %v60
    %125 = vmatpush.msra.mxu0 %v58
    %126 = vmatpush.msra.mxu0 %v56
    %127 = vmatpush.msra.mxu0 %v54
    %128 = vmatmul.f32.gmra.mxu0 %v65
    %v129 = vpop.f32.mrf.mxu0
    %v130 = vadd.f32 0.0, %v129
    %131 = vmatmul.f32.gmra.mxu0 %v68
    %v132 = vpop.f32.mrf.mxu0
    %v133 = vadd.f32 0.0, %v132
    %134 = vmatmul.f32.gmra.mxu0 %v71
    %v135 = vpop.f32.mrf.mxu0
    %v136 = vadd.f32 0.0, %v135
    %137 = vmatmul.f32.gmra.mxu0 %v74
    %v138 = vpop.f32.mrf.mxu0
    %v139 = vadd.f32 0.0, %v138
    %140 = vmatmul.f32.gmra.mxu0 %v77
    %v141 = vpop.f32.mrf.mxu0
    %v142 = vadd.f32 0.0, %v141
    %143 = vmatmul.f32.gmra.mxu0 %v80
    %v144 = vpop.f32.mrf.mxu0
    %v145 = vadd.f32 0.0, %v144
    %146 = vmatmul.f32.gmra.mxu0 %v83
    %v147 = vpop.f32.mrf.mxu0
    %v148 = vadd.f32 0.0, %v147
    %149 = vmatmul.f32.gmra.mxu0 %v86
    %v150 = vpop.f32.mrf.mxu0
    %v151 = vadd.f32 0.0, %v150
    %152 = vmatmul.f32.gmra.mxu0 %v89
    %v153 = vpop.f32.mrf.mxu0
    %v154 = vadd.f32 0.0, %v153
    %155 = vmatmul.f32.gmra.mxu0 %v92
    %v156 = vpop.f32.mrf.mxu0
    %v157 = vadd.f32 0.0, %v156
    %158 = vmatmul.f32.gmra.mxu0 %v95
    %v159 = vpop.f32.mrf.mxu0
    %v160 = vadd.f32 0.0, %v159
    %161 = vmatmul.f32.gmra.mxu0 %v98
    %v162 = vpop.f32.mrf.mxu0
    %v163 = vadd.f32 0.0, %v162
    %164 = vmatmul.f32.gmra.mxu0 %v101
    %v165 = vpop.f32.mrf.mxu0
    %v166 = vadd.f32 0.0, %v165
    %167 = vmatmul.f32.gmra.mxu0 %v104
    %v168 = vpop.f32.mrf.mxu0
    %v169 = vadd.f32 0.0, %v168
    %170 = vmatmul.f32.gmra.mxu0 %v107
    %v171 = vpop.f32.mrf.mxu0
    %v172 = vadd.f32 0.0, %v171
    %173 = vmatmul.f32.gmra.mxu0 %v110
    %v174 = vpop.f32.mrf.mxu0
    %v175 = vadd.f32 0.0, %v174
    %176 = vdwg.mxu0
    %177 = vmatpush.msra.mxu0 0.0
    %178 = vmatpush.msra.mxu0 0.0
    %179 = vmatpush.msra.mxu0 0.0
    %180 = vmatpush.msra.mxu0 0.0
    %181 = vmatpush.msra.mxu0 0.0
    %182 = vmatpush.msra.mxu0 0.0
    %183 = vmatpush.msra.mxu0 0.0
    %184 = vmatpush.msra.mxu0 0.0
    %185 = vmatpush.msra.mxu0 0.0
    %186 = vmatpush.msra.mxu0 0.0
    %187 = vmatpush.msra.mxu0 0.0
    %188 = vmatpush.msra.mxu0 0.0
    %189 = vmatpush.msra.mxu0 %v61
    %190 = vmatpush.msra.mxu0 %v59
    %191 = vmatpush.msra.mxu0 %v57
    %192 = vmatpush.msra.mxu0 %v55
    %193 = vmatmul.f32.gmra.mxu0 %v65
    %v194 = vpop.f32.mrf.mxu0
    %v195 = vadd.f32 0.0, %v194
    %196 = vmatmul.f32.gmra.mxu0 %v68
    %v197 = vpop.f32.mrf.mxu0
    %v198 = vadd.f32 0.0, %v197
    %199 = vmatmul.f32.gmra.mxu0 %v71
    %v200 = vpop.f32.mrf.mxu0
    %v201 = vadd.f32 0.0, %v200
    %202 = vmatmul.f32.gmra.mxu0 %v74
    %v203 = vpop.f32.mrf.mxu0
    %v204 = vadd.f32 0.0, %v203
    %205 = vmatmul.f32.gmra.mxu0 %v77
    %v206 = vpop.f32.mrf.mxu0
    %v207 = vadd.f32 0.0, %v206
    %208 = vmatmul.f32.gmra.mxu0 %v80
    %v209 = vpop.f32.mrf.mxu0
    %v210 = vadd.f32 0.0, %v209
    %211 = vmatmul.f32.gmra.mxu0 %v83
    %v212 = vpop.f32.mrf.mxu0
    %v213 = vadd.f32 0.0, %v212
    %214 = vmatmul.f32.gmra.mxu0 %v86
    %v215 = vpop.f32.mrf.mxu0
    %v216 = vadd.f32 0.0, %v215
    %217 = vmatmul.f32.gmra.mxu0 %v89
    %v218 = vpop.f32.mrf.mxu0
    %v219 = vadd.f32 0.0, %v218
    %220 = vmatmul.f32.gmra.mxu0 %v92
    %v221 = vpop.f32.mrf.mxu0
    %v222 = vadd.f32 0.0, %v221
    %223 = vmatmul.f32.gmra.mxu0 %v95
    %v224 = vpop.f32.mrf.mxu0
    %v225 = vadd.f32 0.0, %v224
    %226 = vmatmul.f32.gmra.mxu0 %v98
    %v227 = vpop.f32.mrf.mxu0
    %v228 = vadd.f32 0.0, %v227
    %229 = vmatmul.f32.gmra.mxu0 %v101
    %v230 = vpop.f32.mrf.mxu0
    %v231 = vadd.f32 0.0, %v230
    %232 = vmatmul.f32.gmra.mxu0 %v104
    %v233 = vpop.f32.mrf.mxu0
    %v234 = vadd.f32 0.0, %v233
    %235 = vmatmul.f32.gmra.mxu0 %v107
    %v236 = vpop.f32.mrf.mxu0
    %v237 = vadd.f32 0.0, %v236
    %238 = vmatmul.f32.gmra.mxu0 %v110
    %v239 = vpop.f32.mrf.mxu0
    %v240 = vadd.f32 0.0, %v239
    %241 = vdwg.mxu0
    %v243 = vperm.slane %v62, 0
    %v244 = vperm.slane %v62, 1
    %v247 = vsub.f32 %v130, %v243
    %v248 = vsub.f32 %v195, %v244
    %v249 = vsub.f32 %v133, %v243
    %v250 = vsub.f32 %v198, %v244
    %v251 = vsub.f32 %v136, %v243
    %v252 = vsub.f32 %v201, %v244
    %v253 = vsub.f32 %v139, %v243
    %v254 = vsub.f32 %v204, %v244
    %v255 = vsub.f32 %v142, %v243
    %v256 = vsub.f32 %v207, %v244
    %v257 = vsub.f32 %v145, %v243
    %v258 = vsub.f32 %v210, %v244
    %v259 = vsub.f32 %v148, %v243
    %v260 = vsub.f32 %v213, %v244
    %v261 = vsub.f32 %v151, %v243
    %v262 = vsub.f32 %v216, %v244
    %v263 = vsub.f32 %v154, %v243
    %v264 = vsub.f32 %v219, %v244
    %v265 = vsub.f32 %v157, %v243
    %v266 = vsub.f32 %v222, %v244
    %v267 = vsub.f32 %v160, %v243
    %v268 = vsub.f32 %v225, %v244
    %v269 = vsub.f32 %v163, %v243
    %v270 = vsub.f32 %v228, %v244
    %v271 = vsub.f32 %v166, %v243
    %v272 = vsub.f32 %v231, %v244
    %v273 = vsub.f32 %v169, %v243
    %v274 = vsub.f32 %v234, %v244
    %v275 = vsub.f32 %v172, %v243
    %v276 = vsub.f32 %v237, %v244
    %v277 = vsub.f32 %v175, %v243
    %v278 = vsub.f32 %v240, %v244
    %vm279 = vcmp.ge.f32.partialorder %v247, %v248
    %v280 = vsel %vm279, %v247, %v248
    %v281 = vsel %vm279, %v36, %v37
    %282 = vmax.index.xlane.f32.xlu0 %v280
    %v283 = vpop.xlane.xlu0 %282
    %284 = vset.pattern.permute.xlu0 %v283
    %285 = vperm.xlu0 %284, %v281
    %v286 = vpop.permute.xlu0 %285
    %vm287 = vcmp.ge.f32.partialorder %v249, %v250
    %v288 = vsel %vm287, %v249, %v250
    %v289 = vsel %vm287, %v36, %v37
    %290 = vmax.index.xlane.f32.xlu0 %v288
    %v291 = vpop.xlane.xlu0 %290
    %292 = vset.pattern.permute.xlu0 %v291
    %293 = vperm.xlu0 %292, %v289
    %v294 = vpop.permute.xlu0 %293
    %vm295 = vcmp.ge.f32.partialorder %v251, %v252
    %v296 = vsel %vm295, %v251, %v252
    %v297 = vsel %vm295, %v36, %v37
    %298 = vmax.index.xlane.f32.xlu0 %v296
    %v299 = vpop.xlane.xlu0 %298
    %300 = vset.pattern.permute.xlu0 %v299
    %301 = vperm.xlu0 %300, %v297
    %v302 = vpop.permute.xlu0 %301
    %vm303 = vcmp.ge.f32.partialorder %v253, %v254
    %v304 = vsel %vm303, %v253, %v254
    %v305 = vsel %vm303, %v36, %v37
    %306 = vmax.index.xlane.f32.xlu0 %v304
    %v307 = vpop.xlane.xlu0 %306
    %308 = vset.pattern.permute.xlu0 %v307
    %309 = vperm.xlu0 %308, %v305
    %v310 = vpop.permute.xlu0 %309
    %vm311 = vcmp.ge.f32.partialorder %v255, %v256
    %v312 = vsel %vm311, %v255, %v256
    %v313 = vsel %vm311, %v36, %v37
    %314 = vmax.index.xlane.f32.xlu0 %v312
    %v315 = vpop.xlane.xlu0 %314
    %316 = vset.pattern.permute.xlu0 %v315
    %317 = vperm.xlu0 %316, %v313
    %v318 = vpop.permute.xlu0 %317
    %vm319 = vcmp.ge.f32.partialorder %v257, %v258
    %v320 = vsel %vm319, %v257, %v258
    %v321 = vsel %vm319, %v36, %v37
    %322 = vmax.index.xlane.f32.xlu0 %v320
    %v323 = vpop.xlane.xlu0 %322
    %324 = vset.pattern.permute.xlu0 %v323
    %325 = vperm.xlu0 %324, %v321
    %v326 = vpop.permute.xlu0 %325
    %vm327 = vcmp.ge.f32.partialorder %v259, %v260
    %v328 = vsel %vm327, %v259, %v260
    %v329 = vsel %vm327, %v36, %v37
    %330 = vmax.index.xlane.f32.xlu0 %v328
    %v331 = vpop.xlane.xlu0 %330
    %332 = vset.pattern.permute.xlu0 %v331
    %333 = vperm.xlu0 %332, %v329
    %v334 = vpop.permute.xlu0 %333
    %vm335 = vcmp.ge.f32.partialorder %v261, %v262
    %v336 = vsel %vm335, %v261, %v262
    %v337 = vsel %vm335, %v36, %v37
    %338 = vmax.index.xlane.f32.xlu0 %v336
    %v339 = vpop.xlane.xlu0 %338
    %340 = vset.pattern.permute.xlu0 %v339
    %341 = vperm.xlu0 %340, %v337
    %v342 = vpop.permute.xlu0 %341
    %vm343 = vcmp.ge.f32.partialorder %v263, %v264
    %v344 = vsel %vm343, %v263, %v264
    %v345 = vsel %vm343, %v36, %v37
    %346 = vmax.index.xlane.f32.xlu0 %v344
    %v347 = vpop.xlane.xlu0 %346
    %348 = vset.pattern.permute.xlu0 %v347
    %349 = vperm.xlu0 %348, %v345
    %v350 = vpop.permute.xlu0 %349
    %vm351 = vcmp.ge.f32.partialorder %v265, %v266
    %v352 = vsel %vm351, %v265, %v266
    %v353 = vsel %vm351, %v36, %v37
    %354 = vmax.index.xlane.f32.xlu0 %v352
    %v355 = vpop.xlane.xlu0 %354
    %356 = vset.pattern.permute.xlu0 %v355
    %357 = vperm.xlu0 %356, %v353
    %v358 = vpop.permute.xlu0 %357
    %vm359 = vcmp.ge.f32.partialorder %v267, %v268
    %v360 = vsel %vm359, %v267, %v268
    %v361 = vsel %vm359, %v36, %v37
    %362 = vmax.index.xlane.f32.xlu0 %v360
    %v363 = vpop.xlane.xlu0 %362
    %364 = vset.pattern.permute.xlu0 %v363
    %365 = vperm.xlu0 %364, %v361
    %v366 = vpop.permute.xlu0 %365
    %vm367 = vcmp.ge.f32.partialorder %v269, %v270
    %v368 = vsel %vm367, %v269, %v270
    %v369 = vsel %vm367, %v36, %v37
    %370 = vmax.index.xlane.f32.xlu0 %v368
    %v371 = vpop.xlane.xlu0 %370
    %372 = vset.pattern.permute.xlu0 %v371
    %373 = vperm.xlu0 %372, %v369
    %v374 = vpop.permute.xlu0 %373
    %vm375 = vcmp.ge.f32.partialorder %v271, %v272
    %v376 = vsel %vm375, %v271, %v272
    %v377 = vsel %vm375, %v36, %v37
    %378 = vmax.index.xlane.f32.xlu0 %v376
    %v379 = vpop.xlane.xlu0 %378
    %380 = vset.pattern.permute.xlu0 %v379
    %381 = vperm.xlu0 %380, %v377
    %v382 = vpop.permute.xlu0 %381
    %vm383 = vcmp.ge.f32.partialorder %v273, %v274
    %v384 = vsel %vm383, %v273, %v274
    %v385 = vsel %vm383, %v36, %v37
    %386 = vmax.index.xlane.f32.xlu0 %v384
    %v387 = vpop.xlane.xlu0 %386
    %388 = vset.pattern.permute.xlu0 %v387
    %389 = vperm.xlu0 %388, %v385
    %v390 = vpop.permute.xlu0 %389
    %vm391 = vcmp.ge.f32.partialorder %v275, %v276
    %v392 = vsel %vm391, %v275, %v276
    %v393 = vsel %vm391, %v36, %v37
    %394 = vmax.index.xlane.f32.xlu0 %v392
    %v395 = vpop.xlane.xlu0 %394
    %396 = vset.pattern.permute.xlu0 %v395
    %397 = vperm.xlu0 %396, %v393
    %v398 = vpop.permute.xlu0 %397
    %vm399 = vcmp.ge.f32.partialorder %v277, %v278
    %v400 = vsel %vm399, %v277, %v278
    %v401 = vsel %vm399, %v36, %v37
    %402 = vmax.index.xlane.f32.xlu0 %v400
    %v403 = vpop.xlane.xlu0 %402
    %404 = vset.pattern.permute.xlu0 %v403
    %405 = vperm.xlu0 %404, %v401
    %v406 = vpop.permute.xlu0 %405
    %vm407 = vcmp.eq.s32.totalorder %v36, %v286
    %vm408 = vcmp.eq.s32.totalorder %v37, %v286
    %vm409 = vcmp.eq.s32.totalorder %v36, %v294
    %vm410 = vcmp.eq.s32.totalorder %v37, %v294
    %vm411 = vcmp.eq.s32.totalorder %v36, %v302
    %vm412 = vcmp.eq.s32.totalorder %v37, %v302
    %vm413 = vcmp.eq.s32.totalorder %v36, %v310
    %vm414 = vcmp.eq.s32.totalorder %v37, %v310
    %vm415 = vcmp.eq.s32.totalorder %v36, %v318
    %vm416 = vcmp.eq.s32.totalorder %v37, %v318
    %vm417 = vcmp.eq.s32.totalorder %v36, %v326
    %vm418 = vcmp.eq.s32.totalorder %v37, %v326
    %vm419 = vcmp.eq.s32.totalorder %v36, %v334
    %vm420 = vcmp.eq.s32.totalorder %v37, %v334
    %vm421 = vcmp.eq.s32.totalorder %v36, %v342
    %vm422 = vcmp.eq.s32.totalorder %v37, %v342
    %vm423 = vcmp.eq.s32.totalorder %v36, %v350
    %vm424 = vcmp.eq.s32.totalorder %v37, %v350
    %vm425 = vcmp.eq.s32.totalorder %v36, %v358
    %vm426 = vcmp.eq.s32.totalorder %v37, %v358
    %vm427 = vcmp.eq.s32.totalorder %v36, %v366
    %vm428 = vcmp.eq.s32.totalorder %v37, %v366
    %vm429 = vcmp.eq.s32.totalorder %v36, %v374
    %vm430 = vcmp.eq.s32.totalorder %v37, %v374
    %vm431 = vcmp.eq.s32.totalorder %v36, %v382
    %vm432 = vcmp.eq.s32.totalorder %v37, %v382
    %vm433 = vcmp.eq.s32.totalorder %v36, %v390
    %vm434 = vcmp.eq.s32.totalorder %v37, %v390
    %vm435 = vcmp.eq.s32.totalorder %v36, %v398
    %vm436 = vcmp.eq.s32.totalorder %v37, %v398
    %vm437 = vcmp.eq.s32.totalorder %v36, %v406
    %vm438 = vcmp.eq.s32.totalorder %v37, %v406
    %v439 = vsel %vm407, 1, 0
    %v440 = vsel %vm408, 1, 0
    %v441 = vsel %vm409, 1, 0
    %v442 = vsel %vm410, 1, 0
    %v443 = vsel %vm411, 1, 0
    %v444 = vsel %vm412, 1, 0
    %v445 = vsel %vm413, 1, 0
    %v446 = vsel %vm414, 1, 0
    %v447 = vsel %vm415, 1, 0
    %v448 = vsel %vm416, 1, 0
    %v449 = vsel %vm417, 1, 0
    %v450 = vsel %vm418, 1, 0
    %v451 = vsel %vm419, 1, 0
    %v452 = vsel %vm420, 1, 0
    %v453 = vsel %vm421, 1, 0
    %v454 = vsel %vm422, 1, 0
    %v455 = vsel %vm423, 1, 0
    %v456 = vsel %vm424, 1, 0
    %v457 = vsel %vm425, 1, 0
    %v458 = vsel %vm426, 1, 0
    %v459 = vsel %vm427, 1, 0
    %v460 = vsel %vm428, 1, 0
    %v461 = vsel %vm429, 1, 0
    %v462 = vsel %vm430, 1, 0
    %v463 = vsel %vm431, 1, 0
    %v464 = vsel %vm432, 1, 0
    %v465 = vsel %vm433, 1, 0
    %v466 = vsel %vm434, 1, 0
    %v467 = vsel %vm435, 1, 0
    %v468 = vsel %vm436, 1, 0
    %v469 = vsel %vm437, 1, 0
    %v470 = vsel %vm438, 1, 0
    %v471 = vcvt.s32.f32 %v439
    %v472 = vcvt.s32.f32 %v440
    %v473 = vcvt.s32.f32 %v441
    %v474 = vcvt.s32.f32 %v442
    %v475 = vcvt.s32.f32 %v443
    %v476 = vcvt.s32.f32 %v444
    %v477 = vcvt.s32.f32 %v445
    %v478 = vcvt.s32.f32 %v446
    %v479 = vcvt.s32.f32 %v447
    %v480 = vcvt.s32.f32 %v448
    %v481 = vcvt.s32.f32 %v449
    %v482 = vcvt.s32.f32 %v450
    %v483 = vcvt.s32.f32 %v451
    %v484 = vcvt.s32.f32 %v452
    %v485 = vcvt.s32.f32 %v453
    %v486 = vcvt.s32.f32 %v454
    %v487 = vcvt.s32.f32 %v455
    %v488 = vcvt.s32.f32 %v456
    %v489 = vcvt.s32.f32 %v457
    %v490 = vcvt.s32.f32 %v458
    %v491 = vcvt.s32.f32 %v459
    %v492 = vcvt.s32.f32 %v460
    %v493 = vcvt.s32.f32 %v461
    %v494 = vcvt.s32.f32 %v462
    %v495 = vcvt.s32.f32 %v463
    %v496 = vcvt.s32.f32 %v464
    %v497 = vcvt.s32.f32 %v465
    %v498 = vcvt.s32.f32 %v466
    %v499 = vcvt.s32.f32 %v467
    %v500 = vcvt.s32.f32 %v468
    %v501 = vcvt.s32.f32 %v469
    %v502 = vcvt.s32.f32 %v470
    %503 = vmatpush.xpose.msra.mxu0 0.0
    %504 = vmatpush.xpose.msra.mxu0 0.0
    %505 = vmatpush.xpose.msra.mxu0 0.0
    %506 = vmatpush.xpose.msra.mxu0 0.0
    %507 = vmatpush.xpose.msra.mxu0 0.0
    %508 = vmatpush.xpose.msra.mxu0 0.0
    %509 = vmatpush.xpose.msra.mxu0 0.0
    %510 = vmatpush.xpose.msra.mxu0 0.0
    %511 = vmatpush.xpose.msra.mxu0 0.0
    %512 = vmatpush.xpose.msra.mxu0 0.0
    %513 = vmatpush.xpose.msra.mxu0 0.0
    %514 = vmatpush.xpose.msra.mxu0 0.0
    %515 = vmatpush.xpose.msra.mxu0 %v60
    %516 = vmatpush.xpose.msra.mxu0 %v58
    %517 = vmatpush.xpose.msra.mxu0 %v56
    %518 = vmatpush.xpose.msra.mxu0 %v54
    %519 = vmatmul.f32.gmra.mxu0 %v471
    %v520 = vpop.f32.mrf.mxu0
    %v521 = vadd.f32 0.0, %v520
    %522 = vmatmul.f32.gmra.mxu0 %v473
    %v523 = vpop.f32.mrf.mxu0
    %v524 = vadd.f32 0.0, %v523
    %525 = vmatmul.f32.gmra.mxu0 %v475
    %v526 = vpop.f32.mrf.mxu0
    %v527 = vadd.f32 0.0, %v526
    %528 = vmatmul.f32.gmra.mxu0 %v477
    %v529 = vpop.f32.mrf.mxu0
    %v530 = vadd.f32 0.0, %v529
    %531 = vmatmul.f32.gmra.mxu0 %v479
    %v532 = vpop.f32.mrf.mxu0
    %v533 = vadd.f32 0.0, %v532
    %534 = vmatmul.f32.gmra.mxu0 %v481
    %v535 = vpop.f32.mrf.mxu0
    %v536 = vadd.f32 0.0, %v535
    %537 = vmatmul.f32.gmra.mxu0 %v483
    %v538 = vpop.f32.mrf.mxu0
    %v539 = vadd.f32 0.0, %v538
    %540 = vmatmul.f32.gmra.mxu0 %v485
    %v541 = vpop.f32.mrf.mxu0
    %v542 = vadd.f32 0.0, %v541
    %543 = vmatmul.f32.gmra.mxu0 %v487
    %v544 = vpop.f32.mrf.mxu0
    %v545 = vadd.f32 0.0, %v544
    %546 = vmatmul.f32.gmra.mxu0 %v489
    %v547 = vpop.f32.mrf.mxu0
    %v548 = vadd.f32 0.0, %v547
    %549 = vmatmul.f32.gmra.mxu0 %v491
    %v550 = vpop.f32.mrf.mxu0
    %v551 = vadd.f32 0.0, %v550
    %552 = vmatmul.f32.gmra.mxu0 %v493
    %v553 = vpop.f32.mrf.mxu0
    %v554 = vadd.f32 0.0, %v553
    %555 = vmatmul.f32.gmra.mxu0 %v495
    %v556 = vpop.f32.mrf.mxu0
    %v557 = vadd.f32 0.0, %v556
    %558 = vmatmul.f32.gmra.mxu0 %v497
    %v559 = vpop.f32.mrf.mxu0
    %v560 = vadd.f32 0.0, %v559
    %561 = vmatmul.f32.gmra.mxu0 %v499
    %v562 = vpop.f32.mrf.mxu0
    %v563 = vadd.f32 0.0, %v562
    %564 = vmatmul.f32.gmra.mxu0 %v501
    %v565 = vpop.f32.mrf.mxu0
    %v566 = vadd.f32 0.0, %v565
    %567 = vdwg.mxu0
    %568 = vmatpush.xpose.msra.mxu0 0.0
    %569 = vmatpush.xpose.msra.mxu0 0.0
    %570 = vmatpush.xpose.msra.mxu0 0.0
    %571 = vmatpush.xpose.msra.mxu0 0.0
    %572 = vmatpush.xpose.msra.mxu0 0.0
    %573 = vmatpush.xpose.msra.mxu0 0.0
    %574 = vmatpush.xpose.msra.mxu0 0.0
    %575 = vmatpush.xpose.msra.mxu0 0.0
    %576 = vmatpush.xpose.msra.mxu0 0.0
    %577 = vmatpush.xpose.msra.mxu0 0.0
    %578 = vmatpush.xpose.msra.mxu0 0.0
    %579 = vmatpush.xpose.msra.mxu0 0.0
    %580 = vmatpush.xpose.msra.mxu0 %v61
    %581 = vmatpush.xpose.msra.mxu0 %v59
    %582 = vmatpush.xpose.msra.mxu0 %v57
    %583 = vmatpush.xpose.msra.mxu0 %v55
    %584 = vmatmul.f32.gmra.mxu0 %v472
    %v585 = vpop.f32.mrf.mxu0
    %v586 = vadd.f32 %v521, %v585
    %587 = vmatmul.f32.gmra.mxu0 %v474
    %v588 = vpop.f32.mrf.mxu0
    %v589 = vadd.f32 %v524, %v588
    %590 = vmatmul.f32.gmra.mxu0 %v476
    %v591 = vpop.f32.mrf.mxu0
    %v592 = vadd.f32 %v527, %v591
    %593 = vmatmul.f32.gmra.mxu0 %v478
    %v594 = vpop.f32.mrf.mxu0
    %v595 = vadd.f32 %v530, %v594
    %596 = vmatmul.f32.gmra.mxu0 %v480
    %v597 = vpop.f32.mrf.mxu0
    %v598 = vadd.f32 %v533, %v597
    %599 = vmatmul.f32.gmra.mxu0 %v482
    %v600 = vpop.f32.mrf.mxu0
    %v601 = vadd.f32 %v536, %v600
    %602 = vmatmul.f32.gmra.mxu0 %v484
    %v603 = vpop.f32.mrf.mxu0
    %v604 = vadd.f32 %v539, %v603
    %605 = vmatmul.f32.gmra.mxu0 %v486
    %v606 = vpop.f32.mrf.mxu0
    %v607 = vadd.f32 %v542, %v606
    %608 = vmatmul.f32.gmra.mxu0 %v488
    %v609 = vpop.f32.mrf.mxu0
    %v610 = vadd.f32 %v545, %v609
    %611 = vmatmul.f32.gmra.mxu0 %v490
    %v612 = vpop.f32.mrf.mxu0
    %v613 = vadd.f32 %v548, %v612
    %614 = vmatmul.f32.gmra.mxu0 %v492
    %v615 = vpop.f32.mrf.mxu0
    %v616 = vadd.f32 %v551, %v615
    %617 = vmatmul.f32.gmra.mxu0 %v494
    %v618 = vpop.f32.mrf.mxu0
    %v619 = vadd.f32 %v554, %v618
    %620 = vmatmul.f32.gmra.mxu0 %v496
    %v621 = vpop.f32.mrf.mxu0
    %v622 = vadd.f32 %v557, %v621
    %623 = vmatmul.f32.gmra.mxu0 %v498
    %v624 = vpop.f32.mrf.mxu0
    %v625 = vadd.f32 %v560, %v624
    %626 = vmatmul.f32.gmra.mxu0 %v500
    %v627 = vpop.f32.mrf.mxu0
    %v628 = vadd.f32 %v563, %v627
    %629 = vmatmul.f32.gmra.mxu0 %v502
    %v630 = vpop.f32.mrf.mxu0
    %v631 = vadd.f32 %v566, %v630
    %632 = vdwg.mxu0
    %v633 = vsub.f32 %v38, %v586
    %v634 = vsub.f32 %v39, %v589
    %v635 = vsub.f32 %v40, %v592
    %v636 = vsub.f32 %v41, %v595
    %v637 = vsub.f32 %v42, %v598
    %v638 = vsub.f32 %v43, %v601
    %v639 = vsub.f32 %v44, %v604
    %v640 = vsub.f32 %v45, %v607
    %v641 = vsub.f32 %v46, %v610
    %v642 = vsub.f32 %v47, %v613
    %v643 = vsub.f32 %v48, %v616
    %v644 = vsub.f32 %v49, %v619
    %v645 = vsub.f32 %v50, %v622
    %v646 = vsub.f32 %v51, %v625
    %v647 = vsub.f32 %v52, %v628
    %v648 = vsub.f32 %v53, %v631
    %v649 = vmul.f32 %v633, %v633
    %v650 = vmul.f32 %v634, %v634
    %v651 = vmul.f32 %v635, %v635
    %v652 = vmul.f32 %v636, %v636
    %v653 = vmul.f32 %v637, %v637
    %v654 = vmul.f32 %v638, %v638
    %v655 = vmul.f32 %v639, %v639
    %v656 = vmul.f32 %v640, %v640
    %v657 = vmul.f32 %v641, %v641
    %v658 = vmul.f32 %v642, %v642
    %v659 = vmul.f32 %v643, %v643
    %v660 = vmul.f32 %v644, %v644
    %v661 = vmul.f32 %v645, %v645
    %v662 = vmul.f32 %v646, %v646
    %v663 = vmul.f32 %v647, %v647
    %v664 = vmul.f32 %v648, %v648
    %v665 = vsel %vm63, %v649, 0.0
    %666 = vadd.xlane.f32.xlu0 %v665
    %v667 = vpop.xlane.xlu0 %666
    %v668 = vsel %vm63, %v650, 0.0
    %669 = vadd.xlane.f32.xlu0 %v668
    %v670 = vpop.xlane.xlu0 %669
    %v671 = vsel %vm63, %v651, 0.0
    %672 = vadd.xlane.f32.xlu0 %v671
    %v673 = vpop.xlane.xlu0 %672
    %v674 = vsel %vm63, %v652, 0.0
    %675 = vadd.xlane.f32.xlu0 %v674
    %v676 = vpop.xlane.xlu0 %675
    %v677 = vsel %vm63, %v653, 0.0
    %678 = vadd.xlane.f32.xlu0 %v677
    %v679 = vpop.xlane.xlu0 %678
    %v680 = vsel %vm63, %v654, 0.0
    %681 = vadd.xlane.f32.xlu0 %v680
    %v682 = vpop.xlane.xlu0 %681
    %v683 = vsel %vm63, %v655, 0.0
    %684 = vadd.xlane.f32.xlu0 %v683
    %v685 = vpop.xlane.xlu0 %684
    %v686 = vsel %vm63, %v656, 0.0
    %687 = vadd.xlane.f32.xlu0 %v686
    %v688 = vpop.xlane.xlu0 %687
    %v689 = vsel %vm63, %v657, 0.0
    %690 = vadd.xlane.f32.xlu0 %v689
    %v691 = vpop.xlane.xlu0 %690
    %v692 = vsel %vm63, %v658, 0.0
    %693 = vadd.xlane.f32.xlu0 %v692
    %v694 = vpop.xlane.xlu0 %693
    %v695 = vsel %vm63, %v659, 0.0
    %696 = vadd.xlane.f32.xlu0 %v695
    %v697 = vpop.xlane.xlu0 %696
    %v698 = vsel %vm63, %v660, 0.0
    %699 = vadd.xlane.f32.xlu0 %v698
    %v700 = vpop.xlane.xlu0 %699
    %v701 = vsel %vm63, %v661, 0.0
    %702 = vadd.xlane.f32.xlu0 %v701
    %v703 = vpop.xlane.xlu0 %702
    %v704 = vsel %vm63, %v662, 0.0
    %705 = vadd.xlane.f32.xlu0 %v704
    %v706 = vpop.xlane.xlu0 %705
    %v707 = vsel %vm63, %v663, 0.0
    %708 = vadd.xlane.f32.xlu0 %v707
    %v709 = vpop.xlane.xlu0 %708
    %v710 = vsel %vm63, %v664, 0.0
    %711 = vadd.xlane.f32.xlu0 %v710
    %v712 = vpop.xlane.xlu0 %711
    %v713 = vperm.slane %v286, %v36
    %v714 = vadd.s32 %v36, 4294967288
    %v715 = vperm.slane %v294, %v714
    %vm716 = vcmask 130112
    %v717 = vsel %vm716, %v715, %v713
    %v718 = vadd.s32 %v36, 4294967280
    %v719 = vperm.slane %v302, %v718
    %vm720 = vcmask 195712
    %v721 = vsel %vm720, %v719, %v717
    %v722 = vadd.s32 %v36, 4294967272
    %v723 = vperm.slane %v310, %v722
    %vm724 = vcmask 261312
    %v725 = vsel %vm724, %v723, %v721
    %v726 = vadd.s32 %v36, 4294967264
    %v727 = vperm.slane %v318, %v726
    %vm728 = vcmask 326912
    %v729 = vsel %vm728, %v727, %v725
    %v730 = vadd.s32 %v36, 4294967256
    %v731 = vperm.slane %v326, %v730
    %vm732 = vcmask 392512
    %v733 = vsel %vm732, %v731, %v729
    %v734 = vadd.s32 %v36, 4294967248
    %v735 = vperm.slane %v334, %v734
    %vm736 = vcmask 458112
    %v737 = vsel %vm736, %v735, %v733
    %v738 = vadd.s32 %v36, 4294967240
    %v739 = vperm.slane %v342, %v738
    %vm740 = vcmask 523712
    %v741 = vsel %vm740, %v739, %v737
    %v742 = vadd.s32 %v36, 4294967232
    %v743 = vperm.slane %v350, %v742
    %vm744 = vcmask 589312
    %v745 = vsel %vm744, %v743, %v741
    %v746 = vadd.s32 %v36, 4294967224
    %v747 = vperm.slane %v358, %v746
    %vm748 = vcmask 654912
    %v749 = vsel %vm748, %v747, %v745
    %v750 = vadd.s32 %v36, 4294967216
    %v751 = vperm.slane %v366, %v750
    %vm752 = vcmask 720512
    %v753 = vsel %vm752, %v751, %v749
    %v754 = vadd.s32 %v36, 4294967208
    %v755 = vperm.slane %v374, %v754
    %vm756 = vcmask 786112
    %v757 = vsel %vm756, %v755, %v753
    %v758 = vadd.s32 %v36, 4294967200
    %v759 = vperm.slane %v382, %v758
    %vm760 = vcmask 851712
    %v761 = vsel %vm760, %v759, %v757
    %v762 = vadd.s32 %v36, 4294967192
    %v763 = vperm.slane %v390, %v762
    %vm764 = vcmask 917312
    %v765 = vsel %vm764, %v763, %v761
    %v766 = vadd.s32 %v36, 4294967184
    %v767 = vperm.slane %v398, %v766
    %vm768 = vcmask 982912
    %v769 = vsel %vm768, %v767, %v765
    %v770 = vadd.s32 %v36, 4294967176
    %v771 = vperm.slane %v406, %v770
    %vm772 = vcmask 1048512
    %v773 = vsel %vm772, %v771, %v769
    %774 = vst [vmem:[#allocation5] sm:$0x1] %v773
    %v791 = vperm.slane %v667, %v36
    %v792 = vperm.slane %v670, %v714
    %v793 = vsel %vm716, %v792, %v791
    %v794 = vperm.slane %v673, %v718
    %v795 = vsel %vm720, %v794, %v793
    %v796 = vperm.slane %v676, %v722
    %v797 = vsel %vm724, %v796, %v795
    %v798 = vperm.slane %v679, %v726
    %v799 = vsel %vm728, %v798, %v797
    %v800 = vperm.slane %v682, %v730
    %v801 = vsel %vm732, %v800, %v799
    %v802 = vperm.slane %v685, %v734
    %v803 = vsel %vm736, %v802, %v801
    %v804 = vperm.slane %v688, %v738
    %v805 = vsel %vm740, %v804, %v803
    %v806 = vperm.slane %v691, %v742
    %v807 = vsel %vm744, %v806, %v805
    %v808 = vperm.slane %v694, %v746
    %v809 = vsel %vm748, %v808, %v807
    %v810 = vperm.slane %v697, %v750
    %v811 = vsel %vm752, %v810, %v809
    %v812 = vperm.slane %v700, %v754
    %v813 = vsel %vm756, %v812, %v811
    %v814 = vperm.slane %v703, %v758
    %v815 = vsel %vm760, %v814, %v813
    %v816 = vperm.slane %v706, %v762
    %v817 = vsel %vm764, %v816, %v815
    %v818 = vperm.slane %v709, %v766
    %v819 = vsel %vm768, %v818, %v817
    %v820 = vperm.slane %v712, %v770
    %v821 = vsel %vm772, %v820, %v819
    %823 = vst [vmem:[#allocation6] sm:$0x1] %v821
    %s824 = scalar_lea.vmem [#allocation2], 64
    %v825 = vld [vmem:[%s824] sm:$0xff]
    %v826 = vld [vmem:[%s824 + $0x8] sm:$0xff]
    %v827 = vld [vmem:[%s824 + $0x10] sm:$0xff]
    %v828 = vld [vmem:[%s824 + $0x18] sm:$0xff]
    %v829 = vld [vmem:[%s824 + $0x20] sm:$0xff]
    %v830 = vld [vmem:[%s824 + $0x28] sm:$0xff]
    %v831 = vld [vmem:[%s824 + $0x30] sm:$0xff]
    %v832 = vld [vmem:[%s824 + $0x38] sm:$0xff]
    %s833 = scalar_lea.vmem %s2, 2
    %v834 = vld [vmem:[%s833] sm:$0x3]
    %v836 = vsel %vm63, %v633, 0
    %v839 = vsel %vm63, %v634, 0
    %v842 = vsel %vm63, %v635, 0
    %v845 = vsel %vm63, %v636, 0
    %v848 = vsel %vm63, %v637, 0
    %v851 = vsel %vm63, %v638, 0
    %v854 = vsel %vm63, %v639, 0
    %v857 = vsel %vm63, %v640, 0
    %v860 = vsel %vm63, %v641, 0
    %v863 = vsel %vm63, %v642, 0
    %v866 = vsel %vm63, %v643, 0
    %v869 = vsel %vm63, %v644, 0
    %v872 = vsel %vm63, %v645, 0
    %v875 = vsel %vm63, %v646, 0
    %v878 = vsel %vm63, %v647, 0
    %v881 = vsel %vm63, %v648, 0
    %883 = vmatpush.msra.mxu0 0.0
    %884 = vmatpush.msra.mxu0 0.0
    %885 = vmatpush.msra.mxu0 0.0
    %886 = vmatpush.msra.mxu0 0.0
    %887 = vmatpush.msra.mxu0 0.0
    %888 = vmatpush.msra.mxu0 0.0
    %889 = vmatpush.msra.mxu0 0.0
    %890 = vmatpush.msra.mxu0 0.0
    %891 = vmatpush.msra.mxu0 0.0
    %892 = vmatpush.msra.mxu0 0.0
    %893 = vmatpush.msra.mxu0 0.0
    %894 = vmatpush.msra.mxu0 0.0
    %895 = vmatpush.msra.mxu0 %v831
    %896 = vmatpush.msra.mxu0 %v829
    %897 = vmatpush.msra.mxu0 %v827
    %898 = vmatpush.msra.mxu0 %v825
    %899 = vmatmul.f32.gmra.mxu0 %v836
    %v900 = vpop.f32.mrf.mxu0
    %v901 = vadd.f32 0.0, %v900
    %902 = vmatmul.f32.gmra.mxu0 %v839
    %v903 = vpop.f32.mrf.mxu0
    %v904 = vadd.f32 0.0, %v903
    %905 = vmatmul.f32.gmra.mxu0 %v842
    %v906 = vpop.f32.mrf.mxu0
    %v907 = vadd.f32 0.0, %v906
    %908 = vmatmul.f32.gmra.mxu0 %v845
    %v909 = vpop.f32.mrf.mxu0
    %v910 = vadd.f32 0.0, %v909
    %911 = vmatmul.f32.gmra.mxu0 %v848
    %v912 = vpop.f32.mrf.mxu0
    %v913 = vadd.f32 0.0, %v912
    %914 = vmatmul.f32.gmra.mxu0 %v851
    %v915 = vpop.f32.mrf.mxu0
    %v916 = vadd.f32 0.0, %v915
    %917 = vmatmul.f32.gmra.mxu0 %v854
    %v918 = vpop.f32.mrf.mxu0
    %v919 = vadd.f32 0.0, %v918
    %920 = vmatmul.f32.gmra.mxu0 %v857
    %v921 = vpop.f32.mrf.mxu0
    %v922 = vadd.f32 0.0, %v921
    %923 = vmatmul.f32.gmra.mxu0 %v860
    %v924 = vpop.f32.mrf.mxu0
    %v925 = vadd.f32 0.0, %v924
    %926 = vmatmul.f32.gmra.mxu0 %v863
    %v927 = vpop.f32.mrf.mxu0
    %v928 = vadd.f32 0.0, %v927
    %929 = vmatmul.f32.gmra.mxu0 %v866
    %v930 = vpop.f32.mrf.mxu0
    %v931 = vadd.f32 0.0, %v930
    %932 = vmatmul.f32.gmra.mxu0 %v869
    %v933 = vpop.f32.mrf.mxu0
    %v934 = vadd.f32 0.0, %v933
    %935 = vmatmul.f32.gmra.mxu0 %v872
    %v936 = vpop.f32.mrf.mxu0
    %v937 = vadd.f32 0.0, %v936
    %938 = vmatmul.f32.gmra.mxu0 %v875
    %v939 = vpop.f32.mrf.mxu0
    %v940 = vadd.f32 0.0, %v939
    %941 = vmatmul.f32.gmra.mxu0 %v878
    %v942 = vpop.f32.mrf.mxu0
    %v943 = vadd.f32 0.0, %v942
    %944 = vmatmul.f32.gmra.mxu0 %v881
    %v945 = vpop.f32.mrf.mxu0
    %v946 = vadd.f32 0.0, %v945
    %947 = vdwg.mxu0
    %948 = vmatpush.msra.mxu0 0.0
    %949 = vmatpush.msra.mxu0 0.0
    %950 = vmatpush.msra.mxu0 0.0
    %951 = vmatpush.msra.mxu0 0.0
    %952 = vmatpush.msra.mxu0 0.0
    %953 = vmatpush.msra.mxu0 0.0
    %954 = vmatpush.msra.mxu0 0.0
    %955 = vmatpush.msra.mxu0 0.0
    %956 = vmatpush.msra.mxu0 0.0
    %957 = vmatpush.msra.mxu0 0.0
    %958 = vmatpush.msra.mxu0 0.0
    %959 = vmatpush.msra.mxu0 0.0
    %960 = vmatpush.msra.mxu0 %v832
    %961 = vmatpush.msra.mxu0 %v830
    %962 = vmatpush.msra.mxu0 %v828
    %963 = vmatpush.msra.mxu0 %v826
    %964 = vmatmul.f32.gmra.mxu0 %v836
    %v965 = vpop.f32.mrf.mxu0
    %v966 = vadd.f32 0.0, %v965
    %967 = vmatmul.f32.gmra.mxu0 %v839
    %v968 = vpop.f32.mrf.mxu0
    %v969 = vadd.f32 0.0, %v968
    %970 = vmatmul.f32.gmra.mxu0 %v842
    %v971 = vpop.f32.mrf.mxu0
    %v972 = vadd.f32 0.0, %v971
    %973 = vmatmul.f32.gmra.mxu0 %v845
    %v974 = vpop.f32.mrf.mxu0
    %v975 = vadd.f32 0.0, %v974
    %976 = vmatmul.f32.gmra.mxu0 %v848
    %v977 = vpop.f32.mrf.mxu0
    %v978 = vadd.f32 0.0, %v977
    %979 = vmatmul.f32.gmra.mxu0 %v851
    %v980 = vpop.f32.mrf.mxu0
    %v981 = vadd.f32 0.0, %v980
    %982 = vmatmul.f32.gmra.mxu0 %v854
    %v983 = vpop.f32.mrf.mxu0
    %v984 = vadd.f32 0.0, %v983
    %985 = vmatmul.f32.gmra.mxu0 %v857
    %v986 = vpop.f32.mrf.mxu0
    %v987 = vadd.f32 0.0, %v986
    %988 = vmatmul.f32.gmra.mxu0 %v860
    %v989 = vpop.f32.mrf.mxu0
    %v990 = vadd.f32 0.0, %v989
    %991 = vmatmul.f32.gmra.mxu0 %v863
    %v992 = vpop.f32.mrf.mxu0
    %v993 = vadd.f32 0.0, %v992
    %994 = vmatmul.f32.gmra.mxu0 %v866
    %v995 = vpop.f32.mrf.mxu0
    %v996 = vadd.f32 0.0, %v995
    %997 = vmatmul.f32.gmra.mxu0 %v869
    %v998 = vpop.f32.mrf.mxu0
    %v999 = vadd.f32 0.0, %v998
    %1000 = vmatmul.f32.gmra.mxu0 %v872
    %v1001 = vpop.f32.mrf.mxu0
    %v1002 = vadd.f32 0.0, %v1001
    %1003 = vmatmul.f32.gmra.mxu0 %v875
    %v1004 = vpop.f32.mrf.mxu0
    %v1005 = vadd.f32 0.0, %v1004
    %1006 = vmatmul.f32.gmra.mxu0 %v878
    %v1007 = vpop.f32.mrf.mxu0
    %v1008 = vadd.f32 0.0, %v1007
    %1009 = vmatmul.f32.gmra.mxu0 %v881
    %v1010 = vpop.f32.mrf.mxu0
    %v1011 = vadd.f32 0.0, %v1010
    %1012 = vdwg.mxu0
    %v1014 = vperm.slane %v834, 0
    %v1015 = vperm.slane %v834, 1
    %v1018 = vsub.f32 %v901, %v1014
    %v1019 = vsub.f32 %v966, %v1015
    %v1020 = vsub.f32 %v904, %v1014
    %v1021 = vsub.f32 %v969, %v1015
    %v1022 = vsub.f32 %v907, %v1014
    %v1023 = vsub.f32 %v972, %v1015
    %v1024 = vsub.f32 %v910, %v1014
    %v1025 = vsub.f32 %v975, %v1015
    %v1026 = vsub.f32 %v913, %v1014
    %v1027 = vsub.f32 %v978, %v1015
    %v1028 = vsub.f32 %v916, %v1014
    %v1029 = vsub.f32 %v981, %v1015
    %v1030 = vsub.f32 %v919, %v1014
    %v1031 = vsub.f32 %v984, %v1015
    %v1032 = vsub.f32 %v922, %v1014
    %v1033 = vsub.f32 %v987, %v1015
    %v1034 = vsub.f32 %v925, %v1014
    %v1035 = vsub.f32 %v990, %v1015
    %v1036 = vsub.f32 %v928, %v1014
    %v1037 = vsub.f32 %v993, %v1015
    %v1038 = vsub.f32 %v931, %v1014
    %v1039 = vsub.f32 %v996, %v1015
    %v1040 = vsub.f32 %v934, %v1014
    %v1041 = vsub.f32 %v999, %v1015
    %v1042 = vsub.f32 %v937, %v1014
    %v1043 = vsub.f32 %v1002, %v1015
    %v1044 = vsub.f32 %v940, %v1014
    %v1045 = vsub.f32 %v1005, %v1015
    %v1046 = vsub.f32 %v943, %v1014
    %v1047 = vsub.f32 %v1008, %v1015
    %v1048 = vsub.f32 %v946, %v1014
    %v1049 = vsub.f32 %v1011, %v1015
    %vm1050 = vcmp.ge.f32.partialorder %v1018, %v1019
    %v1051 = vsel %vm1050, %v1018, %v1019
    %v1052 = vsel %vm1050, %v36, %v37
    %1053 = vmax.index.xlane.f32.xlu0 %v1051
    %v1054 = vpop.xlane.xlu0 %1053
    %1055 = vset.pattern.permute.xlu0 %v1054
    %1056 = vperm.xlu0 %1055, %v1052
    %v1057 = vpop.permute.xlu0 %1056
    %vm1058 = vcmp.ge.f32.partialorder %v1020, %v1021
    %v1059 = vsel %vm1058, %v1020, %v1021
    %v1060 = vsel %vm1058, %v36, %v37
    %1061 = vmax.index.xlane.f32.xlu0 %v1059
    %v1062 = vpop.xlane.xlu0 %1061
    %1063 = vset.pattern.permute.xlu0 %v1062
    %1064 = vperm.xlu0 %1063, %v1060
    %v1065 = vpop.permute.xlu0 %1064
    %vm1066 = vcmp.ge.f32.partialorder %v1022, %v1023
    %v1067 = vsel %vm1066, %v1022, %v1023
    %v1068 = vsel %vm1066, %v36, %v37
    %1069 = vmax.index.xlane.f32.xlu0 %v1067
    %v1070 = vpop.xlane.xlu0 %1069
    %1071 = vset.pattern.permute.xlu0 %v1070
    %1072 = vperm.xlu0 %1071, %v1068
    %v1073 = vpop.permute.xlu0 %1072
    %vm1074 = vcmp.ge.f32.partialorder %v1024, %v1025
    %v1075 = vsel %vm1074, %v1024, %v1025
    %v1076 = vsel %vm1074, %v36, %v37
    %1077 = vmax.index.xlane.f32.xlu0 %v1075
    %v1078 = vpop.xlane.xlu0 %1077
    %1079 = vset.pattern.permute.xlu0 %v1078
    %1080 = vperm.xlu0 %1079, %v1076
    %v1081 = vpop.permute.xlu0 %1080
    %vm1082 = vcmp.ge.f32.partialorder %v1026, %v1027
    %v1083 = vsel %vm1082, %v1026, %v1027
    %v1084 = vsel %vm1082, %v36, %v37
    %1085 = vmax.index.xlane.f32.xlu0 %v1083
    %v1086 = vpop.xlane.xlu0 %1085
    %1087 = vset.pattern.permute.xlu0 %v1086
    %1088 = vperm.xlu0 %1087, %v1084
    %v1089 = vpop.permute.xlu0 %1088
    %vm1090 = vcmp.ge.f32.partialorder %v1028, %v1029
    %v1091 = vsel %vm1090, %v1028, %v1029
    %v1092 = vsel %vm1090, %v36, %v37
    %1093 = vmax.index.xlane.f32.xlu0 %v1091
    %v1094 = vpop.xlane.xlu0 %1093
    %1095 = vset.pattern.permute.xlu0 %v1094
    %1096 = vperm.xlu0 %1095, %v1092
    %v1097 = vpop.permute.xlu0 %1096
    %vm1098 = vcmp.ge.f32.partialorder %v1030, %v1031
    %v1099 = vsel %vm1098, %v1030, %v1031
    %v1100 = vsel %vm1098, %v36, %v37
    %1101 = vmax.index.xlane.f32.xlu0 %v1099
    %v1102 = vpop.xlane.xlu0 %1101
    %1103 = vset.pattern.permute.xlu0 %v1102
    %1104 = vperm.xlu0 %1103, %v1100
    %v1105 = vpop.permute.xlu0 %1104
    %vm1106 = vcmp.ge.f32.partialorder %v1032, %v1033
    %v1107 = vsel %vm1106, %v1032, %v1033
    %v1108 = vsel %vm1106, %v36, %v37
    %1109 = vmax.index.xlane.f32.xlu0 %v1107
    %v1110 = vpop.xlane.xlu0 %1109
    %1111 = vset.pattern.permute.xlu0 %v1110
    %1112 = vperm.xlu0 %1111, %v1108
    %v1113 = vpop.permute.xlu0 %1112
    %vm1114 = vcmp.ge.f32.partialorder %v1034, %v1035
    %v1115 = vsel %vm1114, %v1034, %v1035
    %v1116 = vsel %vm1114, %v36, %v37
    %1117 = vmax.index.xlane.f32.xlu0 %v1115
    %v1118 = vpop.xlane.xlu0 %1117
    %1119 = vset.pattern.permute.xlu0 %v1118
    %1120 = vperm.xlu0 %1119, %v1116
    %v1121 = vpop.permute.xlu0 %1120
    %vm1122 = vcmp.ge.f32.partialorder %v1036, %v1037
    %v1123 = vsel %vm1122, %v1036, %v1037
    %v1124 = vsel %vm1122, %v36, %v37
    %1125 = vmax.index.xlane.f32.xlu0 %v1123
    %v1126 = vpop.xlane.xlu0 %1125
    %1127 = vset.pattern.permute.xlu0 %v1126
    %1128 = vperm.xlu0 %1127, %v1124
    %v1129 = vpop.permute.xlu0 %1128
    %vm1130 = vcmp.ge.f32.partialorder %v1038, %v1039
    %v1131 = vsel %vm1130, %v1038, %v1039
    %v1132 = vsel %vm1130, %v36, %v37
    %1133 = vmax.index.xlane.f32.xlu0 %v1131
    %v1134 = vpop.xlane.xlu0 %1133
    %1135 = vset.pattern.permute.xlu0 %v1134
    %1136 = vperm.xlu0 %1135, %v1132
    %v1137 = vpop.permute.xlu0 %1136
    %vm1138 = vcmp.ge.f32.partialorder %v1040, %v1041
    %v1139 = vsel %vm1138, %v1040, %v1041
    %v1140 = vsel %vm1138, %v36, %v37
    %1141 = vmax.index.xlane.f32.xlu0 %v1139
    %v1142 = vpop.xlane.xlu0 %1141
    %1143 = vset.pattern.permute.xlu0 %v1142
    %1144 = vperm.xlu0 %1143, %v1140
    %v1145 = vpop.permute.xlu0 %1144
    %vm1146 = vcmp.ge.f32.partialorder %v1042, %v1043
    %v1147 = vsel %vm1146, %v1042, %v1043
    %v1148 = vsel %vm1146, %v36, %v37
    %1149 = vmax.index.xlane.f32.xlu0 %v1147
    %v1150 = vpop.xlane.xlu0 %1149
    %1151 = vset.pattern.permute.xlu0 %v1150
    %1152 = vperm.xlu0 %1151, %v1148
    %v1153 = vpop.permute.xlu0 %1152
    %vm1154 = vcmp.ge.f32.partialorder %v1044, %v1045
    %v1155 = vsel %vm1154, %v1044, %v1045
    %v1156 = vsel %vm1154, %v36, %v37
    %1157 = vmax.index.xlane.f32.xlu0 %v1155
    %v1158 = vpop.xlane.xlu0 %1157
    %1159 = vset.pattern.permute.xlu0 %v1158
    %1160 = vperm.xlu0 %1159, %v1156
    %v1161 = vpop.permute.xlu0 %1160
    %vm1162 = vcmp.ge.f32.partialorder %v1046, %v1047
    %v1163 = vsel %vm1162, %v1046, %v1047
    %v1164 = vsel %vm1162, %v36, %v37
    %1165 = vmax.index.xlane.f32.xlu0 %v1163
    %v1166 = vpop.xlane.xlu0 %1165
    %1167 = vset.pattern.permute.xlu0 %v1166
    %1168 = vperm.xlu0 %1167, %v1164
    %v1169 = vpop.permute.xlu0 %1168
    %vm1170 = vcmp.ge.f32.partialorder %v1048, %v1049
    %v1171 = vsel %vm1170, %v1048, %v1049
    %v1172 = vsel %vm1170, %v36, %v37
    %1173 = vmax.index.xlane.f32.xlu0 %v1171
    %v1174 = vpop.xlane.xlu0 %1173
    %1175 = vset.pattern.permute.xlu0 %v1174
    %1176 = vperm.xlu0 %1175, %v1172
    %v1177 = vpop.permute.xlu0 %1176
    %vm1178 = vcmp.eq.s32.totalorder %v36, %v1057
    %vm1179 = vcmp.eq.s32.totalorder %v37, %v1057
    %vm1180 = vcmp.eq.s32.totalorder %v36, %v1065
    %vm1181 = vcmp.eq.s32.totalorder %v37, %v1065
    %vm1182 = vcmp.eq.s32.totalorder %v36, %v1073
    %vm1183 = vcmp.eq.s32.totalorder %v37, %v1073
    %vm1184 = vcmp.eq.s32.totalorder %v36, %v1081
    %vm1185 = vcmp.eq.s32.totalorder %v37, %v1081
    %vm1186 = vcmp.eq.s32.totalorder %v36, %v1089
    %vm1187 = vcmp.eq.s32.totalorder %v37, %v1089
    %vm1188 = vcmp.eq.s32.totalorder %v36, %v1097
    %vm1189 = vcmp.eq.s32.totalorder %v37, %v1097
    %vm1190 = vcmp.eq.s32.totalorder %v36, %v1105
    %vm1191 = vcmp.eq.s32.totalorder %v37, %v1105
    %vm1192 = vcmp.eq.s32.totalorder %v36, %v1113
    %vm1193 = vcmp.eq.s32.totalorder %v37, %v1113
    %vm1194 = vcmp.eq.s32.totalorder %v36, %v1121
    %vm1195 = vcmp.eq.s32.totalorder %v37, %v1121
    %vm1196 = vcmp.eq.s32.totalorder %v36, %v1129
    %vm1197 = vcmp.eq.s32.totalorder %v37, %v1129
    %vm1198 = vcmp.eq.s32.totalorder %v36, %v1137
    %vm1199 = vcmp.eq.s32.totalorder %v37, %v1137
    %vm1200 = vcmp.eq.s32.totalorder %v36, %v1145
    %vm1201 = vcmp.eq.s32.totalorder %v37, %v1145
    %vm1202 = vcmp.eq.s32.totalorder %v36, %v1153
    %vm1203 = vcmp.eq.s32.totalorder %v37, %v1153
    %vm1204 = vcmp.eq.s32.totalorder %v36, %v1161
    %vm1205 = vcmp.eq.s32.totalorder %v37, %v1161
    %vm1206 = vcmp.eq.s32.totalorder %v36, %v1169
    %vm1207 = vcmp.eq.s32.totalorder %v37, %v1169
    %vm1208 = vcmp.eq.s32.totalorder %v36, %v1177
    %vm1209 = vcmp.eq.s32.totalorder %v37, %v1177
    %v1210 = vsel %vm1178, 1, 0
    %v1211 = vsel %vm1179, 1, 0
    %v1212 = vsel %vm1180, 1, 0
    %v1213 = vsel %vm1181, 1, 0
    %v1214 = vsel %vm1182, 1, 0
    %v1215 = vsel %vm1183, 1, 0
    %v1216 = vsel %vm1184, 1, 0
    %v1217 = vsel %vm1185, 1, 0
    %v1218 = vsel %vm1186, 1, 0
    %v1219 = vsel %vm1187, 1, 0
    %v1220 = vsel %vm1188, 1, 0
    %v1221 = vsel %vm1189, 1, 0
    %v1222 = vsel %vm1190, 1, 0
    %v1223 = vsel %vm1191, 1, 0
    %v1224 = vsel %vm1192, 1, 0
    %v1225 = vsel %vm1193, 1, 0
    %v1226 = vsel %vm1194, 1, 0
    %v1227 = vsel %vm1195, 1, 0
    %v1228 = vsel %vm1196, 1, 0
    %v1229 = vsel %vm1197, 1, 0
    %v1230 = vsel %vm1198, 1, 0
    %v1231 = vsel %vm1199, 1, 0
    %v1232 = vsel %vm1200, 1, 0
    %v1233 = vsel %vm1201, 1, 0
    %v1234 = vsel %vm1202, 1, 0
    %v1235 = vsel %vm1203, 1, 0
    %v1236 = vsel %vm1204, 1, 0
    %v1237 = vsel %vm1205, 1, 0
    %v1238 = vsel %vm1206, 1, 0
    %v1239 = vsel %vm1207, 1, 0
    %v1240 = vsel %vm1208, 1, 0
    %v1241 = vsel %vm1209, 1, 0
    %v1242 = vcvt.s32.f32 %v1210
    %v1243 = vcvt.s32.f32 %v1211
    %v1244 = vcvt.s32.f32 %v1212
    %v1245 = vcvt.s32.f32 %v1213
    %v1246 = vcvt.s32.f32 %v1214
    %v1247 = vcvt.s32.f32 %v1215
    %v1248 = vcvt.s32.f32 %v1216
    %v1249 = vcvt.s32.f32 %v1217
    %v1250 = vcvt.s32.f32 %v1218
    %v1251 = vcvt.s32.f32 %v1219
    %v1252 = vcvt.s32.f32 %v1220
    %v1253 = vcvt.s32.f32 %v1221
    %v1254 = vcvt.s32.f32 %v1222
    %v1255 = vcvt.s32.f32 %v1223
    %v1256 = vcvt.s32.f32 %v1224
    %v1257 = vcvt.s32.f32 %v1225
    %v1258 = vcvt.s32.f32 %v1226
    %v1259 = vcvt.s32.f32 %v1227
    %v1260 = vcvt.s32.f32 %v1228
    %v1261 = vcvt.s32.f32 %v1229
    %v1262 = vcvt.s32.f32 %v1230
    %v1263 = vcvt.s32.f32 %v1231
    %v1264 = vcvt.s32.f32 %v1232
    %v1265 = vcvt.s32.f32 %v1233
    %v1266 = vcvt.s32.f32 %v1234
    %v1267 = vcvt.s32.f32 %v1235
    %v1268 = vcvt.s32.f32 %v1236
    %v1269 = vcvt.s32.f32 %v1237
    %v1270 = vcvt.s32.f32 %v1238
    %v1271 = vcvt.s32.f32 %v1239
    %v1272 = vcvt.s32.f32 %v1240
    %v1273 = vcvt.s32.f32 %v1241
    %1274 = vmatpush.xpose.msra.mxu0 0.0
    %1275 = vmatpush.xpose.msra.mxu0 0.0
    %1276 = vmatpush.xpose.msra.mxu0 0.0
    %1277 = vmatpush.xpose.msra.mxu0 0.0
    %1278 = vmatpush.xpose.msra.mxu0 0.0
    %1279 = vmatpush.xpose.msra.mxu0 0.0
    %1280 = vmatpush.xpose.msra.mxu0 0.0
    %1281 = vmatpush.xpose.msra.mxu0 0.0
    %1282 = vmatpush.xpose.msra.mxu0 0.0
    %1283 = vmatpush.xpose.msra.mxu0 0.0
    %1284 = vmatpush.xpose.msra.mxu0 0.0
    %1285 = vmatpush.xpose.msra.mxu0 0.0
    %1286 = vmatpush.xpose.msra.mxu0 %v831
    %1287 = vmatpush.xpose.msra.mxu0 %v829
    %1288 = vmatpush.xpose.msra.mxu0 %v827
    %1289 = vmatpush.xpose.msra.mxu0 %v825
    %1290 = vmatmul.f32.gmra.mxu0 %v1242
    %v1291 = vpop.f32.mrf.mxu0
    %v1292 = vadd.f32 0.0, %v1291
    %1293 = vmatmul.f32.gmra.mxu0 %v1244
    %v1294 = vpop.f32.mrf.mxu0
    %v1295 = vadd.f32 0.0, %v1294
    %1296 = vmatmul.f32.gmra.mxu0 %v1246
    %v1297 = vpop.f32.mrf.mxu0
    %v1298 = vadd.f32 0.0, %v1297
    %1299 = vmatmul.f32.gmra.mxu0 %v1248
    %v1300 = vpop.f32.mrf.mxu0
    %v1301 = vadd.f32 0.0, %v1300
    %1302 = vmatmul.f32.gmra.mxu0 %v1250
    %v1303 = vpop.f32.mrf.mxu0
    %v1304 = vadd.f32 0.0, %v1303
    %1305 = vmatmul.f32.gmra.mxu0 %v1252
    %v1306 = vpop.f32.mrf.mxu0
    %v1307 = vadd.f32 0.0, %v1306
    %1308 = vmatmul.f32.gmra.mxu0 %v1254
    %v1309 = vpop.f32.mrf.mxu0
    %v1310 = vadd.f32 0.0, %v1309
    %1311 = vmatmul.f32.gmra.mxu0 %v1256
    %v1312 = vpop.f32.mrf.mxu0
    %v1313 = vadd.f32 0.0, %v1312
    %1314 = vmatmul.f32.gmra.mxu0 %v1258
    %v1315 = vpop.f32.mrf.mxu0
    %v1316 = vadd.f32 0.0, %v1315
    %1317 = vmatmul.f32.gmra.mxu0 %v1260
    %v1318 = vpop.f32.mrf.mxu0
    %v1319 = vadd.f32 0.0, %v1318
    %1320 = vmatmul.f32.gmra.mxu0 %v1262
    %v1321 = vpop.f32.mrf.mxu0
    %v1322 = vadd.f32 0.0, %v1321
    %1323 = vmatmul.f32.gmra.mxu0 %v1264
    %v1324 = vpop.f32.mrf.mxu0
    %v1325 = vadd.f32 0.0, %v1324
    %1326 = vmatmul.f32.gmra.mxu0 %v1266
    %v1327 = vpop.f32.mrf.mxu0
    %v1328 = vadd.f32 0.0, %v1327
    %1329 = vmatmul.f32.gmra.mxu0 %v1268
    %v1330 = vpop.f32.mrf.mxu0
    %v1331 = vadd.f32 0.0, %v1330
    %1332 = vmatmul.f32.gmra.mxu0 %v1270
    %v1333 = vpop.f32.mrf.mxu0
    %v1334 = vadd.f32 0.0, %v1333
    %1335 = vmatmul.f32.gmra.mxu0 %v1272
    %v1336 = vpop.f32.mrf.mxu0
    %v1337 = vadd.f32 0.0, %v1336
    %1338 = vdwg.mxu0
    %1339 = vmatpush.xpose.msra.mxu0 0.0
    %1340 = vmatpush.xpose.msra.mxu0 0.0
    %1341 = vmatpush.xpose.msra.mxu0 0.0
    %1342 = vmatpush.xpose.msra.mxu0 0.0
    %1343 = vmatpush.xpose.msra.mxu0 0.0
    %1344 = vmatpush.xpose.msra.mxu0 0.0
    %1345 = vmatpush.xpose.msra.mxu0 0.0
    %1346 = vmatpush.xpose.msra.mxu0 0.0
    %1347 = vmatpush.xpose.msra.mxu0 0.0
    %1348 = vmatpush.xpose.msra.mxu0 0.0
    %1349 = vmatpush.xpose.msra.mxu0 0.0
    %1350 = vmatpush.xpose.msra.mxu0 0.0
    %1351 = vmatpush.xpose.msra.mxu0 %v832
    %1352 = vmatpush.xpose.msra.mxu0 %v830
    %1353 = vmatpush.xpose.msra.mxu0 %v828
    %1354 = vmatpush.xpose.msra.mxu0 %v826
    %1355 = vmatmul.f32.gmra.mxu0 %v1243
    %v1356 = vpop.f32.mrf.mxu0
    %v1357 = vadd.f32 %v1292, %v1356
    %1358 = vmatmul.f32.gmra.mxu0 %v1245
    %v1359 = vpop.f32.mrf.mxu0
    %v1360 = vadd.f32 %v1295, %v1359
    %1361 = vmatmul.f32.gmra.mxu0 %v1247
    %v1362 = vpop.f32.mrf.mxu0
    %v1363 = vadd.f32 %v1298, %v1362
    %1364 = vmatmul.f32.gmra.mxu0 %v1249
    %v1365 = vpop.f32.mrf.mxu0
    %v1366 = vadd.f32 %v1301, %v1365
    %1367 = vmatmul.f32.gmra.mxu0 %v1251
    %v1368 = vpop.f32.mrf.mxu0
    %v1369 = vadd.f32 %v1304, %v1368
    %1370 = vmatmul.f32.gmra.mxu0 %v1253
    %v1371 = vpop.f32.mrf.mxu0
    %v1372 = vadd.f32 %v1307, %v1371
    %1373 = vmatmul.f32.gmra.mxu0 %v1255
    %v1374 = vpop.f32.mrf.mxu0
    %v1375 = vadd.f32 %v1310, %v1374
    %1376 = vmatmul.f32.gmra.mxu0 %v1257
    %v1377 = vpop.f32.mrf.mxu0
    %v1378 = vadd.f32 %v1313, %v1377
    %1379 = vmatmul.f32.gmra.mxu0 %v1259
    %v1380 = vpop.f32.mrf.mxu0
    %v1381 = vadd.f32 %v1316, %v1380
    %1382 = vmatmul.f32.gmra.mxu0 %v1261
    %v1383 = vpop.f32.mrf.mxu0
    %v1384 = vadd.f32 %v1319, %v1383
    %1385 = vmatmul.f32.gmra.mxu0 %v1263
    %v1386 = vpop.f32.mrf.mxu0
    %v1387 = vadd.f32 %v1322, %v1386
    %1388 = vmatmul.f32.gmra.mxu0 %v1265
    %v1389 = vpop.f32.mrf.mxu0
    %v1390 = vadd.f32 %v1325, %v1389
    %1391 = vmatmul.f32.gmra.mxu0 %v1267
    %v1392 = vpop.f32.mrf.mxu0
    %v1393 = vadd.f32 %v1328, %v1392
    %1394 = vmatmul.f32.gmra.mxu0 %v1269
    %v1395 = vpop.f32.mrf.mxu0
    %v1396 = vadd.f32 %v1331, %v1395
    %1397 = vmatmul.f32.gmra.mxu0 %v1271
    %v1398 = vpop.f32.mrf.mxu0
    %v1399 = vadd.f32 %v1334, %v1398
    %1400 = vmatmul.f32.gmra.mxu0 %v1273
    %v1401 = vpop.f32.mrf.mxu0
    %v1402 = vadd.f32 %v1337, %v1401
    %1403 = vdwg.mxu0
    %v1404 = vsub.f32 %v633, %v1357
    %v1405 = vsub.f32 %v634, %v1360
    %v1406 = vsub.f32 %v635, %v1363
    %v1407 = vsub.f32 %v636, %v1366
    %v1408 = vsub.f32 %v637, %v1369
    %v1409 = vsub.f32 %v638, %v1372
    %v1410 = vsub.f32 %v639, %v1375
    %v1411 = vsub.f32 %v640, %v1378
    %v1412 = vsub.f32 %v641, %v1381
    %v1413 = vsub.f32 %v642, %v1384
    %v1414 = vsub.f32 %v643, %v1387
    %v1415 = vsub.f32 %v644, %v1390
    %v1416 = vsub.f32 %v645, %v1393
    %v1417 = vsub.f32 %v646, %v1396
    %v1418 = vsub.f32 %v647, %v1399
    %v1419 = vsub.f32 %v648, %v1402
    %v1420 = vmul.f32 %v1404, %v1404
    %v1421 = vmul.f32 %v1405, %v1405
    %v1422 = vmul.f32 %v1406, %v1406
    %v1423 = vmul.f32 %v1407, %v1407
    %v1424 = vmul.f32 %v1408, %v1408
    %v1425 = vmul.f32 %v1409, %v1409
    %v1426 = vmul.f32 %v1410, %v1410
    %v1427 = vmul.f32 %v1411, %v1411
    %v1428 = vmul.f32 %v1412, %v1412
    %v1429 = vmul.f32 %v1413, %v1413
    %v1430 = vmul.f32 %v1414, %v1414
    %v1431 = vmul.f32 %v1415, %v1415
    %v1432 = vmul.f32 %v1416, %v1416
    %v1433 = vmul.f32 %v1417, %v1417
    %v1434 = vmul.f32 %v1418, %v1418
    %v1435 = vmul.f32 %v1419, %v1419
    %v1436 = vsel %vm63, %v1420, 0.0
    %1437 = vadd.xlane.f32.xlu0 %v1436
    %v1438 = vpop.xlane.xlu0 %1437
    %v1439 = vsel %vm63, %v1421, 0.0
    %1440 = vadd.xlane.f32.xlu0 %v1439
    %v1441 = vpop.xlane.xlu0 %1440
    %v1442 = vsel %vm63, %v1422, 0.0
    %1443 = vadd.xlane.f32.xlu0 %v1442
    %v1444 = vpop.xlane.xlu0 %1443
    %v1445 = vsel %vm63, %v1423, 0.0
    %1446 = vadd.xlane.f32.xlu0 %v1445
    %v1447 = vpop.xlane.xlu0 %1446
    %v1448 = vsel %vm63, %v1424, 0.0
    %1449 = vadd.xlane.f32.xlu0 %v1448
    %v1450 = vpop.xlane.xlu0 %1449
    %v1451 = vsel %vm63, %v1425, 0.0
    %1452 = vadd.xlane.f32.xlu0 %v1451
    %v1453 = vpop.xlane.xlu0 %1452
    %v1454 = vsel %vm63, %v1426, 0.0
    %1455 = vadd.xlane.f32.xlu0 %v1454
    %v1456 = vpop.xlane.xlu0 %1455
    %v1457 = vsel %vm63, %v1427, 0.0
    %1458 = vadd.xlane.f32.xlu0 %v1457
    %v1459 = vpop.xlane.xlu0 %1458
    %v1460 = vsel %vm63, %v1428, 0.0
    %1461 = vadd.xlane.f32.xlu0 %v1460
    %v1462 = vpop.xlane.xlu0 %1461
    %v1463 = vsel %vm63, %v1429, 0.0
    %1464 = vadd.xlane.f32.xlu0 %v1463
    %v1465 = vpop.xlane.xlu0 %1464
    %v1466 = vsel %vm63, %v1430, 0.0
    %1467 = vadd.xlane.f32.xlu0 %v1466
    %v1468 = vpop.xlane.xlu0 %1467
    %v1469 = vsel %vm63, %v1431, 0.0
    %1470 = vadd.xlane.f32.xlu0 %v1469
    %v1471 = vpop.xlane.xlu0 %1470
    %v1472 = vsel %vm63, %v1432, 0.0
    %1473 = vadd.xlane.f32.xlu0 %v1472
    %v1474 = vpop.xlane.xlu0 %1473
    %v1475 = vsel %vm63, %v1433, 0.0
    %1476 = vadd.xlane.f32.xlu0 %v1475
    %v1477 = vpop.xlane.xlu0 %1476
    %v1478 = vsel %vm63, %v1434, 0.0
    %1479 = vadd.xlane.f32.xlu0 %v1478
    %v1480 = vpop.xlane.xlu0 %1479
    %v1481 = vsel %vm63, %v1435, 0.0
    %1482 = vadd.xlane.f32.xlu0 %v1481
    %v1483 = vpop.xlane.xlu0 %1482
    %v1484 = vperm.slane %v1057, %v36
    %v1485 = vperm.slane %v1065, %v714
    %v1486 = vsel %vm716, %v1485, %v1484
    %v1487 = vperm.slane %v1073, %v718
    %v1488 = vsel %vm720, %v1487, %v1486
    %v1489 = vperm.slane %v1081, %v722
    %v1490 = vsel %vm724, %v1489, %v1488
    %v1491 = vperm.slane %v1089, %v726
    %v1492 = vsel %vm728, %v1491, %v1490
    %v1493 = vperm.slane %v1097, %v730
    %v1494 = vsel %vm732, %v1493, %v1492
    %v1495 = vperm.slane %v1105, %v734
    %v1496 = vsel %vm736, %v1495, %v1494
    %v1497 = vperm.slane %v1113, %v738
    %v1498 = vsel %vm740, %v1497, %v1496
    %v1499 = vperm.slane %v1121, %v742
    %v1500 = vsel %vm744, %v1499, %v1498
    %v1501 = vperm.slane %v1129, %v746
    %v1502 = vsel %vm748, %v1501, %v1500
    %v1503 = vperm.slane %v1137, %v750
    %v1504 = vsel %vm752, %v1503, %v1502
    %v1505 = vperm.slane %v1145, %v754
    %v1506 = vsel %vm756, %v1505, %v1504
    %v1507 = vperm.slane %v1153, %v758
    %v1508 = vsel %vm760, %v1507, %v1506
    %v1509 = vperm.slane %v1161, %v762
    %v1510 = vsel %vm764, %v1509, %v1508
    %v1511 = vperm.slane %v1169, %v766
    %v1512 = vsel %vm768, %v1511, %v1510
    %v1513 = vperm.slane %v1177, %v770
    %v1514 = vsel %vm772, %v1513, %v1512
    %1515 = vst [vmem:[#allocation5 + $0x1] sm:$0x1] %v1514
    %v1532 = vperm.slane %v1438, %v36
    %v1533 = vperm.slane %v1441, %v714
    %v1534 = vsel %vm716, %v1533, %v1532
    %v1535 = vperm.slane %v1444, %v718
    %v1536 = vsel %vm720, %v1535, %v1534
    %v1537 = vperm.slane %v1447, %v722
    %v1538 = vsel %vm724, %v1537, %v1536
    %v1539 = vperm.slane %v1450, %v726
    %v1540 = vsel %vm728, %v1539, %v1538
    %v1541 = vperm.slane %v1453, %v730
    %v1542 = vsel %vm732, %v1541, %v1540
    %v1543 = vperm.slane %v1456, %v734
    %v1544 = vsel %vm736, %v1543, %v1542
    %v1545 = vperm.slane %v1459, %v738
    %v1546 = vsel %vm740, %v1545, %v1544
    %v1547 = vperm.slane %v1462, %v742
    %v1548 = vsel %vm744, %v1547, %v1546
    %v1549 = vperm.slane %v1465, %v746
    %v1550 = vsel %vm748, %v1549, %v1548
    %v1551 = vperm.slane %v1468, %v750
    %v1552 = vsel %vm752, %v1551, %v1550
    %v1553 = vperm.slane %v1471, %v754
    %v1554 = vsel %vm756, %v1553, %v1552
    %v1555 = vperm.slane %v1474, %v758
    %v1556 = vsel %vm760, %v1555, %v1554
    %v1557 = vperm.slane %v1477, %v762
    %v1558 = vsel %vm764, %v1557, %v1556
    %v1559 = vperm.slane %v1480, %v766
    %v1560 = vsel %vm768, %v1559, %v1558
    %v1561 = vperm.slane %v1483, %v770
    %v1562 = vsel %vm772, %v1561, %v1560
    %1564 = vst [vmem:[#allocation6 + $0x1] sm:$0x1] %v1562
    %s1565 = scalar_lea.vmem [#allocation2], 128
    %v1566 = vld [vmem:[%s1565] sm:$0xff]
    %v1567 = vld [vmem:[%s1565 + $0x8] sm:$0xff]
    %v1568 = vld [vmem:[%s1565 + $0x10] sm:$0xff]
    %v1569 = vld [vmem:[%s1565 + $0x18] sm:$0xff]
    %v1570 = vld [vmem:[%s1565 + $0x20] sm:$0xff]
    %v1571 = vld [vmem:[%s1565 + $0x28] sm:$0xff]
    %v1572 = vld [vmem:[%s1565 + $0x30] sm:$0xff]
    %v1573 = vld [vmem:[%s1565 + $0x38] sm:$0xff]
    %s1574 = scalar_lea.vmem %s2, 4
    %v1575 = vld [vmem:[%s1574] sm:$0x3]
    %v1577 = vsel %vm63, %v1404, 0
    %v1580 = vsel %vm63, %v1405, 0
    %v1583 = vsel %vm63, %v1406, 0
    %v1586 = vsel %vm63, %v1407, 0
    %v1589 = vsel %vm63, %v1408, 0
    %v1592 = vsel %vm63, %v1409, 0
    %v1595 = vsel %vm63, %v1410, 0
    %v1598 = vsel %vm63, %v1411, 0
    %v1601 = vsel %vm63, %v1412, 0
    %v1604 = vsel %vm63, %v1413, 0
    %v1607 = vsel %vm63, %v1414, 0
    %v1610 = vsel %vm63, %v1415, 0
    %v1613 = vsel %vm63, %v1416, 0
    %v1616 = vsel %vm63, %v1417, 0
    %v1619 = vsel %vm63, %v1418, 0
    %v1622 = vsel %vm63, %v1419, 0
    %1624 = vmatpush.msra.mxu0 0.0
    %1625 = vmatpush.msra.mxu0 0.0
    %1626 = vmatpush.msra.mxu0 0.0
    %1627 = vmatpush.msra.mxu0 0.0
    %1628 = vmatpush.msra.mxu0 0.0
    %1629 = vmatpush.msra.mxu0 0.0
    %1630 = vmatpush.msra.mxu0 0.0
    %1631 = vmatpush.msra.mxu0 0.0
    %1632 = vmatpush.msra.mxu0 0.0
    %1633 = vmatpush.msra.mxu0 0.0
    %1634 = vmatpush.msra.mxu0 0.0
    %1635 = vmatpush.msra.mxu0 0.0
    %1636 = vmatpush.msra.mxu0 %v1572
    %1637 = vmatpush.msra.mxu0 %v1570
    %1638 = vmatpush.msra.mxu0 %v1568
    %1639 = vmatpush.msra.mxu0 %v1566
    %1640 = vmatmul.f32.gmra.mxu0 %v1577
    %v1641 = vpop.f32.mrf.mxu0
    %v1642 = vadd.f32 0.0, %v1641
    %1643 = vmatmul.f32.gmra.mxu0 %v1580
    %v1644 = vpop.f32.mrf.mxu0
    %v1645 = vadd.f32 0.0, %v1644
    %1646 = vmatmul.f32.gmra.mxu0 %v1583
    %v1647 = vpop.f32.mrf.mxu0
    %v1648 = vadd.f32 0.0, %v1647
    %1649 = vmatmul.f32.gmra.mxu0 %v1586
    %v1650 = vpop.f32.mrf.mxu0
    %v1651 = vadd.f32 0.0, %v1650
    %1652 = vmatmul.f32.gmra.mxu0 %v1589
    %v1653 = vpop.f32.mrf.mxu0
    %v1654 = vadd.f32 0.0, %v1653
    %1655 = vmatmul.f32.gmra.mxu0 %v1592
    %v1656 = vpop.f32.mrf.mxu0
    %v1657 = vadd.f32 0.0, %v1656
    %1658 = vmatmul.f32.gmra.mxu0 %v1595
    %v1659 = vpop.f32.mrf.mxu0
    %v1660 = vadd.f32 0.0, %v1659
    %1661 = vmatmul.f32.gmra.mxu0 %v1598
    %v1662 = vpop.f32.mrf.mxu0
    %v1663 = vadd.f32 0.0, %v1662
    %1664 = vmatmul.f32.gmra.mxu0 %v1601
    %v1665 = vpop.f32.mrf.mxu0
    %v1666 = vadd.f32 0.0, %v1665
    %1667 = vmatmul.f32.gmra.mxu0 %v1604
    %v1668 = vpop.f32.mrf.mxu0
    %v1669 = vadd.f32 0.0, %v1668
    %1670 = vmatmul.f32.gmra.mxu0 %v1607
    %v1671 = vpop.f32.mrf.mxu0
    %v1672 = vadd.f32 0.0, %v1671
    %1673 = vmatmul.f32.gmra.mxu0 %v1610
    %v1674 = vpop.f32.mrf.mxu0
    %v1675 = vadd.f32 0.0, %v1674
    %1676 = vmatmul.f32.gmra.mxu0 %v1613
    %v1677 = vpop.f32.mrf.mxu0
    %v1678 = vadd.f32 0.0, %v1677
    %1679 = vmatmul.f32.gmra.mxu0 %v1616
    %v1680 = vpop.f32.mrf.mxu0
    %v1681 = vadd.f32 0.0, %v1680
    %1682 = vmatmul.f32.gmra.mxu0 %v1619
    %v1683 = vpop.f32.mrf.mxu0
    %v1684 = vadd.f32 0.0, %v1683
    %1685 = vmatmul.f32.gmra.mxu0 %v1622
    %v1686 = vpop.f32.mrf.mxu0
    %v1687 = vadd.f32 0.0, %v1686
    %1688 = vdwg.mxu0
    %1689 = vmatpush.msra.mxu0 0.0
    %1690 = vmatpush.msra.mxu0 0.0
    %1691 = vmatpush.msra.mxu0 0.0
    %1692 = vmatpush.msra.mxu0 0.0
    %1693 = vmatpush.msra.mxu0 0.0
    %1694 = vmatpush.msra.mxu0 0.0
    %1695 = vmatpush.msra.mxu0 0.0
    %1696 = vmatpush.msra.mxu0 0.0
    %1697 = vmatpush.msra.mxu0 0.0
    %1698 = vmatpush.msra.mxu0 0.0
    %1699 = vmatpush.msra.mxu0 0.0
    %1700 = vmatpush.msra.mxu0 0.0
    %1701 = vmatpush.msra.mxu0 %v1573
    %1702 = vmatpush.msra.mxu0 %v1571
    %1703 = vmatpush.msra.mxu0 %v1569
    %1704 = vmatpush.msra.mxu0 %v1567
    %1705 = vmatmul.f32.gmra.mxu0 %v1577
    %v1706 = vpop.f32.mrf.mxu0
    %v1707 = vadd.f32 0.0, %v1706
    %1708 = vmatmul.f32.gmra.mxu0 %v1580
    %v1709 = vpop.f32.mrf.mxu0
    %v1710 = vadd.f32 0.0, %v1709
    %1711 = vmatmul.f32.gmra.mxu0 %v1583
    %v1712 = vpop.f32.mrf.mxu0
    %v1713 = vadd.f32 0.0, %v1712
    %1714 = vmatmul.f32.gmra.mxu0 %v1586
    %v1715 = vpop.f32.mrf.mxu0
    %v1716 = vadd.f32 0.0, %v1715
    %1717 = vmatmul.f32.gmra.mxu0 %v1589
    %v1718 = vpop.f32.mrf.mxu0
    %v1719 = vadd.f32 0.0, %v1718
    %1720 = vmatmul.f32.gmra.mxu0 %v1592
    %v1721 = vpop.f32.mrf.mxu0
    %v1722 = vadd.f32 0.0, %v1721
    %1723 = vmatmul.f32.gmra.mxu0 %v1595
    %v1724 = vpop.f32.mrf.mxu0
    %v1725 = vadd.f32 0.0, %v1724
    %1726 = vmatmul.f32.gmra.mxu0 %v1598
    %v1727 = vpop.f32.mrf.mxu0
    %v1728 = vadd.f32 0.0, %v1727
    %1729 = vmatmul.f32.gmra.mxu0 %v1601
    %v1730 = vpop.f32.mrf.mxu0
    %v1731 = vadd.f32 0.0, %v1730
    %1732 = vmatmul.f32.gmra.mxu0 %v1604
    %v1733 = vpop.f32.mrf.mxu0
    %v1734 = vadd.f32 0.0, %v1733
    %1735 = vmatmul.f32.gmra.mxu0 %v1607
    %v1736 = vpop.f32.mrf.mxu0
    %v1737 = vadd.f32 0.0, %v1736
    %1738 = vmatmul.f32.gmra.mxu0 %v1610
    %v1739 = vpop.f32.mrf.mxu0
    %v1740 = vadd.f32 0.0, %v1739
    %1741 = vmatmul.f32.gmra.mxu0 %v1613
    %v1742 = vpop.f32.mrf.mxu0
    %v1743 = vadd.f32 0.0, %v1742
    %1744 = vmatmul.f32.gmra.mxu0 %v1616
    %v1745 = vpop.f32.mrf.mxu0
    %v1746 = vadd.f32 0.0, %v1745
    %1747 = vmatmul.f32.gmra.mxu0 %v1619
    %v1748 = vpop.f32.mrf.mxu0
    %v1749 = vadd.f32 0.0, %v1748
    %1750 = vmatmul.f32.gmra.mxu0 %v1622
    %v1751 = vpop.f32.mrf.mxu0
    %v1752 = vadd.f32 0.0, %v1751
    %1753 = vdwg.mxu0
    %v1755 = vperm.slane %v1575, 0
    %v1756 = vperm.slane %v1575, 1
    %v1759 = vsub.f32 %v1642, %v1755
    %v1760 = vsub.f32 %v1707, %v1756
    %v1761 = vsub.f32 %v1645, %v1755
    %v1762 = vsub.f32 %v1710, %v1756
    %v1763 = vsub.f32 %v1648, %v1755
    %v1764 = vsub.f32 %v1713, %v1756
    %v1765 = vsub.f32 %v1651, %v1755
    %v1766 = vsub.f32 %v1716, %v1756
    %v1767 = vsub.f32 %v1654, %v1755
    %v1768 = vsub.f32 %v1719, %v1756
    %v1769 = vsub.f32 %v1657, %v1755
    %v1770 = vsub.f32 %v1722, %v1756
    %v1771 = vsub.f32 %v1660, %v1755
    %v1772 = vsub.f32 %v1725, %v1756
    %v1773 = vsub.f32 %v1663, %v1755
    %v1774 = vsub.f32 %v1728, %v1756
    %v1775 = vsub.f32 %v1666, %v1755
    %v1776 = vsub.f32 %v1731, %v1756
    %v1777 = vsub.f32 %v1669, %v1755
    %v1778 = vsub.f32 %v1734, %v1756
    %v1779 = vsub.f32 %v1672, %v1755
    %v1780 = vsub.f32 %v1737, %v1756
    %v1781 = vsub.f32 %v1675, %v1755
    %v1782 = vsub.f32 %v1740, %v1756
    %v1783 = vsub.f32 %v1678, %v1755
    %v1784 = vsub.f32 %v1743, %v1756
    %v1785 = vsub.f32 %v1681, %v1755
    %v1786 = vsub.f32 %v1746, %v1756
    %v1787 = vsub.f32 %v1684, %v1755
    %v1788 = vsub.f32 %v1749, %v1756
    %v1789 = vsub.f32 %v1687, %v1755
    %v1790 = vsub.f32 %v1752, %v1756
    %vm1791 = vcmp.ge.f32.partialorder %v1759, %v1760
    %v1792 = vsel %vm1791, %v1759, %v1760
    %v1793 = vsel %vm1791, %v36, %v37
    %1794 = vmax.index.xlane.f32.xlu0 %v1792
    %v1795 = vpop.xlane.xlu0 %1794
    %1796 = vset.pattern.permute.xlu0 %v1795
    %1797 = vperm.xlu0 %1796, %v1793
    %v1798 = vpop.permute.xlu0 %1797
    %vm1799 = vcmp.ge.f32.partialorder %v1761, %v1762
    %v1800 = vsel %vm1799, %v1761, %v1762
    %v1801 = vsel %vm1799, %v36, %v37
    %1802 = vmax.index.xlane.f32.xlu0 %v1800
    %v1803 = vpop.xlane.xlu0 %1802
    %1804 = vset.pattern.permute.xlu0 %v1803
    %1805 = vperm.xlu0 %1804, %v1801
    %v1806 = vpop.permute.xlu0 %1805
    %vm1807 = vcmp.ge.f32.partialorder %v1763, %v1764
    %v1808 = vsel %vm1807, %v1763, %v1764
    %v1809 = vsel %vm1807, %v36, %v37
    %1810 = vmax.index.xlane.f32.xlu0 %v1808
    %v1811 = vpop.xlane.xlu0 %1810
    %1812 = vset.pattern.permute.xlu0 %v1811
    %1813 = vperm.xlu0 %1812, %v1809
    %v1814 = vpop.permute.xlu0 %1813
    %vm1815 = vcmp.ge.f32.partialorder %v1765, %v1766
    %v1816 = vsel %vm1815, %v1765, %v1766
    %v1817 = vsel %vm1815, %v36, %v37
    %1818 = vmax.index.xlane.f32.xlu0 %v1816
    %v1819 = vpop.xlane.xlu0 %1818
    %1820 = vset.pattern.permute.xlu0 %v1819
    %1821 = vperm.xlu0 %1820, %v1817
    %v1822 = vpop.permute.xlu0 %1821
    %vm1823 = vcmp.ge.f32.partialorder %v1767, %v1768
    %v1824 = vsel %vm1823, %v1767, %v1768
    %v1825 = vsel %vm1823, %v36, %v37
    %1826 = vmax.index.xlane.f32.xlu0 %v1824
    %v1827 = vpop.xlane.xlu0 %1826
    %1828 = vset.pattern.permute.xlu0 %v1827
    %1829 = vperm.xlu0 %1828, %v1825
    %v1830 = vpop.permute.xlu0 %1829
    %vm1831 = vcmp.ge.f32.partialorder %v1769, %v1770
    %v1832 = vsel %vm1831, %v1769, %v1770
    %v1833 = vsel %vm1831, %v36, %v37
    %1834 = vmax.index.xlane.f32.xlu0 %v1832
    %v1835 = vpop.xlane.xlu0 %1834
    %1836 = vset.pattern.permute.xlu0 %v1835
    %1837 = vperm.xlu0 %1836, %v1833
    %v1838 = vpop.permute.xlu0 %1837
    %vm1839 = vcmp.ge.f32.partialorder %v1771, %v1772
    %v1840 = vsel %vm1839, %v1771, %v1772
    %v1841 = vsel %vm1839, %v36, %v37
    %1842 = vmax.index.xlane.f32.xlu0 %v1840
    %v1843 = vpop.xlane.xlu0 %1842
    %1844 = vset.pattern.permute.xlu0 %v1843
    %1845 = vperm.xlu0 %1844, %v1841
    %v1846 = vpop.permute.xlu0 %1845
    %vm1847 = vcmp.ge.f32.partialorder %v1773, %v1774
    %v1848 = vsel %vm1847, %v1773, %v1774
    %v1849 = vsel %vm1847, %v36, %v37
    %1850 = vmax.index.xlane.f32.xlu0 %v1848
    %v1851 = vpop.xlane.xlu0 %1850
    %1852 = vset.pattern.permute.xlu0 %v1851
    %1853 = vperm.xlu0 %1852, %v1849
    %v1854 = vpop.permute.xlu0 %1853
    %vm1855 = vcmp.ge.f32.partialorder %v1775, %v1776
    %v1856 = vsel %vm1855, %v1775, %v1776
    %v1857 = vsel %vm1855, %v36, %v37
    %1858 = vmax.index.xlane.f32.xlu0 %v1856
    %v1859 = vpop.xlane.xlu0 %1858
    %1860 = vset.pattern.permute.xlu0 %v1859
    %1861 = vperm.xlu0 %1860, %v1857
    %v1862 = vpop.permute.xlu0 %1861
    %vm1863 = vcmp.ge.f32.partialorder %v1777, %v1778
    %v1864 = vsel %vm1863, %v1777, %v1778
    %v1865 = vsel %vm1863, %v36, %v37
    %1866 = vmax.index.xlane.f32.xlu0 %v1864
    %v1867 = vpop.xlane.xlu0 %1866
    %1868 = vset.pattern.permute.xlu0 %v1867
    %1869 = vperm.xlu0 %1868, %v1865
    %v1870 = vpop.permute.xlu0 %1869
    %vm1871 = vcmp.ge.f32.partialorder %v1779, %v1780
    %v1872 = vsel %vm1871, %v1779, %v1780
    %v1873 = vsel %vm1871, %v36, %v37
    %1874 = vmax.index.xlane.f32.xlu0 %v1872
    %v1875 = vpop.xlane.xlu0 %1874
    %1876 = vset.pattern.permute.xlu0 %v1875
    %1877 = vperm.xlu0 %1876, %v1873
    %v1878 = vpop.permute.xlu0 %1877
    %vm1879 = vcmp.ge.f32.partialorder %v1781, %v1782
    %v1880 = vsel %vm1879, %v1781, %v1782
    %v1881 = vsel %vm1879, %v36, %v37
    %1882 = vmax.index.xlane.f32.xlu0 %v1880
    %v1883 = vpop.xlane.xlu0 %1882
    %1884 = vset.pattern.permute.xlu0 %v1883
    %1885 = vperm.xlu0 %1884, %v1881
    %v1886 = vpop.permute.xlu0 %1885
    %vm1887 = vcmp.ge.f32.partialorder %v1783, %v1784
    %v1888 = vsel %vm1887, %v1783, %v1784
    %v1889 = vsel %vm1887, %v36, %v37
    %1890 = vmax.index.xlane.f32.xlu0 %v1888
    %v1891 = vpop.xlane.xlu0 %1890
    %1892 = vset.pattern.permute.xlu0 %v1891
    %1893 = vperm.xlu0 %1892, %v1889
    %v1894 = vpop.permute.xlu0 %1893
    %vm1895 = vcmp.ge.f32.partialorder %v1785, %v1786
    %v1896 = vsel %vm1895, %v1785, %v1786
    %v1897 = vsel %vm1895, %v36, %v37
    %1898 = vmax.index.xlane.f32.xlu0 %v1896
    %v1899 = vpop.xlane.xlu0 %1898
    %1900 = vset.pattern.permute.xlu0 %v1899
    %1901 = vperm.xlu0 %1900, %v1897
    %v1902 = vpop.permute.xlu0 %1901
    %vm1903 = vcmp.ge.f32.partialorder %v1787, %v1788
    %v1904 = vsel %vm1903, %v1787, %v1788
    %v1905 = vsel %vm1903, %v36, %v37
    %1906 = vmax.index.xlane.f32.xlu0 %v1904
    %v1907 = vpop.xlane.xlu0 %1906
    %1908 = vset.pattern.permute.xlu0 %v1907
    %1909 = vperm.xlu0 %1908, %v1905
    %v1910 = vpop.permute.xlu0 %1909
    %vm1911 = vcmp.ge.f32.partialorder %v1789, %v1790
    %v1912 = vsel %vm1911, %v1789, %v1790
    %v1913 = vsel %vm1911, %v36, %v37
    %1914 = vmax.index.xlane.f32.xlu0 %v1912
    %v1915 = vpop.xlane.xlu0 %1914
    %1916 = vset.pattern.permute.xlu0 %v1915
    %1917 = vperm.xlu0 %1916, %v1913
    %v1918 = vpop.permute.xlu0 %1917
    %vm1919 = vcmp.eq.s32.totalorder %v36, %v1798
    %vm1920 = vcmp.eq.s32.totalorder %v37, %v1798
    %vm1921 = vcmp.eq.s32.totalorder %v36, %v1806
    %vm1922 = vcmp.eq.s32.totalorder %v37, %v1806
    %vm1923 = vcmp.eq.s32.totalorder %v36, %v1814
    %vm1924 = vcmp.eq.s32.totalorder %v37, %v1814
    %vm1925 = vcmp.eq.s32.totalorder %v36, %v1822
    %vm1926 = vcmp.eq.s32.totalorder %v37, %v1822
    %vm1927 = vcmp.eq.s32.totalorder %v36, %v1830
    %vm1928 = vcmp.eq.s32.totalorder %v37, %v1830
    %vm1929 = vcmp.eq.s32.totalorder %v36, %v1838
    %vm1930 = vcmp.eq.s32.totalorder %v37, %v1838
    %vm1931 = vcmp.eq.s32.totalorder %v36, %v1846
    %vm1932 = vcmp.eq.s32.totalorder %v37, %v1846
    %vm1933 = vcmp.eq.s32.totalorder %v36, %v1854
    %vm1934 = vcmp.eq.s32.totalorder %v37, %v1854
    %vm1935 = vcmp.eq.s32.totalorder %v36, %v1862
    %vm1936 = vcmp.eq.s32.totalorder %v37, %v1862
    %vm1937 = vcmp.eq.s32.totalorder %v36, %v1870
    %vm1938 = vcmp.eq.s32.totalorder %v37, %v1870
    %vm1939 = vcmp.eq.s32.totalorder %v36, %v1878
    %vm1940 = vcmp.eq.s32.totalorder %v37, %v1878
    %vm1941 = vcmp.eq.s32.totalorder %v36, %v1886
    %vm1942 = vcmp.eq.s32.totalorder %v37, %v1886
    %vm1943 = vcmp.eq.s32.totalorder %v36, %v1894
    %vm1944 = vcmp.eq.s32.totalorder %v37, %v1894
    %vm1945 = vcmp.eq.s32.totalorder %v36, %v1902
    %vm1946 = vcmp.eq.s32.totalorder %v37, %v1902
    %vm1947 = vcmp.eq.s32.totalorder %v36, %v1910
    %vm1948 = vcmp.eq.s32.totalorder %v37, %v1910
    %vm1949 = vcmp.eq.s32.totalorder %v36, %v1918
    %vm1950 = vcmp.eq.s32.totalorder %v37, %v1918
    %v1951 = vsel %vm1919, 1, 0
    %v1952 = vsel %vm1920, 1, 0
    %v1953 = vsel %vm1921, 1, 0
    %v1954 = vsel %vm1922, 1, 0
    %v1955 = vsel %vm1923, 1, 0
    %v1956 = vsel %vm1924, 1, 0
    %v1957 = vsel %vm1925, 1, 0
    %v1958 = vsel %vm1926, 1, 0
    %v1959 = vsel %vm1927, 1, 0
    %v1960 = vsel %vm1928, 1, 0
    %v1961 = vsel %vm1929, 1, 0
    %v1962 = vsel %vm1930, 1, 0
    %v1963 = vsel %vm1931, 1, 0
    %v1964 = vsel %vm1932, 1, 0
    %v1965 = vsel %vm1933, 1, 0
    %v1966 = vsel %vm1934, 1, 0
    %v1967 = vsel %vm1935, 1, 0
    %v1968 = vsel %vm1936, 1, 0
    %v1969 = vsel %vm1937, 1, 0
    %v1970 = vsel %vm1938, 1, 0
    %v1971 = vsel %vm1939, 1, 0
    %v1972 = vsel %vm1940, 1, 0
    %v1973 = vsel %vm1941, 1, 0
    %v1974 = vsel %vm1942, 1, 0
    %v1975 = vsel %vm1943, 1, 0
    %v1976 = vsel %vm1944, 1, 0
    %v1977 = vsel %vm1945, 1, 0
    %v1978 = vsel %vm1946, 1, 0
    %v1979 = vsel %vm1947, 1, 0
    %v1980 = vsel %vm1948, 1, 0
    %v1981 = vsel %vm1949, 1, 0
    %v1982 = vsel %vm1950, 1, 0
    %v1983 = vcvt.s32.f32 %v1951
    %v1984 = vcvt.s32.f32 %v1952
    %v1985 = vcvt.s32.f32 %v1953
    %v1986 = vcvt.s32.f32 %v1954
    %v1987 = vcvt.s32.f32 %v1955
    %v1988 = vcvt.s32.f32 %v1956
    %v1989 = vcvt.s32.f32 %v1957
    %v1990 = vcvt.s32.f32 %v1958
    %v1991 = vcvt.s32.f32 %v1959
    %v1992 = vcvt.s32.f32 %v1960
    %v1993 = vcvt.s32.f32 %v1961
    %v1994 = vcvt.s32.f32 %v1962
    %v1995 = vcvt.s32.f32 %v1963
    %v1996 = vcvt.s32.f32 %v1964
    %v1997 = vcvt.s32.f32 %v1965
    %v1998 = vcvt.s32.f32 %v1966
    %v1999 = vcvt.s32.f32 %v1967
    %v2000 = vcvt.s32.f32 %v1968
    %v2001 = vcvt.s32.f32 %v1969
    %v2002 = vcvt.s32.f32 %v1970
    %v2003 = vcvt.s32.f32 %v1971
    %v2004 = vcvt.s32.f32 %v1972
    %v2005 = vcvt.s32.f32 %v1973
    %v2006 = vcvt.s32.f32 %v1974
    %v2007 = vcvt.s32.f32 %v1975
    %v2008 = vcvt.s32.f32 %v1976
    %v2009 = vcvt.s32.f32 %v1977
    %v2010 = vcvt.s32.f32 %v1978
    %v2011 = vcvt.s32.f32 %v1979
    %v2012 = vcvt.s32.f32 %v1980
    %v2013 = vcvt.s32.f32 %v1981
    %v2014 = vcvt.s32.f32 %v1982
    %2015 = vmatpush.xpose.msra.mxu0 0.0
    %2016 = vmatpush.xpose.msra.mxu0 0.0
    %2017 = vmatpush.xpose.msra.mxu0 0.0
    %2018 = vmatpush.xpose.msra.mxu0 0.0
    %2019 = vmatpush.xpose.msra.mxu0 0.0
    %2020 = vmatpush.xpose.msra.mxu0 0.0
    %2021 = vmatpush.xpose.msra.mxu0 0.0
    %2022 = vmatpush.xpose.msra.mxu0 0.0
    %2023 = vmatpush.xpose.msra.mxu0 0.0
    %2024 = vmatpush.xpose.msra.mxu0 0.0
    %2025 = vmatpush.xpose.msra.mxu0 0.0
    %2026 = vmatpush.xpose.msra.mxu0 0.0
    %2027 = vmatpush.xpose.msra.mxu0 %v1572
    %2028 = vmatpush.xpose.msra.mxu0 %v1570
    %2029 = vmatpush.xpose.msra.mxu0 %v1568
    %2030 = vmatpush.xpose.msra.mxu0 %v1566
    %2031 = vmatmul.f32.gmra.mxu0 %v1983
    %v2032 = vpop.f32.mrf.mxu0
    %v2033 = vadd.f32 0.0, %v2032
    %2034 = vmatmul.f32.gmra.mxu0 %v1985
    %v2035 = vpop.f32.mrf.mxu0
    %v2036 = vadd.f32 0.0, %v2035
    %2037 = vmatmul.f32.gmra.mxu0 %v1987
    %v2038 = vpop.f32.mrf.mxu0
    %v2039 = vadd.f32 0.0, %v2038
    %2040 = vmatmul.f32.gmra.mxu0 %v1989
    %v2041 = vpop.f32.mrf.mxu0
    %v2042 = vadd.f32 0.0, %v2041
    %2043 = vmatmul.f32.gmra.mxu0 %v1991
    %v2044 = vpop.f32.mrf.mxu0
    %v2045 = vadd.f32 0.0, %v2044
    %2046 = vmatmul.f32.gmra.mxu0 %v1993
    %v2047 = vpop.f32.mrf.mxu0
    %v2048 = vadd.f32 0.0, %v2047
    %2049 = vmatmul.f32.gmra.mxu0 %v1995
    %v2050 = vpop.f32.mrf.mxu0
    %v2051 = vadd.f32 0.0, %v2050
    %2052 = vmatmul.f32.gmra.mxu0 %v1997
    %v2053 = vpop.f32.mrf.mxu0
    %v2054 = vadd.f32 0.0, %v2053
    %2055 = vmatmul.f32.gmra.mxu0 %v1999
    %v2056 = vpop.f32.mrf.mxu0
    %v2057 = vadd.f32 0.0, %v2056
    %2058 = vmatmul.f32.gmra.mxu0 %v2001
    %v2059 = vpop.f32.mrf.mxu0
    %v2060 = vadd.f32 0.0, %v2059
    %2061 = vmatmul.f32.gmra.mxu0 %v2003
    %v2062 = vpop.f32.mrf.mxu0
    %v2063 = vadd.f32 0.0, %v2062
    %2064 = vmatmul.f32.gmra.mxu0 %v2005
    %v2065 = vpop.f32.mrf.mxu0
    %v2066 = vadd.f32 0.0, %v2065
    %2067 = vmatmul.f32.gmra.mxu0 %v2007
    %v2068 = vpop.f32.mrf.mxu0
    %v2069 = vadd.f32 0.0, %v2068
    %2070 = vmatmul.f32.gmra.mxu0 %v2009
    %v2071 = vpop.f32.mrf.mxu0
    %v2072 = vadd.f32 0.0, %v2071
    %2073 = vmatmul.f32.gmra.mxu0 %v2011
    %v2074 = vpop.f32.mrf.mxu0
    %v2075 = vadd.f32 0.0, %v2074
    %2076 = vmatmul.f32.gmra.mxu0 %v2013
    %v2077 = vpop.f32.mrf.mxu0
    %v2078 = vadd.f32 0.0, %v2077
    %2079 = vdwg.mxu0
    %2080 = vmatpush.xpose.msra.mxu0 0.0
    %2081 = vmatpush.xpose.msra.mxu0 0.0
    %2082 = vmatpush.xpose.msra.mxu0 0.0
    %2083 = vmatpush.xpose.msra.mxu0 0.0
    %2084 = vmatpush.xpose.msra.mxu0 0.0
    %2085 = vmatpush.xpose.msra.mxu0 0.0
    %2086 = vmatpush.xpose.msra.mxu0 0.0
    %2087 = vmatpush.xpose.msra.mxu0 0.0
    %2088 = vmatpush.xpose.msra.mxu0 0.0
    %2089 = vmatpush.xpose.msra.mxu0 0.0
    %2090 = vmatpush.xpose.msra.mxu0 0.0
    %2091 = vmatpush.xpose.msra.mxu0 0.0
    %2092 = vmatpush.xpose.msra.mxu0 %v1573
    %2093 = vmatpush.xpose.msra.mxu0 %v1571
    %2094 = vmatpush.xpose.msra.mxu0 %v1569
    %2095 = vmatpush.xpose.msra.mxu0 %v1567
    %2096 = vmatmul.f32.gmra.mxu0 %v1984
    %v2097 = vpop.f32.mrf.mxu0
    %v2098 = vadd.f32 %v2033, %v2097
    %2099 = vmatmul.f32.gmra.mxu0 %v1986
    %v2100 = vpop.f32.mrf.mxu0
    %v2101 = vadd.f32 %v2036, %v2100
    %2102 = vmatmul.f32.gmra.mxu0 %v1988
    %v2103 = vpop.f32.mrf.mxu0
    %v2104 = vadd.f32 %v2039, %v2103
    %2105 = vmatmul.f32.gmra.mxu0 %v1990
    %v2106 = vpop.f32.mrf.mxu0
    %v2107 = vadd.f32 %v2042, %v2106
    %2108 = vmatmul.f32.gmra.mxu0 %v1992
    %v2109 = vpop.f32.mrf.mxu0
    %v2110 = vadd.f32 %v2045, %v2109
    %2111 = vmatmul.f32.gmra.mxu0 %v1994
    %v2112 = vpop.f32.mrf.mxu0
    %v2113 = vadd.f32 %v2048, %v2112
    %2114 = vmatmul.f32.gmra.mxu0 %v1996
    %v2115 = vpop.f32.mrf.mxu0
    %v2116 = vadd.f32 %v2051, %v2115
    %2117 = vmatmul.f32.gmra.mxu0 %v1998
    %v2118 = vpop.f32.mrf.mxu0
    %v2119 = vadd.f32 %v2054, %v2118
    %2120 = vmatmul.f32.gmra.mxu0 %v2000
    %v2121 = vpop.f32.mrf.mxu0
    %v2122 = vadd.f32 %v2057, %v2121
    %2123 = vmatmul.f32.gmra.mxu0 %v2002
    %v2124 = vpop.f32.mrf.mxu0
    %v2125 = vadd.f32 %v2060, %v2124
    %2126 = vmatmul.f32.gmra.mxu0 %v2004
    %v2127 = vpop.f32.mrf.mxu0
    %v2128 = vadd.f32 %v2063, %v2127
    %2129 = vmatmul.f32.gmra.mxu0 %v2006
    %v2130 = vpop.f32.mrf.mxu0
    %v2131 = vadd.f32 %v2066, %v2130
    %2132 = vmatmul.f32.gmra.mxu0 %v2008
    %v2133 = vpop.f32.mrf.mxu0
    %v2134 = vadd.f32 %v2069, %v2133
    %2135 = vmatmul.f32.gmra.mxu0 %v2010
    %v2136 = vpop.f32.mrf.mxu0
    %v2137 = vadd.f32 %v2072, %v2136
    %2138 = vmatmul.f32.gmra.mxu0 %v2012
    %v2139 = vpop.f32.mrf.mxu0
    %v2140 = vadd.f32 %v2075, %v2139
    %2141 = vmatmul.f32.gmra.mxu0 %v2014
    %v2142 = vpop.f32.mrf.mxu0
    %v2143 = vadd.f32 %v2078, %v2142
    %2144 = vdwg.mxu0
    %v2145 = vsub.f32 %v1404, %v2098
    %v2146 = vsub.f32 %v1405, %v2101
    %v2147 = vsub.f32 %v1406, %v2104
    %v2148 = vsub.f32 %v1407, %v2107
    %v2149 = vsub.f32 %v1408, %v2110
    %v2150 = vsub.f32 %v1409, %v2113
    %v2151 = vsub.f32 %v1410, %v2116
    %v2152 = vsub.f32 %v1411, %v2119
    %v2153 = vsub.f32 %v1412, %v2122
    %v2154 = vsub.f32 %v1413, %v2125
    %v2155 = vsub.f32 %v1414, %v2128
    %v2156 = vsub.f32 %v1415, %v2131
    %v2157 = vsub.f32 %v1416, %v2134
    %v2158 = vsub.f32 %v1417, %v2137
    %v2159 = vsub.f32 %v1418, %v2140
    %v2160 = vsub.f32 %v1419, %v2143
    %v2161 = vmul.f32 %v2145, %v2145
    %v2162 = vmul.f32 %v2146, %v2146
    %v2163 = vmul.f32 %v2147, %v2147
    %v2164 = vmul.f32 %v2148, %v2148
    %v2165 = vmul.f32 %v2149, %v2149
    %v2166 = vmul.f32 %v2150, %v2150
    %v2167 = vmul.f32 %v2151, %v2151
    %v2168 = vmul.f32 %v2152, %v2152
    %v2169 = vmul.f32 %v2153, %v2153
    %v2170 = vmul.f32 %v2154, %v2154
    %v2171 = vmul.f32 %v2155, %v2155
    %v2172 = vmul.f32 %v2156, %v2156
    %v2173 = vmul.f32 %v2157, %v2157
    %v2174 = vmul.f32 %v2158, %v2158
    %v2175 = vmul.f32 %v2159, %v2159
    %v2176 = vmul.f32 %v2160, %v2160
    %v2177 = vsel %vm63, %v2161, 0.0
    %2178 = vadd.xlane.f32.xlu0 %v2177
    %v2179 = vpop.xlane.xlu0 %2178
    %v2180 = vsel %vm63, %v2162, 0.0
    %2181 = vadd.xlane.f32.xlu0 %v2180
    %v2182 = vpop.xlane.xlu0 %2181
    %v2183 = vsel %vm63, %v2163, 0.0
    %2184 = vadd.xlane.f32.xlu0 %v2183
    %v2185 = vpop.xlane.xlu0 %2184
    %v2186 = vsel %vm63, %v2164, 0.0
    %2187 = vadd.xlane.f32.xlu0 %v2186
    %v2188 = vpop.xlane.xlu0 %2187
    %v2189 = vsel %vm63, %v2165, 0.0
    %2190 = vadd.xlane.f32.xlu0 %v2189
    %v2191 = vpop.xlane.xlu0 %2190
    %v2192 = vsel %vm63, %v2166, 0.0
    %2193 = vadd.xlane.f32.xlu0 %v2192
    %v2194 = vpop.xlane.xlu0 %2193
    %v2195 = vsel %vm63, %v2167, 0.0
    %2196 = vadd.xlane.f32.xlu0 %v2195
    %v2197 = vpop.xlane.xlu0 %2196
    %v2198 = vsel %vm63, %v2168, 0.0
    %2199 = vadd.xlane.f32.xlu0 %v2198
    %v2200 = vpop.xlane.xlu0 %2199
    %v2201 = vsel %vm63, %v2169, 0.0
    %2202 = vadd.xlane.f32.xlu0 %v2201
    %v2203 = vpop.xlane.xlu0 %2202
    %v2204 = vsel %vm63, %v2170, 0.0
    %2205 = vadd.xlane.f32.xlu0 %v2204
    %v2206 = vpop.xlane.xlu0 %2205
    %v2207 = vsel %vm63, %v2171, 0.0
    %2208 = vadd.xlane.f32.xlu0 %v2207
    %v2209 = vpop.xlane.xlu0 %2208
    %v2210 = vsel %vm63, %v2172, 0.0
    %2211 = vadd.xlane.f32.xlu0 %v2210
    %v2212 = vpop.xlane.xlu0 %2211
    %v2213 = vsel %vm63, %v2173, 0.0
    %2214 = vadd.xlane.f32.xlu0 %v2213
    %v2215 = vpop.xlane.xlu0 %2214
    %v2216 = vsel %vm63, %v2174, 0.0
    %2217 = vadd.xlane.f32.xlu0 %v2216
    %v2218 = vpop.xlane.xlu0 %2217
    %v2219 = vsel %vm63, %v2175, 0.0
    %2220 = vadd.xlane.f32.xlu0 %v2219
    %v2221 = vpop.xlane.xlu0 %2220
    %v2222 = vsel %vm63, %v2176, 0.0
    %2223 = vadd.xlane.f32.xlu0 %v2222
    %v2224 = vpop.xlane.xlu0 %2223
    %v2225 = vperm.slane %v1798, %v36
    %v2226 = vperm.slane %v1806, %v714
    %v2227 = vsel %vm716, %v2226, %v2225
    %v2228 = vperm.slane %v1814, %v718
    %v2229 = vsel %vm720, %v2228, %v2227
    %v2230 = vperm.slane %v1822, %v722
    %v2231 = vsel %vm724, %v2230, %v2229
    %v2232 = vperm.slane %v1830, %v726
    %v2233 = vsel %vm728, %v2232, %v2231
    %v2234 = vperm.slane %v1838, %v730
    %v2235 = vsel %vm732, %v2234, %v2233
    %v2236 = vperm.slane %v1846, %v734
    %v2237 = vsel %vm736, %v2236, %v2235
    %v2238 = vperm.slane %v1854, %v738
    %v2239 = vsel %vm740, %v2238, %v2237
    %v2240 = vperm.slane %v1862, %v742
    %v2241 = vsel %vm744, %v2240, %v2239
    %v2242 = vperm.slane %v1870, %v746
    %v2243 = vsel %vm748, %v2242, %v2241
    %v2244 = vperm.slane %v1878, %v750
    %v2245 = vsel %vm752, %v2244, %v2243
    %v2246 = vperm.slane %v1886, %v754
    %v2247 = vsel %vm756, %v2246, %v2245
    %v2248 = vperm.slane %v1894, %v758
    %v2249 = vsel %vm760, %v2248, %v2247
    %v2250 = vperm.slane %v1902, %v762
    %v2251 = vsel %vm764, %v2250, %v2249
    %v2252 = vperm.slane %v1910, %v766
    %v2253 = vsel %vm768, %v2252, %v2251
    %v2254 = vperm.slane %v1918, %v770
    %v2255 = vsel %vm772, %v2254, %v2253
    %2256 = vst [vmem:[#allocation5 + $0x2] sm:$0x1] %v2255
    %v2273 = vperm.slane %v2179, %v36
    %v2274 = vperm.slane %v2182, %v714
    %v2275 = vsel %vm716, %v2274, %v2273
    %v2276 = vperm.slane %v2185, %v718
    %v2277 = vsel %vm720, %v2276, %v2275
    %v2278 = vperm.slane %v2188, %v722
    %v2279 = vsel %vm724, %v2278, %v2277
    %v2280 = vperm.slane %v2191, %v726
    %v2281 = vsel %vm728, %v2280, %v2279
    %v2282 = vperm.slane %v2194, %v730
    %v2283 = vsel %vm732, %v2282, %v2281
    %v2284 = vperm.slane %v2197, %v734
    %v2285 = vsel %vm736, %v2284, %v2283
    %v2286 = vperm.slane %v2200, %v738
    %v2287 = vsel %vm740, %v2286, %v2285
    %v2288 = vperm.slane %v2203, %v742
    %v2289 = vsel %vm744, %v2288, %v2287
    %v2290 = vperm.slane %v2206, %v746
    %v2291 = vsel %vm748, %v2290, %v2289
    %v2292 = vperm.slane %v2209, %v750
    %v2293 = vsel %vm752, %v2292, %v2291
    %v2294 = vperm.slane %v2212, %v754
    %v2295 = vsel %vm756, %v2294, %v2293
    %v2296 = vperm.slane %v2215, %v758
    %v2297 = vsel %vm760, %v2296, %v2295
    %v2298 = vperm.slane %v2218, %v762
    %v2299 = vsel %vm764, %v2298, %v2297
    %v2300 = vperm.slane %v2221, %v766
    %v2301 = vsel %vm768, %v2300, %v2299
    %v2302 = vperm.slane %v2224, %v770
    %v2303 = vsel %vm772, %v2302, %v2301
    %2305 = vst [vmem:[#allocation6 + $0x2] sm:$0x1] %v2303
    %s2306 = scalar_lea.vmem [#allocation2], 192
    %v2307 = vld [vmem:[%s2306] sm:$0xff]
    %v2308 = vld [vmem:[%s2306 + $0x8] sm:$0xff]
    %v2309 = vld [vmem:[%s2306 + $0x10] sm:$0xff]
    %v2310 = vld [vmem:[%s2306 + $0x18] sm:$0xff]
    %v2311 = vld [vmem:[%s2306 + $0x20] sm:$0xff]
    %v2312 = vld [vmem:[%s2306 + $0x28] sm:$0xff]
    %v2313 = vld [vmem:[%s2306 + $0x30] sm:$0xff]
    %v2314 = vld [vmem:[%s2306 + $0x38] sm:$0xff]
    %s2315 = scalar_lea.vmem %s2, 6
    %v2316 = vld [vmem:[%s2315] sm:$0x3]
    %v2318 = vsel %vm63, %v2145, 0
    %v2321 = vsel %vm63, %v2146, 0
    %v2324 = vsel %vm63, %v2147, 0
    %v2327 = vsel %vm63, %v2148, 0
    %v2330 = vsel %vm63, %v2149, 0
    %v2333 = vsel %vm63, %v2150, 0
    %v2336 = vsel %vm63, %v2151, 0
    %v2339 = vsel %vm63, %v2152, 0
    %v2342 = vsel %vm63, %v2153, 0
    %v2345 = vsel %vm63, %v2154, 0
    %v2348 = vsel %vm63, %v2155, 0
    %v2351 = vsel %vm63, %v2156, 0
    %v2354 = vsel %vm63, %v2157, 0
    %v2357 = vsel %vm63, %v2158, 0
    %v2360 = vsel %vm63, %v2159, 0
    %v2363 = vsel %vm63, %v2160, 0
    %2365 = vmatpush.msra.mxu0 0.0
    %2366 = vmatpush.msra.mxu0 0.0
    %2367 = vmatpush.msra.mxu0 0.0
    %2368 = vmatpush.msra.mxu0 0.0
    %2369 = vmatpush.msra.mxu0 0.0
    %2370 = vmatpush.msra.mxu0 0.0
    %2371 = vmatpush.msra.mxu0 0.0
    %2372 = vmatpush.msra.mxu0 0.0
    %2373 = vmatpush.msra.mxu0 0.0
    %2374 = vmatpush.msra.mxu0 0.0
    %2375 = vmatpush.msra.mxu0 0.0
    %2376 = vmatpush.msra.mxu0 0.0
    %2377 = vmatpush.msra.mxu0 %v2313
    %2378 = vmatpush.msra.mxu0 %v2311
    %2379 = vmatpush.msra.mxu0 %v2309
    %2380 = vmatpush.msra.mxu0 %v2307
    %2381 = vmatmul.f32.gmra.mxu0 %v2318
    %v2382 = vpop.f32.mrf.mxu0
    %v2383 = vadd.f32 0.0, %v2382
    %2384 = vmatmul.f32.gmra.mxu0 %v2321
    %v2385 = vpop.f32.mrf.mxu0
    %v2386 = vadd.f32 0.0, %v2385
    %2387 = vmatmul.f32.gmra.mxu0 %v2324
    %v2388 = vpop.f32.mrf.mxu0
    %v2389 = vadd.f32 0.0, %v2388
    %2390 = vmatmul.f32.gmra.mxu0 %v2327
    %v2391 = vpop.f32.mrf.mxu0
    %v2392 = vadd.f32 0.0, %v2391
    %2393 = vmatmul.f32.gmra.mxu0 %v2330
    %v2394 = vpop.f32.mrf.mxu0
    %v2395 = vadd.f32 0.0, %v2394
    %2396 = vmatmul.f32.gmra.mxu0 %v2333
    %v2397 = vpop.f32.mrf.mxu0
    %v2398 = vadd.f32 0.0, %v2397
    %2399 = vmatmul.f32.gmra.mxu0 %v2336
    %v2400 = vpop.f32.mrf.mxu0
    %v2401 = vadd.f32 0.0, %v2400
    %2402 = vmatmul.f32.gmra.mxu0 %v2339
    %v2403 = vpop.f32.mrf.mxu0
    %v2404 = vadd.f32 0.0, %v2403
    %2405 = vmatmul.f32.gmra.mxu0 %v2342
    %v2406 = vpop.f32.mrf.mxu0
    %v2407 = vadd.f32 0.0, %v2406
    %2408 = vmatmul.f32.gmra.mxu0 %v2345
    %v2409 = vpop.f32.mrf.mxu0
    %v2410 = vadd.f32 0.0, %v2409
    %2411 = vmatmul.f32.gmra.mxu0 %v2348
    %v2412 = vpop.f32.mrf.mxu0
    %v2413 = vadd.f32 0.0, %v2412
    %2414 = vmatmul.f32.gmra.mxu0 %v2351
    %v2415 = vpop.f32.mrf.mxu0
    %v2416 = vadd.f32 0.0, %v2415
    %2417 = vmatmul.f32.gmra.mxu0 %v2354
    %v2418 = vpop.f32.mrf.mxu0
    %v2419 = vadd.f32 0.0, %v2418
    %2420 = vmatmul.f32.gmra.mxu0 %v2357
    %v2421 = vpop.f32.mrf.mxu0
    %v2422 = vadd.f32 0.0, %v2421
    %2423 = vmatmul.f32.gmra.mxu0 %v2360
    %v2424 = vpop.f32.mrf.mxu0
    %v2425 = vadd.f32 0.0, %v2424
    %2426 = vmatmul.f32.gmra.mxu0 %v2363
    %v2427 = vpop.f32.mrf.mxu0
    %v2428 = vadd.f32 0.0, %v2427
    %2429 = vdwg.mxu0
    %2430 = vmatpush.msra.mxu0 0.0
    %2431 = vmatpush.msra.mxu0 0.0
    %2432 = vmatpush.msra.mxu0 0.0
    %2433 = vmatpush.msra.mxu0 0.0
    %2434 = vmatpush.msra.mxu0 0.0
    %2435 = vmatpush.msra.mxu0 0.0
    %2436 = vmatpush.msra.mxu0 0.0
    %2437 = vmatpush.msra.mxu0 0.0
    %2438 = vmatpush.msra.mxu0 0.0
    %2439 = vmatpush.msra.mxu0 0.0
    %2440 = vmatpush.msra.mxu0 0.0
    %2441 = vmatpush.msra.mxu0 0.0
    %2442 = vmatpush.msra.mxu0 %v2314
    %2443 = vmatpush.msra.mxu0 %v2312
    %2444 = vmatpush.msra.mxu0 %v2310
    %2445 = vmatpush.msra.mxu0 %v2308
    %2446 = vmatmul.f32.gmra.mxu0 %v2318
    %v2447 = vpop.f32.mrf.mxu0
    %v2448 = vadd.f32 0.0, %v2447
    %2449 = vmatmul.f32.gmra.mxu0 %v2321
    %v2450 = vpop.f32.mrf.mxu0
    %v2451 = vadd.f32 0.0, %v2450
    %2452 = vmatmul.f32.gmra.mxu0 %v2324
    %v2453 = vpop.f32.mrf.mxu0
    %v2454 = vadd.f32 0.0, %v2453
    %2455 = vmatmul.f32.gmra.mxu0 %v2327
    %v2456 = vpop.f32.mrf.mxu0
    %v2457 = vadd.f32 0.0, %v2456
    %2458 = vmatmul.f32.gmra.mxu0 %v2330
    %v2459 = vpop.f32.mrf.mxu0
    %v2460 = vadd.f32 0.0, %v2459
    %2461 = vmatmul.f32.gmra.mxu0 %v2333
    %v2462 = vpop.f32.mrf.mxu0
    %v2463 = vadd.f32 0.0, %v2462
    %2464 = vmatmul.f32.gmra.mxu0 %v2336
    %v2465 = vpop.f32.mrf.mxu0
    %v2466 = vadd.f32 0.0, %v2465
    %2467 = vmatmul.f32.gmra.mxu0 %v2339
    %v2468 = vpop.f32.mrf.mxu0
    %v2469 = vadd.f32 0.0, %v2468
    %2470 = vmatmul.f32.gmra.mxu0 %v2342
    %v2471 = vpop.f32.mrf.mxu0
    %v2472 = vadd.f32 0.0, %v2471
    %2473 = vmatmul.f32.gmra.mxu0 %v2345
    %v2474 = vpop.f32.mrf.mxu0
    %v2475 = vadd.f32 0.0, %v2474
    %2476 = vmatmul.f32.gmra.mxu0 %v2348
    %v2477 = vpop.f32.mrf.mxu0
    %v2478 = vadd.f32 0.0, %v2477
    %2479 = vmatmul.f32.gmra.mxu0 %v2351
    %v2480 = vpop.f32.mrf.mxu0
    %v2481 = vadd.f32 0.0, %v2480
    %2482 = vmatmul.f32.gmra.mxu0 %v2354
    %v2483 = vpop.f32.mrf.mxu0
    %v2484 = vadd.f32 0.0, %v2483
    %2485 = vmatmul.f32.gmra.mxu0 %v2357
    %v2486 = vpop.f32.mrf.mxu0
    %v2487 = vadd.f32 0.0, %v2486
    %2488 = vmatmul.f32.gmra.mxu0 %v2360
    %v2489 = vpop.f32.mrf.mxu0
    %v2490 = vadd.f32 0.0, %v2489
    %2491 = vmatmul.f32.gmra.mxu0 %v2363
    %v2492 = vpop.f32.mrf.mxu0
    %v2493 = vadd.f32 0.0, %v2492
    %2494 = vdwg.mxu0
    %v2496 = vperm.slane %v2316, 0
    %v2497 = vperm.slane %v2316, 1
    %v2500 = vsub.f32 %v2383, %v2496
    %v2501 = vsub.f32 %v2448, %v2497
    %v2502 = vsub.f32 %v2386, %v2496
    %v2503 = vsub.f32 %v2451, %v2497
    %v2504 = vsub.f32 %v2389, %v2496
    %v2505 = vsub.f32 %v2454, %v2497
    %v2506 = vsub.f32 %v2392, %v2496
    %v2507 = vsub.f32 %v2457, %v2497
    %v2508 = vsub.f32 %v2395, %v2496
    %v2509 = vsub.f32 %v2460, %v2497
    %v2510 = vsub.f32 %v2398, %v2496
    %v2511 = vsub.f32 %v2463, %v2497
    %v2512 = vsub.f32 %v2401, %v2496
    %v2513 = vsub.f32 %v2466, %v2497
    %v2514 = vsub.f32 %v2404, %v2496
    %v2515 = vsub.f32 %v2469, %v2497
    %v2516 = vsub.f32 %v2407, %v2496
    %v2517 = vsub.f32 %v2472, %v2497
    %v2518 = vsub.f32 %v2410, %v2496
    %v2519 = vsub.f32 %v2475, %v2497
    %v2520 = vsub.f32 %v2413, %v2496
    %v2521 = vsub.f32 %v2478, %v2497
    %v2522 = vsub.f32 %v2416, %v2496
    %v2523 = vsub.f32 %v2481, %v2497
    %v2524 = vsub.f32 %v2419, %v2496
    %v2525 = vsub.f32 %v2484, %v2497
    %v2526 = vsub.f32 %v2422, %v2496
    %v2527 = vsub.f32 %v2487, %v2497
    %v2528 = vsub.f32 %v2425, %v2496
    %v2529 = vsub.f32 %v2490, %v2497
    %v2530 = vsub.f32 %v2428, %v2496
    %v2531 = vsub.f32 %v2493, %v2497
    %vm2532 = vcmp.ge.f32.partialorder %v2500, %v2501
    %v2533 = vsel %vm2532, %v2500, %v2501
    %v2534 = vsel %vm2532, %v36, %v37
    %2535 = vmax.index.xlane.f32.xlu0 %v2533
    %v2536 = vpop.xlane.xlu0 %2535
    %2537 = vset.pattern.permute.xlu0 %v2536
    %2538 = vperm.xlu0 %2537, %v2534
    %v2539 = vpop.permute.xlu0 %2538
    %vm2540 = vcmp.ge.f32.partialorder %v2502, %v2503
    %v2541 = vsel %vm2540, %v2502, %v2503
    %v2542 = vsel %vm2540, %v36, %v37
    %2543 = vmax.index.xlane.f32.xlu0 %v2541
    %v2544 = vpop.xlane.xlu0 %2543
    %2545 = vset.pattern.permute.xlu0 %v2544
    %2546 = vperm.xlu0 %2545, %v2542
    %v2547 = vpop.permute.xlu0 %2546
    %vm2548 = vcmp.ge.f32.partialorder %v2504, %v2505
    %v2549 = vsel %vm2548, %v2504, %v2505
    %v2550 = vsel %vm2548, %v36, %v37
    %2551 = vmax.index.xlane.f32.xlu0 %v2549
    %v2552 = vpop.xlane.xlu0 %2551
    %2553 = vset.pattern.permute.xlu0 %v2552
    %2554 = vperm.xlu0 %2553, %v2550
    %v2555 = vpop.permute.xlu0 %2554
    %vm2556 = vcmp.ge.f32.partialorder %v2506, %v2507
    %v2557 = vsel %vm2556, %v2506, %v2507
    %v2558 = vsel %vm2556, %v36, %v37
    %2559 = vmax.index.xlane.f32.xlu0 %v2557
    %v2560 = vpop.xlane.xlu0 %2559
    %2561 = vset.pattern.permute.xlu0 %v2560
    %2562 = vperm.xlu0 %2561, %v2558
    %v2563 = vpop.permute.xlu0 %2562
    %vm2564 = vcmp.ge.f32.partialorder %v2508, %v2509
    %v2565 = vsel %vm2564, %v2508, %v2509
    %v2566 = vsel %vm2564, %v36, %v37
    %2567 = vmax.index.xlane.f32.xlu0 %v2565
    %v2568 = vpop.xlane.xlu0 %2567
    %2569 = vset.pattern.permute.xlu0 %v2568
    %2570 = vperm.xlu0 %2569, %v2566
    %v2571 = vpop.permute.xlu0 %2570
    %vm2572 = vcmp.ge.f32.partialorder %v2510, %v2511
    %v2573 = vsel %vm2572, %v2510, %v2511
    %v2574 = vsel %vm2572, %v36, %v37
    %2575 = vmax.index.xlane.f32.xlu0 %v2573
    %v2576 = vpop.xlane.xlu0 %2575
    %2577 = vset.pattern.permute.xlu0 %v2576
    %2578 = vperm.xlu0 %2577, %v2574
    %v2579 = vpop.permute.xlu0 %2578
    %vm2580 = vcmp.ge.f32.partialorder %v2512, %v2513
    %v2581 = vsel %vm2580, %v2512, %v2513
    %v2582 = vsel %vm2580, %v36, %v37
    %2583 = vmax.index.xlane.f32.xlu0 %v2581
    %v2584 = vpop.xlane.xlu0 %2583
    %2585 = vset.pattern.permute.xlu0 %v2584
    %2586 = vperm.xlu0 %2585, %v2582
    %v2587 = vpop.permute.xlu0 %2586
    %vm2588 = vcmp.ge.f32.partialorder %v2514, %v2515
    %v2589 = vsel %vm2588, %v2514, %v2515
    %v2590 = vsel %vm2588, %v36, %v37
    %2591 = vmax.index.xlane.f32.xlu0 %v2589
    %v2592 = vpop.xlane.xlu0 %2591
    %2593 = vset.pattern.permute.xlu0 %v2592
    %2594 = vperm.xlu0 %2593, %v2590
    %v2595 = vpop.permute.xlu0 %2594
    %vm2596 = vcmp.ge.f32.partialorder %v2516, %v2517
    %v2597 = vsel %vm2596, %v2516, %v2517
    %v2598 = vsel %vm2596, %v36, %v37
    %2599 = vmax.index.xlane.f32.xlu0 %v2597
    %v2600 = vpop.xlane.xlu0 %2599
    %2601 = vset.pattern.permute.xlu0 %v2600
    %2602 = vperm.xlu0 %2601, %v2598
    %v2603 = vpop.permute.xlu0 %2602
    %vm2604 = vcmp.ge.f32.partialorder %v2518, %v2519
    %v2605 = vsel %vm2604, %v2518, %v2519
    %v2606 = vsel %vm2604, %v36, %v37
    %2607 = vmax.index.xlane.f32.xlu0 %v2605
    %v2608 = vpop.xlane.xlu0 %2607
    %2609 = vset.pattern.permute.xlu0 %v2608
    %2610 = vperm.xlu0 %2609, %v2606
    %v2611 = vpop.permute.xlu0 %2610
    %vm2612 = vcmp.ge.f32.partialorder %v2520, %v2521
    %v2613 = vsel %vm2612, %v2520, %v2521
    %v2614 = vsel %vm2612, %v36, %v37
    %2615 = vmax.index.xlane.f32.xlu0 %v2613
    %v2616 = vpop.xlane.xlu0 %2615
    %2617 = vset.pattern.permute.xlu0 %v2616
    %2618 = vperm.xlu0 %2617, %v2614
    %v2619 = vpop.permute.xlu0 %2618
    %vm2620 = vcmp.ge.f32.partialorder %v2522, %v2523
    %v2621 = vsel %vm2620, %v2522, %v2523
    %v2622 = vsel %vm2620, %v36, %v37
    %2623 = vmax.index.xlane.f32.xlu0 %v2621
    %v2624 = vpop.xlane.xlu0 %2623
    %2625 = vset.pattern.permute.xlu0 %v2624
    %2626 = vperm.xlu0 %2625, %v2622
    %v2627 = vpop.permute.xlu0 %2626
    %vm2628 = vcmp.ge.f32.partialorder %v2524, %v2525
    %v2629 = vsel %vm2628, %v2524, %v2525
    %v2630 = vsel %vm2628, %v36, %v37
    %2631 = vmax.index.xlane.f32.xlu0 %v2629
    %v2632 = vpop.xlane.xlu0 %2631
    %2633 = vset.pattern.permute.xlu0 %v2632
    %2634 = vperm.xlu0 %2633, %v2630
    %v2635 = vpop.permute.xlu0 %2634
    %vm2636 = vcmp.ge.f32.partialorder %v2526, %v2527
    %v2637 = vsel %vm2636, %v2526, %v2527
    %v2638 = vsel %vm2636, %v36, %v37
    %2639 = vmax.index.xlane.f32.xlu0 %v2637
    %v2640 = vpop.xlane.xlu0 %2639
    %2641 = vset.pattern.permute.xlu0 %v2640
    %2642 = vperm.xlu0 %2641, %v2638
    %v2643 = vpop.permute.xlu0 %2642
    %vm2644 = vcmp.ge.f32.partialorder %v2528, %v2529
    %v2645 = vsel %vm2644, %v2528, %v2529
    %v2646 = vsel %vm2644, %v36, %v37
    %2647 = vmax.index.xlane.f32.xlu0 %v2645
    %v2648 = vpop.xlane.xlu0 %2647
    %2649 = vset.pattern.permute.xlu0 %v2648
    %2650 = vperm.xlu0 %2649, %v2646
    %v2651 = vpop.permute.xlu0 %2650
    %vm2652 = vcmp.ge.f32.partialorder %v2530, %v2531
    %v2653 = vsel %vm2652, %v2530, %v2531
    %v2654 = vsel %vm2652, %v36, %v37
    %2655 = vmax.index.xlane.f32.xlu0 %v2653
    %v2656 = vpop.xlane.xlu0 %2655
    %2657 = vset.pattern.permute.xlu0 %v2656
    %2658 = vperm.xlu0 %2657, %v2654
    %v2659 = vpop.permute.xlu0 %2658
    %vm2660 = vcmp.eq.s32.totalorder %v36, %v2539
    %vm2661 = vcmp.eq.s32.totalorder %v37, %v2539
    %vm2662 = vcmp.eq.s32.totalorder %v36, %v2547
    %vm2663 = vcmp.eq.s32.totalorder %v37, %v2547
    %vm2664 = vcmp.eq.s32.totalorder %v36, %v2555
    %vm2665 = vcmp.eq.s32.totalorder %v37, %v2555
    %vm2666 = vcmp.eq.s32.totalorder %v36, %v2563
    %vm2667 = vcmp.eq.s32.totalorder %v37, %v2563
    %vm2668 = vcmp.eq.s32.totalorder %v36, %v2571
    %vm2669 = vcmp.eq.s32.totalorder %v37, %v2571
    %vm2670 = vcmp.eq.s32.totalorder %v36, %v2579
    %vm2671 = vcmp.eq.s32.totalorder %v37, %v2579
    %vm2672 = vcmp.eq.s32.totalorder %v36, %v2587
    %vm2673 = vcmp.eq.s32.totalorder %v37, %v2587
    %vm2674 = vcmp.eq.s32.totalorder %v36, %v2595
    %vm2675 = vcmp.eq.s32.totalorder %v37, %v2595
    %vm2676 = vcmp.eq.s32.totalorder %v36, %v2603
    %vm2677 = vcmp.eq.s32.totalorder %v37, %v2603
    %vm2678 = vcmp.eq.s32.totalorder %v36, %v2611
    %vm2679 = vcmp.eq.s32.totalorder %v37, %v2611
    %vm2680 = vcmp.eq.s32.totalorder %v36, %v2619
    %vm2681 = vcmp.eq.s32.totalorder %v37, %v2619
    %vm2682 = vcmp.eq.s32.totalorder %v36, %v2627
    %vm2683 = vcmp.eq.s32.totalorder %v37, %v2627
    %vm2684 = vcmp.eq.s32.totalorder %v36, %v2635
    %vm2685 = vcmp.eq.s32.totalorder %v37, %v2635
    %vm2686 = vcmp.eq.s32.totalorder %v36, %v2643
    %vm2687 = vcmp.eq.s32.totalorder %v37, %v2643
    %vm2688 = vcmp.eq.s32.totalorder %v36, %v2651
    %vm2689 = vcmp.eq.s32.totalorder %v37, %v2651
    %vm2690 = vcmp.eq.s32.totalorder %v36, %v2659
    %vm2691 = vcmp.eq.s32.totalorder %v37, %v2659
    %v2692 = vsel %vm2660, 1, 0
    %v2693 = vsel %vm2661, 1, 0
    %v2694 = vsel %vm2662, 1, 0
    %v2695 = vsel %vm2663, 1, 0
    %v2696 = vsel %vm2664, 1, 0
    %v2697 = vsel %vm2665, 1, 0
    %v2698 = vsel %vm2666, 1, 0
    %v2699 = vsel %vm2667, 1, 0
    %v2700 = vsel %vm2668, 1, 0
    %v2701 = vsel %vm2669, 1, 0
    %v2702 = vsel %vm2670, 1, 0
    %v2703 = vsel %vm2671, 1, 0
    %v2704 = vsel %vm2672, 1, 0
    %v2705 = vsel %vm2673, 1, 0
    %v2706 = vsel %vm2674, 1, 0
    %v2707 = vsel %vm2675, 1, 0
    %v2708 = vsel %vm2676, 1, 0
    %v2709 = vsel %vm2677, 1, 0
    %v2710 = vsel %vm2678, 1, 0
    %v2711 = vsel %vm2679, 1, 0
    %v2712 = vsel %vm2680, 1, 0
    %v2713 = vsel %vm2681, 1, 0
    %v2714 = vsel %vm2682, 1, 0
    %v2715 = vsel %vm2683, 1, 0
    %v2716 = vsel %vm2684, 1, 0
    %v2717 = vsel %vm2685, 1, 0
    %v2718 = vsel %vm2686, 1, 0
    %v2719 = vsel %vm2687, 1, 0
    %v2720 = vsel %vm2688, 1, 0
    %v2721 = vsel %vm2689, 1, 0
    %v2722 = vsel %vm2690, 1, 0
    %v2723 = vsel %vm2691, 1, 0
    %v2724 = vcvt.s32.f32 %v2692
    %v2725 = vcvt.s32.f32 %v2693
    %v2726 = vcvt.s32.f32 %v2694
    %v2727 = vcvt.s32.f32 %v2695
    %v2728 = vcvt.s32.f32 %v2696
    %v2729 = vcvt.s32.f32 %v2697
    %v2730 = vcvt.s32.f32 %v2698
    %v2731 = vcvt.s32.f32 %v2699
    %v2732 = vcvt.s32.f32 %v2700
    %v2733 = vcvt.s32.f32 %v2701
    %v2734 = vcvt.s32.f32 %v2702
    %v2735 = vcvt.s32.f32 %v2703
    %v2736 = vcvt.s32.f32 %v2704
    %v2737 = vcvt.s32.f32 %v2705
    %v2738 = vcvt.s32.f32 %v2706
    %v2739 = vcvt.s32.f32 %v2707
    %v2740 = vcvt.s32.f32 %v2708
    %v2741 = vcvt.s32.f32 %v2709
    %v2742 = vcvt.s32.f32 %v2710
    %v2743 = vcvt.s32.f32 %v2711
    %v2744 = vcvt.s32.f32 %v2712
    %v2745 = vcvt.s32.f32 %v2713
    %v2746 = vcvt.s32.f32 %v2714
    %v2747 = vcvt.s32.f32 %v2715
    %v2748 = vcvt.s32.f32 %v2716
    %v2749 = vcvt.s32.f32 %v2717
    %v2750 = vcvt.s32.f32 %v2718
    %v2751 = vcvt.s32.f32 %v2719
    %v2752 = vcvt.s32.f32 %v2720
    %v2753 = vcvt.s32.f32 %v2721
    %v2754 = vcvt.s32.f32 %v2722
    %v2755 = vcvt.s32.f32 %v2723
    %2756 = vmatpush.xpose.msra.mxu0 0.0
    %2757 = vmatpush.xpose.msra.mxu0 0.0
    %2758 = vmatpush.xpose.msra.mxu0 0.0
    %2759 = vmatpush.xpose.msra.mxu0 0.0
    %2760 = vmatpush.xpose.msra.mxu0 0.0
    %2761 = vmatpush.xpose.msra.mxu0 0.0
    %2762 = vmatpush.xpose.msra.mxu0 0.0
    %2763 = vmatpush.xpose.msra.mxu0 0.0
    %2764 = vmatpush.xpose.msra.mxu0 0.0
    %2765 = vmatpush.xpose.msra.mxu0 0.0
    %2766 = vmatpush.xpose.msra.mxu0 0.0
    %2767 = vmatpush.xpose.msra.mxu0 0.0
    %2768 = vmatpush.xpose.msra.mxu0 %v2313
    %2769 = vmatpush.xpose.msra.mxu0 %v2311
    %2770 = vmatpush.xpose.msra.mxu0 %v2309
    %2771 = vmatpush.xpose.msra.mxu0 %v2307
    %2772 = vmatmul.f32.gmra.mxu0 %v2724
    %v2773 = vpop.f32.mrf.mxu0
    %v2774 = vadd.f32 0.0, %v2773
    %2775 = vmatmul.f32.gmra.mxu0 %v2726
    %v2776 = vpop.f32.mrf.mxu0
    %v2777 = vadd.f32 0.0, %v2776
    %2778 = vmatmul.f32.gmra.mxu0 %v2728
    %v2779 = vpop.f32.mrf.mxu0
    %v2780 = vadd.f32 0.0, %v2779
    %2781 = vmatmul.f32.gmra.mxu0 %v2730
    %v2782 = vpop.f32.mrf.mxu0
    %v2783 = vadd.f32 0.0, %v2782
    %2784 = vmatmul.f32.gmra.mxu0 %v2732
    %v2785 = vpop.f32.mrf.mxu0
    %v2786 = vadd.f32 0.0, %v2785
    %2787 = vmatmul.f32.gmra.mxu0 %v2734
    %v2788 = vpop.f32.mrf.mxu0
    %v2789 = vadd.f32 0.0, %v2788
    %2790 = vmatmul.f32.gmra.mxu0 %v2736
    %v2791 = vpop.f32.mrf.mxu0
    %v2792 = vadd.f32 0.0, %v2791
    %2793 = vmatmul.f32.gmra.mxu0 %v2738
    %v2794 = vpop.f32.mrf.mxu0
    %v2795 = vadd.f32 0.0, %v2794
    %2796 = vmatmul.f32.gmra.mxu0 %v2740
    %v2797 = vpop.f32.mrf.mxu0
    %v2798 = vadd.f32 0.0, %v2797
    %2799 = vmatmul.f32.gmra.mxu0 %v2742
    %v2800 = vpop.f32.mrf.mxu0
    %v2801 = vadd.f32 0.0, %v2800
    %2802 = vmatmul.f32.gmra.mxu0 %v2744
    %v2803 = vpop.f32.mrf.mxu0
    %v2804 = vadd.f32 0.0, %v2803
    %2805 = vmatmul.f32.gmra.mxu0 %v2746
    %v2806 = vpop.f32.mrf.mxu0
    %v2807 = vadd.f32 0.0, %v2806
    %2808 = vmatmul.f32.gmra.mxu0 %v2748
    %v2809 = vpop.f32.mrf.mxu0
    %v2810 = vadd.f32 0.0, %v2809
    %2811 = vmatmul.f32.gmra.mxu0 %v2750
    %v2812 = vpop.f32.mrf.mxu0
    %v2813 = vadd.f32 0.0, %v2812
    %2814 = vmatmul.f32.gmra.mxu0 %v2752
    %v2815 = vpop.f32.mrf.mxu0
    %v2816 = vadd.f32 0.0, %v2815
    %2817 = vmatmul.f32.gmra.mxu0 %v2754
    %v2818 = vpop.f32.mrf.mxu0
    %v2819 = vadd.f32 0.0, %v2818
    %2820 = vdwg.mxu0
    %2821 = vmatpush.xpose.msra.mxu0 0.0
    %2822 = vmatpush.xpose.msra.mxu0 0.0
    %2823 = vmatpush.xpose.msra.mxu0 0.0
    %2824 = vmatpush.xpose.msra.mxu0 0.0
    %2825 = vmatpush.xpose.msra.mxu0 0.0
    %2826 = vmatpush.xpose.msra.mxu0 0.0
    %2827 = vmatpush.xpose.msra.mxu0 0.0
    %2828 = vmatpush.xpose.msra.mxu0 0.0
    %2829 = vmatpush.xpose.msra.mxu0 0.0
    %2830 = vmatpush.xpose.msra.mxu0 0.0
    %2831 = vmatpush.xpose.msra.mxu0 0.0
    %2832 = vmatpush.xpose.msra.mxu0 0.0
    %2833 = vmatpush.xpose.msra.mxu0 %v2314
    %2834 = vmatpush.xpose.msra.mxu0 %v2312
    %2835 = vmatpush.xpose.msra.mxu0 %v2310
    %2836 = vmatpush.xpose.msra.mxu0 %v2308
    %2837 = vmatmul.f32.gmra.mxu0 %v2725
    %v2838 = vpop.f32.mrf.mxu0
    %v2839 = vadd.f32 %v2774, %v2838
    %2840 = vmatmul.f32.gmra.mxu0 %v2727
    %v2841 = vpop.f32.mrf.mxu0
    %v2842 = vadd.f32 %v2777, %v2841
    %2843 = vmatmul.f32.gmra.mxu0 %v2729
    %v2844 = vpop.f32.mrf.mxu0
    %v2845 = vadd.f32 %v2780, %v2844
    %2846 = vmatmul.f32.gmra.mxu0 %v2731
    %v2847 = vpop.f32.mrf.mxu0
    %v2848 = vadd.f32 %v2783, %v2847
    %2849 = vmatmul.f32.gmra.mxu0 %v2733
    %v2850 = vpop.f32.mrf.mxu0
    %v2851 = vadd.f32 %v2786, %v2850
    %2852 = vmatmul.f32.gmra.mxu0 %v2735
    %v2853 = vpop.f32.mrf.mxu0
    %v2854 = vadd.f32 %v2789, %v2853
    %2855 = vmatmul.f32.gmra.mxu0 %v2737
    %v2856 = vpop.f32.mrf.mxu0
    %v2857 = vadd.f32 %v2792, %v2856
    %2858 = vmatmul.f32.gmra.mxu0 %v2739
    %v2859 = vpop.f32.mrf.mxu0
    %v2860 = vadd.f32 %v2795, %v2859
    %2861 = vmatmul.f32.gmra.mxu0 %v2741
    %v2862 = vpop.f32.mrf.mxu0
    %v2863 = vadd.f32 %v2798, %v2862
    %2864 = vmatmul.f32.gmra.mxu0 %v2743
    %v2865 = vpop.f32.mrf.mxu0
    %v2866 = vadd.f32 %v2801, %v2865
    %2867 = vmatmul.f32.gmra.mxu0 %v2745
    %v2868 = vpop.f32.mrf.mxu0
    %v2869 = vadd.f32 %v2804, %v2868
    %2870 = vmatmul.f32.gmra.mxu0 %v2747
    %v2871 = vpop.f32.mrf.mxu0
    %v2872 = vadd.f32 %v2807, %v2871
    %2873 = vmatmul.f32.gmra.mxu0 %v2749
    %v2874 = vpop.f32.mrf.mxu0
    %v2875 = vadd.f32 %v2810, %v2874
    %2876 = vmatmul.f32.gmra.mxu0 %v2751
    %v2877 = vpop.f32.mrf.mxu0
    %v2878 = vadd.f32 %v2813, %v2877
    %2879 = vmatmul.f32.gmra.mxu0 %v2753
    %v2880 = vpop.f32.mrf.mxu0
    %v2881 = vadd.f32 %v2816, %v2880
    %2882 = vmatmul.f32.gmra.mxu0 %v2755
    %v2883 = vpop.f32.mrf.mxu0
    %v2884 = vadd.f32 %v2819, %v2883
    %2885 = vdwg.mxu0
    %v2886 = vsub.f32 %v2145, %v2839
    %v2887 = vsub.f32 %v2146, %v2842
    %v2888 = vsub.f32 %v2147, %v2845
    %v2889 = vsub.f32 %v2148, %v2848
    %v2890 = vsub.f32 %v2149, %v2851
    %v2891 = vsub.f32 %v2150, %v2854
    %v2892 = vsub.f32 %v2151, %v2857
    %v2893 = vsub.f32 %v2152, %v2860
    %v2894 = vsub.f32 %v2153, %v2863
    %v2895 = vsub.f32 %v2154, %v2866
    %v2896 = vsub.f32 %v2155, %v2869
    %v2897 = vsub.f32 %v2156, %v2872
    %v2898 = vsub.f32 %v2157, %v2875
    %v2899 = vsub.f32 %v2158, %v2878
    %v2900 = vsub.f32 %v2159, %v2881
    %v2901 = vsub.f32 %v2160, %v2884
    %v2902 = vmul.f32 %v2886, %v2886
    %v2903 = vmul.f32 %v2887, %v2887
    %v2904 = vmul.f32 %v2888, %v2888
    %v2905 = vmul.f32 %v2889, %v2889
    %v2906 = vmul.f32 %v2890, %v2890
    %v2907 = vmul.f32 %v2891, %v2891
    %v2908 = vmul.f32 %v2892, %v2892
    %v2909 = vmul.f32 %v2893, %v2893
    %v2910 = vmul.f32 %v2894, %v2894
    %v2911 = vmul.f32 %v2895, %v2895
    %v2912 = vmul.f32 %v2896, %v2896
    %v2913 = vmul.f32 %v2897, %v2897
    %v2914 = vmul.f32 %v2898, %v2898
    %v2915 = vmul.f32 %v2899, %v2899
    %v2916 = vmul.f32 %v2900, %v2900
    %v2917 = vmul.f32 %v2901, %v2901
    %v2918 = vsel %vm63, %v2902, 0.0
    %2919 = vadd.xlane.f32.xlu0 %v2918
    %v2920 = vpop.xlane.xlu0 %2919
    %v2921 = vsel %vm63, %v2903, 0.0
    %2922 = vadd.xlane.f32.xlu0 %v2921
    %v2923 = vpop.xlane.xlu0 %2922
    %v2924 = vsel %vm63, %v2904, 0.0
    %2925 = vadd.xlane.f32.xlu0 %v2924
    %v2926 = vpop.xlane.xlu0 %2925
    %v2927 = vsel %vm63, %v2905, 0.0
    %2928 = vadd.xlane.f32.xlu0 %v2927
    %v2929 = vpop.xlane.xlu0 %2928
    %v2930 = vsel %vm63, %v2906, 0.0
    %2931 = vadd.xlane.f32.xlu0 %v2930
    %v2932 = vpop.xlane.xlu0 %2931
    %v2933 = vsel %vm63, %v2907, 0.0
    %2934 = vadd.xlane.f32.xlu0 %v2933
    %v2935 = vpop.xlane.xlu0 %2934
    %v2936 = vsel %vm63, %v2908, 0.0
    %2937 = vadd.xlane.f32.xlu0 %v2936
    %v2938 = vpop.xlane.xlu0 %2937
    %v2939 = vsel %vm63, %v2909, 0.0
    %2940 = vadd.xlane.f32.xlu0 %v2939
    %v2941 = vpop.xlane.xlu0 %2940
    %v2942 = vsel %vm63, %v2910, 0.0
    %2943 = vadd.xlane.f32.xlu0 %v2942
    %v2944 = vpop.xlane.xlu0 %2943
    %v2945 = vsel %vm63, %v2911, 0.0
    %2946 = vadd.xlane.f32.xlu0 %v2945
    %v2947 = vpop.xlane.xlu0 %2946
    %v2948 = vsel %vm63, %v2912, 0.0
    %2949 = vadd.xlane.f32.xlu0 %v2948
    %v2950 = vpop.xlane.xlu0 %2949
    %v2951 = vsel %vm63, %v2913, 0.0
    %2952 = vadd.xlane.f32.xlu0 %v2951
    %v2953 = vpop.xlane.xlu0 %2952
    %v2954 = vsel %vm63, %v2914, 0.0
    %2955 = vadd.xlane.f32.xlu0 %v2954
    %v2956 = vpop.xlane.xlu0 %2955
    %v2957 = vsel %vm63, %v2915, 0.0
    %2958 = vadd.xlane.f32.xlu0 %v2957
    %v2959 = vpop.xlane.xlu0 %2958
    %v2960 = vsel %vm63, %v2916, 0.0
    %2961 = vadd.xlane.f32.xlu0 %v2960
    %v2962 = vpop.xlane.xlu0 %2961
    %v2963 = vsel %vm63, %v2917, 0.0
    %2964 = vadd.xlane.f32.xlu0 %v2963
    %v2965 = vpop.xlane.xlu0 %2964
    %v2966 = vperm.slane %v2539, %v36
    %v2967 = vperm.slane %v2547, %v714
    %v2968 = vsel %vm716, %v2967, %v2966
    %v2969 = vperm.slane %v2555, %v718
    %v2970 = vsel %vm720, %v2969, %v2968
    %v2971 = vperm.slane %v2563, %v722
    %v2972 = vsel %vm724, %v2971, %v2970
    %v2973 = vperm.slane %v2571, %v726
    %v2974 = vsel %vm728, %v2973, %v2972
    %v2975 = vperm.slane %v2579, %v730
    %v2976 = vsel %vm732, %v2975, %v2974
    %v2977 = vperm.slane %v2587, %v734
    %v2978 = vsel %vm736, %v2977, %v2976
    %v2979 = vperm.slane %v2595, %v738
    %v2980 = vsel %vm740, %v2979, %v2978
    %v2981 = vperm.slane %v2603, %v742
    %v2982 = vsel %vm744, %v2981, %v2980
    %v2983 = vperm.slane %v2611, %v746
    %v2984 = vsel %vm748, %v2983, %v2982
    %v2985 = vperm.slane %v2619, %v750
    %v2986 = vsel %vm752, %v2985, %v2984
    %v2987 = vperm.slane %v2627, %v754
    %v2988 = vsel %vm756, %v2987, %v2986
    %v2989 = vperm.slane %v2635, %v758
    %v2990 = vsel %vm760, %v2989, %v2988
    %v2991 = vperm.slane %v2643, %v762
    %v2992 = vsel %vm764, %v2991, %v2990
    %v2993 = vperm.slane %v2651, %v766
    %v2994 = vsel %vm768, %v2993, %v2992
    %v2995 = vperm.slane %v2659, %v770
    %v2996 = vsel %vm772, %v2995, %v2994
    %2997 = vst [vmem:[#allocation5 + $0x3] sm:$0x1] %v2996
    %v3014 = vperm.slane %v2920, %v36
    %v3015 = vperm.slane %v2923, %v714
    %v3016 = vsel %vm716, %v3015, %v3014
    %v3017 = vperm.slane %v2926, %v718
    %v3018 = vsel %vm720, %v3017, %v3016
    %v3019 = vperm.slane %v2929, %v722
    %v3020 = vsel %vm724, %v3019, %v3018
    %v3021 = vperm.slane %v2932, %v726
    %v3022 = vsel %vm728, %v3021, %v3020
    %v3023 = vperm.slane %v2935, %v730
    %v3024 = vsel %vm732, %v3023, %v3022
    %v3025 = vperm.slane %v2938, %v734
    %v3026 = vsel %vm736, %v3025, %v3024
    %v3027 = vperm.slane %v2941, %v738
    %v3028 = vsel %vm740, %v3027, %v3026
    %v3029 = vperm.slane %v2944, %v742
    %v3030 = vsel %vm744, %v3029, %v3028
    %v3031 = vperm.slane %v2947, %v746
    %v3032 = vsel %vm748, %v3031, %v3030
    %v3033 = vperm.slane %v2950, %v750
    %v3034 = vsel %vm752, %v3033, %v3032
    %v3035 = vperm.slane %v2953, %v754
    %v3036 = vsel %vm756, %v3035, %v3034
    %v3037 = vperm.slane %v2956, %v758
    %v3038 = vsel %vm760, %v3037, %v3036
    %v3039 = vperm.slane %v2959, %v762
    %v3040 = vsel %vm764, %v3039, %v3038
    %v3041 = vperm.slane %v2962, %v766
    %v3042 = vsel %vm768, %v3041, %v3040
    %v3043 = vperm.slane %v2965, %v770
    %v3044 = vsel %vm772, %v3043, %v3042
    %3046 = vst [vmem:[#allocation6 + $0x3] sm:$0x1] %v3044
    %v3047 = vsub.f32 %v38, %v2886
    %v3048 = vsub.f32 %v39, %v2887
    %v3049 = vsub.f32 %v40, %v2888
    %v3050 = vsub.f32 %v41, %v2889
    %v3051 = vsub.f32 %v42, %v2890
    %v3052 = vsub.f32 %v43, %v2891
    %v3053 = vsub.f32 %v44, %v2892
    %v3054 = vsub.f32 %v45, %v2893
    %v3055 = vsub.f32 %v46, %v2894
    %v3056 = vsub.f32 %v47, %v2895
    %v3057 = vsub.f32 %v48, %v2896
    %v3058 = vsub.f32 %v49, %v2897
    %v3059 = vsub.f32 %v50, %v2898
    %v3060 = vsub.f32 %v51, %v2899
    %v3061 = vsub.f32 %v52, %v2900
    %v3062 = vsub.f32 %v53, %v2901
    %3063 = vst.msk [vmem:[%s3] sm:$0xff] %vm63, %v3047
    %3064 = vst.msk [vmem:[%s3 + $0x8] sm:$0xff] %vm63, %v3048
    %3065 = vst.msk [vmem:[%s3 + $0x10] sm:$0xff] %vm63, %v3049
    %3066 = vst.msk [vmem:[%s3 + $0x18] sm:$0xff] %vm63, %v3050
    %3067 = vst.msk [vmem:[%s3 + $0x20] sm:$0xff] %vm63, %v3051
    %3068 = vst.msk [vmem:[%s3 + $0x28] sm:$0xff] %vm63, %v3052
    %3069 = vst.msk [vmem:[%s3 + $0x30] sm:$0xff] %vm63, %v3053
    %3070 = vst.msk [vmem:[%s3 + $0x38] sm:$0xff] %vm63, %v3054
    %3071 = vst.msk [vmem:[%s3 + $0x40] sm:$0xff] %vm63, %v3055
    %3072 = vst.msk [vmem:[%s3 + $0x48] sm:$0xff] %vm63, %v3056
    %3073 = vst.msk [vmem:[%s3 + $0x50] sm:$0xff] %vm63, %v3057
    %3074 = vst.msk [vmem:[%s3 + $0x58] sm:$0xff] %vm63, %v3058
    %3075 = vst.msk [vmem:[%s3 + $0x60] sm:$0xff] %vm63, %v3059
    %3076 = vst.msk [vmem:[%s3 + $0x68] sm:$0xff] %vm63, %v3060
    %3077 = vst.msk [vmem:[%s3 + $0x70] sm:$0xff] %vm63, %v3061
    %3078 = vst.msk [vmem:[%s3 + $0x78] sm:$0xff] %vm63, %v3062
    // Predicated region
    $region18: #{tpu_custom_call.1} parent=1 // pred_check
      _
    $region19: #{tpu_custom_call.1} parent=1 // pred_check_branch
      %3080 = sbr.rel (0) target = $region21
    $region20: #{tpu_custom_call.1} parent=1 // pred_region
      _
    $region21: #{tpu_custom_call.1} parent=1 // pred_fallthru
      _
    // Predicated region
    $region22: #{tpu_custom_call.1} parent=1 // pred_check
      _
    $region23: #{tpu_custom_call.1} parent=1 // pred_check_branch
      %3082 = sbr.rel (0) target = $region25
    $region24: #{tpu_custom_call.1} parent=1 // pred_region
      %3084 = vsyncadd [#allocation4], 0
      %s3086 = sshll.u32 [#allocation5], 4
      %s3087 = int_to_ptr.vmem [resolvable:$true] %s3086
      %s3088 = sshll.u32 %s4, 4
      %s3089 = int_to_ptr.hbm [resolvable:$true] %s3088
      %3091 = dma.vmem_to_hbm [thread:$0]  %s3087, 64, %s3089, [#allocation4]
    $region25: #{tpu_custom_call.1} parent=1 // pred_fallthru
      _
    // Predicated region
    $region26: #{tpu_custom_call.1} parent=1 // pred_check
      _
    $region27: #{tpu_custom_call.1} parent=1 // pred_check_branch
      %3093 = sbr.rel (0) target = $region29
    $region28: #{tpu_custom_call.1} parent=1 // pred_region
      %3095 = vsyncadd [#allocation7], 0
      %s3097 = sshll.u32 [#allocation6], 4
      %s3098 = int_to_ptr.vmem [resolvable:$true] %s3097
      %s3099 = sshll.u32 %s5, 4
      %s3100 = int_to_ptr.hbm [resolvable:$true] %s3099
      %3102 = dma.vmem_to_hbm [thread:$0]  %s3098, 64, %s3100, [#allocation7]
    $region29: #{tpu_custom_call.1} parent=1 // pred_fallthru
      _
    // Predicated region
    $region30: #{tpu_custom_call.1} parent=1 // pred_check
      _
    $region31: #{tpu_custom_call.1} parent=1 // pred_check_branch
      %3104 = sbr.rel (0) target = $region33
    $region32: #{tpu_custom_call.1} parent=1 // pred_region
      _
    $region33: #{tpu_custom_call.1} parent=1 // pred_fallthru
      _
    // Predicated region
    $region34: #{tpu_custom_call.1} parent=1 // pred_check
      _
    $region35: #{tpu_custom_call.1} parent=1 // pred_check_branch
      %3106 = sbr.rel (0) target = $region37
    $region36: #{tpu_custom_call.1} parent=1 // pred_region
      %3108 = dma.done [#allocation4], 64
    $region37: #{tpu_custom_call.1} parent=1 // pred_fallthru
      _
    // Predicated region
    $region38: #{tpu_custom_call.1} parent=1 // pred_check
      _
    $region39: #{tpu_custom_call.1} parent=1 // pred_check_branch
      %3110 = sbr.rel (0) target = $region41
    $region40: #{tpu_custom_call.1} parent=1 // pred_region
      %3112 = dma.done [#allocation7], 64
    $region41: #{tpu_custom_call.1} parent=1 // pred_fallthru
      _
    %3113 = vsyncpa [#allocation3], 1
    %3114 = vsyncpa [#allocation4], 1
    %3115 = vsyncpa [#allocation7], 1

// kernel: tpu_custom_call.1
$region0: #{tpu_custom_call.1}
  #allocation0 [shape = 'u32[]', space=smem, size = 0x4, offset = 0x4, fixed_abs, tag = 'smem constant byte address 0x4 - core index']
  #allocation1 [shape = 'u32[72,128]{1,0:T(1,128)}', space=vmem, size = 0x9000, scoped, tag = 'internal scratch']
  %s0 = inlined_call_operand.vmem [shape: f32[128,32], index: 0, kind: input, shape index: {}]
  %s1 = inlined_call_operand.hbm [shape: f32[4,32,256], index: 1, kind: input, shape index: {}]
  %s2 = inlined_call_operand.vmem [shape: f32[4,1,256], index: 2, kind: input, shape index: {}]
  %s3 = inlined_call_operand.vmem [shape: f32[128,32], index: 3, kind: output, shape index: {0}]
  %s4 = inlined_call_operand.hbm [shape: s32[4,128], index: 4, kind: output, shape index: {1}]
  %s5 = inlined_call_operand.hbm [shape: f32[4,128], index: 5, kind: output, shape index: {2}]
  %6 = xla_tuple %s3, %s4, %s5
  %s7 = sld [smem:[#allocation0]]
  $region42: #{tpu_custom_call.1} parent=0
    _
  %s9 = ssub.s32 1, %s7
  %s10 = scalar_select 0, %s9, %s7
  $region1: #{tpu_custom_call.1} parent=0
    #allocation2 [shape = 'u8[131072]{0}', space=vmem, size = 0x20000, scoped, tag = 'input window, operand 1, single buffered']
    #allocation3 [shape = 's32[1]{0}', space=sflag, size = 0x4, scoped, tag = 'scoped memory for tpu_custom_call.1']
    #allocation4 [shape = 's32[1]{0}', space=sflag, size = 0x4, scoped, tag = 'scoped memory for tpu_custom_call.1']
    #allocation5 [shape = 'u8[2048]{0}', space=vmem, size = 0x800, scoped, tag = 'output window, operand 1, single buffered']
    #allocation6 [shape = 'u8[2048]{0}', space=vmem, size = 0x800, scoped, tag = 'output window, operand 2, single buffered']
    #allocation7 [shape = 's32[1]{0}', space=sflag, size = 0x4, scoped, tag = 'scoped memory for tpu_custom_call.1']
    %11 = vsyncpa [#allocation3], 0
    %12 = vsyncpa [#allocation4], 0
    %13 = vsyncpa [#allocation7], 0
    // Predicated region
    $region2: #{tpu_custom_call.1} parent=1 // pred_check
      _
    $region3: #{tpu_custom_call.1} parent=1 // pred_check_branch
      %15 = sbr.rel (0) target = $region5
    $region4: #{tpu_custom_call.1} parent=1 // pred_region
      _
    $region5: #{tpu_custom_call.1} parent=1 // pred_fallthru
      _
    // Predicated region
    $region6: #{tpu_custom_call.1} parent=1 // pred_check
      _
    $region7: #{tpu_custom_call.1} parent=1 // pred_check_branch
      %17 = sbr.rel (0) target = $region9
    $region8: #{tpu_custom_call.1} parent=1 // pred_region
      %19 = vsyncadd [#allocation3], 0
      %s20 = sshll.u32 %s1, 4
      %s21 = int_to_ptr.hbm [resolvable:$true] %s20
      %s22 = sshll.u32 [#allocation2], 4
      %s23 = int_to_ptr.vmem [resolvable:$true] %s22
      %28 = dma.hbm_to_vmem [thread:$0]  %s21, 4096, %s23, [#allocation3], 256, 256, 16
    $region9: #{tpu_custom_call.1} parent=1 // pred_fallthru
      _
    // Predicated region
    $region10: #{tpu_custom_call.1} parent=1 // pred_check
      _
    $region11: #{tpu_custom_call.1} parent=1 // pred_check_branch
      %30 = sbr.rel (0) target = $region13
    $region12: #{tpu_custom_call.1} parent=1 // pred_region
      _
    $region13: #{tpu_custom_call.1} parent=1 // pred_fallthru
      _
    // Predicated region
    $region14: #{tpu_custom_call.1} parent=1 // pred_check
      _
    $region15: #{tpu_custom_call.1} parent=1 // pred_check_branch
      %32 = sbr.rel (0) target = $region17
    $region16: #{tpu_custom_call.1} parent=1 // pred_region
      %34 = dma.done [#allocation3], 4096
    $region17: #{tpu_custom_call.1} parent=1 // pred_fallthru
      _
    %v35 = vlaneseq
    %v36 = vand.u32 %v35, 127
    %v37 = vadd.s32 %v36, 128
    %v38 = vld [vmem:[%s0] sm:$0xff]
    %v39 = vld [vmem:[%s0 + $0x8] sm:$0xff]
    %v40 = vld [vmem:[%s0 + $0x10] sm:$0xff]
    %v41 = vld [vmem:[%s0 + $0x18] sm:$0xff]
    %v42 = vld [vmem:[%s0 + $0x20] sm:$0xff]
    %v43 = vld [vmem:[%s0 + $0x28] sm:$0xff]
    %v44 = vld [vmem:[%s0 + $0x30] sm:$0xff]
    %v45 = vld [vmem:[%s0 + $0x38] sm:$0xff]
    %v46 = vld [vmem:[%s0 + $0x40] sm:$0xff]
    %v47 = vld [vmem:[%s0 + $0x48] sm:$0xff]
    %v48 = vld [vmem:[%s0 + $0x50] sm:$0xff]
    %v49 = vld [vmem:[%s0 + $0x58] sm:$0xff]
    %v50 = vld [vmem:[%s0 + $0x60] sm:$0xff]
    %v51 = vld [vmem:[%s0 + $0x68] sm:$0xff]
    %v52 = vld [vmem:[%s0 + $0x70] sm:$0xff]
    %v53 = vld [vmem:[%s0 + $0x78] sm:$0xff]
    %v54 = vld [vmem:[#allocation2] sm:$0xff]
    %v55 = vld [vmem:[#allocation2 + $0x8] sm:$0xff]
    %v56 = vld [vmem:[#allocation2 + $0x10] sm:$0xff]
    %v57 = vld [vmem:[#allocation2 + $0x18] sm:$0xff]
    %v58 = vld [vmem:[#allocation2 + $0x20] sm:$0xff]
    %v59 = vld [vmem:[#allocation2 + $0x28] sm:$0xff]
    %v60 = vld [vmem:[#allocation2 + $0x30] sm:$0xff]
    %v61 = vld [vmem:[#allocation2 + $0x38] sm:$0xff]
    %v62 = vld [vmem:[%s2] sm:$0x3]
    %vm63 = vcmask 261120
    %v65 = vsel %vm63, %v38, 0
    %v68 = vsel %vm63, %v39, 0
    %v71 = vsel %vm63, %v40, 0
    %v74 = vsel %vm63, %v41, 0
    %v77 = vsel %vm63, %v42, 0
    %v80 = vsel %vm63, %v43, 0
    %v83 = vsel %vm63, %v44, 0
    %v86 = vsel %vm63, %v45, 0
    %v89 = vsel %vm63, %v46, 0
    %v92 = vsel %vm63, %v47, 0
    %v95 = vsel %vm63, %v48, 0
    %v98 = vsel %vm63, %v49, 0
    %v101 = vsel %vm63, %v50, 0
    %v104 = vsel %vm63, %v51, 0
    %v107 = vsel %vm63, %v52, 0
    %v110 = vsel %vm63, %v53, 0
    %112 = vmatpush.msra.mxu0 0.0
    %113 = vmatpush.msra.mxu0 0.0
    %114 = vmatpush.msra.mxu0 0.0
    %115 = vmatpush.msra.mxu0 0.0
    %116 = vmatpush.msra.mxu0 0.0
    %117 = vmatpush.msra.mxu0 0.0
    %118 = vmatpush.msra.mxu0 0.0
    %119 = vmatpush.msra.mxu0 0.0
    %120 = vmatpush.msra.mxu0 0.0
    %121 = vmatpush.msra.mxu0 0.0
    %122 = vmatpush.msra.mxu0 0.0
    %123 = vmatpush.msra.mxu0 0.0
    %124 = vmatpush.msra.mxu0 %v60
    %125 = vmatpush.msra.mxu0 %v58
    %126 = vmatpush.msra.mxu0 %v56
    %127 = vmatpush.msra.mxu0 %v54
    %128 = vmatmul.f32.gmra.mxu0 %v65
    %v129 = vpop.f32.mrf.mxu0
    %v130 = vadd.f32 0.0, %v129
    %131 = vmatmul.f32.gmra.mxu0 %v68
    %v132 = vpop.f32.mrf.mxu0
    %v133 = vadd.f32 0.0, %v132
    %134 = vmatmul.f32.gmra.mxu0 %v71
    %v135 = vpop.f32.mrf.mxu0
    %v136 = vadd.f32 0.0, %v135
    %137 = vmatmul.f32.gmra.mxu0 %v74
    %v138 = vpop.f32.mrf.mxu0
    %v139 = vadd.f32 0.0, %v138
    %140 = vmatmul.f32.gmra.mxu0 %v77
    %v141 = vpop.f32.mrf.mxu0
    %v142 = vadd.f32 0.0, %v141
    %143 = vmatmul.f32.gmra.mxu0 %v80
    %v144 = vpop.f32.mrf.mxu0
    %v145 = vadd.f32 0.0, %v144
    %146 = vmatmul.f32.gmra.mxu0 %v83
    %v147 = vpop.f32.mrf.mxu0
    %v148 = vadd.f32 0.0, %v147
    %149 = vmatmul.f32.gmra.mxu0 %v86
    %v150 = vpop.f32.mrf.mxu0
    %v151 = vadd.f32 0.0, %v150
    %152 = vmatmul.f32.gmra.mxu0 %v89
    %v153 = vpop.f32.mrf.mxu0
    %v154 = vadd.f32 0.0, %v153
    %155 = vmatmul.f32.gmra.mxu0 %v92
    %v156 = vpop.f32.mrf.mxu0
    %v157 = vadd.f32 0.0, %v156
    %158 = vmatmul.f32.gmra.mxu0 %v95
    %v159 = vpop.f32.mrf.mxu0
    %v160 = vadd.f32 0.0, %v159
    %161 = vmatmul.f32.gmra.mxu0 %v98
    %v162 = vpop.f32.mrf.mxu0
    %v163 = vadd.f32 0.0, %v162
    %164 = vmatmul.f32.gmra.mxu0 %v101
    %v165 = vpop.f32.mrf.mxu0
    %v166 = vadd.f32 0.0, %v165
    %167 = vmatmul.f32.gmra.mxu0 %v104
    %v168 = vpop.f32.mrf.mxu0
    %v169 = vadd.f32 0.0, %v168
    %170 = vmatmul.f32.gmra.mxu0 %v107
    %v171 = vpop.f32.mrf.mxu0
    %v172 = vadd.f32 0.0, %v171
    %173 = vmatmul.f32.gmra.mxu0 %v110
    %v174 = vpop.f32.mrf.mxu0
    %v175 = vadd.f32 0.0, %v174
    %176 = vdwg.mxu0
    %177 = vmatpush.msra.mxu0 0.0
    %178 = vmatpush.msra.mxu0 0.0
    %179 = vmatpush.msra.mxu0 0.0
    %180 = vmatpush.msra.mxu0 0.0
    %181 = vmatpush.msra.mxu0 0.0
    %182 = vmatpush.msra.mxu0 0.0
    %183 = vmatpush.msra.mxu0 0.0
    %184 = vmatpush.msra.mxu0 0.0
    %185 = vmatpush.msra.mxu0 0.0
    %186 = vmatpush.msra.mxu0 0.0
    %187 = vmatpush.msra.mxu0 0.0
    %188 = vmatpush.msra.mxu0 0.0
    %189 = vmatpush.msra.mxu0 %v61
    %190 = vmatpush.msra.mxu0 %v59
    %191 = vmatpush.msra.mxu0 %v57
    %192 = vmatpush.msra.mxu0 %v55
    %193 = vmatmul.f32.gmra.mxu0 %v65
    %v194 = vpop.f32.mrf.mxu0
    %v195 = vadd.f32 0.0, %v194
    %196 = vmatmul.f32.gmra.mxu0 %v68
    %v197 = vpop.f32.mrf.mxu0
    %v198 = vadd.f32 0.0, %v197
    %199 = vmatmul.f32.gmra.mxu0 %v71
    %v200 = vpop.f32.mrf.mxu0
    %v201 = vadd.f32 0.0, %v200
    %202 = vmatmul.f32.gmra.mxu0 %v74
    %v203 = vpop.f32.mrf.mxu0
    %v204 = vadd.f32 0.0, %v203
    %205 = vmatmul.f32.gmra.mxu0 %v77
    %v206 = vpop.f32.mrf.mxu0
    %v207 = vadd.f32 0.0, %v206
    %208 = vmatmul.f32.gmra.mxu0 %v80
    %v209 = vpop.f32.mrf.mxu0
    %v210 = vadd.f32 0.0, %v209
    %211 = vmatmul.f32.gmra.mxu0 %v83
    %v212 = vpop.f32.mrf.mxu0
    %v213 = vadd.f32 0.0, %v212
    %214 = vmatmul.f32.gmra.mxu0 %v86
    %v215 = vpop.f32.mrf.mxu0
    %v216 = vadd.f32 0.0, %v215
    %217 = vmatmul.f32.gmra.mxu0 %v89
    %v218 = vpop.f32.mrf.mxu0
    %v219 = vadd.f32 0.0, %v218
    %220 = vmatmul.f32.gmra.mxu0 %v92
    %v221 = vpop.f32.mrf.mxu0
    %v222 = vadd.f32 0.0, %v221
    %223 = vmatmul.f32.gmra.mxu0 %v95
    %v224 = vpop.f32.mrf.mxu0
    %v225 = vadd.f32 0.0, %v224
    %226 = vmatmul.f32.gmra.mxu0 %v98
    %v227 = vpop.f32.mrf.mxu0
    %v228 = vadd.f32 0.0, %v227
    %229 = vmatmul.f32.gmra.mxu0 %v101
    %v230 = vpop.f32.mrf.mxu0
    %v231 = vadd.f32 0.0, %v230
    %232 = vmatmul.f32.gmra.mxu0 %v104
    %v233 = vpop.f32.mrf.mxu0
    %v234 = vadd.f32 0.0, %v233
    %235 = vmatmul.f32.gmra.mxu0 %v107
    %v236 = vpop.f32.mrf.mxu0
    %v237 = vadd.f32 0.0, %v236
    %238 = vmatmul.f32.gmra.mxu0 %v110
    %v239 = vpop.f32.mrf.mxu0
    %v240 = vadd.f32 0.0, %v239
    %241 = vdwg.mxu0
    %v243 = vperm.slane %v62, 0
    %v244 = vperm.slane %v62, 1
    %v247 = vsub.f32 %v130, %v243
    %v248 = vsub.f32 %v195, %v244
    %v249 = vsub.f32 %v133, %v243
    %v250 = vsub.f32 %v198, %v244
    %v251 = vsub.f32 %v136, %v243
    %v252 = vsub.f32 %v201, %v244
    %v253 = vsub.f32 %v139, %v243
    %v254 = vsub.f32 %v204, %v244
    %v255 = vsub.f32 %v142, %v243
    %v256 = vsub.f32 %v207, %v244
    %v257 = vsub.f32 %v145, %v243
    %v258 = vsub.f32 %v210, %v244
    %v259 = vsub.f32 %v148, %v243
    %v260 = vsub.f32 %v213, %v244
    %v261 = vsub.f32 %v151, %v243
    %v262 = vsub.f32 %v216, %v244
    %v263 = vsub.f32 %v154, %v243
    %v264 = vsub.f32 %v219, %v244
    %v265 = vsub.f32 %v157, %v243
    %v266 = vsub.f32 %v222, %v244
    %v267 = vsub.f32 %v160, %v243
    %v268 = vsub.f32 %v225, %v244
    %v269 = vsub.f32 %v163, %v243
    %v270 = vsub.f32 %v228, %v244
    %v271 = vsub.f32 %v166, %v243
    %v272 = vsub.f32 %v231, %v244
    %v273 = vsub.f32 %v169, %v243
    %v274 = vsub.f32 %v234, %v244
    %v275 = vsub.f32 %v172, %v243
    %v276 = vsub.f32 %v237, %v244
    %v277 = vsub.f32 %v175, %v243
    %v278 = vsub.f32 %v240, %v244
    %vm279 = vcmp.ge.f32.partialorder %v247, %v248
    %v280 = vsel %vm279, %v247, %v248
    %v281 = vsel %vm279, %v36, %v37
    %282 = vmax.index.xlane.f32.xlu0 %v280
    %v283 = vpop.xlane.xlu0 %282
    %284 = vset.pattern.permute.xlu0 %v283
    %285 = vperm.xlu0 %284, %v281
    %v286 = vpop.permute.xlu0 %285
    %vm287 = vcmp.ge.f32.partialorder %v249, %v250
    %v288 = vsel %vm287, %v249, %v250
    %v289 = vsel %vm287, %v36, %v37
    %290 = vmax.index.xlane.f32.xlu0 %v288
    %v291 = vpop.xlane.xlu0 %290
    %292 = vset.pattern.permute.xlu0 %v291
    %293 = vperm.xlu0 %292, %v289
    %v294 = vpop.permute.xlu0 %293
    %vm295 = vcmp.ge.f32.partialorder %v251, %v252
    %v296 = vsel %vm295, %v251, %v252
    %v297 = vsel %vm295, %v36, %v37
    %298 = vmax.index.xlane.f32.xlu0 %v296
    %v299 = vpop.xlane.xlu0 %298
    %300 = vset.pattern.permute.xlu0 %v299
    %301 = vperm.xlu0 %300, %v297
    %v302 = vpop.permute.xlu0 %301
    %vm303 = vcmp.ge.f32.partialorder %v253, %v254
    %v304 = vsel %vm303, %v253, %v254
    %v305 = vsel %vm303, %v36, %v37
    %306 = vmax.index.xlane.f32.xlu0 %v304
    %v307 = vpop.xlane.xlu0 %306
    %308 = vset.pattern.permute.xlu0 %v307
    %309 = vperm.xlu0 %308, %v305
    %v310 = vpop.permute.xlu0 %309
    %vm311 = vcmp.ge.f32.partialorder %v255, %v256
    %v312 = vsel %vm311, %v255, %v256
    %v313 = vsel %vm311, %v36, %v37
    %314 = vmax.index.xlane.f32.xlu0 %v312
    %v315 = vpop.xlane.xlu0 %314
    %316 = vset.pattern.permute.xlu0 %v315
    %317 = vperm.xlu0 %316, %v313
    %v318 = vpop.permute.xlu0 %317
    %vm319 = vcmp.ge.f32.partialorder %v257, %v258
    %v320 = vsel %vm319, %v257, %v258
    %v321 = vsel %vm319, %v36, %v37
    %322 = vmax.index.xlane.f32.xlu0 %v320
    %v323 = vpop.xlane.xlu0 %322
    %324 = vset.pattern.permute.xlu0 %v323
    %325 = vperm.xlu0 %324, %v321
    %v326 = vpop.permute.xlu0 %325
    %vm327 = vcmp.ge.f32.partialorder %v259, %v260
    %v328 = vsel %vm327, %v259, %v260
    %v329 = vsel %vm327, %v36, %v37
    %330 = vmax.index.xlane.f32.xlu0 %v328
    %v331 = vpop.xlane.xlu0 %330
    %332 = vset.pattern.permute.xlu0 %v331
    %333 = vperm.xlu0 %332, %v329
    %v334 = vpop.permute.xlu0 %333
    %vm335 = vcmp.ge.f32.partialorder %v261, %v262
    %v336 = vsel %vm335, %v261, %v262
    %v337 = vsel %vm335, %v36, %v37
    %338 = vmax.index.xlane.f32.xlu0 %v336
    %v339 = vpop.xlane.xlu0 %338
    %340 = vset.pattern.permute.xlu0 %v339
    %341 = vperm.xlu0 %340, %v337
    %v342 = vpop.permute.xlu0 %341
    %vm343 = vcmp.ge.f32.partialorder %v263, %v264
    %v344 = vsel %vm343, %v263, %v264
    %v345 = vsel %vm343, %v36, %v37
    %346 = vmax.index.xlane.f32.xlu0 %v344
    %v347 = vpop.xlane.xlu0 %346
    %348 = vset.pattern.permute.xlu0 %v347
    %349 = vperm.xlu0 %348, %v345
    %v350 = vpop.permute.xlu0 %349
    %vm351 = vcmp.ge.f32.partialorder %v265, %v266
    %v352 = vsel %vm351, %v265, %v266
    %v353 = vsel %vm351, %v36, %v37
    %354 = vmax.index.xlane.f32.xlu0 %v352
    %v355 = vpop.xlane.xlu0 %354
    %356 = vset.pattern.permute.xlu0 %v355
    %357 = vperm.xlu0 %356, %v353
    %v358 = vpop.permute.xlu0 %357
    %vm359 = vcmp.ge.f32.partialorder %v267, %v268
    %v360 = vsel %vm359, %v267, %v268
    %v361 = vsel %vm359, %v36, %v37
    %362 = vmax.index.xlane.f32.xlu0 %v360
    %v363 = vpop.xlane.xlu0 %362
    %364 = vset.pattern.permute.xlu0 %v363
    %365 = vperm.xlu0 %364, %v361
    %v366 = vpop.permute.xlu0 %365
    %vm367 = vcmp.ge.f32.partialorder %v269, %v270
    %v368 = vsel %vm367, %v269, %v270
    %v369 = vsel %vm367, %v36, %v37
    %370 = vmax.index.xlane.f32.xlu0 %v368
    %v371 = vpop.xlane.xlu0 %370
    %372 = vset.pattern.permute.xlu0 %v371
    %373 = vperm.xlu0 %372, %v369
    %v374 = vpop.permute.xlu0 %373
    %vm375 = vcmp.ge.f32.partialorder %v271, %v272
    %v376 = vsel %vm375, %v271, %v272
    %v377 = vsel %vm375, %v36, %v37
    %378 = vmax.index.xlane.f32.xlu0 %v376
    %v379 = vpop.xlane.xlu0 %378
    %380 = vset.pattern.permute.xlu0 %v379
    %381 = vperm.xlu0 %380, %v377
    %v382 = vpop.permute.xlu0 %381
    %vm383 = vcmp.ge.f32.partialorder %v273, %v274
    %v384 = vsel %vm383, %v273, %v274
    %v385 = vsel %vm383, %v36, %v37
    %386 = vmax.index.xlane.f32.xlu0 %v384
    %v387 = vpop.xlane.xlu0 %386
    %388 = vset.pattern.permute.xlu0 %v387
    %389 = vperm.xlu0 %388, %v385
    %v390 = vpop.permute.xlu0 %389
    %vm391 = vcmp.ge.f32.partialorder %v275, %v276
    %v392 = vsel %vm391, %v275, %v276
    %v393 = vsel %vm391, %v36, %v37
    %394 = vmax.index.xlane.f32.xlu0 %v392
    %v395 = vpop.xlane.xlu0 %394
    %396 = vset.pattern.permute.xlu0 %v395
    %397 = vperm.xlu0 %396, %v393
    %v398 = vpop.permute.xlu0 %397
    %vm399 = vcmp.ge.f32.partialorder %v277, %v278
    %v400 = vsel %vm399, %v277, %v278
    %v401 = vsel %vm399, %v36, %v37
    %402 = vmax.index.xlane.f32.xlu0 %v400
    %v403 = vpop.xlane.xlu0 %402
    %404 = vset.pattern.permute.xlu0 %v403
    %405 = vperm.xlu0 %404, %v401
    %v406 = vpop.permute.xlu0 %405
    %vm407 = vcmp.eq.s32.totalorder %v36, %v286
    %vm408 = vcmp.eq.s32.totalorder %v37, %v286
    %vm409 = vcmp.eq.s32.totalorder %v36, %v294
    %vm410 = vcmp.eq.s32.totalorder %v37, %v294
    %vm411 = vcmp.eq.s32.totalorder %v36, %v302
    %vm412 = vcmp.eq.s32.totalorder %v37, %v302
    %vm413 = vcmp.eq.s32.totalorder %v36, %v310
    %vm414 = vcmp.eq.s32.totalorder %v37, %v310
    %vm415 = vcmp.eq.s32.totalorder %v36, %v318
    %vm416 = vcmp.eq.s32.totalorder %v37, %v318
    %vm417 = vcmp.eq.s32.totalorder %v36, %v326
    %vm418 = vcmp.eq.s32.totalorder %v37, %v326
    %vm419 = vcmp.eq.s32.totalorder %v36, %v334
    %vm420 = vcmp.eq.s32.totalorder %v37, %v334
    %vm421 = vcmp.eq.s32.totalorder %v36, %v342
    %vm422 = vcmp.eq.s32.totalorder %v37, %v342
    %vm423 = vcmp.eq.s32.totalorder %v36, %v350
    %vm424 = vcmp.eq.s32.totalorder %v37, %v350
    %vm425 = vcmp.eq.s32.totalorder %v36, %v358
    %vm426 = vcmp.eq.s32.totalorder %v37, %v358
    %vm427 = vcmp.eq.s32.totalorder %v36, %v366
    %vm428 = vcmp.eq.s32.totalorder %v37, %v366
    %vm429 = vcmp.eq.s32.totalorder %v36, %v374
    %vm430 = vcmp.eq.s32.totalorder %v37, %v374
    %vm431 = vcmp.eq.s32.totalorder %v36, %v382
    %vm432 = vcmp.eq.s32.totalorder %v37, %v382
    %vm433 = vcmp.eq.s32.totalorder %v36, %v390
    %vm434 = vcmp.eq.s32.totalorder %v37, %v390
    %vm435 = vcmp.eq.s32.totalorder %v36, %v398
    %vm436 = vcmp.eq.s32.totalorder %v37, %v398
    %vm437 = vcmp.eq.s32.totalorder %v36, %v406
    %vm438 = vcmp.eq.s32.totalorder %v37, %v406
    %v439 = vsel %vm407, 1, 0
    %v440 = vsel %vm408, 1, 0
    %v441 = vsel %vm409, 1, 0
    %v442 = vsel %vm410, 1, 0
    %v443 = vsel %vm411, 1, 0
    %v444 = vsel %vm412, 1, 0
    %v445 = vsel %vm413, 1, 0
    %v446 = vsel %vm414, 1, 0
    %v447 = vsel %vm415, 1, 0
    %v448 = vsel %vm416, 1, 0
    %v449 = vsel %vm417, 1, 0
    %v450 = vsel %vm418, 1, 0
    %v451 = vsel %vm419, 1, 0
    %v452 = vsel %vm420, 1, 0
    %v453 = vsel %vm421, 1, 0
    %v454 = vsel %vm422, 1, 0
    %v455 = vsel %vm423, 1, 0
    %v456 = vsel %vm424, 1, 0
    %v457 = vsel %vm425, 1, 0
    %v458 = vsel %vm426, 1, 0
    %v459 = vsel %vm427, 1, 0
    %v460 = vsel %vm428, 1, 0
    %v461 = vsel %vm429, 1, 0
    %v462 = vsel %vm430, 1, 0
    %v463 = vsel %vm431, 1, 0
    %v464 = vsel %vm432, 1, 0
    %v465 = vsel %vm433, 1, 0
    %v466 = vsel %vm434, 1, 0
    %v467 = vsel %vm435, 1, 0
    %v468 = vsel %vm436, 1, 0
    %v469 = vsel %vm437, 1, 0
    %v470 = vsel %vm438, 1, 0
    %v471 = vcvt.s32.f32 %v439
    %v472 = vcvt.s32.f32 %v440
    %v473 = vcvt.s32.f32 %v441
    %v474 = vcvt.s32.f32 %v442
    %v475 = vcvt.s32.f32 %v443
    %v476 = vcvt.s32.f32 %v444
    %v477 = vcvt.s32.f32 %v445
    %v478 = vcvt.s32.f32 %v446
    %v479 = vcvt.s32.f32 %v447
    %v480 = vcvt.s32.f32 %v448
    %v481 = vcvt.s32.f32 %v449
    %v482 = vcvt.s32.f32 %v450
    %v483 = vcvt.s32.f32 %v451
    %v484 = vcvt.s32.f32 %v452
    %v485 = vcvt.s32.f32 %v453
    %v486 = vcvt.s32.f32 %v454
    %v487 = vcvt.s32.f32 %v455
    %v488 = vcvt.s32.f32 %v456
    %v489 = vcvt.s32.f32 %v457
    %v490 = vcvt.s32.f32 %v458
    %v491 = vcvt.s32.f32 %v459
    %v492 = vcvt.s32.f32 %v460
    %v493 = vcvt.s32.f32 %v461
    %v494 = vcvt.s32.f32 %v462
    %v495 = vcvt.s32.f32 %v463
    %v496 = vcvt.s32.f32 %v464
    %v497 = vcvt.s32.f32 %v465
    %v498 = vcvt.s32.f32 %v466
    %v499 = vcvt.s32.f32 %v467
    %v500 = vcvt.s32.f32 %v468
    %v501 = vcvt.s32.f32 %v469
    %v502 = vcvt.s32.f32 %v470
    %503 = vmatpush.xpose.msra.mxu0 0.0
    %504 = vmatpush.xpose.msra.mxu0 0.0
    %505 = vmatpush.xpose.msra.mxu0 0.0
    %506 = vmatpush.xpose.msra.mxu0 0.0
    %507 = vmatpush.xpose.msra.mxu0 0.0
    %508 = vmatpush.xpose.msra.mxu0 0.0
    %509 = vmatpush.xpose.msra.mxu0 0.0
    %510 = vmatpush.xpose.msra.mxu0 0.0
    %511 = vmatpush.xpose.msra.mxu0 0.0
    %512 = vmatpush.xpose.msra.mxu0 0.0
    %513 = vmatpush.xpose.msra.mxu0 0.0
    %514 = vmatpush.xpose.msra.mxu0 0.0
    %515 = vmatpush.xpose.msra.mxu0 %v60
    %516 = vmatpush.xpose.msra.mxu0 %v58
    %517 = vmatpush.xpose.msra.mxu0 %v56
    %518 = vmatpush.xpose.msra.mxu0 %v54
    %519 = vmatmul.f32.gmra.mxu0 %v471
    %v520 = vpop.f32.mrf.mxu0
    %v521 = vadd.f32 0.0, %v520
    %522 = vmatmul.f32.gmra.mxu0 %v473
    %v523 = vpop.f32.mrf.mxu0
    %v524 = vadd.f32 0.0, %v523
    %525 = vmatmul.f32.gmra.mxu0 %v475
    %v526 = vpop.f32.mrf.mxu0
    %v527 = vadd.f32 0.0, %v526
    %528 = vmatmul.f32.gmra.mxu0 %v477
    %v529 = vpop.f32.mrf.mxu0
    %v530 = vadd.f32 0.0, %v529
    %531 = vmatmul.f32.gmra.mxu0 %v479
    %v532 = vpop.f32.mrf.mxu0
    %v533 = vadd.f32 0.0, %v532
    %534 = vmatmul.f32.gmra.mxu0 %v481
    %v535 = vpop.f32.mrf.mxu0
    %v536 = vadd.f32 0.0, %v535
    %537 = vmatmul.f32.gmra.mxu0 %v483
    %v538 = vpop.f32.mrf.mxu0
    %v539 = vadd.f32 0.0, %v538
    %540 = vmatmul.f32.gmra.mxu0 %v485
    %v541 = vpop.f32.mrf.mxu0
    %v542 = vadd.f32 0.0, %v541
    %543 = vmatmul.f32.gmra.mxu0 %v487
    %v544 = vpop.f32.mrf.mxu0
    %v545 = vadd.f32 0.0, %v544
    %546 = vmatmul.f32.gmra.mxu0 %v489
    %v547 = vpop.f32.mrf.mxu0
    %v548 = vadd.f32 0.0, %v547
    %549 = vmatmul.f32.gmra.mxu0 %v491
    %v550 = vpop.f32.mrf.mxu0
    %v551 = vadd.f32 0.0, %v550
    %552 = vmatmul.f32.gmra.mxu0 %v493
    %v553 = vpop.f32.mrf.mxu0
    %v554 = vadd.f32 0.0, %v553
    %555 = vmatmul.f32.gmra.mxu0 %v495
    %v556 = vpop.f32.mrf.mxu0
    %v557 = vadd.f32 0.0, %v556
    %558 = vmatmul.f32.gmra.mxu0 %v497
    %v559 = vpop.f32.mrf.mxu0
    %v560 = vadd.f32 0.0, %v559
    %561 = vmatmul.f32.gmra.mxu0 %v499
    %v562 = vpop.f32.mrf.mxu0
    %v563 = vadd.f32 0.0, %v562
    %564 = vmatmul.f32.gmra.mxu0 %v501
    %v565 = vpop.f32.mrf.mxu0
    %v566 = vadd.f32 0.0, %v565
    %567 = vdwg.mxu0
    %568 = vmatpush.xpose.msra.mxu0 0.0
    %569 = vmatpush.xpose.msra.mxu0 0.0
    %570 = vmatpush.xpose.msra.mxu0 0.0
    %571 = vmatpush.xpose.msra.mxu0 0.0
    %572 = vmatpush.xpose.msra.mxu0 0.0
    %573 = vmatpush.xpose.msra.mxu0 0.0
    %574 = vmatpush.xpose.msra.mxu0 0.0
    %575 = vmatpush.xpose.msra.mxu0 0.0
    %576 = vmatpush.xpose.msra.mxu0 0.0
    %577 = vmatpush.xpose.msra.mxu0 0.0
    %578 = vmatpush.xpose.msra.mxu0 0.0
    %579 = vmatpush.xpose.msra.mxu0 0.0
    %580 = vmatpush.xpose.msra.mxu0 %v61
    %581 = vmatpush.xpose.msra.mxu0 %v59
    %582 = vmatpush.xpose.msra.mxu0 %v57
    %583 = vmatpush.xpose.msra.mxu0 %v55
    %584 = vmatmul.f32.gmra.mxu0 %v472
    %v585 = vpop.f32.mrf.mxu0
    %v586 = vadd.f32 %v521, %v585
    %587 = vmatmul.f32.gmra.mxu0 %v474
    %v588 = vpop.f32.mrf.mxu0
    %v589 = vadd.f32 %v524, %v588
    %590 = vmatmul.f32.gmra.mxu0 %v476
    %v591 = vpop.f32.mrf.mxu0
    %v592 = vadd.f32 %v527, %v591
    %593 = vmatmul.f32.gmra.mxu0 %v478
    %v594 = vpop.f32.mrf.mxu0
    %v595 = vadd.f32 %v530, %v594
    %596 = vmatmul.f32.gmra.mxu0 %v480
    %v597 = vpop.f32.mrf.mxu0
    %v598 = vadd.f32 %v533, %v597
    %599 = vmatmul.f32.gmra.mxu0 %v482
    %v600 = vpop.f32.mrf.mxu0
    %v601 = vadd.f32 %v536, %v600
    %602 = vmatmul.f32.gmra.mxu0 %v484
    %v603 = vpop.f32.mrf.mxu0
    %v604 = vadd.f32 %v539, %v603
    %605 = vmatmul.f32.gmra.mxu0 %v486
    %v606 = vpop.f32.mrf.mxu0
    %v607 = vadd.f32 %v542, %v606
    %608 = vmatmul.f32.gmra.mxu0 %v488
    %v609 = vpop.f32.mrf.mxu0
    %v610 = vadd.f32 %v545, %v609
    %611 = vmatmul.f32.gmra.mxu0 %v490
    %v612 = vpop.f32.mrf.mxu0
    %v613 = vadd.f32 %v548, %v612
    %614 = vmatmul.f32.gmra.mxu0 %v492
    %v615 = vpop.f32.mrf.mxu0
    %v616 = vadd.f32 %v551, %v615
    %617 = vmatmul.f32.gmra.mxu0 %v494
    %v618 = vpop.f32.mrf.mxu0
    %v619 = vadd.f32 %v554, %v618
    %620 = vmatmul.f32.gmra.mxu0 %v496
    %v621 = vpop.f32.mrf.mxu0
    %v622 = vadd.f32 %v557, %v621
    %623 = vmatmul.f32.gmra.mxu0 %v498
    %v624 = vpop.f32.mrf.mxu0
    %v625 = vadd.f32 %v560, %v624
    %626 = vmatmul.f32.gmra.mxu0 %v500
    %v627 = vpop.f32.mrf.mxu0
    %v628 = vadd.f32 %v563, %v627
    %629 = vmatmul.f32.gmra.mxu0 %v502
    %v630 = vpop.f32.mrf.mxu0
    %v631 = vadd.f32 %v566, %v630
    %632 = vdwg.mxu0
    %v633 = vsub.f32 %v38, %v586
    %v634 = vsub.f32 %v39, %v589
    %v635 = vsub.f32 %v40, %v592
    %v636 = vsub.f32 %v41, %v595
    %v637 = vsub.f32 %v42, %v598
    %v638 = vsub.f32 %v43, %v601
    %v639 = vsub.f32 %v44, %v604
    %v640 = vsub.f32 %v45, %v607
    %v641 = vsub.f32 %v46, %v610
    %v642 = vsub.f32 %v47, %v613
    %v643 = vsub.f32 %v48, %v616
    %v644 = vsub.f32 %v49, %v619
    %v645 = vsub.f32 %v50, %v622
    %v646 = vsub.f32 %v51, %v625
    %v647 = vsub.f32 %v52, %v628
    %v648 = vsub.f32 %v53, %v631
    %v649 = vmul.f32 %v633, %v633
    %v650 = vmul.f32 %v634, %v634
    %v651 = vmul.f32 %v635, %v635
    %v652 = vmul.f32 %v636, %v636
    %v653 = vmul.f32 %v637, %v637
    %v654 = vmul.f32 %v638, %v638
    %v655 = vmul.f32 %v639, %v639
    %v656 = vmul.f32 %v640, %v640
    %v657 = vmul.f32 %v641, %v641
    %v658 = vmul.f32 %v642, %v642
    %v659 = vmul.f32 %v643, %v643
    %v660 = vmul.f32 %v644, %v644
    %v661 = vmul.f32 %v645, %v645
    %v662 = vmul.f32 %v646, %v646
    %v663 = vmul.f32 %v647, %v647
    %v664 = vmul.f32 %v648, %v648
    %v665 = vsel %vm63, %v649, 0.0
    %666 = vadd.xlane.f32.xlu0 %v665
    %v667 = vpop.xlane.xlu0 %666
    %v668 = vsel %vm63, %v650, 0.0
    %669 = vadd.xlane.f32.xlu0 %v668
    %v670 = vpop.xlane.xlu0 %669
    %v671 = vsel %vm63, %v651, 0.0
    %672 = vadd.xlane.f32.xlu0 %v671
    %v673 = vpop.xlane.xlu0 %672
    %v674 = vsel %vm63, %v652, 0.0
    %675 = vadd.xlane.f32.xlu0 %v674
    %v676 = vpop.xlane.xlu0 %675
    %v677 = vsel %vm63, %v653, 0.0
    %678 = vadd.xlane.f32.xlu0 %v677
    %v679 = vpop.xlane.xlu0 %678
    %v680 = vsel %vm63, %v654, 0.0
    %681 = vadd.xlane.f32.xlu0 %v680
    %v682 = vpop.xlane.xlu0 %681
    %v683 = vsel %vm63, %v655, 0.0
    %684 = vadd.xlane.f32.xlu0 %v683
    %v685 = vpop.xlane.xlu0 %684
    %v686 = vsel %vm63, %v656, 0.0
    %687 = vadd.xlane.f32.xlu0 %v686
    %v688 = vpop.xlane.xlu0 %687
    %v689 = vsel %vm63, %v657, 0.0
    %690 = vadd.xlane.f32.xlu0 %v689
    %v691 = vpop.xlane.xlu0 %690
    %v692 = vsel %vm63, %v658, 0.0
    %693 = vadd.xlane.f32.xlu0 %v692
    %v694 = vpop.xlane.xlu0 %693
    %v695 = vsel %vm63, %v659, 0.0
    %696 = vadd.xlane.f32.xlu0 %v695
    %v697 = vpop.xlane.xlu0 %696
    %v698 = vsel %vm63, %v660, 0.0
    %699 = vadd.xlane.f32.xlu0 %v698
    %v700 = vpop.xlane.xlu0 %699
    %v701 = vsel %vm63, %v661, 0.0
    %702 = vadd.xlane.f32.xlu0 %v701
    %v703 = vpop.xlane.xlu0 %702
    %v704 = vsel %vm63, %v662, 0.0
    %705 = vadd.xlane.f32.xlu0 %v704
    %v706 = vpop.xlane.xlu0 %705
    %v707 = vsel %vm63, %v663, 0.0
    %708 = vadd.xlane.f32.xlu0 %v707
    %v709 = vpop.xlane.xlu0 %708
    %v710 = vsel %vm63, %v664, 0.0
    %711 = vadd.xlane.f32.xlu0 %v710
    %v712 = vpop.xlane.xlu0 %711
    %v713 = vperm.slane %v286, %v36
    %v714 = vadd.s32 %v36, 4294967288
    %v715 = vperm.slane %v294, %v714
    %vm716 = vcmask 130112
    %v717 = vsel %vm716, %v715, %v713
    %v718 = vadd.s32 %v36, 4294967280
    %v719 = vperm.slane %v302, %v718
    %vm720 = vcmask 195712
    %v721 = vsel %vm720, %v719, %v717
    %v722 = vadd.s32 %v36, 4294967272
    %v723 = vperm.slane %v310, %v722
    %vm724 = vcmask 261312
    %v725 = vsel %vm724, %v723, %v721
    %v726 = vadd.s32 %v36, 4294967264
    %v727 = vperm.slane %v318, %v726
    %vm728 = vcmask 326912
    %v729 = vsel %vm728, %v727, %v725
    %v730 = vadd.s32 %v36, 4294967256
    %v731 = vperm.slane %v326, %v730
    %vm732 = vcmask 392512
    %v733 = vsel %vm732, %v731, %v729
    %v734 = vadd.s32 %v36, 4294967248
    %v735 = vperm.slane %v334, %v734
    %vm736 = vcmask 458112
    %v737 = vsel %vm736, %v735, %v733
    %v738 = vadd.s32 %v36, 4294967240
    %v739 = vperm.slane %v342, %v738
    %vm740 = vcmask 523712
    %v741 = vsel %vm740, %v739, %v737
    %v742 = vadd.s32 %v36, 4294967232
    %v743 = vperm.slane %v350, %v742
    %vm744 = vcmask 589312
    %v745 = vsel %vm744, %v743, %v741
    %v746 = vadd.s32 %v36, 4294967224
    %v747 = vperm.slane %v358, %v746
    %vm748 = vcmask 654912
    %v749 = vsel %vm748, %v747, %v745
    %v750 = vadd.s32 %v36, 4294967216
    %v751 = vperm.slane %v366, %v750
    %vm752 = vcmask 720512
    %v753 = vsel %vm752, %v751, %v749
    %v754 = vadd.s32 %v36, 4294967208
    %v755 = vperm.slane %v374, %v754
    %vm756 = vcmask 786112
    %v757 = vsel %vm756, %v755, %v753
    %v758 = vadd.s32 %v36, 4294967200
    %v759 = vperm.slane %v382, %v758
    %vm760 = vcmask 851712
    %v761 = vsel %vm760, %v759, %v757
    %v762 = vadd.s32 %v36, 4294967192
    %v763 = vperm.slane %v390, %v762
    %vm764 = vcmask 917312
    %v765 = vsel %vm764, %v763, %v761
    %v766 = vadd.s32 %v36, 4294967184
    %v767 = vperm.slane %v398, %v766
    %vm768 = vcmask 982912
    %v769 = vsel %vm768, %v767, %v765
    %v770 = vadd.s32 %v36, 4294967176
    %v771 = vperm.slane %v406, %v770
    %vm772 = vcmask 1048512
    %v773 = vsel %vm772, %v771, %v769
    %774 = vst [vmem:[#allocation5] sm:$0x1] %v773
    %v791 = vperm.slane %v667, %v36
    %v792 = vperm.slane %v670, %v714
    %v793 = vsel %vm716, %v792, %v791
    %v794 = vperm.slane %v673, %v718
    %v795 = vsel %vm720, %v794, %v793
    %v796 = vperm.slane %v676, %v722
    %v797 = vsel %vm724, %v796, %v795
    %v798 = vperm.slane %v679, %v726
    %v799 = vsel %vm728, %v798, %v797
    %v800 = vperm.slane %v682, %v730
    %v801 = vsel %vm732, %v800, %v799
    %v802 = vperm.slane %v685, %v734
    %v803 = vsel %vm736, %v802, %v801
    %v804 = vperm.slane %v688, %v738
    %v805 = vsel %vm740, %v804, %v803
    %v806 = vperm.slane %v691, %v742
    %v807 = vsel %vm744, %v806, %v805
    %v808 = vperm.slane %v694, %v746
    %v809 = vsel %vm748, %v808, %v807
    %v810 = vperm.slane %v697, %v750
    %v811 = vsel %vm752, %v810, %v809
    %v812 = vperm.slane %v700, %v754
    %v813 = vsel %vm756, %v812, %v811
    %v814 = vperm.slane %v703, %v758
    %v815 = vsel %vm760, %v814, %v813
    %v816 = vperm.slane %v706, %v762
    %v817 = vsel %vm764, %v816, %v815
    %v818 = vperm.slane %v709, %v766
    %v819 = vsel %vm768, %v818, %v817
    %v820 = vperm.slane %v712, %v770
    %v821 = vsel %vm772, %v820, %v819
    %823 = vst [vmem:[#allocation6] sm:$0x1] %v821
    %s824 = scalar_lea.vmem [#allocation2], 64
    %v825 = vld [vmem:[%s824] sm:$0xff]
    %v826 = vld [vmem:[%s824 + $0x8] sm:$0xff]
    %v827 = vld [vmem:[%s824 + $0x10] sm:$0xff]
    %v828 = vld [vmem:[%s824 + $0x18] sm:$0xff]
    %v829 = vld [vmem:[%s824 + $0x20] sm:$0xff]
    %v830 = vld [vmem:[%s824 + $0x28] sm:$0xff]
    %v831 = vld [vmem:[%s824 + $0x30] sm:$0xff]
    %v832 = vld [vmem:[%s824 + $0x38] sm:$0xff]
    %s833 = scalar_lea.vmem %s2, 2
    %v834 = vld [vmem:[%s833] sm:$0x3]
    %v836 = vsel %vm63, %v633, 0
    %v839 = vsel %vm63, %v634, 0
    %v842 = vsel %vm63, %v635, 0
    %v845 = vsel %vm63, %v636, 0
    %v848 = vsel %vm63, %v637, 0
    %v851 = vsel %vm63, %v638, 0
    %v854 = vsel %vm63, %v639, 0
    %v857 = vsel %vm63, %v640, 0
    %v860 = vsel %vm63, %v641, 0
    %v863 = vsel %vm63, %v642, 0
    %v866 = vsel %vm63, %v643, 0
    %v869 = vsel %vm63, %v644, 0
    %v872 = vsel %vm63, %v645, 0
    %v875 = vsel %vm63, %v646, 0
    %v878 = vsel %vm63, %v647, 0
    %v881 = vsel %vm63, %v648, 0
    %883 = vmatpush.msra.mxu0 0.0
    %884 = vmatpush.msra.mxu0 0.0
    %885 = vmatpush.msra.mxu0 0.0
    %886 = vmatpush.msra.mxu0 0.0
    %887 = vmatpush.msra.mxu0 0.0
    %888 = vmatpush.msra.mxu0 0.0
    %889 = vmatpush.msra.mxu0 0.0
    %890 = vmatpush.msra.mxu0 0.0
    %891 = vmatpush.msra.mxu0 0.0
    %892 = vmatpush.msra.mxu0 0.0
    %893 = vmatpush.msra.mxu0 0.0
    %894 = vmatpush.msra.mxu0 0.0
    %895 = vmatpush.msra.mxu0 %v831
    %896 = vmatpush.msra.mxu0 %v829
    %897 = vmatpush.msra.mxu0 %v827
    %898 = vmatpush.msra.mxu0 %v825
    %899 = vmatmul.f32.gmra.mxu0 %v836
    %v900 = vpop.f32.mrf.mxu0
    %v901 = vadd.f32 0.0, %v900
    %902 = vmatmul.f32.gmra.mxu0 %v839
    %v903 = vpop.f32.mrf.mxu0
    %v904 = vadd.f32 0.0, %v903
    %905 = vmatmul.f32.gmra.mxu0 %v842
    %v906 = vpop.f32.mrf.mxu0
    %v907 = vadd.f32 0.0, %v906
    %908 = vmatmul.f32.gmra.mxu0 %v845
    %v909 = vpop.f32.mrf.mxu0
    %v910 = vadd.f32 0.0, %v909
    %911 = vmatmul.f32.gmra.mxu0 %v848
    %v912 = vpop.f32.mrf.mxu0
    %v913 = vadd.f32 0.0, %v912
    %914 = vmatmul.f32.gmra.mxu0 %v851
    %v915 = vpop.f32.mrf.mxu0
    %v916 = vadd.f32 0.0, %v915
    %917 = vmatmul.f32.gmra.mxu0 %v854
    %v918 = vpop.f32.mrf.mxu0
    %v919 = vadd.f32 0.0, %v918
    %920 = vmatmul.f32.gmra.mxu0 %v857
    %v921 = vpop.f32.mrf.mxu0
    %v922 = vadd.f32 0.0, %v921
    %923 = vmatmul.f32.gmra.mxu0 %v860
    %v924 = vpop.f32.mrf.mxu0
    %v925 = vadd.f32 0.0, %v924
    %926 = vmatmul.f32.gmra.mxu0 %v863
    %v927 = vpop.f32.mrf.mxu0
    %v928 = vadd.f32 0.0, %v927
    %929 = vmatmul.f32.gmra.mxu0 %v866
    %v930 = vpop.f32.mrf.mxu0
    %v931 = vadd.f32 0.0, %v930
    %932 = vmatmul.f32.gmra.mxu0 %v869
    %v933 = vpop.f32.mrf.mxu0
    %v934 = vadd.f32 0.0, %v933
    %935 = vmatmul.f32.gmra.mxu0 %v872
    %v936 = vpop.f32.mrf.mxu0
    %v937 = vadd.f32 0.0, %v936
    %938 = vmatmul.f32.gmra.mxu0 %v875
    %v939 = vpop.f32.mrf.mxu0
    %v940 = vadd.f32 0.0, %v939
    %941 = vmatmul.f32.gmra.mxu0 %v878
    %v942 = vpop.f32.mrf.mxu0
    %v943 = vadd.f32 0.0, %v942
    %944 = vmatmul.f32.gmra.mxu0 %v881
    %v945 = vpop.f32.mrf.mxu0
    %v946 = vadd.f32 0.0, %v945
    %947 = vdwg.mxu0
    %948 = vmatpush.msra.mxu0 0.0
    %949 = vmatpush.msra.mxu0 0.0
    %950 = vmatpush.msra.mxu0 0.0
    %951 = vmatpush.msra.mxu0 0.0
    %952 = vmatpush.msra.mxu0 0.0
    %953 = vmatpush.msra.mxu0 0.0
    %954 = vmatpush.msra.mxu0 0.0
    %955 = vmatpush.msra.mxu0 0.0
    %956 = vmatpush.msra.mxu0 0.0
    %957 = vmatpush.msra.mxu0 0.0
    %958 = vmatpush.msra.mxu0 0.0
    %959 = vmatpush.msra.mxu0 0.0
    %960 = vmatpush.msra.mxu0 %v832
    %961 = vmatpush.msra.mxu0 %v830
    %962 = vmatpush.msra.mxu0 %v828
    %963 = vmatpush.msra.mxu0 %v826
    %964 = vmatmul.f32.gmra.mxu0 %v836
    %v965 = vpop.f32.mrf.mxu0
    %v966 = vadd.f32 0.0, %v965
    %967 = vmatmul.f32.gmra.mxu0 %v839
    %v968 = vpop.f32.mrf.mxu0
    %v969 = vadd.f32 0.0, %v968
    %970 = vmatmul.f32.gmra.mxu0 %v842
    %v971 = vpop.f32.mrf.mxu0
    %v972 = vadd.f32 0.0, %v971
    %973 = vmatmul.f32.gmra.mxu0 %v845
    %v974 = vpop.f32.mrf.mxu0
    %v975 = vadd.f32 0.0, %v974
    %976 = vmatmul.f32.gmra.mxu0 %v848
    %v977 = vpop.f32.mrf.mxu0
    %v978 = vadd.f32 0.0, %v977
    %979 = vmatmul.f32.gmra.mxu0 %v851
    %v980 = vpop.f32.mrf.mxu0
    %v981 = vadd.f32 0.0, %v980
    %982 = vmatmul.f32.gmra.mxu0 %v854
    %v983 = vpop.f32.mrf.mxu0
    %v984 = vadd.f32 0.0, %v983
    %985 = vmatmul.f32.gmra.mxu0 %v857
    %v986 = vpop.f32.mrf.mxu0
    %v987 = vadd.f32 0.0, %v986
    %988 = vmatmul.f32.gmra.mxu0 %v860
    %v989 = vpop.f32.mrf.mxu0
    %v990 = vadd.f32 0.0, %v989
    %991 = vmatmul.f32.gmra.mxu0 %v863
    %v992 = vpop.f32.mrf.mxu0
    %v993 = vadd.f32 0.0, %v992
    %994 = vmatmul.f32.gmra.mxu0 %v866
    %v995 = vpop.f32.mrf.mxu0
    %v996 = vadd.f32 0.0, %v995
    %997 = vmatmul.f32.gmra.mxu0 %v869
    %v998 = vpop.f32.mrf.mxu0
    %v999 = vadd.f32 0.0, %v998
    %1000 = vmatmul.f32.gmra.mxu0 %v872
    %v1001 = vpop.f32.mrf.mxu0
    %v1002 = vadd.f32 0.0, %v1001
    %1003 = vmatmul.f32.gmra.mxu0 %v875
    %v1004 = vpop.f32.mrf.mxu0
    %v1005 = vadd.f32 0.0, %v1004
    %1006 = vmatmul.f32.gmra.mxu0 %v878
    %v1007 = vpop.f32.mrf.mxu0
    %v1008 = vadd.f32 0.0, %v1007
    %1009 = vmatmul.f32.gmra.mxu0 %v881
    %v1010 = vpop.f32.mrf.mxu0
    %v1011 = vadd.f32 0.0, %v1010
    %1012 = vdwg.mxu0
    %v1014 = vperm.slane %v834, 0
    %v1015 = vperm.slane %v834, 1
    %v1018 = vsub.f32 %v901, %v1014
    %v1019 = vsub.f32 %v966, %v1015
    %v1020 = vsub.f32 %v904, %v1014
    %v1021 = vsub.f32 %v969, %v1015
    %v1022 = vsub.f32 %v907, %v1014
    %v1023 = vsub.f32 %v972, %v1015
    %v1024 = vsub.f32 %v910, %v1014
    %v1025 = vsub.f32 %v975, %v1015
    %v1026 = vsub.f32 %v913, %v1014
    %v1027 = vsub.f32 %v978, %v1015
    %v1028 = vsub.f32 %v916, %v1014
    %v1029 = vsub.f32 %v981, %v1015
    %v1030 = vsub.f32 %v919, %v1014
    %v1031 = vsub.f32 %v984, %v1015
    %v1032 = vsub.f32 %v922, %v1014
    %v1033 = vsub.f32 %v987, %v1015
    %v1034 = vsub.f32 %v925, %v1014
    %v1035 = vsub.f32 %v990, %v1015
    %v1036 = vsub.f32 %v928, %v1014
    %v1037 = vsub.f32 %v993, %v1015
    %v1038 = vsub.f32 %v931, %v1014
    %v1039 = vsub.f32 %v996, %v1015
    %v1040 = vsub.f32 %v934, %v1014
    %v1041 = vsub.f32 %v999, %v1015
    %v1042 = vsub.f32 %v937, %v1014
    %v1043 = vsub.f32 %v1002, %v1015
    %v1044 = vsub.f32 %v940, %v1014
    %v1045 = vsub.f32 %v1005, %v1015
    %v1046 = vsub.f32 %v943, %v1014
    %v1047 = vsub.f32 %v1008, %v1015
    %v1048 = vsub.f32 %v946, %v1014
    %v1049 = vsub.f32 %v1011, %v1015
    %vm1050 = vcmp.ge.f32.partialorder %v1018, %v1019
    %v1051 = vsel %vm1050, %v1018, %v1019
    %v1052 = vsel %vm1050, %v36, %v37
    %1053 = vmax.index.xlane.f32.xlu0 %v1051
    %v1054 = vpop.xlane.xlu0 %1053
    %1055 = vset.pattern.permute.xlu0 %v1054
    %1056 = vperm.xlu0 %1055, %v1052
    %v1057 = vpop.permute.xlu0 %1056
    %vm1058 = vcmp.ge.f32.partialorder %v1020, %v1021
    %v1059 = vsel %vm1058, %v1020, %v1021
    %v1060 = vsel %vm1058, %v36, %v37
    %1061 = vmax.index.xlane.f32.xlu0 %v1059
    %v1062 = vpop.xlane.xlu0 %1061
    %1063 = vset.pattern.permute.xlu0 %v1062
    %1064 = vperm.xlu0 %1063, %v1060
    %v1065 = vpop.permute.xlu0 %1064
    %vm1066 = vcmp.ge.f32.partialorder %v1022, %v1023
    %v1067 = vsel %vm1066, %v1022, %v1023
    %v1068 = vsel %vm1066, %v36, %v37
    %1069 = vmax.index.xlane.f32.xlu0 %v1067
    %v1070 = vpop.xlane.xlu0 %1069
    %1071 = vset.pattern.permute.xlu0 %v1070
    %1072 = vperm.xlu0 %1071, %v1068
    %v1073 = vpop.permute.xlu0 %1072
    %vm1074 = vcmp.ge.f32.partialorder %v1024, %v1025
    %v1075 = vsel %vm1074, %v1024, %v1025
    %v1076 = vsel %vm1074, %v36, %v37
    %1077 = vmax.index.xlane.f32.xlu0 %v1075
    %v1078 = vpop.xlane.xlu0 %1077
    %1079 = vset.pattern.permute.xlu0 %v1078
    %1080 = vperm.xlu0 %1079, %v1076
    %v1081 = vpop.permute.xlu0 %1080
    %vm1082 = vcmp.ge.f32.partialorder %v1026, %v1027
    %v1083 = vsel %vm1082, %v1026, %v1027
    %v1084 = vsel %vm1082, %v36, %v37
    %1085 = vmax.index.xlane.f32.xlu0 %v1083
    %v1086 = vpop.xlane.xlu0 %1085
    %1087 = vset.pattern.permute.xlu0 %v1086
    %1088 = vperm.xlu0 %1087, %v1084
    %v1089 = vpop.permute.xlu0 %1088
    %vm1090 = vcmp.ge.f32.partialorder %v1028, %v1029
    %v1091 = vsel %vm1090, %v1028, %v1029
    %v1092 = vsel %vm1090, %v36, %v37
    %1093 = vmax.index.xlane.f32.xlu0 %v1091
    %v1094 = vpop.xlane.xlu0 %1093
    %1095 = vset.pattern.permute.xlu0 %v1094
    %1096 = vperm.xlu0 %1095, %v1092
    %v1097 = vpop.permute.xlu0 %1096
    %vm1098 = vcmp.ge.f32.partialorder %v1030, %v1031
    %v1099 = vsel %vm1098, %v1030, %v1031
    %v1100 = vsel %vm1098, %v36, %v37
    %1101 = vmax.index.xlane.f32.xlu0 %v1099
    %v1102 = vpop.xlane.xlu0 %1101
    %1103 = vset.pattern.permute.xlu0 %v1102
    %1104 = vperm.xlu0 %1103, %v1100
    %v1105 = vpop.permute.xlu0 %1104
    %vm1106 = vcmp.ge.f32.partialorder %v1032, %v1033
    %v1107 = vsel %vm1106, %v1032, %v1033
    %v1108 = vsel %vm1106, %v36, %v37
    %1109 = vmax.index.xlane.f32.xlu0 %v1107
    %v1110 = vpop.xlane.xlu0 %1109
    %1111 = vset.pattern.permute.xlu0 %v1110
    %1112 = vperm.xlu0 %1111, %v1108
    %v1113 = vpop.permute.xlu0 %1112
    %vm1114 = vcmp.ge.f32.partialorder %v1034, %v1035
    %v1115 = vsel %vm1114, %v1034, %v1035
    %v1116 = vsel %vm1114, %v36, %v37
    %1117 = vmax.index.xlane.f32.xlu0 %v1115
    %v1118 = vpop.xlane.xlu0 %1117
    %1119 = vset.pattern.permute.xlu0 %v1118
    %1120 = vperm.xlu0 %1119, %v1116
    %v1121 = vpop.permute.xlu0 %1120
    %vm1122 = vcmp.ge.f32.partialorder %v1036, %v1037
    %v1123 = vsel %vm1122, %v1036, %v1037
    %v1124 = vsel %vm1122, %v36, %v37
    %1125 = vmax.index.xlane.f32.xlu0 %v1123
    %v1126 = vpop.xlane.xlu0 %1125
    %1127 = vset.pattern.permute.xlu0 %v1126
    %1128 = vperm.xlu0 %1127, %v1124
    %v1129 = vpop.permute.xlu0 %1128
    %vm1130 = vcmp.ge.f32.partialorder %v1038, %v1039
    %v1131 = vsel %vm1130, %v1038, %v1039
    %v1132 = vsel %vm1130, %v36, %v37
    %1133 = vmax.index.xlane.f32.xlu0 %v1131
    %v1134 = vpop.xlane.xlu0 %1133
    %1135 = vset.pattern.permute.xlu0 %v1134
    %1136 = vperm.xlu0 %1135, %v1132
    %v1137 = vpop.permute.xlu0 %1136
    %vm1138 = vcmp.ge.f32.partialorder %v1040, %v1041
    %v1139 = vsel %vm1138, %v1040, %v1041
    %v1140 = vsel %vm1138, %v36, %v37
    %1141 = vmax.index.xlane.f32.xlu0 %v1139
    %v1142 = vpop.xlane.xlu0 %1141
    %1143 = vset.pattern.permute.xlu0 %v1142
    %1144 = vperm.xlu0 %1143, %v1140
    %v1145 = vpop.permute.xlu0 %1144
    %vm1146 = vcmp.ge.f32.partialorder %v1042, %v1043
    %v1147 = vsel %vm1146, %v1042, %v1043
    %v1148 = vsel %vm1146, %v36, %v37
    %1149 = vmax.index.xlane.f32.xlu0 %v1147
    %v1150 = vpop.xlane.xlu0 %1149
    %1151 = vset.pattern.permute.xlu0 %v1150
    %1152 = vperm.xlu0 %1151, %v1148
    %v1153 = vpop.permute.xlu0 %1152
    %vm1154 = vcmp.ge.f32.partialorder %v1044, %v1045
    %v1155 = vsel %vm1154, %v1044, %v1045
    %v1156 = vsel %vm1154, %v36, %v37
    %1157 = vmax.index.xlane.f32.xlu0 %v1155
    %v1158 = vpop.xlane.xlu0 %1157
    %1159 = vset.pattern.permute.xlu0 %v1158
    %1160 = vperm.xlu0 %1159, %v1156
    %v1161 = vpop.permute.xlu0 %1160
    %vm1162 = vcmp.ge.f32.partialorder %v1046, %v1047
    %v1163 = vsel %vm1162, %v1046, %v1047
    %v1164 = vsel %vm1162, %v36, %v37
    %1165 = vmax.index.xlane.f32.xlu0 %v1163
    %v1166 = vpop.xlane.xlu0 %1165
    %1167 = vset.pattern.permute.xlu0 %v1166
    %1168 = vperm.xlu0 %1167, %v1164
    %v1169 = vpop.permute.xlu0 %1168
    %vm1170 = vcmp.ge.f32.partialorder %v1048, %v1049
    %v1171 = vsel %vm1170, %v1048, %v1049
    %v1172 = vsel %vm1170, %v36, %v37
    %1173 = vmax.index.xlane.f32.xlu0 %v1171
    %v1174 = vpop.xlane.xlu0 %1173
    %1175 = vset.pattern.permute.xlu0 %v1174
    %1176 = vperm.xlu0 %1175, %v1172
    %v1177 = vpop.permute.xlu0 %1176
    %vm1178 = vcmp.eq.s32.totalorder %v36, %v1057
    %vm1179 = vcmp.eq.s32.totalorder %v37, %v1057
    %vm1180 = vcmp.eq.s32.totalorder %v36, %v1065
    %vm1181 = vcmp.eq.s32.totalorder %v37, %v1065
    %vm1182 = vcmp.eq.s32.totalorder %v36, %v1073
    %vm1183 = vcmp.eq.s32.totalorder %v37, %v1073
    %vm1184 = vcmp.eq.s32.totalorder %v36, %v1081
    %vm1185 = vcmp.eq.s32.totalorder %v37, %v1081
    %vm1186 = vcmp.eq.s32.totalorder %v36, %v1089
    %vm1187 = vcmp.eq.s32.totalorder %v37, %v1089
    %vm1188 = vcmp.eq.s32.totalorder %v36, %v1097
    %vm1189 = vcmp.eq.s32.totalorder %v37, %v1097
    %vm1190 = vcmp.eq.s32.totalorder %v36, %v1105
    %vm1191 = vcmp.eq.s32.totalorder %v37, %v1105
    %vm1192 = vcmp.eq.s32.totalorder %v36, %v1113
    %vm1193 = vcmp.eq.s32.totalorder %v37, %v1113
    %vm1194 = vcmp.eq.s32.totalorder %v36, %v1121
    %vm1195 = vcmp.eq.s32.totalorder %v37, %v1121
    %vm1196 = vcmp.eq.s32.totalorder %v36, %v1129
    %vm1197 = vcmp.eq.s32.totalorder %v37, %v1129
    %vm1198 = vcmp.eq.s32.totalorder %v36, %v1137
    %vm1199 = vcmp.eq.s32.totalorder %v37, %v1137
    %vm1200 = vcmp.eq.s32.totalorder %v36, %v1145
    %vm1201 = vcmp.eq.s32.totalorder %v37, %v1145
    %vm1202 = vcmp.eq.s32.totalorder %v36, %v1153
    %vm1203 = vcmp.eq.s32.totalorder %v37, %v1153
    %vm1204 = vcmp.eq.s32.totalorder %v36, %v1161
    %vm1205 = vcmp.eq.s32.totalorder %v37, %v1161
    %vm1206 = vcmp.eq.s32.totalorder %v36, %v1169
    %vm1207 = vcmp.eq.s32.totalorder %v37, %v1169
    %vm1208 = vcmp.eq.s32.totalorder %v36, %v1177
    %vm1209 = vcmp.eq.s32.totalorder %v37, %v1177
    %v1210 = vsel %vm1178, 1, 0
    %v1211 = vsel %vm1179, 1, 0
    %v1212 = vsel %vm1180, 1, 0
    %v1213 = vsel %vm1181, 1, 0
    %v1214 = vsel %vm1182, 1, 0
    %v1215 = vsel %vm1183, 1, 0
    %v1216 = vsel %vm1184, 1, 0
    %v1217 = vsel %vm1185, 1, 0
    %v1218 = vsel %vm1186, 1, 0
    %v1219 = vsel %vm1187, 1, 0
    %v1220 = vsel %vm1188, 1, 0
    %v1221 = vsel %vm1189, 1, 0
    %v1222 = vsel %vm1190, 1, 0
    %v1223 = vsel %vm1191, 1, 0
    %v1224 = vsel %vm1192, 1, 0
    %v1225 = vsel %vm1193, 1, 0
    %v1226 = vsel %vm1194, 1, 0
    %v1227 = vsel %vm1195, 1, 0
    %v1228 = vsel %vm1196, 1, 0
    %v1229 = vsel %vm1197, 1, 0
    %v1230 = vsel %vm1198, 1, 0
    %v1231 = vsel %vm1199, 1, 0
    %v1232 = vsel %vm1200, 1, 0
    %v1233 = vsel %vm1201, 1, 0
    %v1234 = vsel %vm1202, 1, 0
    %v1235 = vsel %vm1203, 1, 0
    %v1236 = vsel %vm1204, 1, 0
    %v1237 = vsel %vm1205, 1, 0
    %v1238 = vsel %vm1206, 1, 0
    %v1239 = vsel %vm1207, 1, 0
    %v1240 = vsel %vm1208, 1, 0
    %v1241 = vsel %vm1209, 1, 0
    %v1242 = vcvt.s32.f32 %v1210
    %v1243 = vcvt.s32.f32 %v1211
    %v1244 = vcvt.s32.f32 %v1212
    %v1245 = vcvt.s32.f32 %v1213
    %v1246 = vcvt.s32.f32 %v1214
    %v1247 = vcvt.s32.f32 %v1215
    %v1248 = vcvt.s32.f32 %v1216
    %v1249 = vcvt.s32.f32 %v1217
    %v1250 = vcvt.s32.f32 %v1218
    %v1251 = vcvt.s32.f32 %v1219
    %v1252 = vcvt.s32.f32 %v1220
    %v1253 = vcvt.s32.f32 %v1221
    %v1254 = vcvt.s32.f32 %v1222
    %v1255 = vcvt.s32.f32 %v1223
    %v1256 = vcvt.s32.f32 %v1224
    %v1257 = vcvt.s32.f32 %v1225
    %v1258 = vcvt.s32.f32 %v1226
    %v1259 = vcvt.s32.f32 %v1227
    %v1260 = vcvt.s32.f32 %v1228
    %v1261 = vcvt.s32.f32 %v1229
    %v1262 = vcvt.s32.f32 %v1230
    %v1263 = vcvt.s32.f32 %v1231
    %v1264 = vcvt.s32.f32 %v1232
    %v1265 = vcvt.s32.f32 %v1233
    %v1266 = vcvt.s32.f32 %v1234
    %v1267 = vcvt.s32.f32 %v1235
    %v1268 = vcvt.s32.f32 %v1236
    %v1269 = vcvt.s32.f32 %v1237
    %v1270 = vcvt.s32.f32 %v1238
    %v1271 = vcvt.s32.f32 %v1239
    %v1272 = vcvt.s32.f32 %v1240
    %v1273 = vcvt.s32.f32 %v1241
    %1274 = vmatpush.xpose.msra.mxu0 0.0
    %1275 = vmatpush.xpose.msra.mxu0 0.0
    %1276 = vmatpush.xpose.msra.mxu0 0.0
    %1277 = vmatpush.xpose.msra.mxu0 0.0
    %1278 = vmatpush.xpose.msra.mxu0 0.0
    %1279 = vmatpush.xpose.msra.mxu0 0.0
    %1280 = vmatpush.xpose.msra.mxu0 0.0
    %1281 = vmatpush.xpose.msra.mxu0 0.0
    %1282 = vmatpush.xpose.msra.mxu0 0.0
    %1283 = vmatpush.xpose.msra.mxu0 0.0
    %1284 = vmatpush.xpose.msra.mxu0 0.0
    %1285 = vmatpush.xpose.msra.mxu0 0.0
    %1286 = vmatpush.xpose.msra.mxu0 %v831
    %1287 = vmatpush.xpose.msra.mxu0 %v829
    %1288 = vmatpush.xpose.msra.mxu0 %v827
    %1289 = vmatpush.xpose.msra.mxu0 %v825
    %1290 = vmatmul.f32.gmra.mxu0 %v1242
    %v1291 = vpop.f32.mrf.mxu0
    %v1292 = vadd.f32 0.0, %v1291
    %1293 = vmatmul.f32.gmra.mxu0 %v1244
    %v1294 = vpop.f32.mrf.mxu0
    %v1295 = vadd.f32 0.0, %v1294
    %1296 = vmatmul.f32.gmra.mxu0 %v1246
    %v1297 = vpop.f32.mrf.mxu0
    %v1298 = vadd.f32 0.0, %v1297
    %1299 = vmatmul.f32.gmra.mxu0 %v1248
    %v1300 = vpop.f32.mrf.mxu0
    %v1301 = vadd.f32 0.0, %v1300
    %1302 = vmatmul.f32.gmra.mxu0 %v1250
    %v1303 = vpop.f32.mrf.mxu0
    %v1304 = vadd.f32 0.0, %v1303
    %1305 = vmatmul.f32.gmra.mxu0 %v1252
    %v1306 = vpop.f32.mrf.mxu0
    %v1307 = vadd.f32 0.0, %v1306
    %1308 = vmatmul.f32.gmra.mxu0 %v1254
    %v1309 = vpop.f32.mrf.mxu0
    %v1310 = vadd.f32 0.0, %v1309
    %1311 = vmatmul.f32.gmra.mxu0 %v1256
    %v1312 = vpop.f32.mrf.mxu0
    %v1313 = vadd.f32 0.0, %v1312
    %1314 = vmatmul.f32.gmra.mxu0 %v1258
    %v1315 = vpop.f32.mrf.mxu0
    %v1316 = vadd.f32 0.0, %v1315
    %1317 = vmatmul.f32.gmra.mxu0 %v1260
    %v1318 = vpop.f32.mrf.mxu0
    %v1319 = vadd.f32 0.0, %v1318
    %1320 = vmatmul.f32.gmra.mxu0 %v1262
    %v1321 = vpop.f32.mrf.mxu0
    %v1322 = vadd.f32 0.0, %v1321
    %1323 = vmatmul.f32.gmra.mxu0 %v1264
    %v1324 = vpop.f32.mrf.mxu0
    %v1325 = vadd.f32 0.0, %v1324
    %1326 = vmatmul.f32.gmra.mxu0 %v1266
    %v1327 = vpop.f32.mrf.mxu0
    %v1328 = vadd.f32 0.0, %v1327
    %1329 = vmatmul.f32.gmra.mxu0 %v1268
    %v1330 = vpop.f32.mrf.mxu0
    %v1331 = vadd.f32 0.0, %v1330
    %1332 = vmatmul.f32.gmra.mxu0 %v1270
    %v1333 = vpop.f32.mrf.mxu0
    %v1334 = vadd.f32 0.0, %v1333
    %1335 = vmatmul.f32.gmra.mxu0 %v1272
    %v1336 = vpop.f32.mrf.mxu0
    %v1337 = vadd.f32 0.0, %v1336
    %1338 = vdwg.mxu0
    %1339 = vmatpush.xpose.msra.mxu0 0.0
    %1340 = vmatpush.xpose.msra.mxu0 0.0
    %1341 = vmatpush.xpose.msra.mxu0 0.0
    %1342 = vmatpush.xpose.msra.mxu0 0.0
    %1343 = vmatpush.xpose.msra.mxu0 0.0
    %1344 = vmatpush.xpose.msra.mxu0 0.0
    %1345 = vmatpush.xpose.msra.mxu0 0.0
    %1346 = vmatpush.xpose.msra.mxu0 0.0
    %1347 = vmatpush.xpose.msra.mxu0 0.0
    %1348 = vmatpush.xpose.msra.mxu0 0.0
    %1349 = vmatpush.xpose.msra.mxu0 0.0
    %1350 = vmatpush.xpose.msra.mxu0 0.0
    %1351 = vmatpush.xpose.msra.mxu0 %v832
    %1352 = vmatpush.xpose.msra.mxu0 %v830
    %1353 = vmatpush.xpose.msra.mxu0 %v828
    %1354 = vmatpush.xpose.msra.mxu0 %v826
    %1355 = vmatmul.f32.gmra.mxu0 %v1243
    %v1356 = vpop.f32.mrf.mxu0
    %v1357 = vadd.f32 %v1292, %v1356
    %1358 = vmatmul.f32.gmra.mxu0 %v1245
    %v1359 = vpop.f32.mrf.mxu0
    %v1360 = vadd.f32 %v1295, %v1359
    %1361 = vmatmul.f32.gmra.mxu0 %v1247
    %v1362 = vpop.f32.mrf.mxu0
    %v1363 = vadd.f32 %v1298, %v1362
    %1364 = vmatmul.f32.gmra.mxu0 %v1249
    %v1365 = vpop.f32.mrf.mxu0
    %v1366 = vadd.f32 %v1301, %v1365
    %1367 = vmatmul.f32.gmra.mxu0 %v1251
    %v1368 = vpop.f32.mrf.mxu0
    %v1369 = vadd.f32 %v1304, %v1368
    %1370 = vmatmul.f32.gmra.mxu0 %v1253
    %v1371 = vpop.f32.mrf.mxu0
    %v1372 = vadd.f32 %v1307, %v1371
    %1373 = vmatmul.f32.gmra.mxu0 %v1255
    %v1374 = vpop.f32.mrf.mxu0
    %v1375 = vadd.f32 %v1310, %v1374
    %1376 = vmatmul.f32.gmra.mxu0 %v1257
    %v1377 = vpop.f32.mrf.mxu0
    %v1378 = vadd.f32 %v1313, %v1377
    %1379 = vmatmul.f32.gmra.mxu0 %v1259
    %v1380 = vpop.f32.mrf.mxu0
    %v1381 = vadd.f32 %v1316, %v1380
    %1382 = vmatmul.f32.gmra.mxu0 %v1261
    %v1383 = vpop.f32.mrf.mxu0
    %v1384 = vadd.f32 %v1319, %v1383
    %1385 = vmatmul.f32.gmra.mxu0 %v1263
    %v1386 = vpop.f32.mrf.mxu0
    %v1387 = vadd.f32 %v1322, %v1386
    %1388 = vmatmul.f32.gmra.mxu0 %v1265
    %v1389 = vpop.f32.mrf.mxu0
    %v1390 = vadd.f32 %v1325, %v1389
    %1391 = vmatmul.f32.gmra.mxu0 %v1267
    %v1392 = vpop.f32.mrf.mxu0
    %v1393 = vadd.f32 %v1328, %v1392
    %1394 = vmatmul.f32.gmra.mxu0 %v1269
    %v1395 = vpop.f32.mrf.mxu0
    %v1396 = vadd.f32 %v1331, %v1395
    %1397 = vmatmul.f32.gmra.mxu0 %v1271
    %v1398 = vpop.f32.mrf.mxu0
    %v1399 = vadd.f32 %v1334, %v1398
    %1400 = vmatmul.f32.gmra.mxu0 %v1273
    %v1401 = vpop.f32.mrf.mxu0
    %v1402 = vadd.f32 %v1337, %v1401
    %1403 = vdwg.mxu0
    %v1404 = vsub.f32 %v633, %v1357
    %v1405 = vsub.f32 %v634, %v1360
    %v1406 = vsub.f32 %v635, %v1363
    %v1407 = vsub.f32 %v636, %v1366
    %v1408 = vsub.f32 %v637, %v1369
    %v1409 = vsub.f32 %v638, %v1372
    %v1410 = vsub.f32 %v639, %v1375
    %v1411 = vsub.f32 %v640, %v1378
    %v1412 = vsub.f32 %v641, %v1381
    %v1413 = vsub.f32 %v642, %v1384
    %v1414 = vsub.f32 %v643, %v1387
    %v1415 = vsub.f32 %v644, %v1390
    %v1416 = vsub.f32 %v645, %v1393
    %v1417 = vsub.f32 %v646, %v1396
    %v1418 = vsub.f32 %v647, %v1399
    %v1419 = vsub.f32 %v648, %v1402
    %v1420 = vmul.f32 %v1404, %v1404
    %v1421 = vmul.f32 %v1405, %v1405
    %v1422 = vmul.f32 %v1406, %v1406
    %v1423 = vmul.f32 %v1407, %v1407
    %v1424 = vmul.f32 %v1408, %v1408
    %v1425 = vmul.f32 %v1409, %v1409
    %v1426 = vmul.f32 %v1410, %v1410
    %v1427 = vmul.f32 %v1411, %v1411
    %v1428 = vmul.f32 %v1412, %v1412
    %v1429 = vmul.f32 %v1413, %v1413
    %v1430 = vmul.f32 %v1414, %v1414
    %v1431 = vmul.f32 %v1415, %v1415
    %v1432 = vmul.f32 %v1416, %v1416
    %v1433 = vmul.f32 %v1417, %v1417
    %v1434 = vmul.f32 %v1418, %v1418
    %v1435 = vmul.f32 %v1419, %v1419
    %v1436 = vsel %vm63, %v1420, 0.0
    %1437 = vadd.xlane.f32.xlu0 %v1436
    %v1438 = vpop.xlane.xlu0 %1437
    %v1439 = vsel %vm63, %v1421, 0.0
    %1440 = vadd.xlane.f32.xlu0 %v1439
    %v1441 = vpop.xlane.xlu0 %1440
    %v1442 = vsel %vm63, %v1422, 0.0
    %1443 = vadd.xlane.f32.xlu0 %v1442
    %v1444 = vpop.xlane.xlu0 %1443
    %v1445 = vsel %vm63, %v1423, 0.0
    %1446 = vadd.xlane.f32.xlu0 %v1445
    %v1447 = vpop.xlane.xlu0 %1446
    %v1448 = vsel %vm63, %v1424, 0.0
    %1449 = vadd.xlane.f32.xlu0 %v1448
    %v1450 = vpop.xlane.xlu0 %1449
    %v1451 = vsel %vm63, %v1425, 0.0
    %1452 = vadd.xlane.f32.xlu0 %v1451
    %v1453 = vpop.xlane.xlu0 %1452
    %v1454 = vsel %vm63, %v1426, 0.0
    %1455 = vadd.xlane.f32.xlu0 %v1454
    %v1456 = vpop.xlane.xlu0 %1455
    %v1457 = vsel %vm63, %v1427, 0.0
    %1458 = vadd.xlane.f32.xlu0 %v1457
    %v1459 = vpop.xlane.xlu0 %1458
    %v1460 = vsel %vm63, %v1428, 0.0
    %1461 = vadd.xlane.f32.xlu0 %v1460
    %v1462 = vpop.xlane.xlu0 %1461
    %v1463 = vsel %vm63, %v1429, 0.0
    %1464 = vadd.xlane.f32.xlu0 %v1463
    %v1465 = vpop.xlane.xlu0 %1464
    %v1466 = vsel %vm63, %v1430, 0.0
    %1467 = vadd.xlane.f32.xlu0 %v1466
    %v1468 = vpop.xlane.xlu0 %1467
    %v1469 = vsel %vm63, %v1431, 0.0
    %1470 = vadd.xlane.f32.xlu0 %v1469
    %v1471 = vpop.xlane.xlu0 %1470
    %v1472 = vsel %vm63, %v1432, 0.0
    %1473 = vadd.xlane.f32.xlu0 %v1472
    %v1474 = vpop.xlane.xlu0 %1473
    %v1475 = vsel %vm63, %v1433, 0.0
    %1476 = vadd.xlane.f32.xlu0 %v1475
    %v1477 = vpop.xlane.xlu0 %1476
    %v1478 = vsel %vm63, %v1434, 0.0
    %1479 = vadd.xlane.f32.xlu0 %v1478
    %v1480 = vpop.xlane.xlu0 %1479
    %v1481 = vsel %vm63, %v1435, 0.0
    %1482 = vadd.xlane.f32.xlu0 %v1481
    %v1483 = vpop.xlane.xlu0 %1482
    %v1484 = vperm.slane %v1057, %v36
    %v1485 = vperm.slane %v1065, %v714
    %v1486 = vsel %vm716, %v1485, %v1484
    %v1487 = vperm.slane %v1073, %v718
    %v1488 = vsel %vm720, %v1487, %v1486
    %v1489 = vperm.slane %v1081, %v722
    %v1490 = vsel %vm724, %v1489, %v1488
    %v1491 = vperm.slane %v1089, %v726
    %v1492 = vsel %vm728, %v1491, %v1490
    %v1493 = vperm.slane %v1097, %v730
    %v1494 = vsel %vm732, %v1493, %v1492
    %v1495 = vperm.slane %v1105, %v734
    %v1496 = vsel %vm736, %v1495, %v1494
    %v1497 = vperm.slane %v1113, %v738
    %v1498 = vsel %vm740, %v1497, %v1496
    %v1499 = vperm.slane %v1121, %v742
    %v1500 = vsel %vm744, %v1499, %v1498
    %v1501 = vperm.slane %v1129, %v746
    %v1502 = vsel %vm748, %v1501, %v1500
    %v1503 = vperm.slane %v1137, %v750
    %v1504 = vsel %vm752, %v1503, %v1502
    %v1505 = vperm.slane %v1145, %v754
    %v1506 = vsel %vm756, %v1505, %v1504
    %v1507 = vperm.slane %v1153, %v758
    %v1508 = vsel %vm760, %v1507, %v1506
    %v1509 = vperm.slane %v1161, %v762
    %v1510 = vsel %vm764, %v1509, %v1508
    %v1511 = vperm.slane %v1169, %v766
    %v1512 = vsel %vm768, %v1511, %v1510
    %v1513 = vperm.slane %v1177, %v770
    %v1514 = vsel %vm772, %v1513, %v1512
    %1515 = vst [vmem:[#allocation5 + $0x1] sm:$0x1] %v1514
    %v1532 = vperm.slane %v1438, %v36
    %v1533 = vperm.slane %v1441, %v714
    %v1534 = vsel %vm716, %v1533, %v1532
    %v1535 = vperm.slane %v1444, %v718
    %v1536 = vsel %vm720, %v1535, %v1534
    %v1537 = vperm.slane %v1447, %v722
    %v1538 = vsel %vm724, %v1537, %v1536
    %v1539 = vperm.slane %v1450, %v726
    %v1540 = vsel %vm728, %v1539, %v1538
    %v1541 = vperm.slane %v1453, %v730
    %v1542 = vsel %vm732, %v1541, %v1540
    %v1543 = vperm.slane %v1456, %v734
    %v1544 = vsel %vm736, %v1543, %v1542
    %v1545 = vperm.slane %v1459, %v738
    %v1546 = vsel %vm740, %v1545, %v1544
    %v1547 = vperm.slane %v1462, %v742
    %v1548 = vsel %vm744, %v1547, %v1546
    %v1549 = vperm.slane %v1465, %v746
    %v1550 = vsel %vm748, %v1549, %v1548
    %v1551 = vperm.slane %v1468, %v750
    %v1552 = vsel %vm752, %v1551, %v1550
    %v1553 = vperm.slane %v1471, %v754
    %v1554 = vsel %vm756, %v1553, %v1552
    %v1555 = vperm.slane %v1474, %v758
    %v1556 = vsel %vm760, %v1555, %v1554
    %v1557 = vperm.slane %v1477, %v762
    %v1558 = vsel %vm764, %v1557, %v1556
    %v1559 = vperm.slane %v1480, %v766
    %v1560 = vsel %vm768, %v1559, %v1558
    %v1561 = vperm.slane %v1483, %v770
    %v1562 = vsel %vm772, %v1561, %v1560
    %1564 = vst [vmem:[#allocation6 + $0x1] sm:$0x1] %v1562
    %s1565 = scalar_lea.vmem [#allocation2], 128
    %v1566 = vld [vmem:[%s1565] sm:$0xff]
    %v1567 = vld [vmem:[%s1565 + $0x8] sm:$0xff]
    %v1568 = vld [vmem:[%s1565 + $0x10] sm:$0xff]
    %v1569 = vld [vmem:[%s1565 + $0x18] sm:$0xff]
    %v1570 = vld [vmem:[%s1565 + $0x20] sm:$0xff]
    %v1571 = vld [vmem:[%s1565 + $0x28] sm:$0xff]
    %v1572 = vld [vmem:[%s1565 + $0x30] sm:$0xff]
    %v1573 = vld [vmem:[%s1565 + $0x38] sm:$0xff]
    %s1574 = scalar_lea.vmem %s2, 4
    %v1575 = vld [vmem:[%s1574] sm:$0x3]
    %v1577 = vsel %vm63, %v1404, 0
    %v1580 = vsel %vm63, %v1405, 0
    %v1583 = vsel %vm63, %v1406, 0
    %v1586 = vsel %vm63, %v1407, 0
    %v1589 = vsel %vm63, %v1408, 0
    %v1592 = vsel %vm63, %v1409, 0
    %v1595 = vsel %vm63, %v1410, 0
    %v1598 = vsel %vm63, %v1411, 0
    %v1601 = vsel %vm63, %v1412, 0
    %v1604 = vsel %vm63, %v1413, 0
    %v1607 = vsel %vm63, %v1414, 0
    %v1610 = vsel %vm63, %v1415, 0
    %v1613 = vsel %vm63, %v1416, 0
    %v1616 = vsel %vm63, %v1417, 0
    %v1619 = vsel %vm63, %v1418, 0
    %v1622 = vsel %vm63, %v1419, 0
    %1624 = vmatpush.msra.mxu0 0.0
    %1625 = vmatpush.msra.mxu0 0.0
    %1626 = vmatpush.msra.mxu0 0.0
    %1627 = vmatpush.msra.mxu0 0.0
    %1628 = vmatpush.msra.mxu0 0.0
    %1629 = vmatpush.msra.mxu0 0.0
    %1630 = vmatpush.msra.mxu0 0.0
    %1631 = vmatpush.msra.mxu0 0.0
    %1632 = vmatpush.msra.mxu0 0.0
    %1633 = vmatpush.msra.mxu0 0.0
    %1634 = vmatpush.msra.mxu0 0.0
    %1635 = vmatpush.msra.mxu0 0.0
    %1636 = vmatpush.msra.mxu0 %v1572
    %1637 = vmatpush.msra.mxu0 %v1570
    %1638 = vmatpush.msra.mxu0 %v1568
    %1639 = vmatpush.msra.mxu0 %v1566
    %1640 = vmatmul.f32.gmra.mxu0 %v1577
    %v1641 = vpop.f32.mrf.mxu0
    %v1642 = vadd.f32 0.0, %v1641
    %1643 = vmatmul.f32.gmra.mxu0 %v1580
    %v1644 = vpop.f32.mrf.mxu0
    %v1645 = vadd.f32 0.0, %v1644
    %1646 = vmatmul.f32.gmra.mxu0 %v1583
    %v1647 = vpop.f32.mrf.mxu0
    %v1648 = vadd.f32 0.0, %v1647
    %1649 = vmatmul.f32.gmra.mxu0 %v1586
    %v1650 = vpop.f32.mrf.mxu0
    %v1651 = vadd.f32 0.0, %v1650
    %1652 = vmatmul.f32.gmra.mxu0 %v1589
    %v1653 = vpop.f32.mrf.mxu0
    %v1654 = vadd.f32 0.0, %v1653
    %1655 = vmatmul.f32.gmra.mxu0 %v1592
    %v1656 = vpop.f32.mrf.mxu0
    %v1657 = vadd.f32 0.0, %v1656
    %1658 = vmatmul.f32.gmra.mxu0 %v1595
    %v1659 = vpop.f32.mrf.mxu0
    %v1660 = vadd.f32 0.0, %v1659
    %1661 = vmatmul.f32.gmra.mxu0 %v1598
    %v1662 = vpop.f32.mrf.mxu0
    %v1663 = vadd.f32 0.0, %v1662
    %1664 = vmatmul.f32.gmra.mxu0 %v1601
    %v1665 = vpop.f32.mrf.mxu0
    %v1666 = vadd.f32 0.0, %v1665
    %1667 = vmatmul.f32.gmra.mxu0 %v1604
    %v1668 = vpop.f32.mrf.mxu0
    %v1669 = vadd.f32 0.0, %v1668
    %1670 = vmatmul.f32.gmra.mxu0 %v1607
    %v1671 = vpop.f32.mrf.mxu0
    %v1672 = vadd.f32 0.0, %v1671
    %1673 = vmatmul.f32.gmra.mxu0 %v1610
    %v1674 = vpop.f32.mrf.mxu0
    %v1675 = vadd.f32 0.0, %v1674
    %1676 = vmatmul.f32.gmra.mxu0 %v1613
    %v1677 = vpop.f32.mrf.mxu0
    %v1678 = vadd.f32 0.0, %v1677
    %1679 = vmatmul.f32.gmra.mxu0 %v1616
    %v1680 = vpop.f32.mrf.mxu0
    %v1681 = vadd.f32 0.0, %v1680
    %1682 = vmatmul.f32.gmra.mxu0 %v1619
    %v1683 = vpop.f32.mrf.mxu0
    %v1684 = vadd.f32 0.0, %v1683
    %1685 = vmatmul.f32.gmra.mxu0 %v1622
    %v1686 = vpop.f32.mrf.mxu0
    %v1687 = vadd.f32 0.0, %v1686
    %1688 = vdwg.mxu0
    %1689 = vmatpush.msra.mxu0 0.0
    %1690 = vmatpush.msra.mxu0 0.0
    %1691 = vmatpush.msra.mxu0 0.0
    %1692 = vmatpush.msra.mxu0 0.0
    %1693 = vmatpush.msra.mxu0 0.0
    %1694 = vmatpush.msra.mxu0 0.0
    %1695 = vmatpush.msra.mxu0 0.0
    %1696 = vmatpush.msra.mxu0 0.0
    %1697 = vmatpush.msra.mxu0 0.0
    %1698 = vmatpush.msra.mxu0 0.0
    %1699 = vmatpush.msra.mxu0 0.0
    %1700 = vmatpush.msra.mxu0 0.0
    %1701 = vmatpush.msra.mxu0 %v1573
    %1702 = vmatpush.msra.mxu0 %v1571
    %1703 = vmatpush.msra.mxu0 %v1569
    %1704 = vmatpush.msra.mxu0 %v1567
    %1705 = vmatmul.f32.gmra.mxu0 %v1577
    %v1706 = vpop.f32.mrf.mxu0
    %v1707 = vadd.f32 0.0, %v1706
    %1708 = vmatmul.f32.gmra.mxu0 %v1580
    %v1709 = vpop.f32.mrf.mxu0
    %v1710 = vadd.f32 0.0, %v1709
    %1711 = vmatmul.f32.gmra.mxu0 %v1583
    %v1712 = vpop.f32.mrf.mxu0
    %v1713 = vadd.f32 0.0, %v1712
    %1714 = vmatmul.f32.gmra.mxu0 %v1586
    %v1715 = vpop.f32.mrf.mxu0
    %v1716 = vadd.f32 0.0, %v1715
    %1717 = vmatmul.f32.gmra.mxu0 %v1589
    %v1718 = vpop.f32.mrf.mxu0
    %v1719 = vadd.f32 0.0, %v1718
    %1720 = vmatmul.f32.gmra.mxu0 %v1592
    %v1721 = vpop.f32.mrf.mxu0
    %v1722 = vadd.f32 0.0, %v1721
    %1723 = vmatmul.f32.gmra.mxu0 %v1595
    %v1724 = vpop.f32.mrf.mxu0
    %v1725 = vadd.f32 0.0, %v1724
    %1726 = vmatmul.f32.gmra.mxu0 %v1598
    %v1727 = vpop.f32.mrf.mxu0
    %v1728 = vadd.f32 0.0, %v1727
    %1729 = vmatmul.f32.gmra.mxu0 %v1601
    %v1730 = vpop.f32.mrf.mxu0
    %v1731 = vadd.f32 0.0, %v1730
    %1732 = vmatmul.f32.gmra.mxu0 %v1604
    %v1733 = vpop.f32.mrf.mxu0
    %v1734 = vadd.f32 0.0, %v1733
    %1735 = vmatmul.f32.gmra.mxu0 %v1607
    %v1736 = vpop.f32.mrf.mxu0
    %v1737 = vadd.f32 0.0, %v1736
    %1738 = vmatmul.f32.gmra.mxu0 %v1610
    %v1739 = vpop.f32.mrf.mxu0
    %v1740 = vadd.f32 0.0, %v1739
    %1741 = vmatmul.f32.gmra.mxu0 %v1613
    %v1742 = vpop.f32.mrf.mxu0
    %v1743 = vadd.f32 0.0, %v1742
    %1744 = vmatmul.f32.gmra.mxu0 %v1616
    %v1745 = vpop.f32.mrf.mxu0
    %v1746 = vadd.f32 0.0, %v1745
    %1747 = vmatmul.f32.gmra.mxu0 %v1619
    %v1748 = vpop.f32.mrf.mxu0
    %v1749 = vadd.f32 0.0, %v1748
    %1750 = vmatmul.f32.gmra.mxu0 %v1622
    %v1751 = vpop.f32.mrf.mxu0
    %v1752 = vadd.f32 0.0, %v1751
    %1753 = vdwg.mxu0
    %v1755 = vperm.slane %v1575, 0
    %v1756 = vperm.slane %v1575, 1
    %v1759 = vsub.f32 %v1642, %v1755
    %v1760 = vsub.f32 %v1707, %v1756
    %v1761 = vsub.f32 %v1645, %v1755
    %v1762 = vsub.f32 %v1710, %v1756
    %v1763 = vsub.f32 %v1648, %v1755
    %v1764 = vsub.f32 %v1713, %v1756
    %v1765 = vsub.f32 %v1651, %v1755
    %v1766 = vsub.f32 %v1716, %v1756
    %v1767 = vsub.f32 %v1654, %v1755
    %v1768 = vsub.f32 %v1719, %v1756
    %v1769 = vsub.f32 %v1657, %v1755
    %v1770 = vsub.f32 %v1722, %v1756
    %v1771 = vsub.f32 %v1660, %v1755
    %v1772 = vsub.f32 %v1725, %v1756
    %v1773 = vsub.f32 %v1663, %v1755
    %v1774 = vsub.f32 %v1728, %v1756
    %v1775 = vsub.f32 %v1666, %v1755
    %v1776 = vsub.f32 %v1731, %v1756
    %v1777 = vsub.f32 %v1669, %v1755
    %v1778 = vsub.f32 %v1734, %v1756
    %v1779 = vsub.f32 %v1672, %v1755
    %v1780 = vsub.f32 %v1737, %v1756
    %v1781 = vsub.f32 %v1675, %v1755
    %v1782 = vsub.f32 %v1740, %v1756
    %v1783 = vsub.f32 %v1678, %v1755
    %v1784 = vsub.f32 %v1743, %v1756
    %v1785 = vsub.f32 %v1681, %v1755
    %v1786 = vsub.f32 %v1746, %v1756
    %v1787 = vsub.f32 %v1684, %v1755
    %v1788 = vsub.f32 %v1749, %v1756
    %v1789 = vsub.f32 %v1687, %v1755
    %v1790 = vsub.f32 %v1752, %v1756
    %vm1791 = vcmp.ge.f32.partialorder %v1759, %v1760
    %v1792 = vsel %vm1791, %v1759, %v1760
    %v1793 = vsel %vm1791, %v36, %v37
    %1794 = vmax.index.xlane.f32.xlu0 %v1792
    %v1795 = vpop.xlane.xlu0 %1794
    %1796 = vset.pattern.permute.xlu0 %v1795
    %1797 = vperm.xlu0 %1796, %v1793
    %v1798 = vpop.permute.xlu0 %1797
    %vm1799 = vcmp.ge.f32.partialorder %v1761, %v1762
    %v1800 = vsel %vm1799, %v1761, %v1762
    %v1801 = vsel %vm1799, %v36, %v37
    %1802 = vmax.index.xlane.f32.xlu0 %v1800
    %v1803 = vpop.xlane.xlu0 %1802
    %1804 = vset.pattern.permute.xlu0 %v1803
    %1805 = vperm.xlu0 %1804, %v1801
    %v1806 = vpop.permute.xlu0 %1805
    %vm1807 = vcmp.ge.f32.partialorder %v1763, %v1764
    %v1808 = vsel %vm1807, %v1763, %v1764
    %v1809 = vsel %vm1807, %v36, %v37
    %1810 = vmax.index.xlane.f32.xlu0 %v1808
    %v1811 = vpop.xlane.xlu0 %1810
    %1812 = vset.pattern.permute.xlu0 %v1811
    %1813 = vperm.xlu0 %1812, %v1809
    %v1814 = vpop.permute.xlu0 %1813
    %vm1815 = vcmp.ge.f32.partialorder %v1765, %v1766
    %v1816 = vsel %vm1815, %v1765, %v1766
    %v1817 = vsel %vm1815, %v36, %v37
    %1818 = vmax.index.xlane.f32.xlu0 %v1816
    %v1819 = vpop.xlane.xlu0 %1818
    %1820 = vset.pattern.permute.xlu0 %v1819
    %1821 = vperm.xlu0 %1820, %v1817
    %v1822 = vpop.permute.xlu0 %1821
    %vm1823 = vcmp.ge.f32.partialorder %v1767, %v1768
    %v1824 = vsel %vm1823, %v1767, %v1768
    %v1825 = vsel %vm1823, %v36, %v37
    %1826 = vmax.index.xlane.f32.xlu0 %v1824
    %v1827 = vpop.xlane.xlu0 %1826
    %1828 = vset.pattern.permute.xlu0 %v1827
    %1829 = vperm.xlu0 %1828, %v1825
    %v1830 = vpop.permute.xlu0 %1829
    %vm1831 = vcmp.ge.f32.partialorder %v1769, %v1770
    %v1832 = vsel %vm1831, %v1769, %v1770
    %v1833 = vsel %vm1831, %v36, %v37
    %1834 = vmax.index.xlane.f32.xlu0 %v1832
    %v1835 = vpop.xlane.xlu0 %1834
    %1836 = vset.pattern.permute.xlu0 %v1835
    %1837 = vperm.xlu0 %1836, %v1833
    %v1838 = vpop.permute.xlu0 %1837
    %vm1839 = vcmp.ge.f32.partialorder %v1771, %v1772
    %v1840 = vsel %vm1839, %v1771, %v1772
    %v1841 = vsel %vm1839, %v36, %v37
    %1842 = vmax.index.xlane.f32.xlu0 %v1840
    %v1843 = vpop.xlane.xlu0 %1842
    %1844 = vset.pattern.permute.xlu0 %v1843
    %1845 = vperm.xlu0 %1844, %v1841
    %v1846 = vpop.permute.xlu0 %1845
    %vm1847 = vcmp.ge.f32.partialorder %v1773, %v1774
    %v1848 = vsel %vm1847, %v1773, %v1774
    %v1849 = vsel %vm1847, %v36, %v37
    %1850 = vmax.index.xlane.f32.xlu0 %v1848
    %v1851 = vpop.xlane.xlu0 %1850
    %1852 = vset.pattern.permute.xlu0 %v1851
    %1853 = vperm.xlu0 %1852, %v1849
    %v1854 = vpop.permute.xlu0 %1853
    %vm1855 = vcmp.ge.f32.partialorder %v1775, %v1776
    %v1856 = vsel %vm1855, %v1775, %v1776
    %v1857 = vsel %vm1855, %v36, %v37
    %1858 = vmax.index.xlane.f32.xlu0 %v1856
    %v1859 = vpop.xlane.xlu0 %1858
    %1860 = vset.pattern.permute.xlu0 %v1859
    %1861 = vperm.xlu0 %1860, %v1857
    %v1862 = vpop.permute.xlu0 %1861
    %vm1863 = vcmp.ge.f32.partialorder %v1777, %v1778
    %v1864 = vsel %vm1863, %v1777, %v1778
    %v1865 = vsel %vm1863, %v36, %v37
    %1866 = vmax.index.xlane.f32.xlu0 %v1864
    %v1867 = vpop.xlane.xlu0 %1866
    %1868 = vset.pattern.permute.xlu0 %v1867
    %1869 = vperm.xlu0 %1868, %v1865
    %v1870 = vpop.permute.xlu0 %1869
    %vm1871 = vcmp.ge.f32.partialorder %v1779, %v1780
    %v1872 = vsel %vm1871, %v1779, %v1780
    %v1873 = vsel %vm1871, %v36, %v37
    %1874 = vmax.index.xlane.f32.xlu0 %v1872
    %v1875 = vpop.xlane.xlu0 %1874
    %1876 = vset.pattern.permute.xlu0 %v1875
    %1877 = vperm.xlu0 %1876, %v1873
    %v1878 = vpop.permute.xlu0 %1877
    %vm1879 = vcmp.ge.f32.partialorder %v1781, %v1782
    %v1880 = vsel %vm1879, %v1781, %v1782
    %v1881 = vsel %vm1879, %v36, %v37
    %1882 = vmax.index.xlane.f32.xlu0 %v1880
    %v1883 = vpop.xlane.xlu0 %1882
    %1884 = vset.pattern.permute.xlu0 %v1883
    %1885 = vperm.xlu0 %1884, %v1881
    %v1886 = vpop.permute.xlu0 %1885
    %vm1887 = vcmp.ge.f32.partialorder %v1783, %v1784
    %v1888 = vsel %vm1887, %v1783, %v1784
    %v1889 = vsel %vm1887, %v36, %v37
    %1890 = vmax.index.xlane.f32.xlu0 %v1888
    %v1891 = vpop.xlane.xlu0 %1890
    %1892 = vset.pattern.permute.xlu0 %v1891
    %1893 = vperm.xlu0 %1892, %v1889
    %v1894 = vpop.permute.xlu0 %1893
    %vm1895 = vcmp.ge.f32.partialorder %v1785, %v1786
    %v1896 = vsel %vm1895, %v1785, %v1786
    %v1897 = vsel %vm1895, %v36, %v37
    %1898 = vmax.index.xlane.f32.xlu0 %v1896
    %v1899 = vpop.xlane.xlu0 %1898
    %1900 = vset.pattern.permute.xlu0 %v1899
    %1901 = vperm.xlu0 %1900, %v1897
    %v1902 = vpop.permute.xlu0 %1901
    %vm1903 = vcmp.ge.f32.partialorder %v1787, %v1788
    %v1904 = vsel %vm1903, %v1787, %v1788
    %v1905 = vsel %vm1903, %v36, %v37
    %1906 = vmax.index.xlane.f32.xlu0 %v1904
    %v1907 = vpop.xlane.xlu0 %1906
    %1908 = vset.pattern.permute.xlu0 %v1907
    %1909 = vperm.xlu0 %1908, %v1905
    %v1910 = vpop.permute.xlu0 %1909
    %vm1911 = vcmp.ge.f32.partialorder %v1789, %v1790
    %v1912 = vsel %vm1911, %v1789, %v1790
    %v1913 = vsel %vm1911, %v36, %v37
    %1914 = vmax.index.xlane.f32.xlu0 %v1912
    %v1915 = vpop.xlane.xlu0 %1914
    %1916 = vset.pattern.permute.xlu0 %v1915
    %1917 = vperm.xlu0 %1916, %v1913
    %v1918 = vpop.permute.xlu0 %1917
    %vm1919 = vcmp.eq.s32.totalorder %v36, %v1798
    %vm1920 = vcmp.eq.s32.totalorder %v37, %v1798
    %vm1921 = vcmp.eq.s32.totalorder %v36, %v1806
    %vm1922 = vcmp.eq.s32.totalorder %v37, %v1806
    %vm1923 = vcmp.eq.s32.totalorder %v36, %v1814
    %vm1924 = vcmp.eq.s32.totalorder %v37, %v1814
    %vm1925 = vcmp.eq.s32.totalorder %v36, %v1822
    %vm1926 = vcmp.eq.s32.totalorder %v37, %v1822
    %vm1927 = vcmp.eq.s32.totalorder %v36, %v1830
    %vm1928 = vcmp.eq.s32.totalorder %v37, %v1830
    %vm1929 = vcmp.eq.s32.totalorder %v36, %v1838
    %vm1930 = vcmp.eq.s32.totalorder %v37, %v1838
    %vm1931 = vcmp.eq.s32.totalorder %v36, %v1846
    %vm1932 = vcmp.eq.s32.totalorder %v37, %v1846
    %vm1933 = vcmp.eq.s32.totalorder %v36, %v1854
    %vm1934 = vcmp.eq.s32.totalorder %v37, %v1854
    %vm1935 = vcmp.eq.s32.totalorder %v36, %v1862
    %vm1936 = vcmp.eq.s32.totalorder %v37, %v1862
    %vm1937 = vcmp.eq.s32.totalorder %v36, %v1870
    %vm1938 = vcmp.eq.s32.totalorder %v37, %v1870
    %vm1939 = vcmp.eq.s32.totalorder %v36, %v1878
    %vm1940 = vcmp.eq.s32.totalorder %v37, %v1878
    %vm1941 = vcmp.eq.s32.totalorder %v36, %v1886
    %vm1942 = vcmp.eq.s32.totalorder %v37, %v1886
    %vm1943 = vcmp.eq.s32.totalorder %v36, %v1894
    %vm1944 = vcmp.eq.s32.totalorder %v37, %v1894
    %vm1945 = vcmp.eq.s32.totalorder %v36, %v1902
    %vm1946 = vcmp.eq.s32.totalorder %v37, %v1902
    %vm1947 = vcmp.eq.s32.totalorder %v36, %v1910
    %vm1948 = vcmp.eq.s32.totalorder %v37, %v1910
    %vm1949 = vcmp.eq.s32.totalorder %v36, %v1918
    %vm1950 = vcmp.eq.s32.totalorder %v37, %v1918
    %v1951 = vsel %vm1919, 1, 0
    %v1952 = vsel %vm1920, 1, 0
    %v1953 = vsel %vm1921, 1, 0
    %v1954 = vsel %vm1922, 1, 0
    %v1955 = vsel %vm1923, 1, 0
    %v1956 = vsel %vm1924, 1, 0
    %v1957 = vsel %vm1925, 1, 0
    %v1958 = vsel %vm1926, 1, 0
    %v1959 = vsel %vm1927, 1, 0
    %v1960 = vsel %vm1928, 1, 0
    %v1961 = vsel %vm1929, 1, 0
    %v1962 = vsel %vm1930, 1, 0
    %v1963 = vsel %vm1931, 1, 0
    %v1964 = vsel %vm1932, 1, 0
    %v1965 = vsel %vm1933, 1, 0
    %v1966 = vsel %vm1934, 1, 0
    %v1967 = vsel %vm1935, 1, 0
    %v1968 = vsel %vm1936, 1, 0
    %v1969 = vsel %vm1937, 1, 0
    %v1970 = vsel %vm1938, 1, 0
    %v1971 = vsel %vm1939, 1, 0
    %v1972 = vsel %vm1940, 1, 0
    %v1973 = vsel %vm1941, 1, 0
    %v1974 = vsel %vm1942, 1, 0
    %v1975 = vsel %vm1943, 1, 0
    %v1976 = vsel %vm1944, 1, 0
    %v1977 = vsel %vm1945, 1, 0
    %v1978 = vsel %vm1946, 1, 0
    %v1979 = vsel %vm1947, 1, 0
    %v1980 = vsel %vm1948, 1, 0
    %v1981 = vsel %vm1949, 1, 0
    %v1982 = vsel %vm1950, 1, 0
    %v1983 = vcvt.s32.f32 %v1951
    %v1984 = vcvt.s32.f32 %v1952
    %v1985 = vcvt.s32.f32 %v1953
    %v1986 = vcvt.s32.f32 %v1954
    %v1987 = vcvt.s32.f32 %v1955
    %v1988 = vcvt.s32.f32 %v1956
    %v1989 = vcvt.s32.f32 %v1957
    %v1990 = vcvt.s32.f32 %v1958
    %v1991 = vcvt.s32.f32 %v1959
    %v1992 = vcvt.s32.f32 %v1960
    %v1993 = vcvt.s32.f32 %v1961
    %v1994 = vcvt.s32.f32 %v1962
    %v1995 = vcvt.s32.f32 %v1963
    %v1996 = vcvt.s32.f32 %v1964
    %v1997 = vcvt.s32.f32 %v1965
    %v1998 = vcvt.s32.f32 %v1966
    %v1999 = vcvt.s32.f32 %v1967
    %v2000 = vcvt.s32.f32 %v1968
    %v2001 = vcvt.s32.f32 %v1969
    %v2002 = vcvt.s32.f32 %v1970
    %v2003 = vcvt.s32.f32 %v1971
    %v2004 = vcvt.s32.f32 %v1972
    %v2005 = vcvt.s32.f32 %v1973
    %v2006 = vcvt.s32.f32 %v1974
    %v2007 = vcvt.s32.f32 %v1975
    %v2008 = vcvt.s32.f32 %v1976
    %v2009 = vcvt.s32.f32 %v1977
    %v2010 = vcvt.s32.f32 %v1978
    %v2011 = vcvt.s32.f32 %v1979
    %v2012 = vcvt.s32.f32 %v1980
    %v2013 = vcvt.s32.f32 %v1981
    %v2014 = vcvt.s32.f32 %v1982
    %2015 = vmatpush.xpose.msra.mxu0 0.0
    %2016 = vmatpush.xpose.msra.mxu0 0.0
    %2017 = vmatpush.xpose.msra.mxu0 0.0
    %2018 = vmatpush.xpose.msra.mxu0 0.0
    %2019 = vmatpush.xpose.msra.mxu0 0.0
    %2020 = vmatpush.xpose.msra.mxu0 0.0
    %2021 = vmatpush.xpose.msra.mxu0 0.0
    %2022 = vmatpush.xpose.msra.mxu0 0.0
    %2023 = vmatpush.xpose.msra.mxu0 0.0
    %2024 = vmatpush.xpose.msra.mxu0 0.0
    %2025 = vmatpush.xpose.msra.mxu0 0.0
    %2026 = vmatpush.xpose.msra.mxu0 0.0
    %2027 = vmatpush.xpose.msra.mxu0 %v1572
    %2028 = vmatpush.xpose.msra.mxu0 %v1570
    %2029 = vmatpush.xpose.msra.mxu0 %v1568
    %2030 = vmatpush.xpose.msra.mxu0 %v1566
    %2031 = vmatmul.f32.gmra.mxu0 %v1983
    %v2032 = vpop.f32.mrf.mxu0
    %v2033 = vadd.f32 0.0, %v2032
    %2034 = vmatmul.f32.gmra.mxu0 %v1985
    %v2035 = vpop.f32.mrf.mxu0
    %v2036 = vadd.f32 0.0, %v2035
    %2037 = vmatmul.f32.gmra.mxu0 %v1987
    %v2038 = vpop.f32.mrf.mxu0
    %v2039 = vadd.f32 0.0, %v2038
    %2040 = vmatmul.f32.gmra.mxu0 %v1989
    %v2041 = vpop.f32.mrf.mxu0
    %v2042 = vadd.f32 0.0, %v2041
    %2043 = vmatmul.f32.gmra.mxu0 %v1991
    %v2044 = vpop.f32.mrf.mxu0
    %v2045 = vadd.f32 0.0, %v2044
    %2046 = vmatmul.f32.gmra.mxu0 %v1993
    %v2047 = vpop.f32.mrf.mxu0
    %v2048 = vadd.f32 0.0, %v2047
    %2049 = vmatmul.f32.gmra.mxu0 %v1995
    %v2050 = vpop.f32.mrf.mxu0
    %v2051 = vadd.f32 0.0, %v2050
    %2052 = vmatmul.f32.gmra.mxu0 %v1997
    %v2053 = vpop.f32.mrf.mxu0
    %v2054 = vadd.f32 0.0, %v2053
    %2055 = vmatmul.f32.gmra.mxu0 %v1999
    %v2056 = vpop.f32.mrf.mxu0
    %v2057 = vadd.f32 0.0, %v2056
    %2058 = vmatmul.f32.gmra.mxu0 %v2001
    %v2059 = vpop.f32.mrf.mxu0
    %v2060 = vadd.f32 0.0, %v2059
    %2061 = vmatmul.f32.gmra.mxu0 %v2003
    %v2062 = vpop.f32.mrf.mxu0
    %v2063 = vadd.f32 0.0, %v2062
    %2064 = vmatmul.f32.gmra.mxu0 %v2005
    %v2065 = vpop.f32.mrf.mxu0
    %v2066 = vadd.f32 0.0, %v2065
    %2067 = vmatmul.f32.gmra.mxu0 %v2007
    %v2068 = vpop.f32.mrf.mxu0
    %v2069 = vadd.f32 0.0, %v2068
    %2070 = vmatmul.f32.gmra.mxu0 %v2009
    %v2071 = vpop.f32.mrf.mxu0
    %v2072 = vadd.f32 0.0, %v2071
    %2073 = vmatmul.f32.gmra.mxu0 %v2011
    %v2074 = vpop.f32.mrf.mxu0
    %v2075 = vadd.f32 0.0, %v2074
    %2076 = vmatmul.f32.gmra.mxu0 %v2013
    %v2077 = vpop.f32.mrf.mxu0
    %v2078 = vadd.f32 0.0, %v2077
    %2079 = vdwg.mxu0
    %2080 = vmatpush.xpose.msra.mxu0 0.0
    %2081 = vmatpush.xpose.msra.mxu0 0.0
    %2082 = vmatpush.xpose.msra.mxu0 0.0
    %2083 = vmatpush.xpose.msra.mxu0 0.0
    %2084 = vmatpush.xpose.msra.mxu0 0.0
    %2085 = vmatpush.xpose.msra.mxu0 0.0
    %2086 = vmatpush.xpose.msra.mxu0 0.0
    %2087 = vmatpush.xpose.msra.mxu0 0.0
    %2088 = vmatpush.xpose.msra.mxu0 0.0
    %2089 = vmatpush.xpose.msra.mxu0 0.0
    %2090 = vmatpush.xpose.msra.mxu0 0.0
    %2091 = vmatpush.xpose.msra.mxu0 0.0
    %2092 = vmatpush.xpose.msra.mxu0 %v1573
    %2093 = vmatpush.xpose.msra.mxu0 %v1571
    %2094 = vmatpush.xpose.msra.mxu0 %v1569
    %2095 = vmatpush.xpose.msra.mxu0 %v1567
    %2096 = vmatmul.f32.gmra.mxu0 %v1984
    %v2097 = vpop.f32.mrf.mxu0
    %v2098 = vadd.f32 %v2033, %v2097
    %2099 = vmatmul.f32.gmra.mxu0 %v1986
    %v2100 = vpop.f32.mrf.mxu0
    %v2101 = vadd.f32 %v2036, %v2100
    %2102 = vmatmul.f32.gmra.mxu0 %v1988
    %v2103 = vpop.f32.mrf.mxu0
    %v2104 = vadd.f32 %v2039, %v2103
    %2105 = vmatmul.f32.gmra.mxu0 %v1990
    %v2106 = vpop.f32.mrf.mxu0
    %v2107 = vadd.f32 %v2042, %v2106
    %2108 = vmatmul.f32.gmra.mxu0 %v1992
    %v2109 = vpop.f32.mrf.mxu0
    %v2110 = vadd.f32 %v2045, %v2109
    %2111 = vmatmul.f32.gmra.mxu0 %v1994
    %v2112 = vpop.f32.mrf.mxu0
    %v2113 = vadd.f32 %v2048, %v2112
    %2114 = vmatmul.f32.gmra.mxu0 %v1996
    %v2115 = vpop.f32.mrf.mxu0
    %v2116 = vadd.f32 %v2051, %v2115
    %2117 = vmatmul.f32.gmra.mxu0 %v1998
    %v2118 = vpop.f32.mrf.mxu0
    %v2119 = vadd.f32 %v2054, %v2118
    %2120 = vmatmul.f32.gmra.mxu0 %v2000
    %v2121 = vpop.f32.mrf.mxu0
    %v2122 = vadd.f32 %v2057, %v2121
    %2123 = vmatmul.f32.gmra.mxu0 %v2002
    %v2124 = vpop.f32.mrf.mxu0
    %v2125 = vadd.f32 %v2060, %v2124
    %2126 = vmatmul.f32.gmra.mxu0 %v2004
    %v2127 = vpop.f32.mrf.mxu0
    %v2128 = vadd.f32 %v2063, %v2127
    %2129 = vmatmul.f32.gmra.mxu0 %v2006
    %v2130 = vpop.f32.mrf.mxu0
    %v2131 = vadd.f32 %v2066, %v2130
    %2132 = vmatmul.f32.gmra.mxu0 %v2008
    %v2133 = vpop.f32.mrf.mxu0
    %v2134 = vadd.f32 %v2069, %v2133
    %2135 = vmatmul.f32.gmra.mxu0 %v2010
    %v2136 = vpop.f32.mrf.mxu0
    %v2137 = vadd.f32 %v2072, %v2136
    %2138 = vmatmul.f32.gmra.mxu0 %v2012
    %v2139 = vpop.f32.mrf.mxu0
    %v2140 = vadd.f32 %v2075, %v2139
    %2141 = vmatmul.f32.gmra.mxu0 %v2014
    %v2142 = vpop.f32.mrf.mxu0
    %v2143 = vadd.f32 %v2078, %v2142
    %2144 = vdwg.mxu0
    %v2145 = vsub.f32 %v1404, %v2098
    %v2146 = vsub.f32 %v1405, %v2101
    %v2147 = vsub.f32 %v1406, %v2104
    %v2148 = vsub.f32 %v1407, %v2107
    %v2149 = vsub.f32 %v1408, %v2110
    %v2150 = vsub.f32 %v1409, %v2113
    %v2151 = vsub.f32 %v1410, %v2116
    %v2152 = vsub.f32 %v1411, %v2119
    %v2153 = vsub.f32 %v1412, %v2122
    %v2154 = vsub.f32 %v1413, %v2125
    %v2155 = vsub.f32 %v1414, %v2128
    %v2156 = vsub.f32 %v1415, %v2131
    %v2157 = vsub.f32 %v1416, %v2134
    %v2158 = vsub.f32 %v1417, %v2137
    %v2159 = vsub.f32 %v1418, %v2140
    %v2160 = vsub.f32 %v1419, %v2143
    %v2161 = vmul.f32 %v2145, %v2145
    %v2162 = vmul.f32 %v2146, %v2146
    %v2163 = vmul.f32 %v2147, %v2147
    %v2164 = vmul.f32 %v2148, %v2148
    %v2165 = vmul.f32 %v2149, %v2149
    %v2166 = vmul.f32 %v2150, %v2150
    %v2167 = vmul.f32 %v2151, %v2151
    %v2168 = vmul.f32 %v2152, %v2152
    %v2169 = vmul.f32 %v2153, %v2153
    %v2170 = vmul.f32 %v2154, %v2154
    %v2171 = vmul.f32 %v2155, %v2155
    %v2172 = vmul.f32 %v2156, %v2156
    %v2173 = vmul.f32 %v2157, %v2157
    %v2174 = vmul.f32 %v2158, %v2158
    %v2175 = vmul.f32 %v2159, %v2159
    %v2176 = vmul.f32 %v2160, %v2160
    %v2177 = vsel %vm63, %v2161, 0.0
    %2178 = vadd.xlane.f32.xlu0 %v2177
    %v2179 = vpop.xlane.xlu0 %2178
    %v2180 = vsel %vm63, %v2162, 0.0
    %2181 = vadd.xlane.f32.xlu0 %v2180
    %v2182 = vpop.xlane.xlu0 %2181
    %v2183 = vsel %vm63, %v2163, 0.0
    %2184 = vadd.xlane.f32.xlu0 %v2183
    %v2185 = vpop.xlane.xlu0 %2184
    %v2186 = vsel %vm63, %v2164, 0.0
    %2187 = vadd.xlane.f32.xlu0 %v2186
    %v2188 = vpop.xlane.xlu0 %2187
    %v2189 = vsel %vm63, %v2165, 0.0
    %2190 = vadd.xlane.f32.xlu0 %v2189
    %v2191 = vpop.xlane.xlu0 %2190
    %v2192 = vsel %vm63, %v2166, 0.0
    %2193 = vadd.xlane.f32.xlu0 %v2192
    %v2194 = vpop.xlane.xlu0 %2193
    %v2195 = vsel %vm63, %v2167, 0.0
    %2196 = vadd.xlane.f32.xlu0 %v2195
    %v2197 = vpop.xlane.xlu0 %2196
    %v2198 = vsel %vm63, %v2168, 0.0
    %2199 = vadd.xlane.f32.xlu0 %v2198
    %v2200 = vpop.xlane.xlu0 %2199
    %v2201 = vsel %vm63, %v2169, 0.0
    %2202 = vadd.xlane.f32.xlu0 %v2201
    %v2203 = vpop.xlane.xlu0 %2202
    %v2204 = vsel %vm63, %v2170, 0.0
    %2205 = vadd.xlane.f32.xlu0 %v2204
    %v2206 = vpop.xlane.xlu0 %2205
    %v2207 = vsel %vm63, %v2171, 0.0
    %2208 = vadd.xlane.f32.xlu0 %v2207
    %v2209 = vpop.xlane.xlu0 %2208
    %v2210 = vsel %vm63, %v2172, 0.0
    %2211 = vadd.xlane.f32.xlu0 %v2210
    %v2212 = vpop.xlane.xlu0 %2211
    %v2213 = vsel %vm63, %v2173, 0.0
    %2214 = vadd.xlane.f32.xlu0 %v2213
    %v2215 = vpop.xlane.xlu0 %2214
    %v2216 = vsel %vm63, %v2174, 0.0
    %2217 = vadd.xlane.f32.xlu0 %v2216
    %v2218 = vpop.xlane.xlu0 %2217
    %v2219 = vsel %vm63, %v2175, 0.0
    %2220 = vadd.xlane.f32.xlu0 %v2219
    %v2221 = vpop.xlane.xlu0 %2220
    %v2222 = vsel %vm63, %v2176, 0.0
    %2223 = vadd.xlane.f32.xlu0 %v2222
    %v2224 = vpop.xlane.xlu0 %2223
    %v2225 = vperm.slane %v1798, %v36
    %v2226 = vperm.slane %v1806, %v714
    %v2227 = vsel %vm716, %v2226, %v2225
    %v2228 = vperm.slane %v1814, %v718
    %v2229 = vsel %vm720, %v2228, %v2227
    %v2230 = vperm.slane %v1822, %v722
    %v2231 = vsel %vm724, %v2230, %v2229
    %v2232 = vperm.slane %v1830, %v726
    %v2233 = vsel %vm728, %v2232, %v2231
    %v2234 = vperm.slane %v1838, %v730
    %v2235 = vsel %vm732, %v2234, %v2233
    %v2236 = vperm.slane %v1846, %v734
    %v2237 = vsel %vm736, %v2236, %v2235
    %v2238 = vperm.slane %v1854, %v738
    %v2239 = vsel %vm740, %v2238, %v2237
    %v2240 = vperm.slane %v1862, %v742
    %v2241 = vsel %vm744, %v2240, %v2239
    %v2242 = vperm.slane %v1870, %v746
    %v2243 = vsel %vm748, %v2242, %v2241
    %v2244 = vperm.slane %v1878, %v750
    %v2245 = vsel %vm752, %v2244, %v2243
    %v2246 = vperm.slane %v1886, %v754
    %v2247 = vsel %vm756, %v2246, %v2245
    %v2248 = vperm.slane %v1894, %v758
    %v2249 = vsel %vm760, %v2248, %v2247
    %v2250 = vperm.slane %v1902, %v762
    %v2251 = vsel %vm764, %v2250, %v2249
    %v2252 = vperm.slane %v1910, %v766
    %v2253 = vsel %vm768, %v2252, %v2251
    %v2254 = vperm.slane %v1918, %v770
    %v2255 = vsel %vm772, %v2254, %v2253
    %2256 = vst [vmem:[#allocation5 + $0x2] sm:$0x1] %v2255
    %v2273 = vperm.slane %v2179, %v36
    %v2274 = vperm.slane %v2182, %v714
    %v2275 = vsel %vm716, %v2274, %v2273
    %v2276 = vperm.slane %v2185, %v718
    %v2277 = vsel %vm720, %v2276, %v2275
    %v2278 = vperm.slane %v2188, %v722
    %v2279 = vsel %vm724, %v2278, %v2277
    %v2280 = vperm.slane %v2191, %v726
    %v2281 = vsel %vm728, %v2280, %v2279
    %v2282 = vperm.slane %v2194, %v730
    %v2283 = vsel %vm732, %v2282, %v2281
    %v2284 = vperm.slane %v2197, %v734
    %v2285 = vsel %vm736, %v2284, %v2283
    %v2286 = vperm.slane %v2200, %v738
    %v2287 = vsel %vm740, %v2286, %v2285
    %v2288 = vperm.slane %v2203, %v742
    %v2289 = vsel %vm744, %v2288, %v2287
    %v2290 = vperm.slane %v2206, %v746
    %v2291 = vsel %vm748, %v2290, %v2289
    %v2292 = vperm.slane %v2209, %v750
    %v2293 = vsel %vm752, %v2292, %v2291
    %v2294 = vperm.slane %v2212, %v754
    %v2295 = vsel %vm756, %v2294, %v2293
    %v2296 = vperm.slane %v2215, %v758
    %v2297 = vsel %vm760, %v2296, %v2295
    %v2298 = vperm.slane %v2218, %v762
    %v2299 = vsel %vm764, %v2298, %v2297
    %v2300 = vperm.slane %v2221, %v766
    %v2301 = vsel %vm768, %v2300, %v2299
    %v2302 = vperm.slane %v2224, %v770
    %v2303 = vsel %vm772, %v2302, %v2301
    %2305 = vst [vmem:[#allocation6 + $0x2] sm:$0x1] %v2303
    %s2306 = scalar_lea.vmem [#allocation2], 192
    %v2307 = vld [vmem:[%s2306] sm:$0xff]
    %v2308 = vld [vmem:[%s2306 + $0x8] sm:$0xff]
    %v2309 = vld [vmem:[%s2306 + $0x10] sm:$0xff]
    %v2310 = vld [vmem:[%s2306 + $0x18] sm:$0xff]
    %v2311 = vld [vmem:[%s2306 + $0x20] sm:$0xff]
    %v2312 = vld [vmem:[%s2306 + $0x28] sm:$0xff]
    %v2313 = vld [vmem:[%s2306 + $0x30] sm:$0xff]
    %v2314 = vld [vmem:[%s2306 + $0x38] sm:$0xff]
    %s2315 = scalar_lea.vmem %s2, 6
    %v2316 = vld [vmem:[%s2315] sm:$0x3]
    %v2318 = vsel %vm63, %v2145, 0
    %v2321 = vsel %vm63, %v2146, 0
    %v2324 = vsel %vm63, %v2147, 0
    %v2327 = vsel %vm63, %v2148, 0
    %v2330 = vsel %vm63, %v2149, 0
    %v2333 = vsel %vm63, %v2150, 0
    %v2336 = vsel %vm63, %v2151, 0
    %v2339 = vsel %vm63, %v2152, 0
    %v2342 = vsel %vm63, %v2153, 0
    %v2345 = vsel %vm63, %v2154, 0
    %v2348 = vsel %vm63, %v2155, 0
    %v2351 = vsel %vm63, %v2156, 0
    %v2354 = vsel %vm63, %v2157, 0
    %v2357 = vsel %vm63, %v2158, 0
    %v2360 = vsel %vm63, %v2159, 0
    %v2363 = vsel %vm63, %v2160, 0
    %2365 = vmatpush.msra.mxu0 0.0
    %2366 = vmatpush.msra.mxu0 0.0
    %2367 = vmatpush.msra.mxu0 0.0
    %2368 = vmatpush.msra.mxu0 0.0
    %2369 = vmatpush.msra.mxu0 0.0
    %2370 = vmatpush.msra.mxu0 0.0
    %2371 = vmatpush.msra.mxu0 0.0
    %2372 = vmatpush.msra.mxu0 0.0
    %2373 = vmatpush.msra.mxu0 0.0
    %2374 = vmatpush.msra.mxu0 0.0
    %2375 = vmatpush.msra.mxu0 0.0
    %2376 = vmatpush.msra.mxu0 0.0
    %2377 = vmatpush.msra.mxu0 %v2313
    %2378 = vmatpush.msra.mxu0 %v2311
    %2379 = vmatpush.msra.mxu0 %v2309
    %2380 = vmatpush.msra.mxu0 %v2307
    %2381 = vmatmul.f32.gmra.mxu0 %v2318
    %v2382 = vpop.f32.mrf.mxu0
    %v2383 = vadd.f32 0.0, %v2382
    %2384 = vmatmul.f32.gmra.mxu0 %v2321
    %v2385 = vpop.f32.mrf.mxu0
    %v2386 = vadd.f32 0.0, %v2385
    %2387 = vmatmul.f32.gmra.mxu0 %v2324
    %v2388 = vpop.f32.mrf.mxu0
    %v2389 = vadd.f32 0.0, %v2388
    %2390 = vmatmul.f32.gmra.mxu0 %v2327
    %v2391 = vpop.f32.mrf.mxu0
    %v2392 = vadd.f32 0.0, %v2391
    %2393 = vmatmul.f32.gmra.mxu0 %v2330
    %v2394 = vpop.f32.mrf.mxu0
    %v2395 = vadd.f32 0.0, %v2394
    %2396 = vmatmul.f32.gmra.mxu0 %v2333
    %v2397 = vpop.f32.mrf.mxu0
    %v2398 = vadd.f32 0.0, %v2397
    %2399 = vmatmul.f32.gmra.mxu0 %v2336
    %v2400 = vpop.f32.mrf.mxu0
    %v2401 = vadd.f32 0.0, %v2400
    %2402 = vmatmul.f32.gmra.mxu0 %v2339
    %v2403 = vpop.f32.mrf.mxu0
    %v2404 = vadd.f32 0.0, %v2403
    %2405 = vmatmul.f32.gmra.mxu0 %v2342
    %v2406 = vpop.f32.mrf.mxu0
    %v2407 = vadd.f32 0.0, %v2406
    %2408 = vmatmul.f32.gmra.mxu0 %v2345
    %v2409 = vpop.f32.mrf.mxu0
    %v2410 = vadd.f32 0.0, %v2409
    %2411 = vmatmul.f32.gmra.mxu0 %v2348
    %v2412 = vpop.f32.mrf.mxu0
    %v2413 = vadd.f32 0.0, %v2412
    %2414 = vmatmul.f32.gmra.mxu0 %v2351
    %v2415 = vpop.f32.mrf.mxu0
    %v2416 = vadd.f32 0.0, %v2415
    %2417 = vmatmul.f32.gmra.mxu0 %v2354
    %v2418 = vpop.f32.mrf.mxu0
    %v2419 = vadd.f32 0.0, %v2418
    %2420 = vmatmul.f32.gmra.mxu0 %v2357
    %v2421 = vpop.f32.mrf.mxu0
    %v2422 = vadd.f32 0.0, %v2421
    %2423 = vmatmul.f32.gmra.mxu0 %v2360
    %v2424 = vpop.f32.mrf.mxu0
    %v2425 = vadd.f32 0.0, %v2424
    %2426 = vmatmul.f32.gmra.mxu0 %v2363
    %v2427 = vpop.f32.mrf.mxu0
    %v2428 = vadd.f32 0.0, %v2427
    %2429 = vdwg.mxu0
    %2430 = vmatpush.msra.mxu0 0.0
    %2431 = vmatpush.msra.mxu0 0.0
    %2432 = vmatpush.msra.mxu0 0.0
    %2433 = vmatpush.msra.mxu0 0.0
    %2434 = vmatpush.msra.mxu0 0.0
    %2435 = vmatpush.msra.mxu0 0.0
    %2436 = vmatpush.msra.mxu0 0.0
    %2437 = vmatpush.msra.mxu0 0.0
    %2438 = vmatpush.msra.mxu0 0.0
    %2439 = vmatpush.msra.mxu0 0.0
    %2440 = vmatpush.msra.mxu0 0.0
    %2441 = vmatpush.msra.mxu0 0.0
    %2442 = vmatpush.msra.mxu0 %v2314
    %2443 = vmatpush.msra.mxu0 %v2312
    %2444 = vmatpush.msra.mxu0 %v2310
    %2445 = vmatpush.msra.mxu0 %v2308
    %2446 = vmatmul.f32.gmra.mxu0 %v2318
    %v2447 = vpop.f32.mrf.mxu0
    %v2448 = vadd.f32 0.0, %v2447
    %2449 = vmatmul.f32.gmra.mxu0 %v2321
    %v2450 = vpop.f32.mrf.mxu0
    %v2451 = vadd.f32 0.0, %v2450
    %2452 = vmatmul.f32.gmra.mxu0 %v2324
    %v2453 = vpop.f32.mrf.mxu0
    %v2454 = vadd.f32 0.0, %v2453
    %2455 = vmatmul.f32.gmra.mxu0 %v2327
    %v2456 = vpop.f32.mrf.mxu0
    %v2457 = vadd.f32 0.0, %v2456
    %2458 = vmatmul.f32.gmra.mxu0 %v2330
    %v2459 = vpop.f32.mrf.mxu0
    %v2460 = vadd.f32 0.0, %v2459
    %2461 = vmatmul.f32.gmra.mxu0 %v2333
    %v2462 = vpop.f32.mrf.mxu0
    %v2463 = vadd.f32 0.0, %v2462
    %2464 = vmatmul.f32.gmra.mxu0 %v2336
    %v2465 = vpop.f32.mrf.mxu0
    %v2466 = vadd.f32 0.0, %v2465
    %2467 = vmatmul.f32.gmra.mxu0 %v2339
    %v2468 = vpop.f32.mrf.mxu0
    %v2469 = vadd.f32 0.0, %v2468
    %2470 = vmatmul.f32.gmra.mxu0 %v2342
    %v2471 = vpop.f32.mrf.mxu0
    %v2472 = vadd.f32 0.0, %v2471
    %2473 = vmatmul.f32.gmra.mxu0 %v2345
    %v2474 = vpop.f32.mrf.mxu0
    %v2475 = vadd.f32 0.0, %v2474
    %2476 = vmatmul.f32.gmra.mxu0 %v2348
    %v2477 = vpop.f32.mrf.mxu0
    %v2478 = vadd.f32 0.0, %v2477
    %2479 = vmatmul.f32.gmra.mxu0 %v2351
    %v2480 = vpop.f32.mrf.mxu0
    %v2481 = vadd.f32 0.0, %v2480
    %2482 = vmatmul.f32.gmra.mxu0 %v2354
    %v2483 = vpop.f32.mrf.mxu0
    %v2484 = vadd.f32 0.0, %v2483
    %2485 = vmatmul.f32.gmra.mxu0 %v2357
    %v2486 = vpop.f32.mrf.mxu0
    %v2487 = vadd.f32 0.0, %v2486
    %2488 = vmatmul.f32.gmra.mxu0 %v2360
    %v2489 = vpop.f32.mrf.mxu0
    %v2490 = vadd.f32 0.0, %v2489
    %2491 = vmatmul.f32.gmra.mxu0 %v2363
    %v2492 = vpop.f32.mrf.mxu0
    %v2493 = vadd.f32 0.0, %v2492
    %2494 = vdwg.mxu0
    %v2496 = vperm.slane %v2316, 0
    %v2497 = vperm.slane %v2316, 1
    %v2500 = vsub.f32 %v2383, %v2496
    %v2501 = vsub.f32 %v2448, %v2497
    %v2502 = vsub.f32 %v2386, %v2496
    %v2503 = vsub.f32 %v2451, %v2497
    %v2504 = vsub.f32 %v2389, %v2496
    %v2505 = vsub.f32 %v2454, %v2497
    %v2506 = vsub.f32 %v2392, %v2496
    %v2507 = vsub.f32 %v2457, %v2497
    %v2508 = vsub.f32 %v2395, %v2496
    %v2509 = vsub.f32 %v2460, %v2497
    %v2510 = vsub.f32 %v2398, %v2496
    %v2511 = vsub.f32 %v2463, %v2497
    %v2512 = vsub.f32 %v2401, %v2496
    %v2513 = vsub.f32 %v2466, %v2497
    %v2514 = vsub.f32 %v2404, %v2496
    %v2515 = vsub.f32 %v2469, %v2497
    %v2516 = vsub.f32 %v2407, %v2496
    %v2517 = vsub.f32 %v2472, %v2497
    %v2518 = vsub.f32 %v2410, %v2496
    %v2519 = vsub.f32 %v2475, %v2497
    %v2520 = vsub.f32 %v2413, %v2496
    %v2521 = vsub.f32 %v2478, %v2497
    %v2522 = vsub.f32 %v2416, %v2496
    %v2523 = vsub.f32 %v2481, %v2497
    %v2524 = vsub.f32 %v2419, %v2496
    %v2525 = vsub.f32 %v2484, %v2497
    %v2526 = vsub.f32 %v2422, %v2496
    %v2527 = vsub.f32 %v2487, %v2497
    %v2528 = vsub.f32 %v2425, %v2496
    %v2529 = vsub.f32 %v2490, %v2497
    %v2530 = vsub.f32 %v2428, %v2496
    %v2531 = vsub.f32 %v2493, %v2497
    %vm2532 = vcmp.ge.f32.partialorder %v2500, %v2501
    %v2533 = vsel %vm2532, %v2500, %v2501
    %v2534 = vsel %vm2532, %v36, %v37
    %2535 = vmax.index.xlane.f32.xlu0 %v2533
    %v2536 = vpop.xlane.xlu0 %2535
    %2537 = vset.pattern.permute.xlu0 %v2536
    %2538 = vperm.xlu0 %2537, %v2534
    %v2539 = vpop.permute.xlu0 %2538
    %vm2540 = vcmp.ge.f32.partialorder %v2502, %v2503
    %v2541 = vsel %vm2540, %v2502, %v2503
    %v2542 = vsel %vm2540, %v36, %v37
    %2543 = vmax.index.xlane.f32.xlu0 %v2541
    %v2544 = vpop.xlane.xlu0 %2543
    %2545 = vset.pattern.permute.xlu0 %v2544
    %2546 = vperm.xlu0 %2545, %v2542
    %v2547 = vpop.permute.xlu0 %2546
    %vm2548 = vcmp.ge.f32.partialorder %v2504, %v2505
    %v2549 = vsel %vm2548, %v2504, %v2505
    %v2550 = vsel %vm2548, %v36, %v37
    %2551 = vmax.index.xlane.f32.xlu0 %v2549
    %v2552 = vpop.xlane.xlu0 %2551
    %2553 = vset.pattern.permute.xlu0 %v2552
    %2554 = vperm.xlu0 %2553, %v2550
    %v2555 = vpop.permute.xlu0 %2554
    %vm2556 = vcmp.ge.f32.partialorder %v2506, %v2507
    %v2557 = vsel %vm2556, %v2506, %v2507
    %v2558 = vsel %vm2556, %v36, %v37
    %2559 = vmax.index.xlane.f32.xlu0 %v2557
    %v2560 = vpop.xlane.xlu0 %2559
    %2561 = vset.pattern.permute.xlu0 %v2560
    %2562 = vperm.xlu0 %2561, %v2558
    %v2563 = vpop.permute.xlu0 %2562
    %vm2564 = vcmp.ge.f32.partialorder %v2508, %v2509
    %v2565 = vsel %vm2564, %v2508, %v2509
    %v2566 = vsel %vm2564, %v36, %v37
    %2567 = vmax.index.xlane.f32.xlu0 %v2565
    %v2568 = vpop.xlane.xlu0 %2567
    %2569 = vset.pattern.permute.xlu0 %v2568
    %2570 = vperm.xlu0 %2569, %v2566
    %v2571 = vpop.permute.xlu0 %2570
    %vm2572 = vcmp.ge.f32.partialorder %v2510, %v2511
    %v2573 = vsel %vm2572, %v2510, %v2511
    %v2574 = vsel %vm2572, %v36, %v37
    %2575 = vmax.index.xlane.f32.xlu0 %v2573
    %v2576 = vpop.xlane.xlu0 %2575
    %2577 = vset.pattern.permute.xlu0 %v2576
    %2578 = vperm.xlu0 %2577, %v2574
    %v2579 = vpop.permute.xlu0 %2578
    %vm2580 = vcmp.ge.f32.partialorder %v2512, %v2513
    %v2581 = vsel %vm2580, %v2512, %v2513
    %v2582 = vsel %vm2580, %v36, %v37
    %2583 = vmax.index.xlane.f32.xlu0 %v2581
    %v2584 = vpop.xlane.xlu0 %2583
    %2585 = vset.pattern.permute.xlu0 %v2584
    %2586 = vperm.xlu0 %2585, %v2582
    %v2587 = vpop.permute.xlu0 %2586
    %vm2588 = vcmp.ge.f32.partialorder %v2514, %v2515
    %v2589 = vsel %vm2588, %v2514, %v2515
    %v2590 = vsel %vm2588, %v36, %v37
    %2591 = vmax.index.xlane.f32.xlu0 %v2589
    %v2592 = vpop.xlane.xlu0 %2591
    %2593 = vset.pattern.permute.xlu0 %v2592
    %2594 = vperm.xlu0 %2593, %v2590
    %v2595 = vpop.permute.xlu0 %2594
    %vm2596 = vcmp.ge.f32.partialorder %v2516, %v2517
    %v2597 = vsel %vm2596, %v2516, %v2517
    %v2598 = vsel %vm2596, %v36, %v37
    %2599 = vmax.index.xlane.f32.xlu0 %v2597
    %v2600 = vpop.xlane.xlu0 %2599
    %2601 = vset.pattern.permute.xlu0 %v2600
    %2602 = vperm.xlu0 %2601, %v2598
    %v2603 = vpop.permute.xlu0 %2602
    %vm2604 = vcmp.ge.f32.partialorder %v2518, %v2519
    %v2605 = vsel %vm2604, %v2518, %v2519
    %v2606 = vsel %vm2604, %v36, %v37
    %2607 = vmax.index.xlane.f32.xlu0 %v2605
    %v2608 = vpop.xlane.xlu0 %2607
    %2609 = vset.pattern.permute.xlu0 %v2608
    %2610 = vperm.xlu0 %2609, %v2606
    %v2611 = vpop.permute.xlu0 %2610
    %vm2612 = vcmp.ge.f32.partialorder %v2520, %v2521
    %v2613 = vsel %vm2612, %v2520, %v2521
    %v2614 = vsel %vm2612, %v36, %v37
    %2615 = vmax.index.xlane.f32.xlu0 %v2613
    %v2616 = vpop.xlane.xlu0 %2615
    %2617 = vset.pattern.permute.xlu0 %v2616
    %2618 = vperm.xlu0 %2617, %v2614
    %v2619 = vpop.permute.xlu0 %2618
    %vm2620 = vcmp.ge.f32.partialorder %v2522, %v2523
    %v2621 = vsel %vm2620, %v2522, %v2523
    %v2622 = vsel %vm2620, %v36, %v37
    %2623 = vmax.index.xlane.f32.xlu0 %v2621
    %v2624 = vpop.xlane.xlu0 %2623
    %2625 = vset.pattern.permute.xlu0 %v2624
    %2626 = vperm.xlu0 %2625, %v2622
    %v2627 = vpop.permute.xlu0 %2626
    %vm2628 = vcmp.ge.f32.partialorder %v2524, %v2525
    %v2629 = vsel %vm2628, %v2524, %v2525
    %v2630 = vsel %vm2628, %v36, %v37
    %2631 = vmax.index.xlane.f32.xlu0 %v2629
    %v2632 = vpop.xlane.xlu0 %2631
    %2633 = vset.pattern.permute.xlu0 %v2632
    %2634 = vperm.xlu0 %2633, %v2630
    %v2635 = vpop.permute.xlu0 %2634
    %vm2636 = vcmp.ge.f32.partialorder %v2526, %v2527
    %v2637 = vsel %vm2636, %v2526, %v2527
    %v2638 = vsel %vm2636, %v36, %v37
    %2639 = vmax.index.xlane.f32.xlu0 %v2637
    %v2640 = vpop.xlane.xlu0 %2639
    %2641 = vset.pattern.permute.xlu0 %v2640
    %2642 = vperm.xlu0 %2641, %v2638
    %v2643 = vpop.permute.xlu0 %2642
    %vm2644 = vcmp.ge.f32.partialorder %v2528, %v2529
    %v2645 = vsel %vm2644, %v2528, %v2529
    %v2646 = vsel %vm2644, %v36, %v37
    %2647 = vmax.index.xlane.f32.xlu0 %v2645
    %v2648 = vpop.xlane.xlu0 %2647
    %2649 = vset.pattern.permute.xlu0 %v2648
    %2650 = vperm.xlu0 %2649, %v2646
    %v2651 = vpop.permute.xlu0 %2650
    %vm2652 = vcmp.ge.f32.partialorder %v2530, %v2531
    %v2653 = vsel %vm2652, %v2530, %v2531
    %v2654 = vsel %vm2652, %v36, %v37
    %2655 = vmax.index.xlane.f32.xlu0 %v2653
    %v2656 = vpop.xlane.xlu0 %2655
    %2657 = vset.pattern.permute.xlu0 %v2656
    %2658 = vperm.xlu0 %2657, %v2654
    %v2659 = vpop.permute.xlu0 %2658
    %vm2660 = vcmp.eq.s32.totalorder %v36, %v2539
    %vm2661 = vcmp.eq.s32.totalorder %v37, %v2539
    %vm2662 = vcmp.eq.s32.totalorder %v36, %v2547
    %vm2663 = vcmp.eq.s32.totalorder %v37, %v2547
    %vm2664 = vcmp.eq.s32.totalorder %v36, %v2555
    %vm2665 = vcmp.eq.s32.totalorder %v37, %v2555
    %vm2666 = vcmp.eq.s32.totalorder %v36, %v2563
    %vm2667 = vcmp.eq.s32.totalorder %v37, %v2563
    %vm2668 = vcmp.eq.s32.totalorder %v36, %v2571
    %vm2669 = vcmp.eq.s32.totalorder %v37, %v2571
    %vm2670 = vcmp.eq.s32.totalorder %v36, %v2579
    %vm2671 = vcmp.eq.s32.totalorder %v37, %v2579
    %vm2672 = vcmp.eq.s32.totalorder %v36, %v2587
    %vm2673 = vcmp.eq.s32.totalorder %v37, %v2587
    %vm2674 = vcmp.eq.s32.totalorder %v36, %v2595
    %vm2675 = vcmp.eq.s32.totalorder %v37, %v2595
    %vm2676 = vcmp.eq.s32.totalorder %v36, %v2603
    %vm2677 = vcmp.eq.s32.totalorder %v37, %v2603
    %vm2678 = vcmp.eq.s32.totalorder %v36, %v2611
    %vm2679 = vcmp.eq.s32.totalorder %v37, %v2611
    %vm2680 = vcmp.eq.s32.totalorder %v36, %v2619
    %vm2681 = vcmp.eq.s32.totalorder %v37, %v2619
    %vm2682 = vcmp.eq.s32.totalorder %v36, %v2627
    %vm2683 = vcmp.eq.s32.totalorder %v37, %v2627
    %vm2684 = vcmp.eq.s32.totalorder %v36, %v2635
    %vm2685 = vcmp.eq.s32.totalorder %v37, %v2635
    %vm2686 = vcmp.eq.s32.totalorder %v36, %v2643
    %vm2687 = vcmp.eq.s32.totalorder %v37, %v2643
    %vm2688 = vcmp.eq.s32.totalorder %v36, %v2651
    %vm2689 = vcmp.eq.s32.totalorder %v37, %v2651
    %vm2690 = vcmp.eq.s32.totalorder %v36, %v2659
    %vm2691 = vcmp.eq.s32.totalorder %v37, %v2659
    %v2692 = vsel %vm2660, 1, 0
    %v2693 = vsel %vm2661, 1, 0
    %v2694 = vsel %vm2662, 1, 0
    %v2695 = vsel %vm2663, 1, 0
    %v2696 = vsel %vm2664, 1, 0
    %v2697 = vsel %vm2665, 1, 0
    %v2698 = vsel %vm2666, 1, 0
    %v2699 = vsel %vm2667, 1, 0
    %v2700 = vsel %vm2668, 1, 0
    %v2701 = vsel %vm2669, 1, 0
    %v2702 = vsel %vm2670, 1, 0
    %v2703 = vsel %vm2671, 1, 0
    %v2704 = vsel %vm2672, 1, 0
    %v2705 = vsel %vm2673, 1, 0
    %v2706 = vsel %vm2674, 1, 0
    %v2707 = vsel %vm2675, 1, 0
    %v2708 = vsel %vm2676, 1, 0
    %v2709 = vsel %vm2677, 1, 0
    %v2710 = vsel %vm2678, 1, 0
    %v2711 = vsel %vm2679, 1, 0
    %v2712 = vsel %vm2680, 1, 0
    %v2713 = vsel %vm2681, 1, 0
    %v2714 = vsel %vm2682, 1, 0
    %v2715 = vsel %vm2683, 1, 0
    %v2716 = vsel %vm2684, 1, 0
    %v2717 = vsel %vm2685, 1, 0
    %v2718 = vsel %vm2686, 1, 0
    %v2719 = vsel %vm2687, 1, 0
    %v2720 = vsel %vm2688, 1, 0
    %v2721 = vsel %vm2689, 1, 0
    %v2722 = vsel %vm2690, 1, 0
    %v2723 = vsel %vm2691, 1, 0
    %v2724 = vcvt.s32.f32 %v2692
    %v2725 = vcvt.s32.f32 %v2693
    %v2726 = vcvt.s32.f32 %v2694
    %v2727 = vcvt.s32.f32 %v2695
    %v2728 = vcvt.s32.f32 %v2696
    %v2729 = vcvt.s32.f32 %v2697
    %v2730 = vcvt.s32.f32 %v2698
    %v2731 = vcvt.s32.f32 %v2699
    %v2732 = vcvt.s32.f32 %v2700
    %v2733 = vcvt.s32.f32 %v2701
    %v2734 = vcvt.s32.f32 %v2702
    %v2735 = vcvt.s32.f32 %v2703
    %v2736 = vcvt.s32.f32 %v2704
    %v2737 = vcvt.s32.f32 %v2705
    %v2738 = vcvt.s32.f32 %v2706
    %v2739 = vcvt.s32.f32 %v2707
    %v2740 = vcvt.s32.f32 %v2708
    %v2741 = vcvt.s32.f32 %v2709
    %v2742 = vcvt.s32.f32 %v2710
    %v2743 = vcvt.s32.f32 %v2711
    %v2744 = vcvt.s32.f32 %v2712
    %v2745 = vcvt.s32.f32 %v2713
    %v2746 = vcvt.s32.f32 %v2714
    %v2747 = vcvt.s32.f32 %v2715
    %v2748 = vcvt.s32.f32 %v2716
    %v2749 = vcvt.s32.f32 %v2717
    %v2750 = vcvt.s32.f32 %v2718
    %v2751 = vcvt.s32.f32 %v2719
    %v2752 = vcvt.s32.f32 %v2720
    %v2753 = vcvt.s32.f32 %v2721
    %v2754 = vcvt.s32.f32 %v2722
    %v2755 = vcvt.s32.f32 %v2723
    %2756 = vmatpush.xpose.msra.mxu0 0.0
    %2757 = vmatpush.xpose.msra.mxu0 0.0
    %2758 = vmatpush.xpose.msra.mxu0 0.0
    %2759 = vmatpush.xpose.msra.mxu0 0.0
    %2760 = vmatpush.xpose.msra.mxu0 0.0
    %2761 = vmatpush.xpose.msra.mxu0 0.0
    %2762 = vmatpush.xpose.msra.mxu0 0.0
    %2763 = vmatpush.xpose.msra.mxu0 0.0
    %2764 = vmatpush.xpose.msra.mxu0 0.0
    %2765 = vmatpush.xpose.msra.mxu0 0.0
    %2766 = vmatpush.xpose.msra.mxu0 0.0
    %2767 = vmatpush.xpose.msra.mxu0 0.0
    %2768 = vmatpush.xpose.msra.mxu0 %v2313
    %2769 = vmatpush.xpose.msra.mxu0 %v2311
    %2770 = vmatpush.xpose.msra.mxu0 %v2309
    %2771 = vmatpush.xpose.msra.mxu0 %v2307
    %2772 = vmatmul.f32.gmra.mxu0 %v2724
    %v2773 = vpop.f32.mrf.mxu0
    %v2774 = vadd.f32 0.0, %v2773
    %2775 = vmatmul.f32.gmra.mxu0 %v2726
    %v2776 = vpop.f32.mrf.mxu0
    %v2777 = vadd.f32 0.0, %v2776
    %2778 = vmatmul.f32.gmra.mxu0 %v2728
    %v2779 = vpop.f32.mrf.mxu0
    %v2780 = vadd.f32 0.0, %v2779
    %2781 = vmatmul.f32.gmra.mxu0 %v2730
    %v2782 = vpop.f32.mrf.mxu0
    %v2783 = vadd.f32 0.0, %v2782
    %2784 = vmatmul.f32.gmra.mxu0 %v2732
    %v2785 = vpop.f32.mrf.mxu0
    %v2786 = vadd.f32 0.0, %v2785
    %2787 = vmatmul.f32.gmra.mxu0 %v2734
    %v2788 = vpop.f32.mrf.mxu0
    %v2789 = vadd.f32 0.0, %v2788
    %2790 = vmatmul.f32.gmra.mxu0 %v2736
    %v2791 = vpop.f32.mrf.mxu0
    %v2792 = vadd.f32 0.0, %v2791
    %2793 = vmatmul.f32.gmra.mxu0 %v2738
    %v2794 = vpop.f32.mrf.mxu0
    %v2795 = vadd.f32 0.0, %v2794
    %2796 = vmatmul.f32.gmra.mxu0 %v2740
    %v2797 = vpop.f32.mrf.mxu0
    %v2798 = vadd.f32 0.0, %v2797
    %2799 = vmatmul.f32.gmra.mxu0 %v2742
    %v2800 = vpop.f32.mrf.mxu0
    %v2801 = vadd.f32 0.0, %v2800
    %2802 = vmatmul.f32.gmra.mxu0 %v2744
    %v2803 = vpop.f32.mrf.mxu0
    %v2804 = vadd.f32 0.0, %v2803
    %2805 = vmatmul.f32.gmra.mxu0 %v2746
    %v2806 = vpop.f32.mrf.mxu0
    %v2807 = vadd.f32 0.0, %v2806
    %2808 = vmatmul.f32.gmra.mxu0 %v2748
    %v2809 = vpop.f32.mrf.mxu0
    %v2810 = vadd.f32 0.0, %v2809
    %2811 = vmatmul.f32.gmra.mxu0 %v2750
    %v2812 = vpop.f32.mrf.mxu0
    %v2813 = vadd.f32 0.0, %v2812
    %2814 = vmatmul.f32.gmra.mxu0 %v2752
    %v2815 = vpop.f32.mrf.mxu0
    %v2816 = vadd.f32 0.0, %v2815
    %2817 = vmatmul.f32.gmra.mxu0 %v2754
    %v2818 = vpop.f32.mrf.mxu0
    %v2819 = vadd.f32 0.0, %v2818
    %2820 = vdwg.mxu0
    %2821 = vmatpush.xpose.msra.mxu0 0.0
    %2822 = vmatpush.xpose.msra.mxu0 0.0
    %2823 = vmatpush.xpose.msra.mxu0 0.0
    %2824 = vmatpush.xpose.msra.mxu0 0.0
    %2825 = vmatpush.xpose.msra.mxu0 0.0
    %2826 = vmatpush.xpose.msra.mxu0 0.0
    %2827 = vmatpush.xpose.msra.mxu0 0.0
    %2828 = vmatpush.xpose.msra.mxu0 0.0
    %2829 = vmatpush.xpose.msra.mxu0 0.0
    %2830 = vmatpush.xpose.msra.mxu0 0.0
    %2831 = vmatpush.xpose.msra.mxu0 0.0
    %2832 = vmatpush.xpose.msra.mxu0 0.0
    %2833 = vmatpush.xpose.msra.mxu0 %v2314
    %2834 = vmatpush.xpose.msra.mxu0 %v2312
    %2835 = vmatpush.xpose.msra.mxu0 %v2310
    %2836 = vmatpush.xpose.msra.mxu0 %v2308
    %2837 = vmatmul.f32.gmra.mxu0 %v2725
    %v2838 = vpop.f32.mrf.mxu0
    %v2839 = vadd.f32 %v2774, %v2838
    %2840 = vmatmul.f32.gmra.mxu0 %v2727
    %v2841 = vpop.f32.mrf.mxu0
    %v2842 = vadd.f32 %v2777, %v2841
    %2843 = vmatmul.f32.gmra.mxu0 %v2729
    %v2844 = vpop.f32.mrf.mxu0
    %v2845 = vadd.f32 %v2780, %v2844
    %2846 = vmatmul.f32.gmra.mxu0 %v2731
    %v2847 = vpop.f32.mrf.mxu0
    %v2848 = vadd.f32 %v2783, %v2847
    %2849 = vmatmul.f32.gmra.mxu0 %v2733
    %v2850 = vpop.f32.mrf.mxu0
    %v2851 = vadd.f32 %v2786, %v2850
    %2852 = vmatmul.f32.gmra.mxu0 %v2735
    %v2853 = vpop.f32.mrf.mxu0
    %v2854 = vadd.f32 %v2789, %v2853
    %2855 = vmatmul.f32.gmra.mxu0 %v2737
    %v2856 = vpop.f32.mrf.mxu0
    %v2857 = vadd.f32 %v2792, %v2856
    %2858 = vmatmul.f32.gmra.mxu0 %v2739
    %v2859 = vpop.f32.mrf.mxu0
    %v2860 = vadd.f32 %v2795, %v2859
    %2861 = vmatmul.f32.gmra.mxu0 %v2741
    %v2862 = vpop.f32.mrf.mxu0
    %v2863 = vadd.f32 %v2798, %v2862
    %2864 = vmatmul.f32.gmra.mxu0 %v2743
    %v2865 = vpop.f32.mrf.mxu0
    %v2866 = vadd.f32 %v2801, %v2865
    %2867 = vmatmul.f32.gmra.mxu0 %v2745
    %v2868 = vpop.f32.mrf.mxu0
    %v2869 = vadd.f32 %v2804, %v2868
    %2870 = vmatmul.f32.gmra.mxu0 %v2747
    %v2871 = vpop.f32.mrf.mxu0
    %v2872 = vadd.f32 %v2807, %v2871
    %2873 = vmatmul.f32.gmra.mxu0 %v2749
    %v2874 = vpop.f32.mrf.mxu0
    %v2875 = vadd.f32 %v2810, %v2874
    %2876 = vmatmul.f32.gmra.mxu0 %v2751
    %v2877 = vpop.f32.mrf.mxu0
    %v2878 = vadd.f32 %v2813, %v2877
    %2879 = vmatmul.f32.gmra.mxu0 %v2753
    %v2880 = vpop.f32.mrf.mxu0
    %v2881 = vadd.f32 %v2816, %v2880
    %2882 = vmatmul.f32.gmra.mxu0 %v2755
    %v2883 = vpop.f32.mrf.mxu0
    %v2884 = vadd.f32 %v2819, %v2883
    %2885 = vdwg.mxu0
    %v2886 = vsub.f32 %v2145, %v2839
    %v2887 = vsub.f32 %v2146, %v2842
    %v2888 = vsub.f32 %v2147, %v2845
    %v2889 = vsub.f32 %v2148, %v2848
    %v2890 = vsub.f32 %v2149, %v2851
    %v2891 = vsub.f32 %v2150, %v2854
    %v2892 = vsub.f32 %v2151, %v2857
    %v2893 = vsub.f32 %v2152, %v2860
    %v2894 = vsub.f32 %v2153, %v2863
    %v2895 = vsub.f32 %v2154, %v2866
    %v2896 = vsub.f32 %v2155, %v2869
    %v2897 = vsub.f32 %v2156, %v2872
    %v2898 = vsub.f32 %v2157, %v2875
    %v2899 = vsub.f32 %v2158, %v2878
    %v2900 = vsub.f32 %v2159, %v2881
    %v2901 = vsub.f32 %v2160, %v2884
    %v2902 = vmul.f32 %v2886, %v2886
    %v2903 = vmul.f32 %v2887, %v2887
    %v2904 = vmul.f32 %v2888, %v2888
    %v2905 = vmul.f32 %v2889, %v2889
    %v2906 = vmul.f32 %v2890, %v2890
    %v2907 = vmul.f32 %v2891, %v2891
    %v2908 = vmul.f32 %v2892, %v2892
    %v2909 = vmul.f32 %v2893, %v2893
    %v2910 = vmul.f32 %v2894, %v2894
    %v2911 = vmul.f32 %v2895, %v2895
    %v2912 = vmul.f32 %v2896, %v2896
    %v2913 = vmul.f32 %v2897, %v2897
    %v2914 = vmul.f32 %v2898, %v2898
    %v2915 = vmul.f32 %v2899, %v2899
    %v2916 = vmul.f32 %v2900, %v2900
    %v2917 = vmul.f32 %v2901, %v2901
    %v2918 = vsel %vm63, %v2902, 0.0
    %2919 = vadd.xlane.f32.xlu0 %v2918
    %v2920 = vpop.xlane.xlu0 %2919
    %v2921 = vsel %vm63, %v2903, 0.0
    %2922 = vadd.xlane.f32.xlu0 %v2921
    %v2923 = vpop.xlane.xlu0 %2922
    %v2924 = vsel %vm63, %v2904, 0.0
    %2925 = vadd.xlane.f32.xlu0 %v2924
    %v2926 = vpop.xlane.xlu0 %2925
    %v2927 = vsel %vm63, %v2905, 0.0
    %2928 = vadd.xlane.f32.xlu0 %v2927
    %v2929 = vpop.xlane.xlu0 %2928
    %v2930 = vsel %vm63, %v2906, 0.0
    %2931 = vadd.xlane.f32.xlu0 %v2930
    %v2932 = vpop.xlane.xlu0 %2931
    %v2933 = vsel %vm63, %v2907, 0.0
    %2934 = vadd.xlane.f32.xlu0 %v2933
    %v2935 = vpop.xlane.xlu0 %2934
    %v2936 = vsel %vm63, %v2908, 0.0
    %2937 = vadd.xlane.f32.xlu0 %v2936
    %v2938 = vpop.xlane.xlu0 %2937
    %v2939 = vsel %vm63, %v2909, 0.0
    %2940 = vadd.xlane.f32.xlu0 %v2939
    %v2941 = vpop.xlane.xlu0 %2940
    %v2942 = vsel %vm63, %v2910, 0.0
    %2943 = vadd.xlane.f32.xlu0 %v2942
    %v2944 = vpop.xlane.xlu0 %2943
    %v2945 = vsel %vm63, %v2911, 0.0
    %2946 = vadd.xlane.f32.xlu0 %v2945
    %v2947 = vpop.xlane.xlu0 %2946
    %v2948 = vsel %vm63, %v2912, 0.0
    %2949 = vadd.xlane.f32.xlu0 %v2948
    %v2950 = vpop.xlane.xlu0 %2949
    %v2951 = vsel %vm63, %v2913, 0.0
    %2952 = vadd.xlane.f32.xlu0 %v2951
    %v2953 = vpop.xlane.xlu0 %2952
    %v2954 = vsel %vm63, %v2914, 0.0
    %2955 = vadd.xlane.f32.xlu0 %v2954
    %v2956 = vpop.xlane.xlu0 %2955
    %v2957 = vsel %vm63, %v2915, 0.0
    %2958 = vadd.xlane.f32.xlu0 %v2957
    %v2959 = vpop.xlane.xlu0 %2958
    %v2960 = vsel %vm63, %v2916, 0.0
    %2961 = vadd.xlane.f32.xlu0 %v2960
    %v2962 = vpop.xlane.xlu0 %2961
    %v2963 = vsel %vm63, %v2917, 0.0
    %2964 = vadd.xlane.f32.xlu0 %v2963
    %v2965 = vpop.xlane.xlu0 %2964
    %v2966 = vperm.slane %v2539, %v36
    %v2967 = vperm.slane %v2547, %v714
    %v2968 = vsel %vm716, %v2967, %v2966
    %v2969 = vperm.slane %v2555, %v718
    %v2970 = vsel %vm720, %v2969, %v2968
    %v2971 = vperm.slane %v2563, %v722
    %v2972 = vsel %vm724, %v2971, %v2970
    %v2973 = vperm.slane %v2571, %v726
    %v2974 = vsel %vm728, %v2973, %v2972
    %v2975 = vperm.slane %v2579, %v730
    %v2976 = vsel %vm732, %v2975, %v2974
    %v2977 = vperm.slane %v2587, %v734
    %v2978 = vsel %vm736, %v2977, %v2976
    %v2979 = vperm.slane %v2595, %v738
    %v2980 = vsel %vm740, %v2979, %v2978
    %v2981 = vperm.slane %v2603, %v742
    %v2982 = vsel %vm744, %v2981, %v2980
    %v2983 = vperm.slane %v2611, %v746
    %v2984 = vsel %vm748, %v2983, %v2982
    %v2985 = vperm.slane %v2619, %v750
    %v2986 = vsel %vm752, %v2985, %v2984
    %v2987 = vperm.slane %v2627, %v754
    %v2988 = vsel %vm756, %v2987, %v2986
    %v2989 = vperm.slane %v2635, %v758
    %v2990 = vsel %vm760, %v2989, %v2988
    %v2991 = vperm.slane %v2643, %v762
    %v2992 = vsel %vm764, %v2991, %v2990
    %v2993 = vperm.slane %v2651, %v766
    %v2994 = vsel %vm768, %v2993, %v2992
    %v2995 = vperm.slane %v2659, %v770
    %v2996 = vsel %vm772, %v2995, %v2994
    %2997 = vst [vmem:[#allocation5 + $0x3] sm:$0x1] %v2996
    %v3014 = vperm.slane %v2920, %v36
    %v3015 = vperm.slane %v2923, %v714
    %v3016 = vsel %vm716, %v3015, %v3014
    %v3017 = vperm.slane %v2926, %v718
    %v3018 = vsel %vm720, %v3017, %v3016
    %v3019 = vperm.slane %v2929, %v722
    %v3020 = vsel %vm724, %v3019, %v3018
    %v3021 = vperm.slane %v2932, %v726
    %v3022 = vsel %vm728, %v3021, %v3020
    %v3023 = vperm.slane %v2935, %v730
    %v3024 = vsel %vm732, %v3023, %v3022
    %v3025 = vperm.slane %v2938, %v734
    %v3026 = vsel %vm736, %v3025, %v3024
    %v3027 = vperm.slane %v2941, %v738
    %v3028 = vsel %vm740, %v3027, %v3026
    %v3029 = vperm.slane %v2944, %v742
    %v3030 = vsel %vm744, %v3029, %v3028
    %v3031 = vperm.slane %v2947, %v746
    %v3032 = vsel %vm748, %v3031, %v3030
    %v3033 = vperm.slane %v2950, %v750
    %v3034 = vsel %vm752, %v3033, %v3032
    %v3035 = vperm.slane %v2953, %v754
    %v3036 = vsel %vm756, %v3035, %v3034
    %v3037 = vperm.slane %v2956, %v758
    %v3038 = vsel %vm760, %v3037, %v3036
    %v3039 = vperm.slane %v2959, %v762
    %v3040 = vsel %vm764, %v3039, %v3038
    %v3041 = vperm.slane %v2962, %v766
    %v3042 = vsel %vm768, %v3041, %v3040
    %v3043 = vperm.slane %v2965, %v770
    %v3044 = vsel %vm772, %v3043, %v3042
    %3046 = vst [vmem:[#allocation6 + $0x3] sm:$0x1] %v3044
    %v3047 = vsub.f32 %v38, %v2886
    %v3048 = vsub.f32 %v39, %v2887
    %v3049 = vsub.f32 %v40, %v2888
    %v3050 = vsub.f32 %v41, %v2889
    %v3051 = vsub.f32 %v42, %v2890
    %v3052 = vsub.f32 %v43, %v2891
    %v3053 = vsub.f32 %v44, %v2892
    %v3054 = vsub.f32 %v45, %v2893
    %v3055 = vsub.f32 %v46, %v2894
    %v3056 = vsub.f32 %v47, %v2895
    %v3057 = vsub.f32 %v48, %v2896
    %v3058 = vsub.f32 %v49, %v2897
    %v3059 = vsub.f32 %v50, %v2898
    %v3060 = vsub.f32 %v51, %v2899
    %v3061 = vsub.f32 %v52, %v2900
    %v3062 = vsub.f32 %v53, %v2901
    %3063 = vst.msk [vmem:[%s3] sm:$0xff] %vm63, %v3047
    %3064 = vst.msk [vmem:[%s3 + $0x8] sm:$0xff] %vm63, %v3048
    %3065 = vst.msk [vmem:[%s3 + $0x10] sm:$0xff] %vm63, %v3049
    %3066 = vst.msk [vmem:[%s3 + $0x18] sm:$0xff] %vm63, %v3050
    %3067 = vst.msk [vmem:[%s3 + $0x20] sm:$0xff] %vm63, %v3051
    %3068 = vst.msk [vmem:[%s3 + $0x28] sm:$0xff] %vm63, %v3052
    %3069 = vst.msk [vmem:[%s3 + $0x30] sm:$0xff] %vm63, %v3053
    %3070 = vst.msk [vmem:[%s3 + $0x38] sm:$0xff] %vm63, %v3054
    %3071 = vst.msk [vmem:[%s3 + $0x40] sm:$0xff] %vm63, %v3055
    %3072 = vst.msk [vmem:[%s3 + $0x48] sm:$0xff] %vm63, %v3056
    %3073 = vst.msk [vmem:[%s3 + $0x50] sm:$0xff] %vm63, %v3057
    %3074 = vst.msk [vmem:[%s3 + $0x58] sm:$0xff] %vm63, %v3058
    %3075 = vst.msk [vmem:[%s3 + $0x60] sm:$0xff] %vm63, %v3059
    %3076 = vst.msk [vmem:[%s3 + $0x68] sm:$0xff] %vm63, %v3060
    %3077 = vst.msk [vmem:[%s3 + $0x70] sm:$0xff] %vm63, %v3061
    %3078 = vst.msk [vmem:[%s3 + $0x78] sm:$0xff] %vm63, %v3062
    // Predicated region
    $region18: #{tpu_custom_call.1} parent=1 // pred_check
      _
    $region19: #{tpu_custom_call.1} parent=1 // pred_check_branch
      %3080 = sbr.rel (0) target = $region21
    $region20: #{tpu_custom_call.1} parent=1 // pred_region
      _
    $region21: #{tpu_custom_call.1} parent=1 // pred_fallthru
      _
    // Predicated region
    $region22: #{tpu_custom_call.1} parent=1 // pred_check
      _
    $region23: #{tpu_custom_call.1} parent=1 // pred_check_branch
      %3082 = sbr.rel (0) target = $region25
    $region24: #{tpu_custom_call.1} parent=1 // pred_region
      %3084 = vsyncadd [#allocation4], 0
      %s3086 = sshll.u32 [#allocation5], 4
      %s3087 = int_to_ptr.vmem [resolvable:$true] %s3086
      %s3088 = sshll.u32 %s4, 4
      %s3089 = int_to_ptr.hbm [resolvable:$true] %s3088
      %3091 = dma.vmem_to_hbm [thread:$0]  %s3087, 64, %s3089, [#allocation4]
    $region25: #{tpu_custom_call.1} parent=1 // pred_fallthru
      _
    // Predicated region
    $region26: #{tpu_custom_call.1} parent=1 // pred_check
      _
    $region27: #{tpu_custom_call.1} parent=1 // pred_check_branch
      %3093 = sbr.rel (0) target = $region29
    $region28: #{tpu_custom_call.1} parent=1 // pred_region
      %3095 = vsyncadd [#allocation7], 0
      %s3097 = sshll.u32 [#allocation6], 4
      %s3098 = int_to_ptr.vmem [resolvable:$true] %s3097
      %s3099 = sshll.u32 %s5, 4
      %s3100 = int_to_ptr.hbm [resolvable:$true] %s3099
      %3102 = dma.vmem_to_hbm [thread:$0]  %s3098, 64, %s3100, [#allocation7]
    $region29: #{tpu_custom_call.1} parent=1 // pred_fallthru
      _
    // Predicated region
    $region30: #{tpu_custom_call.1} parent=1 // pred_check
      _
    $region31: #{tpu_custom_call.1} parent=1 // pred_check_branch
      %3104 = sbr.rel (0) target = $region33
    $region32: #{tpu_custom_call.1} parent=1 // pred_region
      _
    $region33: #{tpu_custom_call.1} parent=1 // pred_fallthru
      _
    // Predicated region
    $region34: #{tpu_custom_call.1} parent=1 // pred_check
      _
    $region35: #{tpu_custom_call.1} parent=1 // pred_check_branch
      %3106 = sbr.rel (0) target = $region37
    $region36: #{tpu_custom_call.1} parent=1 // pred_region
      %3108 = dma.done [#allocation4], 64
    $region37: #{tpu_custom_call.1} parent=1 // pred_fallthru
      _
    // Predicated region
    $region38: #{tpu_custom_call.1} parent=1 // pred_check
      _
    $region39: #{tpu_custom_call.1} parent=1 // pred_check_branch
      %3110 = sbr.rel (0) target = $region41
    $region40: #{tpu_custom_call.1} parent=1 // pred_region
      %3112 = dma.done [#allocation7], 64
    $region41: #{tpu_custom_call.1} parent=1 // pred_fallthru
      _
    %3113 = vsyncpa [#allocation3], 1
    %3114 = vsyncpa [#allocation4], 1
    %3115 = vsyncpa [#allocation7], 1

// kernel: tpu_custom_call.1
$region0: #{tpu_custom_call.1}
  #allocation0 [shape = 'u32[]', space=smem, size = 0x4, offset = 0x4, fixed_abs, tag = 'smem constant byte address 0x4 - core index']
  #allocation1 [shape = 'u32[72,128]{1,0:T(1,128)}', space=vmem, size = 0x9000, scoped, tag = 'internal scratch']
  %s0 = inlined_call_operand.vmem [shape: f32[128,32], index: 0, kind: input, shape index: {}]
  %s1 = inlined_call_operand.hbm [shape: f32[4,32,256], index: 1, kind: input, shape index: {}]
  %s2 = inlined_call_operand.vmem [shape: f32[4,1,256], index: 2, kind: input, shape index: {}]
  %s3 = inlined_call_operand.vmem [shape: f32[128,32], index: 3, kind: output, shape index: {0}]
  %s4 = inlined_call_operand.hbm [shape: s32[4,128], index: 4, kind: output, shape index: {1}]
  %s5 = inlined_call_operand.hbm [shape: f32[4,128], index: 5, kind: output, shape index: {2}]
  %6 = xla_tuple %s3, %s4, %s5
  %s7 = sld [smem:[#allocation0]]
  $region42: #{tpu_custom_call.1} parent=0
    _
  %s9 = ssub.s32 1, %s7
  %s10 = scalar_select 0, %s9, %s7
  $region1: #{tpu_custom_call.1} parent=0
    #allocation2 [shape = 'u8[131072]{0}', space=vmem, size = 0x20000, scoped, tag = 'input window, operand 1, single buffered']
    #allocation3 [shape = 's32[1]{0}', space=sflag, size = 0x4, scoped, tag = 'scoped memory for tpu_custom_call.1']
    #allocation4 [shape = 's32[1]{0}', space=sflag, size = 0x4, scoped, tag = 'scoped memory for tpu_custom_call.1']
    #allocation5 [shape = 'u8[2048]{0}', space=vmem, size = 0x800, scoped, tag = 'output window, operand 1, single buffered']
    #allocation6 [shape = 'u8[2048]{0}', space=vmem, size = 0x800, scoped, tag = 'output window, operand 2, single buffered']
    #allocation7 [shape = 's32[1]{0}', space=sflag, size = 0x4, scoped, tag = 'scoped memory for tpu_custom_call.1']
    %11 = vsyncpa [#allocation3], 0
    %12 = vsyncpa [#allocation4], 0
    %13 = vsyncpa [#allocation7], 0
    // Predicated region
    $region2: #{tpu_custom_call.1} parent=1 // pred_check
      _
    $region3: #{tpu_custom_call.1} parent=1 // pred_check_branch
      %15 = sbr.rel (0) target = $region5
    $region4: #{tpu_custom_call.1} parent=1 // pred_region
      _
    $region5: #{tpu_custom_call.1} parent=1 // pred_fallthru
      _
    // Predicated region
    $region6: #{tpu_custom_call.1} parent=1 // pred_check
      _
    $region7: #{tpu_custom_call.1} parent=1 // pred_check_branch
      %17 = sbr.rel (0) target = $region9
    $region8: #{tpu_custom_call.1} parent=1 // pred_region
      %19 = vsyncadd [#allocation3], 0
      %s20 = sshll.u32 %s1, 4
      %s21 = int_to_ptr.hbm [resolvable:$true] %s20
      %s22 = sshll.u32 [#allocation2], 4
      %s23 = int_to_ptr.vmem [resolvable:$true] %s22
      %28 = dma.hbm_to_vmem [thread:$0]  %s21, 4096, %s23, [#allocation3], 256, 256, 16
    $region9: #{tpu_custom_call.1} parent=1 // pred_fallthru
      _
    // Predicated region
    $region10: #{tpu_custom_call.1} parent=1 // pred_check
      _
    $region11: #{tpu_custom_call.1} parent=1 // pred_check_branch
      %30 = sbr.rel (0) target = $region13
    $region12: #{tpu_custom_call.1} parent=1 // pred_region
      _
    $region13: #{tpu_custom_call.1} parent=1 // pred_fallthru
      _
    // Predicated region
    $region14: #{tpu_custom_call.1} parent=1 // pred_check
      _
    $region15: #{tpu_custom_call.1} parent=1 // pred_check_branch
      %32 = sbr.rel (0) target = $region17
    $region16: #{tpu_custom_call.1} parent=1 // pred_region
      %34 = dma.done [#allocation3], 4096
    $region17: #{tpu_custom_call.1} parent=1 // pred_fallthru
      _
    %v35 = vlaneseq
    %v36 = vand.u32 %v35, 127
    %v37 = vadd.s32 %v36, 128
    %v38 = vld [vmem:[%s0] sm:$0xff]
    %v39 = vld [vmem:[%s0 + $0x8] sm:$0xff]
    %v40 = vld [vmem:[%s0 + $0x10] sm:$0xff]
    %v41 = vld [vmem:[%s0 + $0x18] sm:$0xff]
    %v42 = vld [vmem:[%s0 + $0x20] sm:$0xff]
    %v43 = vld [vmem:[%s0 + $0x28] sm:$0xff]
    %v44 = vld [vmem:[%s0 + $0x30] sm:$0xff]
    %v45 = vld [vmem:[%s0 + $0x38] sm:$0xff]
    %v46 = vld [vmem:[%s0 + $0x40] sm:$0xff]
    %v47 = vld [vmem:[%s0 + $0x48] sm:$0xff]
    %v48 = vld [vmem:[%s0 + $0x50] sm:$0xff]
    %v49 = vld [vmem:[%s0 + $0x58] sm:$0xff]
    %v50 = vld [vmem:[%s0 + $0x60] sm:$0xff]
    %v51 = vld [vmem:[%s0 + $0x68] sm:$0xff]
    %v52 = vld [vmem:[%s0 + $0x70] sm:$0xff]
    %v53 = vld [vmem:[%s0 + $0x78] sm:$0xff]
    %v54 = vld [vmem:[#allocation2] sm:$0xff]
    %v55 = vld [vmem:[#allocation2 + $0x8] sm:$0xff]
    %v56 = vld [vmem:[#allocation2 + $0x10] sm:$0xff]
    %v57 = vld [vmem:[#allocation2 + $0x18] sm:$0xff]
    %v58 = vld [vmem:[#allocation2 + $0x20] sm:$0xff]
    %v59 = vld [vmem:[#allocation2 + $0x28] sm:$0xff]
    %v60 = vld [vmem:[#allocation2 + $0x30] sm:$0xff]
    %v61 = vld [vmem:[#allocation2 + $0x38] sm:$0xff]
    %v62 = vld [vmem:[%s2] sm:$0x3]
    %vm63 = vcmask 261120
    %v65 = vsel %vm63, %v38, 0
    %v68 = vsel %vm63, %v39, 0
    %v71 = vsel %vm63, %v40, 0
    %v74 = vsel %vm63, %v41, 0
    %v77 = vsel %vm63, %v42, 0
    %v80 = vsel %vm63, %v43, 0
    %v83 = vsel %vm63, %v44, 0
    %v86 = vsel %vm63, %v45, 0
    %v89 = vsel %vm63, %v46, 0
    %v92 = vsel %vm63, %v47, 0
    %v95 = vsel %vm63, %v48, 0
    %v98 = vsel %vm63, %v49, 0
    %v101 = vsel %vm63, %v50, 0
    %v104 = vsel %vm63, %v51, 0
    %v107 = vsel %vm63, %v52, 0
    %v110 = vsel %vm63, %v53, 0
    %112 = vmatpush.msra.mxu0 0.0
    %113 = vmatpush.msra.mxu0 0.0
    %114 = vmatpush.msra.mxu0 0.0
    %115 = vmatpush.msra.mxu0 0.0
    %116 = vmatpush.msra.mxu0 0.0
    %117 = vmatpush.msra.mxu0 0.0
    %118 = vmatpush.msra.mxu0 0.0
    %119 = vmatpush.msra.mxu0 0.0
    %120 = vmatpush.msra.mxu0 0.0
    %121 = vmatpush.msra.mxu0 0.0
    %122 = vmatpush.msra.mxu0 0.0
    %123 = vmatpush.msra.mxu0 0.0
    %124 = vmatpush.msra.mxu0 %v60
    %125 = vmatpush.msra.mxu0 %v58
    %126 = vmatpush.msra.mxu0 %v56
    %127 = vmatpush.msra.mxu0 %v54
    %128 = vmatmul.f32.gmra.mxu0 %v65
    %v129 = vpop.f32.mrf.mxu0
    %v130 = vadd.f32 0.0, %v129
    %131 = vmatmul.f32.gmra.mxu0 %v68
    %v132 = vpop.f32.mrf.mxu0
    %v133 = vadd.f32 0.0, %v132
    %134 = vmatmul.f32.gmra.mxu0 %v71
    %v135 = vpop.f32.mrf.mxu0
    %v136 = vadd.f32 0.0, %v135
    %137 = vmatmul.f32.gmra.mxu0 %v74
    %v138 = vpop.f32.mrf.mxu0
    %v139 = vadd.f32 0.0, %v138
    %140 = vmatmul.f32.gmra.mxu0 %v77
    %v141 = vpop.f32.mrf.mxu0
    %v142 = vadd.f32 0.0, %v141
    %143 = vmatmul.f32.gmra.mxu0 %v80
    %v144 = vpop.f32.mrf.mxu0
    %v145 = vadd.f32 0.0, %v144
    %146 = vmatmul.f32.gmra.mxu0 %v83
    %v147 = vpop.f32.mrf.mxu0
    %v148 = vadd.f32 0.0, %v147
    %149 = vmatmul.f32.gmra.mxu0 %v86
    %v150 = vpop.f32.mrf.mxu0
    %v151 = vadd.f32 0.0, %v150
    %152 = vmatmul.f32.gmra.mxu0 %v89
    %v153 = vpop.f32.mrf.mxu0
    %v154 = vadd.f32 0.0, %v153
    %155 = vmatmul.f32.gmra.mxu0 %v92
    %v156 = vpop.f32.mrf.mxu0
    %v157 = vadd.f32 0.0, %v156
    %158 = vmatmul.f32.gmra.mxu0 %v95
    %v159 = vpop.f32.mrf.mxu0
    %v160 = vadd.f32 0.0, %v159
    %161 = vmatmul.f32.gmra.mxu0 %v98
    %v162 = vpop.f32.mrf.mxu0
    %v163 = vadd.f32 0.0, %v162
    %164 = vmatmul.f32.gmra.mxu0 %v101
    %v165 = vpop.f32.mrf.mxu0
    %v166 = vadd.f32 0.0, %v165
    %167 = vmatmul.f32.gmra.mxu0 %v104
    %v168 = vpop.f32.mrf.mxu0
    %v169 = vadd.f32 0.0, %v168
    %170 = vmatmul.f32.gmra.mxu0 %v107
    %v171 = vpop.f32.mrf.mxu0
    %v172 = vadd.f32 0.0, %v171
    %173 = vmatmul.f32.gmra.mxu0 %v110
    %v174 = vpop.f32.mrf.mxu0
    %v175 = vadd.f32 0.0, %v174
    %176 = vdwg.mxu0
    %177 = vmatpush.msra.mxu0 0.0
    %178 = vmatpush.msra.mxu0 0.0
    %179 = vmatpush.msra.mxu0 0.0
    %180 = vmatpush.msra.mxu0 0.0
    %181 = vmatpush.msra.mxu0 0.0
    %182 = vmatpush.msra.mxu0 0.0
    %183 = vmatpush.msra.mxu0 0.0
    %184 = vmatpush.msra.mxu0 0.0
    %185 = vmatpush.msra.mxu0 0.0
    %186 = vmatpush.msra.mxu0 0.0
    %187 = vmatpush.msra.mxu0 0.0
    %188 = vmatpush.msra.mxu0 0.0
    %189 = vmatpush.msra.mxu0 %v61
    %190 = vmatpush.msra.mxu0 %v59
    %191 = vmatpush.msra.mxu0 %v57
    %192 = vmatpush.msra.mxu0 %v55
    %193 = vmatmul.f32.gmra.mxu0 %v65
    %v194 = vpop.f32.mrf.mxu0
    %v195 = vadd.f32 0.0, %v194
    %196 = vmatmul.f32.gmra.mxu0 %v68
    %v197 = vpop.f32.mrf.mxu0
    %v198 = vadd.f32 0.0, %v197
    %199 = vmatmul.f32.gmra.mxu0 %v71
    %v200 = vpop.f32.mrf.mxu0
    %v201 = vadd.f32 0.0, %v200
    %202 = vmatmul.f32.gmra.mxu0 %v74
    %v203 = vpop.f32.mrf.mxu0
    %v204 = vadd.f32 0.0, %v203
    %205 = vmatmul.f32.gmra.mxu0 %v77
    %v206 = vpop.f32.mrf.mxu0
    %v207 = vadd.f32 0.0, %v206
    %208 = vmatmul.f32.gmra.mxu0 %v80
    %v209 = vpop.f32.mrf.mxu0
    %v210 = vadd.f32 0.0, %v209
    %211 = vmatmul.f32.gmra.mxu0 %v83
    %v212 = vpop.f32.mrf.mxu0
    %v213 = vadd.f32 0.0, %v212
    %214 = vmatmul.f32.gmra.mxu0 %v86
    %v215 = vpop.f32.mrf.mxu0
    %v216 = vadd.f32 0.0, %v215
    %217 = vmatmul.f32.gmra.mxu0 %v89
    %v218 = vpop.f32.mrf.mxu0
    %v219 = vadd.f32 0.0, %v218
    %220 = vmatmul.f32.gmra.mxu0 %v92
    %v221 = vpop.f32.mrf.mxu0
    %v222 = vadd.f32 0.0, %v221
    %223 = vmatmul.f32.gmra.mxu0 %v95
    %v224 = vpop.f32.mrf.mxu0
    %v225 = vadd.f32 0.0, %v224
    %226 = vmatmul.f32.gmra.mxu0 %v98
    %v227 = vpop.f32.mrf.mxu0
    %v228 = vadd.f32 0.0, %v227
    %229 = vmatmul.f32.gmra.mxu0 %v101
    %v230 = vpop.f32.mrf.mxu0
    %v231 = vadd.f32 0.0, %v230
    %232 = vmatmul.f32.gmra.mxu0 %v104
    %v233 = vpop.f32.mrf.mxu0
    %v234 = vadd.f32 0.0, %v233
    %235 = vmatmul.f32.gmra.mxu0 %v107
    %v236 = vpop.f32.mrf.mxu0
    %v237 = vadd.f32 0.0, %v236
    %238 = vmatmul.f32.gmra.mxu0 %v110
    %v239 = vpop.f32.mrf.mxu0
    %v240 = vadd.f32 0.0, %v239
    %241 = vdwg.mxu0
    %v243 = vperm.slane %v62, 0
    %v244 = vperm.slane %v62, 1
    %v247 = vsub.f32 %v130, %v243
    %v248 = vsub.f32 %v195, %v244
    %v249 = vsub.f32 %v133, %v243
    %v250 = vsub.f32 %v198, %v244
    %v251 = vsub.f32 %v136, %v243
    %v252 = vsub.f32 %v201, %v244
    %v253 = vsub.f32 %v139, %v243
    %v254 = vsub.f32 %v204, %v244
    %v255 = vsub.f32 %v142, %v243
    %v256 = vsub.f32 %v207, %v244
    %v257 = vsub.f32 %v145, %v243
    %v258 = vsub.f32 %v210, %v244
    %v259 = vsub.f32 %v148, %v243
    %v260 = vsub.f32 %v213, %v244
    %v261 = vsub.f32 %v151, %v243
    %v262 = vsub.f32 %v216, %v244
    %v263 = vsub.f32 %v154, %v243
    %v264 = vsub.f32 %v219, %v244
    %v265 = vsub.f32 %v157, %v243
    %v266 = vsub.f32 %v222, %v244
    %v267 = vsub.f32 %v160, %v243
    %v268 = vsub.f32 %v225, %v244
    %v269 = vsub.f32 %v163, %v243
    %v270 = vsub.f32 %v228, %v244
    %v271 = vsub.f32 %v166, %v243
    %v272 = vsub.f32 %v231, %v244
    %v273 = vsub.f32 %v169, %v243
    %v274 = vsub.f32 %v234, %v244
    %v275 = vsub.f32 %v172, %v243
    %v276 = vsub.f32 %v237, %v244
    %v277 = vsub.f32 %v175, %v243
    %v278 = vsub.f32 %v240, %v244
    %v279 = vmax.f32 %v247, %v248
    %280 = vmax.xlane.f32.xlu0 %v279
    %v281 = vpop.xlane.xlu0 %280
    %v282 = vmax.f32 %v249, %v250
    %283 = vmax.xlane.f32.xlu0 %v282
    %v284 = vpop.xlane.xlu0 %283
    %v285 = vmax.f32 %v251, %v252
    %286 = vmax.xlane.f32.xlu0 %v285
    %v287 = vpop.xlane.xlu0 %286
    %v288 = vmax.f32 %v253, %v254
    %289 = vmax.xlane.f32.xlu0 %v288
    %v290 = vpop.xlane.xlu0 %289
    %v291 = vmax.f32 %v255, %v256
    %292 = vmax.xlane.f32.xlu0 %v291
    %v293 = vpop.xlane.xlu0 %292
    %v294 = vmax.f32 %v257, %v258
    %295 = vmax.xlane.f32.xlu0 %v294
    %v296 = vpop.xlane.xlu0 %295
    %v297 = vmax.f32 %v259, %v260
    %298 = vmax.xlane.f32.xlu0 %v297
    %v299 = vpop.xlane.xlu0 %298
    %v300 = vmax.f32 %v261, %v262
    %301 = vmax.xlane.f32.xlu0 %v300
    %v302 = vpop.xlane.xlu0 %301
    %v303 = vmax.f32 %v263, %v264
    %304 = vmax.xlane.f32.xlu0 %v303
    %v305 = vpop.xlane.xlu0 %304
    %v306 = vmax.f32 %v265, %v266
    %307 = vmax.xlane.f32.xlu0 %v306
    %v308 = vpop.xlane.xlu0 %307
    %v309 = vmax.f32 %v267, %v268
    %310 = vmax.xlane.f32.xlu0 %v309
    %v311 = vpop.xlane.xlu0 %310
    %v312 = vmax.f32 %v269, %v270
    %313 = vmax.xlane.f32.xlu0 %v312
    %v314 = vpop.xlane.xlu0 %313
    %v315 = vmax.f32 %v271, %v272
    %316 = vmax.xlane.f32.xlu0 %v315
    %v317 = vpop.xlane.xlu0 %316
    %v318 = vmax.f32 %v273, %v274
    %319 = vmax.xlane.f32.xlu0 %v318
    %v320 = vpop.xlane.xlu0 %319
    %v321 = vmax.f32 %v275, %v276
    %322 = vmax.xlane.f32.xlu0 %v321
    %v323 = vpop.xlane.xlu0 %322
    %v324 = vmax.f32 %v277, %v278
    %325 = vmax.xlane.f32.xlu0 %v324
    %v326 = vpop.xlane.xlu0 %325
    %vm327 = vcmp.eq.f32.partialorder %v247, %v281
    %vm328 = vcmp.eq.f32.partialorder %v248, %v281
    %vm329 = vcmp.eq.f32.partialorder %v249, %v284
    %vm330 = vcmp.eq.f32.partialorder %v250, %v284
    %vm331 = vcmp.eq.f32.partialorder %v251, %v287
    %vm332 = vcmp.eq.f32.partialorder %v252, %v287
    %vm333 = vcmp.eq.f32.partialorder %v253, %v290
    %vm334 = vcmp.eq.f32.partialorder %v254, %v290
    %vm335 = vcmp.eq.f32.partialorder %v255, %v293
    %vm336 = vcmp.eq.f32.partialorder %v256, %v293
    %vm337 = vcmp.eq.f32.partialorder %v257, %v296
    %vm338 = vcmp.eq.f32.partialorder %v258, %v296
    %vm339 = vcmp.eq.f32.partialorder %v259, %v299
    %vm340 = vcmp.eq.f32.partialorder %v260, %v299
    %vm341 = vcmp.eq.f32.partialorder %v261, %v302
    %vm342 = vcmp.eq.f32.partialorder %v262, %v302
    %vm343 = vcmp.eq.f32.partialorder %v263, %v305
    %vm344 = vcmp.eq.f32.partialorder %v264, %v305
    %vm345 = vcmp.eq.f32.partialorder %v265, %v308
    %vm346 = vcmp.eq.f32.partialorder %v266, %v308
    %vm347 = vcmp.eq.f32.partialorder %v267, %v311
    %vm348 = vcmp.eq.f32.partialorder %v268, %v311
    %vm349 = vcmp.eq.f32.partialorder %v269, %v314
    %vm350 = vcmp.eq.f32.partialorder %v270, %v314
    %vm351 = vcmp.eq.f32.partialorder %v271, %v317
    %vm352 = vcmp.eq.f32.partialorder %v272, %v317
    %vm353 = vcmp.eq.f32.partialorder %v273, %v320
    %vm354 = vcmp.eq.f32.partialorder %v274, %v320
    %vm355 = vcmp.eq.f32.partialorder %v275, %v323
    %vm356 = vcmp.eq.f32.partialorder %v276, %v323
    %vm357 = vcmp.eq.f32.partialorder %v277, %v326
    %vm358 = vcmp.eq.f32.partialorder %v278, %v326
    %v359 = vsel %vm327, %v36, 256
    %v360 = vsel %vm328, %v37, 256
    %v361 = vsel %vm329, %v36, 256
    %v362 = vsel %vm330, %v37, 256
    %v363 = vsel %vm331, %v36, 256
    %v364 = vsel %vm332, %v37, 256
    %v365 = vsel %vm333, %v36, 256
    %v366 = vsel %vm334, %v37, 256
    %v367 = vsel %vm335, %v36, 256
    %v368 = vsel %vm336, %v37, 256
    %v369 = vsel %vm337, %v36, 256
    %v370 = vsel %vm338, %v37, 256
    %v371 = vsel %vm339, %v36, 256
    %v372 = vsel %vm340, %v37, 256
    %v373 = vsel %vm341, %v36, 256
    %v374 = vsel %vm342, %v37, 256
    %v375 = vsel %vm343, %v36, 256
    %v376 = vsel %vm344, %v37, 256
    %v377 = vsel %vm345, %v36, 256
    %v378 = vsel %vm346, %v37, 256
    %v379 = vsel %vm347, %v36, 256
    %v380 = vsel %vm348, %v37, 256
    %v381 = vsel %vm349, %v36, 256
    %v382 = vsel %vm350, %v37, 256
    %v383 = vsel %vm351, %v36, 256
    %v384 = vsel %vm352, %v37, 256
    %v385 = vsel %vm353, %v36, 256
    %v386 = vsel %vm354, %v37, 256
    %v387 = vsel %vm355, %v36, 256
    %v388 = vsel %vm356, %v37, 256
    %v389 = vsel %vm357, %v36, 256
    %v390 = vsel %vm358, %v37, 256
    %vm391 = vcmp.lt.s32.totalorder %v359, %v360
    %v392 = vsel %vm391, %v359, %v360
    %v393 = vand.u32 %v392, 65535
    %v394 = vshra.s32 %v392, 16
    %v395 = vcvt.s32.f32 %v393
    %v396 = vcvt.s32.f32 %v394
    %397 = vmin.xlane.f32.xlu0 %v396
    %v398 = vpop.xlane.xlu0 %397
    %vm399 = vcmp.eq.f32.partialorder %v396, %v398
    %v400 = vsel %vm399, %v395, inf
    %401 = vmin.xlane.f32.xlu0 %v400
    %v402 = vpop.xlane.xlu0 %401
    %v403 = vcvt.f32.s32 %v402
    %v404 = vcvt.f32.s32 %v398
    %v405 = vshll.u32 %v404, 16
    %v406 = vadd.s32 %v405, %v403
    %vm407 = vcmp.lt.s32.totalorder %v361, %v362
    %v408 = vsel %vm407, %v361, %v362
    %v409 = vand.u32 %v408, 65535
    %v410 = vshra.s32 %v408, 16
    %v411 = vcvt.s32.f32 %v409
    %v412 = vcvt.s32.f32 %v410
    %413 = vmin.xlane.f32.xlu0 %v412
    %v414 = vpop.xlane.xlu0 %413
    %vm415 = vcmp.eq.f32.partialorder %v412, %v414
    %v416 = vsel %vm415, %v411, inf
    %417 = vmin.xlane.f32.xlu0 %v416
    %v418 = vpop.xlane.xlu0 %417
    %v419 = vcvt.f32.s32 %v418
    %v420 = vcvt.f32.s32 %v414
    %v421 = vshll.u32 %v420, 16
    %v422 = vadd.s32 %v421, %v419
    %vm423 = vcmp.lt.s32.totalorder %v363, %v364
    %v424 = vsel %vm423, %v363, %v364
    %v425 = vand.u32 %v424, 65535
    %v426 = vshra.s32 %v424, 16
    %v427 = vcvt.s32.f32 %v425
    %v428 = vcvt.s32.f32 %v426
    %429 = vmin.xlane.f32.xlu0 %v428
    %v430 = vpop.xlane.xlu0 %429
    %vm431 = vcmp.eq.f32.partialorder %v428, %v430
    %v432 = vsel %vm431, %v427, inf
    %433 = vmin.xlane.f32.xlu0 %v432
    %v434 = vpop.xlane.xlu0 %433
    %v435 = vcvt.f32.s32 %v434
    %v436 = vcvt.f32.s32 %v430
    %v437 = vshll.u32 %v436, 16
    %v438 = vadd.s32 %v437, %v435
    %vm439 = vcmp.lt.s32.totalorder %v365, %v366
    %v440 = vsel %vm439, %v365, %v366
    %v441 = vand.u32 %v440, 65535
    %v442 = vshra.s32 %v440, 16
    %v443 = vcvt.s32.f32 %v441
    %v444 = vcvt.s32.f32 %v442
    %445 = vmin.xlane.f32.xlu0 %v444
    %v446 = vpop.xlane.xlu0 %445
    %vm447 = vcmp.eq.f32.partialorder %v444, %v446
    %v448 = vsel %vm447, %v443, inf
    %449 = vmin.xlane.f32.xlu0 %v448
    %v450 = vpop.xlane.xlu0 %449
    %v451 = vcvt.f32.s32 %v450
    %v452 = vcvt.f32.s32 %v446
    %v453 = vshll.u32 %v452, 16
    %v454 = vadd.s32 %v453, %v451
    %vm455 = vcmp.lt.s32.totalorder %v367, %v368
    %v456 = vsel %vm455, %v367, %v368
    %v457 = vand.u32 %v456, 65535
    %v458 = vshra.s32 %v456, 16
    %v459 = vcvt.s32.f32 %v457
    %v460 = vcvt.s32.f32 %v458
    %461 = vmin.xlane.f32.xlu0 %v460
    %v462 = vpop.xlane.xlu0 %461
    %vm463 = vcmp.eq.f32.partialorder %v460, %v462
    %v464 = vsel %vm463, %v459, inf
    %465 = vmin.xlane.f32.xlu0 %v464
    %v466 = vpop.xlane.xlu0 %465
    %v467 = vcvt.f32.s32 %v466
    %v468 = vcvt.f32.s32 %v462
    %v469 = vshll.u32 %v468, 16
    %v470 = vadd.s32 %v469, %v467
    %vm471 = vcmp.lt.s32.totalorder %v369, %v370
    %v472 = vsel %vm471, %v369, %v370
    %v473 = vand.u32 %v472, 65535
    %v474 = vshra.s32 %v472, 16
    %v475 = vcvt.s32.f32 %v473
    %v476 = vcvt.s32.f32 %v474
    %477 = vmin.xlane.f32.xlu0 %v476
    %v478 = vpop.xlane.xlu0 %477
    %vm479 = vcmp.eq.f32.partialorder %v476, %v478
    %v480 = vsel %vm479, %v475, inf
    %481 = vmin.xlane.f32.xlu0 %v480
    %v482 = vpop.xlane.xlu0 %481
    %v483 = vcvt.f32.s32 %v482
    %v484 = vcvt.f32.s32 %v478
    %v485 = vshll.u32 %v484, 16
    %v486 = vadd.s32 %v485, %v483
    %vm487 = vcmp.lt.s32.totalorder %v371, %v372
    %v488 = vsel %vm487, %v371, %v372
    %v489 = vand.u32 %v488, 65535
    %v490 = vshra.s32 %v488, 16
    %v491 = vcvt.s32.f32 %v489
    %v492 = vcvt.s32.f32 %v490
    %493 = vmin.xlane.f32.xlu0 %v492
    %v494 = vpop.xlane.xlu0 %493
    %vm495 = vcmp.eq.f32.partialorder %v492, %v494
    %v496 = vsel %vm495, %v491, inf
    %497 = vmin.xlane.f32.xlu0 %v496
    %v498 = vpop.xlane.xlu0 %497
    %v499 = vcvt.f32.s32 %v498
    %v500 = vcvt.f32.s32 %v494
    %v501 = vshll.u32 %v500, 16
    %v502 = vadd.s32 %v501, %v499
    %vm503 = vcmp.lt.s32.totalorder %v373, %v374
    %v504 = vsel %vm503, %v373, %v374
    %v505 = vand.u32 %v504, 65535
    %v506 = vshra.s32 %v504, 16
    %v507 = vcvt.s32.f32 %v505
    %v508 = vcvt.s32.f32 %v506
    %509 = vmin.xlane.f32.xlu0 %v508
    %v510 = vpop.xlane.xlu0 %509
    %vm511 = vcmp.eq.f32.partialorder %v508, %v510
    %v512 = vsel %vm511, %v507, inf
    %513 = vmin.xlane.f32.xlu0 %v512
    %v514 = vpop.xlane.xlu0 %513
    %v515 = vcvt.f32.s32 %v514
    %v516 = vcvt.f32.s32 %v510
    %v517 = vshll.u32 %v516, 16
    %v518 = vadd.s32 %v517, %v515
    %vm519 = vcmp.lt.s32.totalorder %v375, %v376
    %v520 = vsel %vm519, %v375, %v376
    %v521 = vand.u32 %v520, 65535
    %v522 = vshra.s32 %v520, 16
    %v523 = vcvt.s32.f32 %v521
    %v524 = vcvt.s32.f32 %v522
    %525 = vmin.xlane.f32.xlu0 %v524
    %v526 = vpop.xlane.xlu0 %525
    %vm527 = vcmp.eq.f32.partialorder %v524, %v526
    %v528 = vsel %vm527, %v523, inf
    %529 = vmin.xlane.f32.xlu0 %v528
    %v530 = vpop.xlane.xlu0 %529
    %v531 = vcvt.f32.s32 %v530
    %v532 = vcvt.f32.s32 %v526
    %v533 = vshll.u32 %v532, 16
    %v534 = vadd.s32 %v533, %v531
    %vm535 = vcmp.lt.s32.totalorder %v377, %v378
    %v536 = vsel %vm535, %v377, %v378
    %v537 = vand.u32 %v536, 65535
    %v538 = vshra.s32 %v536, 16
    %v539 = vcvt.s32.f32 %v537
    %v540 = vcvt.s32.f32 %v538
    %541 = vmin.xlane.f32.xlu0 %v540
    %v542 = vpop.xlane.xlu0 %541
    %vm543 = vcmp.eq.f32.partialorder %v540, %v542
    %v544 = vsel %vm543, %v539, inf
    %545 = vmin.xlane.f32.xlu0 %v544
    %v546 = vpop.xlane.xlu0 %545
    %v547 = vcvt.f32.s32 %v546
    %v548 = vcvt.f32.s32 %v542
    %v549 = vshll.u32 %v548, 16
    %v550 = vadd.s32 %v549, %v547
    %vm551 = vcmp.lt.s32.totalorder %v379, %v380
    %v552 = vsel %vm551, %v379, %v380
    %v553 = vand.u32 %v552, 65535
    %v554 = vshra.s32 %v552, 16
    %v555 = vcvt.s32.f32 %v553
    %v556 = vcvt.s32.f32 %v554
    %557 = vmin.xlane.f32.xlu0 %v556
    %v558 = vpop.xlane.xlu0 %557
    %vm559 = vcmp.eq.f32.partialorder %v556, %v558
    %v560 = vsel %vm559, %v555, inf
    %561 = vmin.xlane.f32.xlu0 %v560
    %v562 = vpop.xlane.xlu0 %561
    %v563 = vcvt.f32.s32 %v562
    %v564 = vcvt.f32.s32 %v558
    %v565 = vshll.u32 %v564, 16
    %v566 = vadd.s32 %v565, %v563
    %vm567 = vcmp.lt.s32.totalorder %v381, %v382
    %v568 = vsel %vm567, %v381, %v382
    %v569 = vand.u32 %v568, 65535
    %v570 = vshra.s32 %v568, 16
    %v571 = vcvt.s32.f32 %v569
    %v572 = vcvt.s32.f32 %v570
    %573 = vmin.xlane.f32.xlu0 %v572
    %v574 = vpop.xlane.xlu0 %573
    %vm575 = vcmp.eq.f32.partialorder %v572, %v574
    %v576 = vsel %vm575, %v571, inf
    %577 = vmin.xlane.f32.xlu0 %v576
    %v578 = vpop.xlane.xlu0 %577
    %v579 = vcvt.f32.s32 %v578
    %v580 = vcvt.f32.s32 %v574
    %v581 = vshll.u32 %v580, 16
    %v582 = vadd.s32 %v581, %v579
    %vm583 = vcmp.lt.s32.totalorder %v383, %v384
    %v584 = vsel %vm583, %v383, %v384
    %v585 = vand.u32 %v584, 65535
    %v586 = vshra.s32 %v584, 16
    %v587 = vcvt.s32.f32 %v585
    %v588 = vcvt.s32.f32 %v586
    %589 = vmin.xlane.f32.xlu0 %v588
    %v590 = vpop.xlane.xlu0 %589
    %vm591 = vcmp.eq.f32.partialorder %v588, %v590
    %v592 = vsel %vm591, %v587, inf
    %593 = vmin.xlane.f32.xlu0 %v592
    %v594 = vpop.xlane.xlu0 %593
    %v595 = vcvt.f32.s32 %v594
    %v596 = vcvt.f32.s32 %v590
    %v597 = vshll.u32 %v596, 16
    %v598 = vadd.s32 %v597, %v595
    %vm599 = vcmp.lt.s32.totalorder %v385, %v386
    %v600 = vsel %vm599, %v385, %v386
    %v601 = vand.u32 %v600, 65535
    %v602 = vshra.s32 %v600, 16
    %v603 = vcvt.s32.f32 %v601
    %v604 = vcvt.s32.f32 %v602
    %605 = vmin.xlane.f32.xlu0 %v604
    %v606 = vpop.xlane.xlu0 %605
    %vm607 = vcmp.eq.f32.partialorder %v604, %v606
    %v608 = vsel %vm607, %v603, inf
    %609 = vmin.xlane.f32.xlu0 %v608
    %v610 = vpop.xlane.xlu0 %609
    %v611 = vcvt.f32.s32 %v610
    %v612 = vcvt.f32.s32 %v606
    %v613 = vshll.u32 %v612, 16
    %v614 = vadd.s32 %v613, %v611
    %vm615 = vcmp.lt.s32.totalorder %v387, %v388
    %v616 = vsel %vm615, %v387, %v388
    %v617 = vand.u32 %v616, 65535
    %v618 = vshra.s32 %v616, 16
    %v619 = vcvt.s32.f32 %v617
    %v620 = vcvt.s32.f32 %v618
    %621 = vmin.xlane.f32.xlu0 %v620
    %v622 = vpop.xlane.xlu0 %621
    %vm623 = vcmp.eq.f32.partialorder %v620, %v622
    %v624 = vsel %vm623, %v619, inf
    %625 = vmin.xlane.f32.xlu0 %v624
    %v626 = vpop.xlane.xlu0 %625
    %v627 = vcvt.f32.s32 %v626
    %v628 = vcvt.f32.s32 %v622
    %v629 = vshll.u32 %v628, 16
    %v630 = vadd.s32 %v629, %v627
    %vm631 = vcmp.lt.s32.totalorder %v389, %v390
    %v632 = vsel %vm631, %v389, %v390
    %v633 = vand.u32 %v632, 65535
    %v634 = vshra.s32 %v632, 16
    %v635 = vcvt.s32.f32 %v633
    %v636 = vcvt.s32.f32 %v634
    %637 = vmin.xlane.f32.xlu0 %v636
    %v638 = vpop.xlane.xlu0 %637
    %vm639 = vcmp.eq.f32.partialorder %v636, %v638
    %v640 = vsel %vm639, %v635, inf
    %641 = vmin.xlane.f32.xlu0 %v640
    %v642 = vpop.xlane.xlu0 %641
    %v643 = vcvt.f32.s32 %v642
    %v644 = vcvt.f32.s32 %v638
    %v645 = vshll.u32 %v644, 16
    %v646 = vadd.s32 %v645, %v643
    %vm647 = vcmp.eq.s32.totalorder %v36, %v406
    %vm648 = vcmp.eq.s32.totalorder %v37, %v406
    %vm649 = vcmp.eq.s32.totalorder %v36, %v422
    %vm650 = vcmp.eq.s32.totalorder %v37, %v422
    %vm651 = vcmp.eq.s32.totalorder %v36, %v438
    %vm652 = vcmp.eq.s32.totalorder %v37, %v438
    %vm653 = vcmp.eq.s32.totalorder %v36, %v454
    %vm654 = vcmp.eq.s32.totalorder %v37, %v454
    %vm655 = vcmp.eq.s32.totalorder %v36, %v470
    %vm656 = vcmp.eq.s32.totalorder %v37, %v470
    %vm657 = vcmp.eq.s32.totalorder %v36, %v486
    %vm658 = vcmp.eq.s32.totalorder %v37, %v486
    %vm659 = vcmp.eq.s32.totalorder %v36, %v502
    %vm660 = vcmp.eq.s32.totalorder %v37, %v502
    %vm661 = vcmp.eq.s32.totalorder %v36, %v518
    %vm662 = vcmp.eq.s32.totalorder %v37, %v518
    %vm663 = vcmp.eq.s32.totalorder %v36, %v534
    %vm664 = vcmp.eq.s32.totalorder %v37, %v534
    %vm665 = vcmp.eq.s32.totalorder %v36, %v550
    %vm666 = vcmp.eq.s32.totalorder %v37, %v550
    %vm667 = vcmp.eq.s32.totalorder %v36, %v566
    %vm668 = vcmp.eq.s32.totalorder %v37, %v566
    %vm669 = vcmp.eq.s32.totalorder %v36, %v582
    %vm670 = vcmp.eq.s32.totalorder %v37, %v582
    %vm671 = vcmp.eq.s32.totalorder %v36, %v598
    %vm672 = vcmp.eq.s32.totalorder %v37, %v598
    %vm673 = vcmp.eq.s32.totalorder %v36, %v614
    %vm674 = vcmp.eq.s32.totalorder %v37, %v614
    %vm675 = vcmp.eq.s32.totalorder %v36, %v630
    %vm676 = vcmp.eq.s32.totalorder %v37, %v630
    %vm677 = vcmp.eq.s32.totalorder %v36, %v646
    %vm678 = vcmp.eq.s32.totalorder %v37, %v646
    %v679 = vsel %vm647, 1, 0
    %v680 = vsel %vm648, 1, 0
    %v681 = vsel %vm649, 1, 0
    %v682 = vsel %vm650, 1, 0
    %v683 = vsel %vm651, 1, 0
    %v684 = vsel %vm652, 1, 0
    %v685 = vsel %vm653, 1, 0
    %v686 = vsel %vm654, 1, 0
    %v687 = vsel %vm655, 1, 0
    %v688 = vsel %vm656, 1, 0
    %v689 = vsel %vm657, 1, 0
    %v690 = vsel %vm658, 1, 0
    %v691 = vsel %vm659, 1, 0
    %v692 = vsel %vm660, 1, 0
    %v693 = vsel %vm661, 1, 0
    %v694 = vsel %vm662, 1, 0
    %v695 = vsel %vm663, 1, 0
    %v696 = vsel %vm664, 1, 0
    %v697 = vsel %vm665, 1, 0
    %v698 = vsel %vm666, 1, 0
    %v699 = vsel %vm667, 1, 0
    %v700 = vsel %vm668, 1, 0
    %v701 = vsel %vm669, 1, 0
    %v702 = vsel %vm670, 1, 0
    %v703 = vsel %vm671, 1, 0
    %v704 = vsel %vm672, 1, 0
    %v705 = vsel %vm673, 1, 0
    %v706 = vsel %vm674, 1, 0
    %v707 = vsel %vm675, 1, 0
    %v708 = vsel %vm676, 1, 0
    %v709 = vsel %vm677, 1, 0
    %v710 = vsel %vm678, 1, 0
    %v711 = vcvt.s32.f32 %v679
    %v712 = vcvt.s32.f32 %v680
    %v713 = vcvt.s32.f32 %v681
    %v714 = vcvt.s32.f32 %v682
    %v715 = vcvt.s32.f32 %v683
    %v716 = vcvt.s32.f32 %v684
    %v717 = vcvt.s32.f32 %v685
    %v718 = vcvt.s32.f32 %v686
    %v719 = vcvt.s32.f32 %v687
    %v720 = vcvt.s32.f32 %v688
    %v721 = vcvt.s32.f32 %v689
    %v722 = vcvt.s32.f32 %v690
    %v723 = vcvt.s32.f32 %v691
    %v724 = vcvt.s32.f32 %v692
    %v725 = vcvt.s32.f32 %v693
    %v726 = vcvt.s32.f32 %v694
    %v727 = vcvt.s32.f32 %v695
    %v728 = vcvt.s32.f32 %v696
    %v729 = vcvt.s32.f32 %v697
    %v730 = vcvt.s32.f32 %v698
    %v731 = vcvt.s32.f32 %v699
    %v732 = vcvt.s32.f32 %v700
    %v733 = vcvt.s32.f32 %v701
    %v734 = vcvt.s32.f32 %v702
    %v735 = vcvt.s32.f32 %v703
    %v736 = vcvt.s32.f32 %v704
    %v737 = vcvt.s32.f32 %v705
    %v738 = vcvt.s32.f32 %v706
    %v739 = vcvt.s32.f32 %v707
    %v740 = vcvt.s32.f32 %v708
    %v741 = vcvt.s32.f32 %v709
    %v742 = vcvt.s32.f32 %v710
    %743 = vmatpush.xpose.msra.mxu0 0.0
    %744 = vmatpush.xpose.msra.mxu0 0.0
    %745 = vmatpush.xpose.msra.mxu0 0.0
    %746 = vmatpush.xpose.msra.mxu0 0.0
    %747 = vmatpush.xpose.msra.mxu0 0.0
    %748 = vmatpush.xpose.msra.mxu0 0.0
    %749 = vmatpush.xpose.msra.mxu0 0.0
    %750 = vmatpush.xpose.msra.mxu0 0.0
    %751 = vmatpush.xpose.msra.mxu0 0.0
    %752 = vmatpush.xpose.msra.mxu0 0.0
    %753 = vmatpush.xpose.msra.mxu0 0.0
    %754 = vmatpush.xpose.msra.mxu0 0.0
    %755 = vmatpush.xpose.msra.mxu0 %v60
    %756 = vmatpush.xpose.msra.mxu0 %v58
    %757 = vmatpush.xpose.msra.mxu0 %v56
    %758 = vmatpush.xpose.msra.mxu0 %v54
    %759 = vmatmul.f32.gmra.mxu0 %v711
    %v760 = vpop.f32.mrf.mxu0
    %v761 = vadd.f32 0.0, %v760
    %762 = vmatmul.f32.gmra.mxu0 %v713
    %v763 = vpop.f32.mrf.mxu0
    %v764 = vadd.f32 0.0, %v763
    %765 = vmatmul.f32.gmra.mxu0 %v715
    %v766 = vpop.f32.mrf.mxu0
    %v767 = vadd.f32 0.0, %v766
    %768 = vmatmul.f32.gmra.mxu0 %v717
    %v769 = vpop.f32.mrf.mxu0
    %v770 = vadd.f32 0.0, %v769
    %771 = vmatmul.f32.gmra.mxu0 %v719
    %v772 = vpop.f32.mrf.mxu0
    %v773 = vadd.f32 0.0, %v772
    %774 = vmatmul.f32.gmra.mxu0 %v721
    %v775 = vpop.f32.mrf.mxu0
    %v776 = vadd.f32 0.0, %v775
    %777 = vmatmul.f32.gmra.mxu0 %v723
    %v778 = vpop.f32.mrf.mxu0
    %v779 = vadd.f32 0.0, %v778
    %780 = vmatmul.f32.gmra.mxu0 %v725
    %v781 = vpop.f32.mrf.mxu0
    %v782 = vadd.f32 0.0, %v781
    %783 = vmatmul.f32.gmra.mxu0 %v727
    %v784 = vpop.f32.mrf.mxu0
    %v785 = vadd.f32 0.0, %v784
    %786 = vmatmul.f32.gmra.mxu0 %v729
    %v787 = vpop.f32.mrf.mxu0
    %v788 = vadd.f32 0.0, %v787
    %789 = vmatmul.f32.gmra.mxu0 %v731
    %v790 = vpop.f32.mrf.mxu0
    %v791 = vadd.f32 0.0, %v790
    %792 = vmatmul.f32.gmra.mxu0 %v733
    %v793 = vpop.f32.mrf.mxu0
    %v794 = vadd.f32 0.0, %v793
    %795 = vmatmul.f32.gmra.mxu0 %v735
    %v796 = vpop.f32.mrf.mxu0
    %v797 = vadd.f32 0.0, %v796
    %798 = vmatmul.f32.gmra.mxu0 %v737
    %v799 = vpop.f32.mrf.mxu0
    %v800 = vadd.f32 0.0, %v799
    %801 = vmatmul.f32.gmra.mxu0 %v739
    %v802 = vpop.f32.mrf.mxu0
    %v803 = vadd.f32 0.0, %v802
    %804 = vmatmul.f32.gmra.mxu0 %v741
    %v805 = vpop.f32.mrf.mxu0
    %v806 = vadd.f32 0.0, %v805
    %807 = vdwg.mxu0
    %808 = vmatpush.xpose.msra.mxu0 0.0
    %809 = vmatpush.xpose.msra.mxu0 0.0
    %810 = vmatpush.xpose.msra.mxu0 0.0
    %811 = vmatpush.xpose.msra.mxu0 0.0
    %812 = vmatpush.xpose.msra.mxu0 0.0
    %813 = vmatpush.xpose.msra.mxu0 0.0
    %814 = vmatpush.xpose.msra.mxu0 0.0
    %815 = vmatpush.xpose.msra.mxu0 0.0
    %816 = vmatpush.xpose.msra.mxu0 0.0
    %817 = vmatpush.xpose.msra.mxu0 0.0
    %818 = vmatpush.xpose.msra.mxu0 0.0
    %819 = vmatpush.xpose.msra.mxu0 0.0
    %820 = vmatpush.xpose.msra.mxu0 %v61
    %821 = vmatpush.xpose.msra.mxu0 %v59
    %822 = vmatpush.xpose.msra.mxu0 %v57
    %823 = vmatpush.xpose.msra.mxu0 %v55
    %824 = vmatmul.f32.gmra.mxu0 %v712
    %v825 = vpop.f32.mrf.mxu0
    %v826 = vadd.f32 %v761, %v825
    %827 = vmatmul.f32.gmra.mxu0 %v714
    %v828 = vpop.f32.mrf.mxu0
    %v829 = vadd.f32 %v764, %v828
    %830 = vmatmul.f32.gmra.mxu0 %v716
    %v831 = vpop.f32.mrf.mxu0
    %v832 = vadd.f32 %v767, %v831
    %833 = vmatmul.f32.gmra.mxu0 %v718
    %v834 = vpop.f32.mrf.mxu0
    %v835 = vadd.f32 %v770, %v834
    %836 = vmatmul.f32.gmra.mxu0 %v720
    %v837 = vpop.f32.mrf.mxu0
    %v838 = vadd.f32 %v773, %v837
    %839 = vmatmul.f32.gmra.mxu0 %v722
    %v840 = vpop.f32.mrf.mxu0
    %v841 = vadd.f32 %v776, %v840
    %842 = vmatmul.f32.gmra.mxu0 %v724
    %v843 = vpop.f32.mrf.mxu0
    %v844 = vadd.f32 %v779, %v843
    %845 = vmatmul.f32.gmra.mxu0 %v726
    %v846 = vpop.f32.mrf.mxu0
    %v847 = vadd.f32 %v782, %v846
    %848 = vmatmul.f32.gmra.mxu0 %v728
    %v849 = vpop.f32.mrf.mxu0
    %v850 = vadd.f32 %v785, %v849
    %851 = vmatmul.f32.gmra.mxu0 %v730
    %v852 = vpop.f32.mrf.mxu0
    %v853 = vadd.f32 %v788, %v852
    %854 = vmatmul.f32.gmra.mxu0 %v732
    %v855 = vpop.f32.mrf.mxu0
    %v856 = vadd.f32 %v791, %v855
    %857 = vmatmul.f32.gmra.mxu0 %v734
    %v858 = vpop.f32.mrf.mxu0
    %v859 = vadd.f32 %v794, %v858
    %860 = vmatmul.f32.gmra.mxu0 %v736
    %v861 = vpop.f32.mrf.mxu0
    %v862 = vadd.f32 %v797, %v861
    %863 = vmatmul.f32.gmra.mxu0 %v738
    %v864 = vpop.f32.mrf.mxu0
    %v865 = vadd.f32 %v800, %v864
    %866 = vmatmul.f32.gmra.mxu0 %v740
    %v867 = vpop.f32.mrf.mxu0
    %v868 = vadd.f32 %v803, %v867
    %869 = vmatmul.f32.gmra.mxu0 %v742
    %v870 = vpop.f32.mrf.mxu0
    %v871 = vadd.f32 %v806, %v870
    %872 = vdwg.mxu0
    %v873 = vsub.f32 %v38, %v826
    %v874 = vsub.f32 %v39, %v829
    %v875 = vsub.f32 %v40, %v832
    %v876 = vsub.f32 %v41, %v835
    %v877 = vsub.f32 %v42, %v838
    %v878 = vsub.f32 %v43, %v841
    %v879 = vsub.f32 %v44, %v844
    %v880 = vsub.f32 %v45, %v847
    %v881 = vsub.f32 %v46, %v850
    %v882 = vsub.f32 %v47, %v853
    %v883 = vsub.f32 %v48, %v856
    %v884 = vsub.f32 %v49, %v859
    %v885 = vsub.f32 %v50, %v862
    %v886 = vsub.f32 %v51, %v865
    %v887 = vsub.f32 %v52, %v868
    %v888 = vsub.f32 %v53, %v871
    %v889 = vmul.f32 %v873, %v873
    %v890 = vmul.f32 %v874, %v874
    %v891 = vmul.f32 %v875, %v875
    %v892 = vmul.f32 %v876, %v876
    %v893 = vmul.f32 %v877, %v877
    %v894 = vmul.f32 %v878, %v878
    %v895 = vmul.f32 %v879, %v879
    %v896 = vmul.f32 %v880, %v880
    %v897 = vmul.f32 %v881, %v881
    %v898 = vmul.f32 %v882, %v882
    %v899 = vmul.f32 %v883, %v883
    %v900 = vmul.f32 %v884, %v884
    %v901 = vmul.f32 %v885, %v885
    %v902 = vmul.f32 %v886, %v886
    %v903 = vmul.f32 %v887, %v887
    %v904 = vmul.f32 %v888, %v888
    %v905 = vsel %vm63, %v889, 0.0
    %906 = vadd.xlane.f32.xlu0 %v905
    %v907 = vpop.xlane.xlu0 %906
    %v908 = vsel %vm63, %v890, 0.0
    %909 = vadd.xlane.f32.xlu0 %v908
    %v910 = vpop.xlane.xlu0 %909
    %v911 = vsel %vm63, %v891, 0.0
    %912 = vadd.xlane.f32.xlu0 %v911
    %v913 = vpop.xlane.xlu0 %912
    %v914 = vsel %vm63, %v892, 0.0
    %915 = vadd.xlane.f32.xlu0 %v914
    %v916 = vpop.xlane.xlu0 %915
    %v917 = vsel %vm63, %v893, 0.0
    %918 = vadd.xlane.f32.xlu0 %v917
    %v919 = vpop.xlane.xlu0 %918
    %v920 = vsel %vm63, %v894, 0.0
    %921 = vadd.xlane.f32.xlu0 %v920
    %v922 = vpop.xlane.xlu0 %921
    %v923 = vsel %vm63, %v895, 0.0
    %924 = vadd.xlane.f32.xlu0 %v923
    %v925 = vpop.xlane.xlu0 %924
    %v926 = vsel %vm63, %v896, 0.0
    %927 = vadd.xlane.f32.xlu0 %v926
    %v928 = vpop.xlane.xlu0 %927
    %v929 = vsel %vm63, %v897, 0.0
    %930 = vadd.xlane.f32.xlu0 %v929
    %v931 = vpop.xlane.xlu0 %930
    %v932 = vsel %vm63, %v898, 0.0
    %933 = vadd.xlane.f32.xlu0 %v932
    %v934 = vpop.xlane.xlu0 %933
    %v935 = vsel %vm63, %v899, 0.0
    %936 = vadd.xlane.f32.xlu0 %v935
    %v937 = vpop.xlane.xlu0 %936
    %v938 = vsel %vm63, %v900, 0.0
    %939 = vadd.xlane.f32.xlu0 %v938
    %v940 = vpop.xlane.xlu0 %939
    %v941 = vsel %vm63, %v901, 0.0
    %942 = vadd.xlane.f32.xlu0 %v941
    %v943 = vpop.xlane.xlu0 %942
    %v944 = vsel %vm63, %v902, 0.0
    %945 = vadd.xlane.f32.xlu0 %v944
    %v946 = vpop.xlane.xlu0 %945
    %v947 = vsel %vm63, %v903, 0.0
    %948 = vadd.xlane.f32.xlu0 %v947
    %v949 = vpop.xlane.xlu0 %948
    %v950 = vsel %vm63, %v904, 0.0
    %951 = vadd.xlane.f32.xlu0 %v950
    %v952 = vpop.xlane.xlu0 %951
    %v953 = vperm.slane %v406, %v36
    %v954 = vadd.s32 %v36, 4294967288
    %v955 = vperm.slane %v422, %v954
    %vm956 = vcmask 130112
    %v957 = vsel %vm956, %v955, %v953
    %v958 = vadd.s32 %v36, 4294967280
    %v959 = vperm.slane %v438, %v958
    %vm960 = vcmask 195712
    %v961 = vsel %vm960, %v959, %v957
    %v962 = vadd.s32 %v36, 4294967272
    %v963 = vperm.slane %v454, %v962
    %vm964 = vcmask 261312
    %v965 = vsel %vm964, %v963, %v961
    %v966 = vadd.s32 %v36, 4294967264
    %v967 = vperm.slane %v470, %v966
    %vm968 = vcmask 326912
    %v969 = vsel %vm968, %v967, %v965
    %v970 = vadd.s32 %v36, 4294967256
    %v971 = vperm.slane %v486, %v970
    %vm972 = vcmask 392512
    %v973 = vsel %vm972, %v971, %v969
    %v974 = vadd.s32 %v36, 4294967248
    %v975 = vperm.slane %v502, %v974
    %vm976 = vcmask 458112
    %v977 = vsel %vm976, %v975, %v973
    %v978 = vadd.s32 %v36, 4294967240
    %v979 = vperm.slane %v518, %v978
    %vm980 = vcmask 523712
    %v981 = vsel %vm980, %v979, %v977
    %v982 = vadd.s32 %v36, 4294967232
    %v983 = vperm.slane %v534, %v982
    %vm984 = vcmask 589312
    %v985 = vsel %vm984, %v983, %v981
    %v986 = vadd.s32 %v36, 4294967224
    %v987 = vperm.slane %v550, %v986
    %vm988 = vcmask 654912
    %v989 = vsel %vm988, %v987, %v985
    %v990 = vadd.s32 %v36, 4294967216
    %v991 = vperm.slane %v566, %v990
    %vm992 = vcmask 720512
    %v993 = vsel %vm992, %v991, %v989
    %v994 = vadd.s32 %v36, 4294967208
    %v995 = vperm.slane %v582, %v994
    %vm996 = vcmask 786112
    %v997 = vsel %vm996, %v995, %v993
    %v998 = vadd.s32 %v36, 4294967200
    %v999 = vperm.slane %v598, %v998
    %vm1000 = vcmask 851712
    %v1001 = vsel %vm1000, %v999, %v997
    %v1002 = vadd.s32 %v36, 4294967192
    %v1003 = vperm.slane %v614, %v1002
    %vm1004 = vcmask 917312
    %v1005 = vsel %vm1004, %v1003, %v1001
    %v1006 = vadd.s32 %v36, 4294967184
    %v1007 = vperm.slane %v630, %v1006
    %vm1008 = vcmask 982912
    %v1009 = vsel %vm1008, %v1007, %v1005
    %v1010 = vadd.s32 %v36, 4294967176
    %v1011 = vperm.slane %v646, %v1010
    %vm1012 = vcmask 1048512
    %v1013 = vsel %vm1012, %v1011, %v1009
    %1014 = vst [vmem:[#allocation5] sm:$0x1] %v1013
    %v1031 = vperm.slane %v907, %v36
    %v1032 = vperm.slane %v910, %v954
    %v1033 = vsel %vm956, %v1032, %v1031
    %v1034 = vperm.slane %v913, %v958
    %v1035 = vsel %vm960, %v1034, %v1033
    %v1036 = vperm.slane %v916, %v962
    %v1037 = vsel %vm964, %v1036, %v1035
    %v1038 = vperm.slane %v919, %v966
    %v1039 = vsel %vm968, %v1038, %v1037
    %v1040 = vperm.slane %v922, %v970
    %v1041 = vsel %vm972, %v1040, %v1039
    %v1042 = vperm.slane %v925, %v974
    %v1043 = vsel %vm976, %v1042, %v1041
    %v1044 = vperm.slane %v928, %v978
    %v1045 = vsel %vm980, %v1044, %v1043
    %v1046 = vperm.slane %v931, %v982
    %v1047 = vsel %vm984, %v1046, %v1045
    %v1048 = vperm.slane %v934, %v986
    %v1049 = vsel %vm988, %v1048, %v1047
    %v1050 = vperm.slane %v937, %v990
    %v1051 = vsel %vm992, %v1050, %v1049
    %v1052 = vperm.slane %v940, %v994
    %v1053 = vsel %vm996, %v1052, %v1051
    %v1054 = vperm.slane %v943, %v998
    %v1055 = vsel %vm1000, %v1054, %v1053
    %v1056 = vperm.slane %v946, %v1002
    %v1057 = vsel %vm1004, %v1056, %v1055
    %v1058 = vperm.slane %v949, %v1006
    %v1059 = vsel %vm1008, %v1058, %v1057
    %v1060 = vperm.slane %v952, %v1010
    %v1061 = vsel %vm1012, %v1060, %v1059
    %1063 = vst [vmem:[#allocation6] sm:$0x1] %v1061
    %s1064 = scalar_lea.vmem [#allocation2], 64
    %v1065 = vld [vmem:[%s1064] sm:$0xff]
    %v1066 = vld [vmem:[%s1064 + $0x8] sm:$0xff]
    %v1067 = vld [vmem:[%s1064 + $0x10] sm:$0xff]
    %v1068 = vld [vmem:[%s1064 + $0x18] sm:$0xff]
    %v1069 = vld [vmem:[%s1064 + $0x20] sm:$0xff]
    %v1070 = vld [vmem:[%s1064 + $0x28] sm:$0xff]
    %v1071 = vld [vmem:[%s1064 + $0x30] sm:$0xff]
    %v1072 = vld [vmem:[%s1064 + $0x38] sm:$0xff]
    %s1073 = scalar_lea.vmem %s2, 2
    %v1074 = vld [vmem:[%s1073] sm:$0x3]
    %v1076 = vsel %vm63, %v873, 0
    %v1079 = vsel %vm63, %v874, 0
    %v1082 = vsel %vm63, %v875, 0
    %v1085 = vsel %vm63, %v876, 0
    %v1088 = vsel %vm63, %v877, 0
    %v1091 = vsel %vm63, %v878, 0
    %v1094 = vsel %vm63, %v879, 0
    %v1097 = vsel %vm63, %v880, 0
    %v1100 = vsel %vm63, %v881, 0
    %v1103 = vsel %vm63, %v882, 0
    %v1106 = vsel %vm63, %v883, 0
    %v1109 = vsel %vm63, %v884, 0
    %v1112 = vsel %vm63, %v885, 0
    %v1115 = vsel %vm63, %v886, 0
    %v1118 = vsel %vm63, %v887, 0
    %v1121 = vsel %vm63, %v888, 0
    %1123 = vmatpush.msra.mxu0 0.0
    %1124 = vmatpush.msra.mxu0 0.0
    %1125 = vmatpush.msra.mxu0 0.0
    %1126 = vmatpush.msra.mxu0 0.0
    %1127 = vmatpush.msra.mxu0 0.0
    %1128 = vmatpush.msra.mxu0 0.0
    %1129 = vmatpush.msra.mxu0 0.0
    %1130 = vmatpush.msra.mxu0 0.0
    %1131 = vmatpush.msra.mxu0 0.0
    %1132 = vmatpush.msra.mxu0 0.0
    %1133 = vmatpush.msra.mxu0 0.0
    %1134 = vmatpush.msra.mxu0 0.0
    %1135 = vmatpush.msra.mxu0 %v1071
    %1136 = vmatpush.msra.mxu0 %v1069
    %1137 = vmatpush.msra.mxu0 %v1067
    %1138 = vmatpush.msra.mxu0 %v1065
    %1139 = vmatmul.f32.gmra.mxu0 %v1076
    %v1140 = vpop.f32.mrf.mxu0
    %v1141 = vadd.f32 0.0, %v1140
    %1142 = vmatmul.f32.gmra.mxu0 %v1079
    %v1143 = vpop.f32.mrf.mxu0
    %v1144 = vadd.f32 0.0, %v1143
    %1145 = vmatmul.f32.gmra.mxu0 %v1082
    %v1146 = vpop.f32.mrf.mxu0
    %v1147 = vadd.f32 0.0, %v1146
    %1148 = vmatmul.f32.gmra.mxu0 %v1085
    %v1149 = vpop.f32.mrf.mxu0
    %v1150 = vadd.f32 0.0, %v1149
    %1151 = vmatmul.f32.gmra.mxu0 %v1088
    %v1152 = vpop.f32.mrf.mxu0
    %v1153 = vadd.f32 0.0, %v1152
    %1154 = vmatmul.f32.gmra.mxu0 %v1091
    %v1155 = vpop.f32.mrf.mxu0
    %v1156 = vadd.f32 0.0, %v1155
    %1157 = vmatmul.f32.gmra.mxu0 %v1094
    %v1158 = vpop.f32.mrf.mxu0
    %v1159 = vadd.f32 0.0, %v1158
    %1160 = vmatmul.f32.gmra.mxu0 %v1097
    %v1161 = vpop.f32.mrf.mxu0
    %v1162 = vadd.f32 0.0, %v1161
    %1163 = vmatmul.f32.gmra.mxu0 %v1100
    %v1164 = vpop.f32.mrf.mxu0
    %v1165 = vadd.f32 0.0, %v1164
    %1166 = vmatmul.f32.gmra.mxu0 %v1103
    %v1167 = vpop.f32.mrf.mxu0
    %v1168 = vadd.f32 0.0, %v1167
    %1169 = vmatmul.f32.gmra.mxu0 %v1106
    %v1170 = vpop.f32.mrf.mxu0
    %v1171 = vadd.f32 0.0, %v1170
    %1172 = vmatmul.f32.gmra.mxu0 %v1109
    %v1173 = vpop.f32.mrf.mxu0
    %v1174 = vadd.f32 0.0, %v1173
    %1175 = vmatmul.f32.gmra.mxu0 %v1112
    %v1176 = vpop.f32.mrf.mxu0
    %v1177 = vadd.f32 0.0, %v1176
    %1178 = vmatmul.f32.gmra.mxu0 %v1115
    %v1179 = vpop.f32.mrf.mxu0
    %v1180 = vadd.f32 0.0, %v1179
    %1181 = vmatmul.f32.gmra.mxu0 %v1118
    %v1182 = vpop.f32.mrf.mxu0
    %v1183 = vadd.f32 0.0, %v1182
    %1184 = vmatmul.f32.gmra.mxu0 %v1121
    %v1185 = vpop.f32.mrf.mxu0
    %v1186 = vadd.f32 0.0, %v1185
    %1187 = vdwg.mxu0
    %1188 = vmatpush.msra.mxu0 0.0
    %1189 = vmatpush.msra.mxu0 0.0
    %1190 = vmatpush.msra.mxu0 0.0
    %1191 = vmatpush.msra.mxu0 0.0
    %1192 = vmatpush.msra.mxu0 0.0
    %1193 = vmatpush.msra.mxu0 0.0
    %1194 = vmatpush.msra.mxu0 0.0
    %1195 = vmatpush.msra.mxu0 0.0
    %1196 = vmatpush.msra.mxu0 0.0
    %1197 = vmatpush.msra.mxu0 0.0
    %1198 = vmatpush.msra.mxu0 0.0
    %1199 = vmatpush.msra.mxu0 0.0
    %1200 = vmatpush.msra.mxu0 %v1072
    %1201 = vmatpush.msra.mxu0 %v1070
    %1202 = vmatpush.msra.mxu0 %v1068
    %1203 = vmatpush.msra.mxu0 %v1066
    %1204 = vmatmul.f32.gmra.mxu0 %v1076
    %v1205 = vpop.f32.mrf.mxu0
    %v1206 = vadd.f32 0.0, %v1205
    %1207 = vmatmul.f32.gmra.mxu0 %v1079
    %v1208 = vpop.f32.mrf.mxu0
    %v1209 = vadd.f32 0.0, %v1208
    %1210 = vmatmul.f32.gmra.mxu0 %v1082
    %v1211 = vpop.f32.mrf.mxu0
    %v1212 = vadd.f32 0.0, %v1211
    %1213 = vmatmul.f32.gmra.mxu0 %v1085
    %v1214 = vpop.f32.mrf.mxu0
    %v1215 = vadd.f32 0.0, %v1214
    %1216 = vmatmul.f32.gmra.mxu0 %v1088
    %v1217 = vpop.f32.mrf.mxu0
    %v1218 = vadd.f32 0.0, %v1217
    %1219 = vmatmul.f32.gmra.mxu0 %v1091
    %v1220 = vpop.f32.mrf.mxu0
    %v1221 = vadd.f32 0.0, %v1220
    %1222 = vmatmul.f32.gmra.mxu0 %v1094
    %v1223 = vpop.f32.mrf.mxu0
    %v1224 = vadd.f32 0.0, %v1223
    %1225 = vmatmul.f32.gmra.mxu0 %v1097
    %v1226 = vpop.f32.mrf.mxu0
    %v1227 = vadd.f32 0.0, %v1226
    %1228 = vmatmul.f32.gmra.mxu0 %v1100
    %v1229 = vpop.f32.mrf.mxu0
    %v1230 = vadd.f32 0.0, %v1229
    %1231 = vmatmul.f32.gmra.mxu0 %v1103
    %v1232 = vpop.f32.mrf.mxu0
    %v1233 = vadd.f32 0.0, %v1232
    %1234 = vmatmul.f32.gmra.mxu0 %v1106
    %v1235 = vpop.f32.mrf.mxu0
    %v1236 = vadd.f32 0.0, %v1235
    %1237 = vmatmul.f32.gmra.mxu0 %v1109
    %v1238 = vpop.f32.mrf.mxu0
    %v1239 = vadd.f32 0.0, %v1238
    %1240 = vmatmul.f32.gmra.mxu0 %v1112
    %v1241 = vpop.f32.mrf.mxu0
    %v1242 = vadd.f32 0.0, %v1241
    %1243 = vmatmul.f32.gmra.mxu0 %v1115
    %v1244 = vpop.f32.mrf.mxu0
    %v1245 = vadd.f32 0.0, %v1244
    %1246 = vmatmul.f32.gmra.mxu0 %v1118
    %v1247 = vpop.f32.mrf.mxu0
    %v1248 = vadd.f32 0.0, %v1247
    %1249 = vmatmul.f32.gmra.mxu0 %v1121
    %v1250 = vpop.f32.mrf.mxu0
    %v1251 = vadd.f32 0.0, %v1250
    %1252 = vdwg.mxu0
    %v1254 = vperm.slane %v1074, 0
    %v1255 = vperm.slane %v1074, 1
    %v1258 = vsub.f32 %v1141, %v1254
    %v1259 = vsub.f32 %v1206, %v1255
    %v1260 = vsub.f32 %v1144, %v1254
    %v1261 = vsub.f32 %v1209, %v1255
    %v1262 = vsub.f32 %v1147, %v1254
    %v1263 = vsub.f32 %v1212, %v1255
    %v1264 = vsub.f32 %v1150, %v1254
    %v1265 = vsub.f32 %v1215, %v1255
    %v1266 = vsub.f32 %v1153, %v1254
    %v1267 = vsub.f32 %v1218, %v1255
    %v1268 = vsub.f32 %v1156, %v1254
    %v1269 = vsub.f32 %v1221, %v1255
    %v1270 = vsub.f32 %v1159, %v1254
    %v1271 = vsub.f32 %v1224, %v1255
    %v1272 = vsub.f32 %v1162, %v1254
    %v1273 = vsub.f32 %v1227, %v1255
    %v1274 = vsub.f32 %v1165, %v1254
    %v1275 = vsub.f32 %v1230, %v1255
    %v1276 = vsub.f32 %v1168, %v1254
    %v1277 = vsub.f32 %v1233, %v1255
    %v1278 = vsub.f32 %v1171, %v1254
    %v1279 = vsub.f32 %v1236, %v1255
    %v1280 = vsub.f32 %v1174, %v1254
    %v1281 = vsub.f32 %v1239, %v1255
    %v1282 = vsub.f32 %v1177, %v1254
    %v1283 = vsub.f32 %v1242, %v1255
    %v1284 = vsub.f32 %v1180, %v1254
    %v1285 = vsub.f32 %v1245, %v1255
    %v1286 = vsub.f32 %v1183, %v1254
    %v1287 = vsub.f32 %v1248, %v1255
    %v1288 = vsub.f32 %v1186, %v1254
    %v1289 = vsub.f32 %v1251, %v1255
    %v1290 = vmax.f32 %v1258, %v1259
    %1291 = vmax.xlane.f32.xlu0 %v1290
    %v1292 = vpop.xlane.xlu0 %1291
    %v1293 = vmax.f32 %v1260, %v1261
    %1294 = vmax.xlane.f32.xlu0 %v1293
    %v1295 = vpop.xlane.xlu0 %1294
    %v1296 = vmax.f32 %v1262, %v1263
    %1297 = vmax.xlane.f32.xlu0 %v1296
    %v1298 = vpop.xlane.xlu0 %1297
    %v1299 = vmax.f32 %v1264, %v1265
    %1300 = vmax.xlane.f32.xlu0 %v1299
    %v1301 = vpop.xlane.xlu0 %1300
    %v1302 = vmax.f32 %v1266, %v1267
    %1303 = vmax.xlane.f32.xlu0 %v1302
    %v1304 = vpop.xlane.xlu0 %1303
    %v1305 = vmax.f32 %v1268, %v1269
    %1306 = vmax.xlane.f32.xlu0 %v1305
    %v1307 = vpop.xlane.xlu0 %1306
    %v1308 = vmax.f32 %v1270, %v1271
    %1309 = vmax.xlane.f32.xlu0 %v1308
    %v1310 = vpop.xlane.xlu0 %1309
    %v1311 = vmax.f32 %v1272, %v1273
    %1312 = vmax.xlane.f32.xlu0 %v1311
    %v1313 = vpop.xlane.xlu0 %1312
    %v1314 = vmax.f32 %v1274, %v1275
    %1315 = vmax.xlane.f32.xlu0 %v1314
    %v1316 = vpop.xlane.xlu0 %1315
    %v1317 = vmax.f32 %v1276, %v1277
    %1318 = vmax.xlane.f32.xlu0 %v1317
    %v1319 = vpop.xlane.xlu0 %1318
    %v1320 = vmax.f32 %v1278, %v1279
    %1321 = vmax.xlane.f32.xlu0 %v1320
    %v1322 = vpop.xlane.xlu0 %1321
    %v1323 = vmax.f32 %v1280, %v1281
    %1324 = vmax.xlane.f32.xlu0 %v1323
    %v1325 = vpop.xlane.xlu0 %1324
    %v1326 = vmax.f32 %v1282, %v1283
    %1327 = vmax.xlane.f32.xlu0 %v1326
    %v1328 = vpop.xlane.xlu0 %1327
    %v1329 = vmax.f32 %v1284, %v1285
    %1330 = vmax.xlane.f32.xlu0 %v1329
    %v1331 = vpop.xlane.xlu0 %1330
    %v1332 = vmax.f32 %v1286, %v1287
    %1333 = vmax.xlane.f32.xlu0 %v1332
    %v1334 = vpop.xlane.xlu0 %1333
    %v1335 = vmax.f32 %v1288, %v1289
    %1336 = vmax.xlane.f32.xlu0 %v1335
    %v1337 = vpop.xlane.xlu0 %1336
    %vm1338 = vcmp.eq.f32.partialorder %v1258, %v1292
    %vm1339 = vcmp.eq.f32.partialorder %v1259, %v1292
    %vm1340 = vcmp.eq.f32.partialorder %v1260, %v1295
    %vm1341 = vcmp.eq.f32.partialorder %v1261, %v1295
    %vm1342 = vcmp.eq.f32.partialorder %v1262, %v1298
    %vm1343 = vcmp.eq.f32.partialorder %v1263, %v1298
    %vm1344 = vcmp.eq.f32.partialorder %v1264, %v1301
    %vm1345 = vcmp.eq.f32.partialorder %v1265, %v1301
    %vm1346 = vcmp.eq.f32.partialorder %v1266, %v1304
    %vm1347 = vcmp.eq.f32.partialorder %v1267, %v1304
    %vm1348 = vcmp.eq.f32.partialorder %v1268, %v1307
    %vm1349 = vcmp.eq.f32.partialorder %v1269, %v1307
    %vm1350 = vcmp.eq.f32.partialorder %v1270, %v1310
    %vm1351 = vcmp.eq.f32.partialorder %v1271, %v1310
    %vm1352 = vcmp.eq.f32.partialorder %v1272, %v1313
    %vm1353 = vcmp.eq.f32.partialorder %v1273, %v1313
    %vm1354 = vcmp.eq.f32.partialorder %v1274, %v1316
    %vm1355 = vcmp.eq.f32.partialorder %v1275, %v1316
    %vm1356 = vcmp.eq.f32.partialorder %v1276, %v1319
    %vm1357 = vcmp.eq.f32.partialorder %v1277, %v1319
    %vm1358 = vcmp.eq.f32.partialorder %v1278, %v1322
    %vm1359 = vcmp.eq.f32.partialorder %v1279, %v1322
    %vm1360 = vcmp.eq.f32.partialorder %v1280, %v1325
    %vm1361 = vcmp.eq.f32.partialorder %v1281, %v1325
    %vm1362 = vcmp.eq.f32.partialorder %v1282, %v1328
    %vm1363 = vcmp.eq.f32.partialorder %v1283, %v1328
    %vm1364 = vcmp.eq.f32.partialorder %v1284, %v1331
    %vm1365 = vcmp.eq.f32.partialorder %v1285, %v1331
    %vm1366 = vcmp.eq.f32.partialorder %v1286, %v1334
    %vm1367 = vcmp.eq.f32.partialorder %v1287, %v1334
    %vm1368 = vcmp.eq.f32.partialorder %v1288, %v1337
    %vm1369 = vcmp.eq.f32.partialorder %v1289, %v1337
    %v1370 = vsel %vm1338, %v36, 256
    %v1371 = vsel %vm1339, %v37, 256
    %v1372 = vsel %vm1340, %v36, 256
    %v1373 = vsel %vm1341, %v37, 256
    %v1374 = vsel %vm1342, %v36, 256
    %v1375 = vsel %vm1343, %v37, 256
    %v1376 = vsel %vm1344, %v36, 256
    %v1377 = vsel %vm1345, %v37, 256
    %v1378 = vsel %vm1346, %v36, 256
    %v1379 = vsel %vm1347, %v37, 256
    %v1380 = vsel %vm1348, %v36, 256
    %v1381 = vsel %vm1349, %v37, 256
    %v1382 = vsel %vm1350, %v36, 256
    %v1383 = vsel %vm1351, %v37, 256
    %v1384 = vsel %vm1352, %v36, 256
    %v1385 = vsel %vm1353, %v37, 256
    %v1386 = vsel %vm1354, %v36, 256
    %v1387 = vsel %vm1355, %v37, 256
    %v1388 = vsel %vm1356, %v36, 256
    %v1389 = vsel %vm1357, %v37, 256
    %v1390 = vsel %vm1358, %v36, 256
    %v1391 = vsel %vm1359, %v37, 256
    %v1392 = vsel %vm1360, %v36, 256
    %v1393 = vsel %vm1361, %v37, 256
    %v1394 = vsel %vm1362, %v36, 256
    %v1395 = vsel %vm1363, %v37, 256
    %v1396 = vsel %vm1364, %v36, 256
    %v1397 = vsel %vm1365, %v37, 256
    %v1398 = vsel %vm1366, %v36, 256
    %v1399 = vsel %vm1367, %v37, 256
    %v1400 = vsel %vm1368, %v36, 256
    %v1401 = vsel %vm1369, %v37, 256
    %vm1402 = vcmp.lt.s32.totalorder %v1370, %v1371
    %v1403 = vsel %vm1402, %v1370, %v1371
    %v1404 = vand.u32 %v1403, 65535
    %v1405 = vshra.s32 %v1403, 16
    %v1406 = vcvt.s32.f32 %v1404
    %v1407 = vcvt.s32.f32 %v1405
    %1408 = vmin.xlane.f32.xlu0 %v1407
    %v1409 = vpop.xlane.xlu0 %1408
    %vm1410 = vcmp.eq.f32.partialorder %v1407, %v1409
    %v1411 = vsel %vm1410, %v1406, inf
    %1412 = vmin.xlane.f32.xlu0 %v1411
    %v1413 = vpop.xlane.xlu0 %1412
    %v1414 = vcvt.f32.s32 %v1413
    %v1415 = vcvt.f32.s32 %v1409
    %v1416 = vshll.u32 %v1415, 16
    %v1417 = vadd.s32 %v1416, %v1414
    %vm1418 = vcmp.lt.s32.totalorder %v1372, %v1373
    %v1419 = vsel %vm1418, %v1372, %v1373
    %v1420 = vand.u32 %v1419, 65535
    %v1421 = vshra.s32 %v1419, 16
    %v1422 = vcvt.s32.f32 %v1420
    %v1423 = vcvt.s32.f32 %v1421
    %1424 = vmin.xlane.f32.xlu0 %v1423
    %v1425 = vpop.xlane.xlu0 %1424
    %vm1426 = vcmp.eq.f32.partialorder %v1423, %v1425
    %v1427 = vsel %vm1426, %v1422, inf
    %1428 = vmin.xlane.f32.xlu0 %v1427
    %v1429 = vpop.xlane.xlu0 %1428
    %v1430 = vcvt.f32.s32 %v1429
    %v1431 = vcvt.f32.s32 %v1425
    %v1432 = vshll.u32 %v1431, 16
    %v1433 = vadd.s32 %v1432, %v1430
    %vm1434 = vcmp.lt.s32.totalorder %v1374, %v1375
    %v1435 = vsel %vm1434, %v1374, %v1375
    %v1436 = vand.u32 %v1435, 65535
    %v1437 = vshra.s32 %v1435, 16
    %v1438 = vcvt.s32.f32 %v1436
    %v1439 = vcvt.s32.f32 %v1437
    %1440 = vmin.xlane.f32.xlu0 %v1439
    %v1441 = vpop.xlane.xlu0 %1440
    %vm1442 = vcmp.eq.f32.partialorder %v1439, %v1441
    %v1443 = vsel %vm1442, %v1438, inf
    %1444 = vmin.xlane.f32.xlu0 %v1443
    %v1445 = vpop.xlane.xlu0 %1444
    %v1446 = vcvt.f32.s32 %v1445
    %v1447 = vcvt.f32.s32 %v1441
    %v1448 = vshll.u32 %v1447, 16
    %v1449 = vadd.s32 %v1448, %v1446
    %vm1450 = vcmp.lt.s32.totalorder %v1376, %v1377
    %v1451 = vsel %vm1450, %v1376, %v1377
    %v1452 = vand.u32 %v1451, 65535
    %v1453 = vshra.s32 %v1451, 16
    %v1454 = vcvt.s32.f32 %v1452
    %v1455 = vcvt.s32.f32 %v1453
    %1456 = vmin.xlane.f32.xlu0 %v1455
    %v1457 = vpop.xlane.xlu0 %1456
    %vm1458 = vcmp.eq.f32.partialorder %v1455, %v1457
    %v1459 = vsel %vm1458, %v1454, inf
    %1460 = vmin.xlane.f32.xlu0 %v1459
    %v1461 = vpop.xlane.xlu0 %1460
    %v1462 = vcvt.f32.s32 %v1461
    %v1463 = vcvt.f32.s32 %v1457
    %v1464 = vshll.u32 %v1463, 16
    %v1465 = vadd.s32 %v1464, %v1462
    %vm1466 = vcmp.lt.s32.totalorder %v1378, %v1379
    %v1467 = vsel %vm1466, %v1378, %v1379
    %v1468 = vand.u32 %v1467, 65535
    %v1469 = vshra.s32 %v1467, 16
    %v1470 = vcvt.s32.f32 %v1468
    %v1471 = vcvt.s32.f32 %v1469
    %1472 = vmin.xlane.f32.xlu0 %v1471
    %v1473 = vpop.xlane.xlu0 %1472
    %vm1474 = vcmp.eq.f32.partialorder %v1471, %v1473
    %v1475 = vsel %vm1474, %v1470, inf
    %1476 = vmin.xlane.f32.xlu0 %v1475
    %v1477 = vpop.xlane.xlu0 %1476
    %v1478 = vcvt.f32.s32 %v1477
    %v1479 = vcvt.f32.s32 %v1473
    %v1480 = vshll.u32 %v1479, 16
    %v1481 = vadd.s32 %v1480, %v1478
    %vm1482 = vcmp.lt.s32.totalorder %v1380, %v1381
    %v1483 = vsel %vm1482, %v1380, %v1381
    %v1484 = vand.u32 %v1483, 65535
    %v1485 = vshra.s32 %v1483, 16
    %v1486 = vcvt.s32.f32 %v1484
    %v1487 = vcvt.s32.f32 %v1485
    %1488 = vmin.xlane.f32.xlu0 %v1487
    %v1489 = vpop.xlane.xlu0 %1488
    %vm1490 = vcmp.eq.f32.partialorder %v1487, %v1489
    %v1491 = vsel %vm1490, %v1486, inf
    %1492 = vmin.xlane.f32.xlu0 %v1491
    %v1493 = vpop.xlane.xlu0 %1492
    %v1494 = vcvt.f32.s32 %v1493
    %v1495 = vcvt.f32.s32 %v1489
    %v1496 = vshll.u32 %v1495, 16
    %v1497 = vadd.s32 %v1496, %v1494
    %vm1498 = vcmp.lt.s32.totalorder %v1382, %v1383
    %v1499 = vsel %vm1498, %v1382, %v1383
    %v1500 = vand.u32 %v1499, 65535
    %v1501 = vshra.s32 %v1499, 16
    %v1502 = vcvt.s32.f32 %v1500
    %v1503 = vcvt.s32.f32 %v1501
    %1504 = vmin.xlane.f32.xlu0 %v1503
    %v1505 = vpop.xlane.xlu0 %1504
    %vm1506 = vcmp.eq.f32.partialorder %v1503, %v1505
    %v1507 = vsel %vm1506, %v1502, inf
    %1508 = vmin.xlane.f32.xlu0 %v1507
    %v1509 = vpop.xlane.xlu0 %1508
    %v1510 = vcvt.f32.s32 %v1509
    %v1511 = vcvt.f32.s32 %v1505
    %v1512 = vshll.u32 %v1511, 16
    %v1513 = vadd.s32 %v1512, %v1510
    %vm1514 = vcmp.lt.s32.totalorder %v1384, %v1385
    %v1515 = vsel %vm1514, %v1384, %v1385
    %v1516 = vand.u32 %v1515, 65535
    %v1517 = vshra.s32 %v1515, 16
    %v1518 = vcvt.s32.f32 %v1516
    %v1519 = vcvt.s32.f32 %v1517
    %1520 = vmin.xlane.f32.xlu0 %v1519
    %v1521 = vpop.xlane.xlu0 %1520
    %vm1522 = vcmp.eq.f32.partialorder %v1519, %v1521
    %v1523 = vsel %vm1522, %v1518, inf
    %1524 = vmin.xlane.f32.xlu0 %v1523
    %v1525 = vpop.xlane.xlu0 %1524
    %v1526 = vcvt.f32.s32 %v1525
    %v1527 = vcvt.f32.s32 %v1521
    %v1528 = vshll.u32 %v1527, 16
    %v1529 = vadd.s32 %v1528, %v1526
    %vm1530 = vcmp.lt.s32.totalorder %v1386, %v1387
    %v1531 = vsel %vm1530, %v1386, %v1387
    %v1532 = vand.u32 %v1531, 65535
    %v1533 = vshra.s32 %v1531, 16
    %v1534 = vcvt.s32.f32 %v1532
    %v1535 = vcvt.s32.f32 %v1533
    %1536 = vmin.xlane.f32.xlu0 %v1535
    %v1537 = vpop.xlane.xlu0 %1536
    %vm1538 = vcmp.eq.f32.partialorder %v1535, %v1537
    %v1539 = vsel %vm1538, %v1534, inf
    %1540 = vmin.xlane.f32.xlu0 %v1539
    %v1541 = vpop.xlane.xlu0 %1540
    %v1542 = vcvt.f32.s32 %v1541
    %v1543 = vcvt.f32.s32 %v1537
    %v1544 = vshll.u32 %v1543, 16
    %v1545 = vadd.s32 %v1544, %v1542
    %vm1546 = vcmp.lt.s32.totalorder %v1388, %v1389
    %v1547 = vsel %vm1546, %v1388, %v1389
    %v1548 = vand.u32 %v1547, 65535
    %v1549 = vshra.s32 %v1547, 16
    %v1550 = vcvt.s32.f32 %v1548
    %v1551 = vcvt.s32.f32 %v1549
    %1552 = vmin.xlane.f32.xlu0 %v1551
    %v1553 = vpop.xlane.xlu0 %1552
    %vm1554 = vcmp.eq.f32.partialorder %v1551, %v1553
    %v1555 = vsel %vm1554, %v1550, inf
    %1556 = vmin.xlane.f32.xlu0 %v1555
    %v1557 = vpop.xlane.xlu0 %1556
    %v1558 = vcvt.f32.s32 %v1557
    %v1559 = vcvt.f32.s32 %v1553
    %v1560 = vshll.u32 %v1559, 16
    %v1561 = vadd.s32 %v1560, %v1558
    %vm1562 = vcmp.lt.s32.totalorder %v1390, %v1391
    %v1563 = vsel %vm1562, %v1390, %v1391
    %v1564 = vand.u32 %v1563, 65535
    %v1565 = vshra.s32 %v1563, 16
    %v1566 = vcvt.s32.f32 %v1564
    %v1567 = vcvt.s32.f32 %v1565
    %1568 = vmin.xlane.f32.xlu0 %v1567
    %v1569 = vpop.xlane.xlu0 %1568
    %vm1570 = vcmp.eq.f32.partialorder %v1567, %v1569
    %v1571 = vsel %vm1570, %v1566, inf
    %1572 = vmin.xlane.f32.xlu0 %v1571
    %v1573 = vpop.xlane.xlu0 %1572
    %v1574 = vcvt.f32.s32 %v1573
    %v1575 = vcvt.f32.s32 %v1569
    %v1576 = vshll.u32 %v1575, 16
    %v1577 = vadd.s32 %v1576, %v1574
    %vm1578 = vcmp.lt.s32.totalorder %v1392, %v1393
    %v1579 = vsel %vm1578, %v1392, %v1393
    %v1580 = vand.u32 %v1579, 65535
    %v1581 = vshra.s32 %v1579, 16
    %v1582 = vcvt.s32.f32 %v1580
    %v1583 = vcvt.s32.f32 %v1581
    %1584 = vmin.xlane.f32.xlu0 %v1583
    %v1585 = vpop.xlane.xlu0 %1584
    %vm1586 = vcmp.eq.f32.partialorder %v1583, %v1585
    %v1587 = vsel %vm1586, %v1582, inf
    %1588 = vmin.xlane.f32.xlu0 %v1587
    %v1589 = vpop.xlane.xlu0 %1588
    %v1590 = vcvt.f32.s32 %v1589
    %v1591 = vcvt.f32.s32 %v1585
    %v1592 = vshll.u32 %v1591, 16
    %v1593 = vadd.s32 %v1592, %v1590
    %vm1594 = vcmp.lt.s32.totalorder %v1394, %v1395
    %v1595 = vsel %vm1594, %v1394, %v1395
    %v1596 = vand.u32 %v1595, 65535
    %v1597 = vshra.s32 %v1595, 16
    %v1598 = vcvt.s32.f32 %v1596
    %v1599 = vcvt.s32.f32 %v1597
    %1600 = vmin.xlane.f32.xlu0 %v1599
    %v1601 = vpop.xlane.xlu0 %1600
    %vm1602 = vcmp.eq.f32.partialorder %v1599, %v1601
    %v1603 = vsel %vm1602, %v1598, inf
    %1604 = vmin.xlane.f32.xlu0 %v1603
    %v1605 = vpop.xlane.xlu0 %1604
    %v1606 = vcvt.f32.s32 %v1605
    %v1607 = vcvt.f32.s32 %v1601
    %v1608 = vshll.u32 %v1607, 16
    %v1609 = vadd.s32 %v1608, %v1606
    %vm1610 = vcmp.lt.s32.totalorder %v1396, %v1397
    %v1611 = vsel %vm1610, %v1396, %v1397
    %v1612 = vand.u32 %v1611, 65535
    %v1613 = vshra.s32 %v1611, 16
    %v1614 = vcvt.s32.f32 %v1612
    %v1615 = vcvt.s32.f32 %v1613
    %1616 = vmin.xlane.f32.xlu0 %v1615
    %v1617 = vpop.xlane.xlu0 %1616
    %vm1618 = vcmp.eq.f32.partialorder %v1615, %v1617
    %v1619 = vsel %vm1618, %v1614, inf
    %1620 = vmin.xlane.f32.xlu0 %v1619
    %v1621 = vpop.xlane.xlu0 %1620
    %v1622 = vcvt.f32.s32 %v1621
    %v1623 = vcvt.f32.s32 %v1617
    %v1624 = vshll.u32 %v1623, 16
    %v1625 = vadd.s32 %v1624, %v1622
    %vm1626 = vcmp.lt.s32.totalorder %v1398, %v1399
    %v1627 = vsel %vm1626, %v1398, %v1399
    %v1628 = vand.u32 %v1627, 65535
    %v1629 = vshra.s32 %v1627, 16
    %v1630 = vcvt.s32.f32 %v1628
    %v1631 = vcvt.s32.f32 %v1629
    %1632 = vmin.xlane.f32.xlu0 %v1631
    %v1633 = vpop.xlane.xlu0 %1632
    %vm1634 = vcmp.eq.f32.partialorder %v1631, %v1633
    %v1635 = vsel %vm1634, %v1630, inf
    %1636 = vmin.xlane.f32.xlu0 %v1635
    %v1637 = vpop.xlane.xlu0 %1636
    %v1638 = vcvt.f32.s32 %v1637
    %v1639 = vcvt.f32.s32 %v1633
    %v1640 = vshll.u32 %v1639, 16
    %v1641 = vadd.s32 %v1640, %v1638
    %vm1642 = vcmp.lt.s32.totalorder %v1400, %v1401
    %v1643 = vsel %vm1642, %v1400, %v1401
    %v1644 = vand.u32 %v1643, 65535
    %v1645 = vshra.s32 %v1643, 16
    %v1646 = vcvt.s32.f32 %v1644
    %v1647 = vcvt.s32.f32 %v1645
    %1648 = vmin.xlane.f32.xlu0 %v1647
    %v1649 = vpop.xlane.xlu0 %1648
    %vm1650 = vcmp.eq.f32.partialorder %v1647, %v1649
    %v1651 = vsel %vm1650, %v1646, inf
    %1652 = vmin.xlane.f32.xlu0 %v1651
    %v1653 = vpop.xlane.xlu0 %1652
    %v1654 = vcvt.f32.s32 %v1653
    %v1655 = vcvt.f32.s32 %v1649
    %v1656 = vshll.u32 %v1655, 16
    %v1657 = vadd.s32 %v1656, %v1654
    %vm1658 = vcmp.eq.s32.totalorder %v36, %v1417
    %vm1659 = vcmp.eq.s32.totalorder %v37, %v1417
    %vm1660 = vcmp.eq.s32.totalorder %v36, %v1433
    %vm1661 = vcmp.eq.s32.totalorder %v37, %v1433
    %vm1662 = vcmp.eq.s32.totalorder %v36, %v1449
    %vm1663 = vcmp.eq.s32.totalorder %v37, %v1449
    %vm1664 = vcmp.eq.s32.totalorder %v36, %v1465
    %vm1665 = vcmp.eq.s32.totalorder %v37, %v1465
    %vm1666 = vcmp.eq.s32.totalorder %v36, %v1481
    %vm1667 = vcmp.eq.s32.totalorder %v37, %v1481
    %vm1668 = vcmp.eq.s32.totalorder %v36, %v1497
    %vm1669 = vcmp.eq.s32.totalorder %v37, %v1497
    %vm1670 = vcmp.eq.s32.totalorder %v36, %v1513
    %vm1671 = vcmp.eq.s32.totalorder %v37, %v1513
    %vm1672 = vcmp.eq.s32.totalorder %v36, %v1529
    %vm1673 = vcmp.eq.s32.totalorder %v37, %v1529
    %vm1674 = vcmp.eq.s32.totalorder %v36, %v1545
    %vm1675 = vcmp.eq.s32.totalorder %v37, %v1545
    %vm1676 = vcmp.eq.s32.totalorder %v36, %v1561
    %vm1677 = vcmp.eq.s32.totalorder %v37, %v1561
    %vm1678 = vcmp.eq.s32.totalorder %v36, %v1577
    %vm1679 = vcmp.eq.s32.totalorder %v37, %v1577
    %vm1680 = vcmp.eq.s32.totalorder %v36, %v1593
    %vm1681 = vcmp.eq.s32.totalorder %v37, %v1593
    %vm1682 = vcmp.eq.s32.totalorder %v36, %v1609
    %vm1683 = vcmp.eq.s32.totalorder %v37, %v1609
    %vm1684 = vcmp.eq.s32.totalorder %v36, %v1625
    %vm1685 = vcmp.eq.s32.totalorder %v37, %v1625
    %vm1686 = vcmp.eq.s32.totalorder %v36, %v1641
    %vm1687 = vcmp.eq.s32.totalorder %v37, %v1641
    %vm1688 = vcmp.eq.s32.totalorder %v36, %v1657
    %vm1689 = vcmp.eq.s32.totalorder %v37, %v1657
    %v1690 = vsel %vm1658, 1, 0
    %v1691 = vsel %vm1659, 1, 0
    %v1692 = vsel %vm1660, 1, 0
    %v1693 = vsel %vm1661, 1, 0
    %v1694 = vsel %vm1662, 1, 0
    %v1695 = vsel %vm1663, 1, 0
    %v1696 = vsel %vm1664, 1, 0
    %v1697 = vsel %vm1665, 1, 0
    %v1698 = vsel %vm1666, 1, 0
    %v1699 = vsel %vm1667, 1, 0
    %v1700 = vsel %vm1668, 1, 0
    %v1701 = vsel %vm1669, 1, 0
    %v1702 = vsel %vm1670, 1, 0
    %v1703 = vsel %vm1671, 1, 0
    %v1704 = vsel %vm1672, 1, 0
    %v1705 = vsel %vm1673, 1, 0
    %v1706 = vsel %vm1674, 1, 0
    %v1707 = vsel %vm1675, 1, 0
    %v1708 = vsel %vm1676, 1, 0
    %v1709 = vsel %vm1677, 1, 0
    %v1710 = vsel %vm1678, 1, 0
    %v1711 = vsel %vm1679, 1, 0
    %v1712 = vsel %vm1680, 1, 0
    %v1713 = vsel %vm1681, 1, 0
    %v1714 = vsel %vm1682, 1, 0
    %v1715 = vsel %vm1683, 1, 0
    %v1716 = vsel %vm1684, 1, 0
    %v1717 = vsel %vm1685, 1, 0
    %v1718 = vsel %vm1686, 1, 0
    %v1719 = vsel %vm1687, 1, 0
    %v1720 = vsel %vm1688, 1, 0
    %v1721 = vsel %vm1689, 1, 0
    %v1722 = vcvt.s32.f32 %v1690
    %v1723 = vcvt.s32.f32 %v1691
    %v1724 = vcvt.s32.f32 %v1692
    %v1725 = vcvt.s32.f32 %v1693
    %v1726 = vcvt.s32.f32 %v1694
    %v1727 = vcvt.s32.f32 %v1695
    %v1728 = vcvt.s32.f32 %v1696
    %v1729 = vcvt.s32.f32 %v1697
    %v1730 = vcvt.s32.f32 %v1698
    %v1731 = vcvt.s32.f32 %v1699
    %v1732 = vcvt.s32.f32 %v1700
    %v1733 = vcvt.s32.f32 %v1701
    %v1734 = vcvt.s32.f32 %v1702
    %v1735 = vcvt.s32.f32 %v1703
    %v1736 = vcvt.s32.f32 %v1704
    %v1737 = vcvt.s32.f32 %v1705
    %v1738 = vcvt.s32.f32 %v1706
    %v1739 = vcvt.s32.f32 %v1707
    %v1740 = vcvt.s32.f32 %v1708
    %v1741 = vcvt.s32.f32 %v1709
    %v1742 = vcvt.s32.f32 %v1710
    %v1743 = vcvt.s32.f32 %v1711
    %v1744 = vcvt.s32.f32 %v1712
    %v1745 = vcvt.s32.f32 %v1713
    %v1746 = vcvt.s32.f32 %v1714
    %v1747 = vcvt.s32.f32 %v1715
    %v1748 = vcvt.s32.f32 %v1716
    %v1749 = vcvt.s32.f32 %v1717
    %v1750 = vcvt.s32.f32 %v1718
    %v1751 = vcvt.s32.f32 %v1719
    %v1752 = vcvt.s32.f32 %v1720
    %v1753 = vcvt.s32.f32 %v1721
    %1754 = vmatpush.xpose.msra.mxu0 0.0
    %1755 = vmatpush.xpose.msra.mxu0 0.0
    %1756 = vmatpush.xpose.msra.mxu0 0.0
    %1757 = vmatpush.xpose.msra.mxu0 0.0
    %1758 = vmatpush.xpose.msra.mxu0 0.0
    %1759 = vmatpush.xpose.msra.mxu0 0.0
    %1760 = vmatpush.xpose.msra.mxu0 0.0
    %1761 = vmatpush.xpose.msra.mxu0 0.0
    %1762 = vmatpush.xpose.msra.mxu0 0.0
    %1763 = vmatpush.xpose.msra.mxu0 0.0
    %1764 = vmatpush.xpose.msra.mxu0 0.0
    %1765 = vmatpush.xpose.msra.mxu0 0.0
    %1766 = vmatpush.xpose.msra.mxu0 %v1071
    %1767 = vmatpush.xpose.msra.mxu0 %v1069
    %1768 = vmatpush.xpose.msra.mxu0 %v1067
    %1769 = vmatpush.xpose.msra.mxu0 %v1065
    %1770 = vmatmul.f32.gmra.mxu0 %v1722
    %v1771 = vpop.f32.mrf.mxu0
    %v1772 = vadd.f32 0.0, %v1771
    %1773 = vmatmul.f32.gmra.mxu0 %v1724
    %v1774 = vpop.f32.mrf.mxu0
    %v1775 = vadd.f32 0.0, %v1774
    %1776 = vmatmul.f32.gmra.mxu0 %v1726
    %v1777 = vpop.f32.mrf.mxu0
    %v1778 = vadd.f32 0.0, %v1777
    %1779 = vmatmul.f32.gmra.mxu0 %v1728
    %v1780 = vpop.f32.mrf.mxu0
    %v1781 = vadd.f32 0.0, %v1780
    %1782 = vmatmul.f32.gmra.mxu0 %v1730
    %v1783 = vpop.f32.mrf.mxu0
    %v1784 = vadd.f32 0.0, %v1783
    %1785 = vmatmul.f32.gmra.mxu0 %v1732
    %v1786 = vpop.f32.mrf.mxu0
    %v1787 = vadd.f32 0.0, %v1786
    %1788 = vmatmul.f32.gmra.mxu0 %v1734
    %v1789 = vpop.f32.mrf.mxu0
    %v1790 = vadd.f32 0.0, %v1789
    %1791 = vmatmul.f32.gmra.mxu0 %v1736
    %v1792 = vpop.f32.mrf.mxu0
    %v1793 = vadd.f32 0.0, %v1792
    %1794 = vmatmul.f32.gmra.mxu0 %v1738
    %v1795 = vpop.f32.mrf.mxu0
    %v1796 = vadd.f32 0.0, %v1795
    %1797 = vmatmul.f32.gmra.mxu0 %v1740
    %v1798 = vpop.f32.mrf.mxu0
    %v1799 = vadd.f32 0.0, %v1798
    %1800 = vmatmul.f32.gmra.mxu0 %v1742
    %v1801 = vpop.f32.mrf.mxu0
    %v1802 = vadd.f32 0.0, %v1801
    %1803 = vmatmul.f32.gmra.mxu0 %v1744
    %v1804 = vpop.f32.mrf.mxu0
    %v1805 = vadd.f32 0.0, %v1804
    %1806 = vmatmul.f32.gmra.mxu0 %v1746
    %v1807 = vpop.f32.mrf.mxu0
    %v1808 = vadd.f32 0.0, %v1807
    %1809 = vmatmul.f32.gmra.mxu0 %v1748
    %v1810 = vpop.f32.mrf.mxu0
    %v1811 = vadd.f32 0.0, %v1810
    %1812 = vmatmul.f32.gmra.mxu0 %v1750
    %v1813 = vpop.f32.mrf.mxu0
    %v1814 = vadd.f32 0.0, %v1813
    %1815 = vmatmul.f32.gmra.mxu0 %v1752
    %v1816 = vpop.f32.mrf.mxu0
    %v1817 = vadd.f32 0.0, %v1816
    %1818 = vdwg.mxu0
    %1819 = vmatpush.xpose.msra.mxu0 0.0
    %1820 = vmatpush.xpose.msra.mxu0 0.0
    %1821 = vmatpush.xpose.msra.mxu0 0.0
    %1822 = vmatpush.xpose.msra.mxu0 0.0
    %1823 = vmatpush.xpose.msra.mxu0 0.0
    %1824 = vmatpush.xpose.msra.mxu0 0.0
    %1825 = vmatpush.xpose.msra.mxu0 0.0
    %1826 = vmatpush.xpose.msra.mxu0 0.0
    %1827 = vmatpush.xpose.msra.mxu0 0.0
    %1828 = vmatpush.xpose.msra.mxu0 0.0
    %1829 = vmatpush.xpose.msra.mxu0 0.0
    %1830 = vmatpush.xpose.msra.mxu0 0.0
    %1831 = vmatpush.xpose.msra.mxu0 %v1072
    %1832 = vmatpush.xpose.msra.mxu0 %v1070
    %1833 = vmatpush.xpose.msra.mxu0 %v1068
    %1834 = vmatpush.xpose.msra.mxu0 %v1066
    %1835 = vmatmul.f32.gmra.mxu0 %v1723
    %v1836 = vpop.f32.mrf.mxu0
    %v1837 = vadd.f32 %v1772, %v1836
    %1838 = vmatmul.f32.gmra.mxu0 %v1725
    %v1839 = vpop.f32.mrf.mxu0
    %v1840 = vadd.f32 %v1775, %v1839
    %1841 = vmatmul.f32.gmra.mxu0 %v1727
    %v1842 = vpop.f32.mrf.mxu0
    %v1843 = vadd.f32 %v1778, %v1842
    %1844 = vmatmul.f32.gmra.mxu0 %v1729
    %v1845 = vpop.f32.mrf.mxu0
    %v1846 = vadd.f32 %v1781, %v1845
    %1847 = vmatmul.f32.gmra.mxu0 %v1731
    %v1848 = vpop.f32.mrf.mxu0
    %v1849 = vadd.f32 %v1784, %v1848
    %1850 = vmatmul.f32.gmra.mxu0 %v1733
    %v1851 = vpop.f32.mrf.mxu0
    %v1852 = vadd.f32 %v1787, %v1851
    %1853 = vmatmul.f32.gmra.mxu0 %v1735
    %v1854 = vpop.f32.mrf.mxu0
    %v1855 = vadd.f32 %v1790, %v1854
    %1856 = vmatmul.f32.gmra.mxu0 %v1737
    %v1857 = vpop.f32.mrf.mxu0
    %v1858 = vadd.f32 %v1793, %v1857
    %1859 = vmatmul.f32.gmra.mxu0 %v1739
    %v1860 = vpop.f32.mrf.mxu0
    %v1861 = vadd.f32 %v1796, %v1860
    %1862 = vmatmul.f32.gmra.mxu0 %v1741
    %v1863 = vpop.f32.mrf.mxu0
    %v1864 = vadd.f32 %v1799, %v1863
    %1865 = vmatmul.f32.gmra.mxu0 %v1743
    %v1866 = vpop.f32.mrf.mxu0
    %v1867 = vadd.f32 %v1802, %v1866
    %1868 = vmatmul.f32.gmra.mxu0 %v1745
    %v1869 = vpop.f32.mrf.mxu0
    %v1870 = vadd.f32 %v1805, %v1869
    %1871 = vmatmul.f32.gmra.mxu0 %v1747
    %v1872 = vpop.f32.mrf.mxu0
    %v1873 = vadd.f32 %v1808, %v1872
    %1874 = vmatmul.f32.gmra.mxu0 %v1749
    %v1875 = vpop.f32.mrf.mxu0
    %v1876 = vadd.f32 %v1811, %v1875
    %1877 = vmatmul.f32.gmra.mxu0 %v1751
    %v1878 = vpop.f32.mrf.mxu0
    %v1879 = vadd.f32 %v1814, %v1878
    %1880 = vmatmul.f32.gmra.mxu0 %v1753
    %v1881 = vpop.f32.mrf.mxu0
    %v1882 = vadd.f32 %v1817, %v1881
    %1883 = vdwg.mxu0
    %v1884 = vsub.f32 %v873, %v1837
    %v1885 = vsub.f32 %v874, %v1840
    %v1886 = vsub.f32 %v875, %v1843
    %v1887 = vsub.f32 %v876, %v1846
    %v1888 = vsub.f32 %v877, %v1849
    %v1889 = vsub.f32 %v878, %v1852
    %v1890 = vsub.f32 %v879, %v1855
    %v1891 = vsub.f32 %v880, %v1858
    %v1892 = vsub.f32 %v881, %v1861
    %v1893 = vsub.f32 %v882, %v1864
    %v1894 = vsub.f32 %v883, %v1867
    %v1895 = vsub.f32 %v884, %v1870
    %v1896 = vsub.f32 %v885, %v1873
    %v1897 = vsub.f32 %v886, %v1876
    %v1898 = vsub.f32 %v887, %v1879
    %v1899 = vsub.f32 %v888, %v1882
    %v1900 = vmul.f32 %v1884, %v1884
    %v1901 = vmul.f32 %v1885, %v1885
    %v1902 = vmul.f32 %v1886, %v1886
    %v1903 = vmul.f32 %v1887, %v1887
    %v1904 = vmul.f32 %v1888, %v1888
    %v1905 = vmul.f32 %v1889, %v1889
    %v1906 = vmul.f32 %v1890, %v1890
    %v1907 = vmul.f32 %v1891, %v1891
    %v1908 = vmul.f32 %v1892, %v1892
    %v1909 = vmul.f32 %v1893, %v1893
    %v1910 = vmul.f32 %v1894, %v1894
    %v1911 = vmul.f32 %v1895, %v1895
    %v1912 = vmul.f32 %v1896, %v1896
    %v1913 = vmul.f32 %v1897, %v1897
    %v1914 = vmul.f32 %v1898, %v1898
    %v1915 = vmul.f32 %v1899, %v1899
    %v1916 = vsel %vm63, %v1900, 0.0
    %1917 = vadd.xlane.f32.xlu0 %v1916
    %v1918 = vpop.xlane.xlu0 %1917
    %v1919 = vsel %vm63, %v1901, 0.0
    %1920 = vadd.xlane.f32.xlu0 %v1919
    %v1921 = vpop.xlane.xlu0 %1920
    %v1922 = vsel %vm63, %v1902, 0.0
    %1923 = vadd.xlane.f32.xlu0 %v1922
    %v1924 = vpop.xlane.xlu0 %1923
    %v1925 = vsel %vm63, %v1903, 0.0
    %1926 = vadd.xlane.f32.xlu0 %v1925
    %v1927 = vpop.xlane.xlu0 %1926
    %v1928 = vsel %vm63, %v1904, 0.0
    %1929 = vadd.xlane.f32.xlu0 %v1928
    %v1930 = vpop.xlane.xlu0 %1929
    %v1931 = vsel %vm63, %v1905, 0.0
    %1932 = vadd.xlane.f32.xlu0 %v1931
    %v1933 = vpop.xlane.xlu0 %1932
    %v1934 = vsel %vm63, %v1906, 0.0
    %1935 = vadd.xlane.f32.xlu0 %v1934
    %v1936 = vpop.xlane.xlu0 %1935
    %v1937 = vsel %vm63, %v1907, 0.0
    %1938 = vadd.xlane.f32.xlu0 %v1937
    %v1939 = vpop.xlane.xlu0 %1938
    %v1940 = vsel %vm63, %v1908, 0.0
    %1941 = vadd.xlane.f32.xlu0 %v1940
    %v1942 = vpop.xlane.xlu0 %1941
    %v1943 = vsel %vm63, %v1909, 0.0
    %1944 = vadd.xlane.f32.xlu0 %v1943
    %v1945 = vpop.xlane.xlu0 %1944
    %v1946 = vsel %vm63, %v1910, 0.0
    %1947 = vadd.xlane.f32.xlu0 %v1946
    %v1948 = vpop.xlane.xlu0 %1947
    %v1949 = vsel %vm63, %v1911, 0.0
    %1950 = vadd.xlane.f32.xlu0 %v1949
    %v1951 = vpop.xlane.xlu0 %1950
    %v1952 = vsel %vm63, %v1912, 0.0
    %1953 = vadd.xlane.f32.xlu0 %v1952
    %v1954 = vpop.xlane.xlu0 %1953
    %v1955 = vsel %vm63, %v1913, 0.0
    %1956 = vadd.xlane.f32.xlu0 %v1955
    %v1957 = vpop.xlane.xlu0 %1956
    %v1958 = vsel %vm63, %v1914, 0.0
    %1959 = vadd.xlane.f32.xlu0 %v1958
    %v1960 = vpop.xlane.xlu0 %1959
    %v1961 = vsel %vm63, %v1915, 0.0
    %1962 = vadd.xlane.f32.xlu0 %v1961
    %v1963 = vpop.xlane.xlu0 %1962
    %v1964 = vperm.slane %v1417, %v36
    %v1965 = vperm.slane %v1433, %v954
    %v1966 = vsel %vm956, %v1965, %v1964
    %v1967 = vperm.slane %v1449, %v958
    %v1968 = vsel %vm960, %v1967, %v1966
    %v1969 = vperm.slane %v1465, %v962
    %v1970 = vsel %vm964, %v1969, %v1968
    %v1971 = vperm.slane %v1481, %v966
    %v1972 = vsel %vm968, %v1971, %v1970
    %v1973 = vperm.slane %v1497, %v970
    %v1974 = vsel %vm972, %v1973, %v1972
    %v1975 = vperm.slane %v1513, %v974
    %v1976 = vsel %vm976, %v1975, %v1974
    %v1977 = vperm.slane %v1529, %v978
    %v1978 = vsel %vm980, %v1977, %v1976
    %v1979 = vperm.slane %v1545, %v982
    %v1980 = vsel %vm984, %v1979, %v1978
    %v1981 = vperm.slane %v1561, %v986
    %v1982 = vsel %vm988, %v1981, %v1980
    %v1983 = vperm.slane %v1577, %v990
    %v1984 = vsel %vm992, %v1983, %v1982
    %v1985 = vperm.slane %v1593, %v994
    %v1986 = vsel %vm996, %v1985, %v1984
    %v1987 = vperm.slane %v1609, %v998
    %v1988 = vsel %vm1000, %v1987, %v1986
    %v1989 = vperm.slane %v1625, %v1002
    %v1990 = vsel %vm1004, %v1989, %v1988
    %v1991 = vperm.slane %v1641, %v1006
    %v1992 = vsel %vm1008, %v1991, %v1990
    %v1993 = vperm.slane %v1657, %v1010
    %v1994 = vsel %vm1012, %v1993, %v1992
    %1995 = vst [vmem:[#allocation5 + $0x1] sm:$0x1] %v1994
    %v2012 = vperm.slane %v1918, %v36
    %v2013 = vperm.slane %v1921, %v954
    %v2014 = vsel %vm956, %v2013, %v2012
    %v2015 = vperm.slane %v1924, %v958
    %v2016 = vsel %vm960, %v2015, %v2014
    %v2017 = vperm.slane %v1927, %v962
    %v2018 = vsel %vm964, %v2017, %v2016
    %v2019 = vperm.slane %v1930, %v966
    %v2020 = vsel %vm968, %v2019, %v2018
    %v2021 = vperm.slane %v1933, %v970
    %v2022 = vsel %vm972, %v2021, %v2020
    %v2023 = vperm.slane %v1936, %v974
    %v2024 = vsel %vm976, %v2023, %v2022
    %v2025 = vperm.slane %v1939, %v978
    %v2026 = vsel %vm980, %v2025, %v2024
    %v2027 = vperm.slane %v1942, %v982
    %v2028 = vsel %vm984, %v2027, %v2026
    %v2029 = vperm.slane %v1945, %v986
    %v2030 = vsel %vm988, %v2029, %v2028
    %v2031 = vperm.slane %v1948, %v990
    %v2032 = vsel %vm992, %v2031, %v2030
    %v2033 = vperm.slane %v1951, %v994
    %v2034 = vsel %vm996, %v2033, %v2032
    %v2035 = vperm.slane %v1954, %v998
    %v2036 = vsel %vm1000, %v2035, %v2034
    %v2037 = vperm.slane %v1957, %v1002
    %v2038 = vsel %vm1004, %v2037, %v2036
    %v2039 = vperm.slane %v1960, %v1006
    %v2040 = vsel %vm1008, %v2039, %v2038
    %v2041 = vperm.slane %v1963, %v1010
    %v2042 = vsel %vm1012, %v2041, %v2040
    %2044 = vst [vmem:[#allocation6 + $0x1] sm:$0x1] %v2042
    %s2045 = scalar_lea.vmem [#allocation2], 128
    %v2046 = vld [vmem:[%s2045] sm:$0xff]
    %v2047 = vld [vmem:[%s2045 + $0x8] sm:$0xff]
    %v2048 = vld [vmem:[%s2045 + $0x10] sm:$0xff]
    %v2049 = vld [vmem:[%s2045 + $0x18] sm:$0xff]
    %v2050 = vld [vmem:[%s2045 + $0x20] sm:$0xff]
    %v2051 = vld [vmem:[%s2045 + $0x28] sm:$0xff]
    %v2052 = vld [vmem:[%s2045 + $0x30] sm:$0xff]
    %v2053 = vld [vmem:[%s2045 + $0x38] sm:$0xff]
    %s2054 = scalar_lea.vmem %s2, 4
    %v2055 = vld [vmem:[%s2054] sm:$0x3]
    %v2057 = vsel %vm63, %v1884, 0
    %v2060 = vsel %vm63, %v1885, 0
    %v2063 = vsel %vm63, %v1886, 0
    %v2066 = vsel %vm63, %v1887, 0
    %v2069 = vsel %vm63, %v1888, 0
    %v2072 = vsel %vm63, %v1889, 0
    %v2075 = vsel %vm63, %v1890, 0
    %v2078 = vsel %vm63, %v1891, 0
    %v2081 = vsel %vm63, %v1892, 0
    %v2084 = vsel %vm63, %v1893, 0
    %v2087 = vsel %vm63, %v1894, 0
    %v2090 = vsel %vm63, %v1895, 0
    %v2093 = vsel %vm63, %v1896, 0
    %v2096 = vsel %vm63, %v1897, 0
    %v2099 = vsel %vm63, %v1898, 0
    %v2102 = vsel %vm63, %v1899, 0
    %2104 = vmatpush.msra.mxu0 0.0
    %2105 = vmatpush.msra.mxu0 0.0
    %2106 = vmatpush.msra.mxu0 0.0
    %2107 = vmatpush.msra.mxu0 0.0
    %2108 = vmatpush.msra.mxu0 0.0
    %2109 = vmatpush.msra.mxu0 0.0
    %2110 = vmatpush.msra.mxu0 0.0
    %2111 = vmatpush.msra.mxu0 0.0
    %2112 = vmatpush.msra.mxu0 0.0
    %2113 = vmatpush.msra.mxu0 0.0
    %2114 = vmatpush.msra.mxu0 0.0
    %2115 = vmatpush.msra.mxu0 0.0
    %2116 = vmatpush.msra.mxu0 %v2052
    %2117 = vmatpush.msra.mxu0 %v2050
    %2118 = vmatpush.msra.mxu0 %v2048
    %2119 = vmatpush.msra.mxu0 %v2046
    %2120 = vmatmul.f32.gmra.mxu0 %v2057
    %v2121 = vpop.f32.mrf.mxu0
    %v2122 = vadd.f32 0.0, %v2121
    %2123 = vmatmul.f32.gmra.mxu0 %v2060
    %v2124 = vpop.f32.mrf.mxu0
    %v2125 = vadd.f32 0.0, %v2124
    %2126 = vmatmul.f32.gmra.mxu0 %v2063
    %v2127 = vpop.f32.mrf.mxu0
    %v2128 = vadd.f32 0.0, %v2127
    %2129 = vmatmul.f32.gmra.mxu0 %v2066
    %v2130 = vpop.f32.mrf.mxu0
    %v2131 = vadd.f32 0.0, %v2130
    %2132 = vmatmul.f32.gmra.mxu0 %v2069
    %v2133 = vpop.f32.mrf.mxu0
    %v2134 = vadd.f32 0.0, %v2133
    %2135 = vmatmul.f32.gmra.mxu0 %v2072
    %v2136 = vpop.f32.mrf.mxu0
    %v2137 = vadd.f32 0.0, %v2136
    %2138 = vmatmul.f32.gmra.mxu0 %v2075
    %v2139 = vpop.f32.mrf.mxu0
    %v2140 = vadd.f32 0.0, %v2139
    %2141 = vmatmul.f32.gmra.mxu0 %v2078
    %v2142 = vpop.f32.mrf.mxu0
    %v2143 = vadd.f32 0.0, %v2142
    %2144 = vmatmul.f32.gmra.mxu0 %v2081
    %v2145 = vpop.f32.mrf.mxu0
    %v2146 = vadd.f32 0.0, %v2145
    %2147 = vmatmul.f32.gmra.mxu0 %v2084
    %v2148 = vpop.f32.mrf.mxu0
    %v2149 = vadd.f32 0.0, %v2148
    %2150 = vmatmul.f32.gmra.mxu0 %v2087
    %v2151 = vpop.f32.mrf.mxu0
    %v2152 = vadd.f32 0.0, %v2151
    %2153 = vmatmul.f32.gmra.mxu0 %v2090
    %v2154 = vpop.f32.mrf.mxu0
    %v2155 = vadd.f32 0.0, %v2154
    %2156 = vmatmul.f32.gmra.mxu0 %v2093
    %v2157 = vpop.f32.mrf.mxu0
    %v2158 = vadd.f32 0.0, %v2157
    %2159 = vmatmul.f32.gmra.mxu0 %v2096
    %v2160 = vpop.f32.mrf.mxu0
    %v2161 = vadd.f32 0.0, %v2160
    %2162 = vmatmul.f32.gmra.mxu0 %v2099
    %v2163 = vpop.f32.mrf.mxu0
    %v2164 = vadd.f32 0.0, %v2163
    %2165 = vmatmul.f32.gmra.mxu0 %v2102
    %v2166 = vpop.f32.mrf.mxu0
    %v2167 = vadd.f32 0.0, %v2166
    %2168 = vdwg.mxu0
    %2169 = vmatpush.msra.mxu0 0.0
    %2170 = vmatpush.msra.mxu0 0.0
    %2171 = vmatpush.msra.mxu0 0.0
    %2172 = vmatpush.msra.mxu0 0.0
    %2173 = vmatpush.msra.mxu0 0.0
    %2174 = vmatpush.msra.mxu0 0.0
    %2175 = vmatpush.msra.mxu0 0.0
    %2176 = vmatpush.msra.mxu0 0.0
    %2177 = vmatpush.msra.mxu0 0.0
    %2178 = vmatpush.msra.mxu0 0.0
    %2179 = vmatpush.msra.mxu0 0.0
    %2180 = vmatpush.msra.mxu0 0.0
    %2181 = vmatpush.msra.mxu0 %v2053
    %2182 = vmatpush.msra.mxu0 %v2051
    %2183 = vmatpush.msra.mxu0 %v2049
    %2184 = vmatpush.msra.mxu0 %v2047
    %2185 = vmatmul.f32.gmra.mxu0 %v2057
    %v2186 = vpop.f32.mrf.mxu0
    %v2187 = vadd.f32 0.0, %v2186
    %2188 = vmatmul.f32.gmra.mxu0 %v2060
    %v2189 = vpop.f32.mrf.mxu0
    %v2190 = vadd.f32 0.0, %v2189
    %2191 = vmatmul.f32.gmra.mxu0 %v2063
    %v2192 = vpop.f32.mrf.mxu0
    %v2193 = vadd.f32 0.0, %v2192
    %2194 = vmatmul.f32.gmra.mxu0 %v2066
    %v2195 = vpop.f32.mrf.mxu0
    %v2196 = vadd.f32 0.0, %v2195
    %2197 = vmatmul.f32.gmra.mxu0 %v2069
    %v2198 = vpop.f32.mrf.mxu0
    %v2199 = vadd.f32 0.0, %v2198
    %2200 = vmatmul.f32.gmra.mxu0 %v2072
    %v2201 = vpop.f32.mrf.mxu0
    %v2202 = vadd.f32 0.0, %v2201
    %2203 = vmatmul.f32.gmra.mxu0 %v2075
    %v2204 = vpop.f32.mrf.mxu0
    %v2205 = vadd.f32 0.0, %v2204
    %2206 = vmatmul.f32.gmra.mxu0 %v2078
    %v2207 = vpop.f32.mrf.mxu0
    %v2208 = vadd.f32 0.0, %v2207
    %2209 = vmatmul.f32.gmra.mxu0 %v2081
    %v2210 = vpop.f32.mrf.mxu0
    %v2211 = vadd.f32 0.0, %v2210
    %2212 = vmatmul.f32.gmra.mxu0 %v2084
    %v2213 = vpop.f32.mrf.mxu0
    %v2214 = vadd.f32 0.0, %v2213
    %2215 = vmatmul.f32.gmra.mxu0 %v2087
    %v2216 = vpop.f32.mrf.mxu0
    %v2217 = vadd.f32 0.0, %v2216
    %2218 = vmatmul.f32.gmra.mxu0 %v2090
    %v2219 = vpop.f32.mrf.mxu0
    %v2220 = vadd.f32 0.0, %v2219
    %2221 = vmatmul.f32.gmra.mxu0 %v2093
    %v2222 = vpop.f32.mrf.mxu0
    %v2223 = vadd.f32 0.0, %v2222
    %2224 = vmatmul.f32.gmra.mxu0 %v2096
    %v2225 = vpop.f32.mrf.mxu0
    %v2226 = vadd.f32 0.0, %v2225
    %2227 = vmatmul.f32.gmra.mxu0 %v2099
    %v2228 = vpop.f32.mrf.mxu0
    %v2229 = vadd.f32 0.0, %v2228
    %2230 = vmatmul.f32.gmra.mxu0 %v2102
    %v2231 = vpop.f32.mrf.mxu0
    %v2232 = vadd.f32 0.0, %v2231
    %2233 = vdwg.mxu0
    %v2235 = vperm.slane %v2055, 0
    %v2236 = vperm.slane %v2055, 1
    %v2239 = vsub.f32 %v2122, %v2235
    %v2240 = vsub.f32 %v2187, %v2236
    %v2241 = vsub.f32 %v2125, %v2235
    %v2242 = vsub.f32 %v2190, %v2236
    %v2243 = vsub.f32 %v2128, %v2235
    %v2244 = vsub.f32 %v2193, %v2236
    %v2245 = vsub.f32 %v2131, %v2235
    %v2246 = vsub.f32 %v2196, %v2236
    %v2247 = vsub.f32 %v2134, %v2235
    %v2248 = vsub.f32 %v2199, %v2236
    %v2249 = vsub.f32 %v2137, %v2235
    %v2250 = vsub.f32 %v2202, %v2236
    %v2251 = vsub.f32 %v2140, %v2235
    %v2252 = vsub.f32 %v2205, %v2236
    %v2253 = vsub.f32 %v2143, %v2235
    %v2254 = vsub.f32 %v2208, %v2236
    %v2255 = vsub.f32 %v2146, %v2235
    %v2256 = vsub.f32 %v2211, %v2236
    %v2257 = vsub.f32 %v2149, %v2235
    %v2258 = vsub.f32 %v2214, %v2236
    %v2259 = vsub.f32 %v2152, %v2235
    %v2260 = vsub.f32 %v2217, %v2236
    %v2261 = vsub.f32 %v2155, %v2235
    %v2262 = vsub.f32 %v2220, %v2236
    %v2263 = vsub.f32 %v2158, %v2235
    %v2264 = vsub.f32 %v2223, %v2236
    %v2265 = vsub.f32 %v2161, %v2235
    %v2266 = vsub.f32 %v2226, %v2236
    %v2267 = vsub.f32 %v2164, %v2235
    %v2268 = vsub.f32 %v2229, %v2236
    %v2269 = vsub.f32 %v2167, %v2235
    %v2270 = vsub.f32 %v2232, %v2236
    %v2271 = vmax.f32 %v2239, %v2240
    %2272 = vmax.xlane.f32.xlu0 %v2271
    %v2273 = vpop.xlane.xlu0 %2272
    %v2274 = vmax.f32 %v2241, %v2242
    %2275 = vmax.xlane.f32.xlu0 %v2274
    %v2276 = vpop.xlane.xlu0 %2275
    %v2277 = vmax.f32 %v2243, %v2244
    %2278 = vmax.xlane.f32.xlu0 %v2277
    %v2279 = vpop.xlane.xlu0 %2278
    %v2280 = vmax.f32 %v2245, %v2246
    %2281 = vmax.xlane.f32.xlu0 %v2280
    %v2282 = vpop.xlane.xlu0 %2281
    %v2283 = vmax.f32 %v2247, %v2248
    %2284 = vmax.xlane.f32.xlu0 %v2283
    %v2285 = vpop.xlane.xlu0 %2284
    %v2286 = vmax.f32 %v2249, %v2250
    %2287 = vmax.xlane.f32.xlu0 %v2286
    %v2288 = vpop.xlane.xlu0 %2287
    %v2289 = vmax.f32 %v2251, %v2252
    %2290 = vmax.xlane.f32.xlu0 %v2289
    %v2291 = vpop.xlane.xlu0 %2290
    %v2292 = vmax.f32 %v2253, %v2254
    %2293 = vmax.xlane.f32.xlu0 %v2292
    %v2294 = vpop.xlane.xlu0 %2293
    %v2295 = vmax.f32 %v2255, %v2256
    %2296 = vmax.xlane.f32.xlu0 %v2295
    %v2297 = vpop.xlane.xlu0 %2296
    %v2298 = vmax.f32 %v2257, %v2258
    %2299 = vmax.xlane.f32.xlu0 %v2298
    %v2300 = vpop.xlane.xlu0 %2299
    %v2301 = vmax.f32 %v2259, %v2260
    %2302 = vmax.xlane.f32.xlu0 %v2301
    %v2303 = vpop.xlane.xlu0 %2302
    %v2304 = vmax.f32 %v2261, %v2262
    %2305 = vmax.xlane.f32.xlu0 %v2304
    %v2306 = vpop.xlane.xlu0 %2305
    %v2307 = vmax.f32 %v2263, %v2264
    %2308 = vmax.xlane.f32.xlu0 %v2307
    %v2309 = vpop.xlane.xlu0 %2308
    %v2310 = vmax.f32 %v2265, %v2266
    %2311 = vmax.xlane.f32.xlu0 %v2310
    %v2312 = vpop.xlane.xlu0 %2311
    %v2313 = vmax.f32 %v2267, %v2268
    %2314 = vmax.xlane.f32.xlu0 %v2313
    %v2315 = vpop.xlane.xlu0 %2314
    %v2316 = vmax.f32 %v2269, %v2270
    %2317 = vmax.xlane.f32.xlu0 %v2316
    %v2318 = vpop.xlane.xlu0 %2317
    %vm2319 = vcmp.eq.f32.partialorder %v2239, %v2273
    %vm2320 = vcmp.eq.f32.partialorder %v2240, %v2273
    %vm2321 = vcmp.eq.f32.partialorder %v2241, %v2276
    %vm2322 = vcmp.eq.f32.partialorder %v2242, %v2276
    %vm2323 = vcmp.eq.f32.partialorder %v2243, %v2279
    %vm2324 = vcmp.eq.f32.partialorder %v2244, %v2279
    %vm2325 = vcmp.eq.f32.partialorder %v2245, %v2282
    %vm2326 = vcmp.eq.f32.partialorder %v2246, %v2282
    %vm2327 = vcmp.eq.f32.partialorder %v2247, %v2285
    %vm2328 = vcmp.eq.f32.partialorder %v2248, %v2285
    %vm2329 = vcmp.eq.f32.partialorder %v2249, %v2288
    %vm2330 = vcmp.eq.f32.partialorder %v2250, %v2288
    %vm2331 = vcmp.eq.f32.partialorder %v2251, %v2291
    %vm2332 = vcmp.eq.f32.partialorder %v2252, %v2291
    %vm2333 = vcmp.eq.f32.partialorder %v2253, %v2294
    %vm2334 = vcmp.eq.f32.partialorder %v2254, %v2294
    %vm2335 = vcmp.eq.f32.partialorder %v2255, %v2297
    %vm2336 = vcmp.eq.f32.partialorder %v2256, %v2297
    %vm2337 = vcmp.eq.f32.partialorder %v2257, %v2300
    %vm2338 = vcmp.eq.f32.partialorder %v2258, %v2300
    %vm2339 = vcmp.eq.f32.partialorder %v2259, %v2303
    %vm2340 = vcmp.eq.f32.partialorder %v2260, %v2303
    %vm2341 = vcmp.eq.f32.partialorder %v2261, %v2306
    %vm2342 = vcmp.eq.f32.partialorder %v2262, %v2306
    %vm2343 = vcmp.eq.f32.partialorder %v2263, %v2309
    %vm2344 = vcmp.eq.f32.partialorder %v2264, %v2309
    %vm2345 = vcmp.eq.f32.partialorder %v2265, %v2312
    %vm2346 = vcmp.eq.f32.partialorder %v2266, %v2312
    %vm2347 = vcmp.eq.f32.partialorder %v2267, %v2315
    %vm2348 = vcmp.eq.f32.partialorder %v2268, %v2315
    %vm2349 = vcmp.eq.f32.partialorder %v2269, %v2318
    %vm2350 = vcmp.eq.f32.partialorder %v2270, %v2318
    %v2351 = vsel %vm2319, %v36, 256
    %v2352 = vsel %vm2320, %v37, 256
    %v2353 = vsel %vm2321, %v36, 256
    %v2354 = vsel %vm2322, %v37, 256
    %v2355 = vsel %vm2323, %v36, 256
    %v2356 = vsel %vm2324, %v37, 256
    %v2357 = vsel %vm2325, %v36, 256
    %v2358 = vsel %vm2326, %v37, 256
    %v2359 = vsel %vm2327, %v36, 256
    %v2360 = vsel %vm2328, %v37, 256
    %v2361 = vsel %vm2329, %v36, 256
    %v2362 = vsel %vm2330, %v37, 256
    %v2363 = vsel %vm2331, %v36, 256
    %v2364 = vsel %vm2332, %v37, 256
    %v2365 = vsel %vm2333, %v36, 256
    %v2366 = vsel %vm2334, %v37, 256
    %v2367 = vsel %vm2335, %v36, 256
    %v2368 = vsel %vm2336, %v37, 256
    %v2369 = vsel %vm2337, %v36, 256
    %v2370 = vsel %vm2338, %v37, 256
    %v2371 = vsel %vm2339, %v36, 256
    %v2372 = vsel %vm2340, %v37, 256
    %v2373 = vsel %vm2341, %v36, 256
    %v2374 = vsel %vm2342, %v37, 256
    %v2375 = vsel %vm2343, %v36, 256
    %v2376 = vsel %vm2344, %v37, 256
    %v2377 = vsel %vm2345, %v36, 256
    %v2378 = vsel %vm2346, %v37, 256
    %v2379 = vsel %vm2347, %v36, 256
    %v2380 = vsel %vm2348, %v37, 256
    %v2381 = vsel %vm2349, %v36, 256
    %v2382 = vsel %vm2350, %v37, 256
    %vm2383 = vcmp.lt.s32.totalorder %v2351, %v2352
    %v2384 = vsel %vm2383, %v2351, %v2352
    %v2385 = vand.u32 %v2384, 65535
    %v2386 = vshra.s32 %v2384, 16
    %v2387 = vcvt.s32.f32 %v2385
    %v2388 = vcvt.s32.f32 %v2386
    %2389 = vmin.xlane.f32.xlu0 %v2388
    %v2390 = vpop.xlane.xlu0 %2389
    %vm2391 = vcmp.eq.f32.partialorder %v2388, %v2390
    %v2392 = vsel %vm2391, %v2387, inf
    %2393 = vmin.xlane.f32.xlu0 %v2392
    %v2394 = vpop.xlane.xlu0 %2393
    %v2395 = vcvt.f32.s32 %v2394
    %v2396 = vcvt.f32.s32 %v2390
    %v2397 = vshll.u32 %v2396, 16
    %v2398 = vadd.s32 %v2397, %v2395
    %vm2399 = vcmp.lt.s32.totalorder %v2353, %v2354
    %v2400 = vsel %vm2399, %v2353, %v2354
    %v2401 = vand.u32 %v2400, 65535
    %v2402 = vshra.s32 %v2400, 16
    %v2403 = vcvt.s32.f32 %v2401
    %v2404 = vcvt.s32.f32 %v2402
    %2405 = vmin.xlane.f32.xlu0 %v2404
    %v2406 = vpop.xlane.xlu0 %2405
    %vm2407 = vcmp.eq.f32.partialorder %v2404, %v2406
    %v2408 = vsel %vm2407, %v2403, inf
    %2409 = vmin.xlane.f32.xlu0 %v2408
    %v2410 = vpop.xlane.xlu0 %2409
    %v2411 = vcvt.f32.s32 %v2410
    %v2412 = vcvt.f32.s32 %v2406
    %v2413 = vshll.u32 %v2412, 16
    %v2414 = vadd.s32 %v2413, %v2411
    %vm2415 = vcmp.lt.s32.totalorder %v2355, %v2356
    %v2416 = vsel %vm2415, %v2355, %v2356
    %v2417 = vand.u32 %v2416, 65535
    %v2418 = vshra.s32 %v2416, 16
    %v2419 = vcvt.s32.f32 %v2417
    %v2420 = vcvt.s32.f32 %v2418
    %2421 = vmin.xlane.f32.xlu0 %v2420
    %v2422 = vpop.xlane.xlu0 %2421
    %vm2423 = vcmp.eq.f32.partialorder %v2420, %v2422
    %v2424 = vsel %vm2423, %v2419, inf
    %2425 = vmin.xlane.f32.xlu0 %v2424
    %v2426 = vpop.xlane.xlu0 %2425
    %v2427 = vcvt.f32.s32 %v2426
    %v2428 = vcvt.f32.s32 %v2422
    %v2429 = vshll.u32 %v2428, 16
    %v2430 = vadd.s32 %v2429, %v2427
    %vm2431 = vcmp.lt.s32.totalorder %v2357, %v2358
    %v2432 = vsel %vm2431, %v2357, %v2358
    %v2433 = vand.u32 %v2432, 65535
    %v2434 = vshra.s32 %v2432, 16
    %v2435 = vcvt.s32.f32 %v2433
    %v2436 = vcvt.s32.f32 %v2434
    %2437 = vmin.xlane.f32.xlu0 %v2436
    %v2438 = vpop.xlane.xlu0 %2437
    %vm2439 = vcmp.eq.f32.partialorder %v2436, %v2438
    %v2440 = vsel %vm2439, %v2435, inf
    %2441 = vmin.xlane.f32.xlu0 %v2440
    %v2442 = vpop.xlane.xlu0 %2441
    %v2443 = vcvt.f32.s32 %v2442
    %v2444 = vcvt.f32.s32 %v2438
    %v2445 = vshll.u32 %v2444, 16
    %v2446 = vadd.s32 %v2445, %v2443
    %vm2447 = vcmp.lt.s32.totalorder %v2359, %v2360
    %v2448 = vsel %vm2447, %v2359, %v2360
    %v2449 = vand.u32 %v2448, 65535
    %v2450 = vshra.s32 %v2448, 16
    %v2451 = vcvt.s32.f32 %v2449
    %v2452 = vcvt.s32.f32 %v2450
    %2453 = vmin.xlane.f32.xlu0 %v2452
    %v2454 = vpop.xlane.xlu0 %2453
    %vm2455 = vcmp.eq.f32.partialorder %v2452, %v2454
    %v2456 = vsel %vm2455, %v2451, inf
    %2457 = vmin.xlane.f32.xlu0 %v2456
    %v2458 = vpop.xlane.xlu0 %2457
    %v2459 = vcvt.f32.s32 %v2458
    %v2460 = vcvt.f32.s32 %v2454
    %v2461 = vshll.u32 %v2460, 16
    %v2462 = vadd.s32 %v2461, %v2459
    %vm2463 = vcmp.lt.s32.totalorder %v2361, %v2362
    %v2464 = vsel %vm2463, %v2361, %v2362
    %v2465 = vand.u32 %v2464, 65535
    %v2466 = vshra.s32 %v2464, 16
    %v2467 = vcvt.s32.f32 %v2465
    %v2468 = vcvt.s32.f32 %v2466
    %2469 = vmin.xlane.f32.xlu0 %v2468
    %v2470 = vpop.xlane.xlu0 %2469
    %vm2471 = vcmp.eq.f32.partialorder %v2468, %v2470
    %v2472 = vsel %vm2471, %v2467, inf
    %2473 = vmin.xlane.f32.xlu0 %v2472
    %v2474 = vpop.xlane.xlu0 %2473
    %v2475 = vcvt.f32.s32 %v2474
    %v2476 = vcvt.f32.s32 %v2470
    %v2477 = vshll.u32 %v2476, 16
    %v2478 = vadd.s32 %v2477, %v2475
    %vm2479 = vcmp.lt.s32.totalorder %v2363, %v2364
    %v2480 = vsel %vm2479, %v2363, %v2364
    %v2481 = vand.u32 %v2480, 65535
    %v2482 = vshra.s32 %v2480, 16
    %v2483 = vcvt.s32.f32 %v2481
    %v2484 = vcvt.s32.f32 %v2482
    %2485 = vmin.xlane.f32.xlu0 %v2484
    %v2486 = vpop.xlane.xlu0 %2485
    %vm2487 = vcmp.eq.f32.partialorder %v2484, %v2486
    %v2488 = vsel %vm2487, %v2483, inf
    %2489 = vmin.xlane.f32.xlu0 %v2488
    %v2490 = vpop.xlane.xlu0 %2489
    %v2491 = vcvt.f32.s32 %v2490
    %v2492 = vcvt.f32.s32 %v2486
    %v2493 = vshll.u32 %v2492, 16
    %v2494 = vadd.s32 %v2493, %v2491
    %vm2495 = vcmp.lt.s32.totalorder %v2365, %v2366
    %v2496 = vsel %vm2495, %v2365, %v2366
    %v2497 = vand.u32 %v2496, 65535
    %v2498 = vshra.s32 %v2496, 16
    %v2499 = vcvt.s32.f32 %v2497
    %v2500 = vcvt.s32.f32 %v2498
    %2501 = vmin.xlane.f32.xlu0 %v2500
    %v2502 = vpop.xlane.xlu0 %2501
    %vm2503 = vcmp.eq.f32.partialorder %v2500, %v2502
    %v2504 = vsel %vm2503, %v2499, inf
    %2505 = vmin.xlane.f32.xlu0 %v2504
    %v2506 = vpop.xlane.xlu0 %2505
    %v2507 = vcvt.f32.s32 %v2506
    %v2508 = vcvt.f32.s32 %v2502
    %v2509 = vshll.u32 %v2508, 16
    %v2510 = vadd.s32 %v2509, %v2507
    %vm2511 = vcmp.lt.s32.totalorder %v2367, %v2368
    %v2512 = vsel %vm2511, %v2367, %v2368
    %v2513 = vand.u32 %v2512, 65535
    %v2514 = vshra.s32 %v2512, 16
    %v2515 = vcvt.s32.f32 %v2513
    %v2516 = vcvt.s32.f32 %v2514
    %2517 = vmin.xlane.f32.xlu0 %v2516
    %v2518 = vpop.xlane.xlu0 %2517
    %vm2519 = vcmp.eq.f32.partialorder %v2516, %v2518
    %v2520 = vsel %vm2519, %v2515, inf
    %2521 = vmin.xlane.f32.xlu0 %v2520
    %v2522 = vpop.xlane.xlu0 %2521
    %v2523 = vcvt.f32.s32 %v2522
    %v2524 = vcvt.f32.s32 %v2518
    %v2525 = vshll.u32 %v2524, 16
    %v2526 = vadd.s32 %v2525, %v2523
    %vm2527 = vcmp.lt.s32.totalorder %v2369, %v2370
    %v2528 = vsel %vm2527, %v2369, %v2370
    %v2529 = vand.u32 %v2528, 65535
    %v2530 = vshra.s32 %v2528, 16
    %v2531 = vcvt.s32.f32 %v2529
    %v2532 = vcvt.s32.f32 %v2530
    %2533 = vmin.xlane.f32.xlu0 %v2532
    %v2534 = vpop.xlane.xlu0 %2533
    %vm2535 = vcmp.eq.f32.partialorder %v2532, %v2534
    %v2536 = vsel %vm2535, %v2531, inf
    %2537 = vmin.xlane.f32.xlu0 %v2536
    %v2538 = vpop.xlane.xlu0 %2537
    %v2539 = vcvt.f32.s32 %v2538
    %v2540 = vcvt.f32.s32 %v2534
    %v2541 = vshll.u32 %v2540, 16
    %v2542 = vadd.s32 %v2541, %v2539
    %vm2543 = vcmp.lt.s32.totalorder %v2371, %v2372
    %v2544 = vsel %vm2543, %v2371, %v2372
    %v2545 = vand.u32 %v2544, 65535
    %v2546 = vshra.s32 %v2544, 16
    %v2547 = vcvt.s32.f32 %v2545
    %v2548 = vcvt.s32.f32 %v2546
    %2549 = vmin.xlane.f32.xlu0 %v2548
    %v2550 = vpop.xlane.xlu0 %2549
    %vm2551 = vcmp.eq.f32.partialorder %v2548, %v2550
    %v2552 = vsel %vm2551, %v2547, inf
    %2553 = vmin.xlane.f32.xlu0 %v2552
    %v2554 = vpop.xlane.xlu0 %2553
    %v2555 = vcvt.f32.s32 %v2554
    %v2556 = vcvt.f32.s32 %v2550
    %v2557 = vshll.u32 %v2556, 16
    %v2558 = vadd.s32 %v2557, %v2555
    %vm2559 = vcmp.lt.s32.totalorder %v2373, %v2374
    %v2560 = vsel %vm2559, %v2373, %v2374
    %v2561 = vand.u32 %v2560, 65535
    %v2562 = vshra.s32 %v2560, 16
    %v2563 = vcvt.s32.f32 %v2561
    %v2564 = vcvt.s32.f32 %v2562
    %2565 = vmin.xlane.f32.xlu0 %v2564
    %v2566 = vpop.xlane.xlu0 %2565
    %vm2567 = vcmp.eq.f32.partialorder %v2564, %v2566
    %v2568 = vsel %vm2567, %v2563, inf
    %2569 = vmin.xlane.f32.xlu0 %v2568
    %v2570 = vpop.xlane.xlu0 %2569
    %v2571 = vcvt.f32.s32 %v2570
    %v2572 = vcvt.f32.s32 %v2566
    %v2573 = vshll.u32 %v2572, 16
    %v2574 = vadd.s32 %v2573, %v2571
    %vm2575 = vcmp.lt.s32.totalorder %v2375, %v2376
    %v2576 = vsel %vm2575, %v2375, %v2376
    %v2577 = vand.u32 %v2576, 65535
    %v2578 = vshra.s32 %v2576, 16
    %v2579 = vcvt.s32.f32 %v2577
    %v2580 = vcvt.s32.f32 %v2578
    %2581 = vmin.xlane.f32.xlu0 %v2580
    %v2582 = vpop.xlane.xlu0 %2581
    %vm2583 = vcmp.eq.f32.partialorder %v2580, %v2582
    %v2584 = vsel %vm2583, %v2579, inf
    %2585 = vmin.xlane.f32.xlu0 %v2584
    %v2586 = vpop.xlane.xlu0 %2585
    %v2587 = vcvt.f32.s32 %v2586
    %v2588 = vcvt.f32.s32 %v2582
    %v2589 = vshll.u32 %v2588, 16
    %v2590 = vadd.s32 %v2589, %v2587
    %vm2591 = vcmp.lt.s32.totalorder %v2377, %v2378
    %v2592 = vsel %vm2591, %v2377, %v2378
    %v2593 = vand.u32 %v2592, 65535
    %v2594 = vshra.s32 %v2592, 16
    %v2595 = vcvt.s32.f32 %v2593
    %v2596 = vcvt.s32.f32 %v2594
    %2597 = vmin.xlane.f32.xlu0 %v2596
    %v2598 = vpop.xlane.xlu0 %2597
    %vm2599 = vcmp.eq.f32.partialorder %v2596, %v2598
    %v2600 = vsel %vm2599, %v2595, inf
    %2601 = vmin.xlane.f32.xlu0 %v2600
    %v2602 = vpop.xlane.xlu0 %2601
    %v2603 = vcvt.f32.s32 %v2602
    %v2604 = vcvt.f32.s32 %v2598
    %v2605 = vshll.u32 %v2604, 16
    %v2606 = vadd.s32 %v2605, %v2603
    %vm2607 = vcmp.lt.s32.totalorder %v2379, %v2380
    %v2608 = vsel %vm2607, %v2379, %v2380
    %v2609 = vand.u32 %v2608, 65535
    %v2610 = vshra.s32 %v2608, 16
    %v2611 = vcvt.s32.f32 %v2609
    %v2612 = vcvt.s32.f32 %v2610
    %2613 = vmin.xlane.f32.xlu0 %v2612
    %v2614 = vpop.xlane.xlu0 %2613
    %vm2615 = vcmp.eq.f32.partialorder %v2612, %v2614
    %v2616 = vsel %vm2615, %v2611, inf
    %2617 = vmin.xlane.f32.xlu0 %v2616
    %v2618 = vpop.xlane.xlu0 %2617
    %v2619 = vcvt.f32.s32 %v2618
    %v2620 = vcvt.f32.s32 %v2614
    %v2621 = vshll.u32 %v2620, 16
    %v2622 = vadd.s32 %v2621, %v2619
    %vm2623 = vcmp.lt.s32.totalorder %v2381, %v2382
    %v2624 = vsel %vm2623, %v2381, %v2382
    %v2625 = vand.u32 %v2624, 65535
    %v2626 = vshra.s32 %v2624, 16
    %v2627 = vcvt.s32.f32 %v2625
    %v2628 = vcvt.s32.f32 %v2626
    %2629 = vmin.xlane.f32.xlu0 %v2628
    %v2630 = vpop.xlane.xlu0 %2629
    %vm2631 = vcmp.eq.f32.partialorder %v2628, %v2630
    %v2632 = vsel %vm2631, %v2627, inf
    %2633 = vmin.xlane.f32.xlu0 %v2632
    %v2634 = vpop.xlane.xlu0 %2633
    %v2635 = vcvt.f32.s32 %v2634
    %v2636 = vcvt.f32.s32 %v2630
    %v2637 = vshll.u32 %v2636, 16
    %v2638 = vadd.s32 %v2637, %v2635
    %vm2639 = vcmp.eq.s32.totalorder %v36, %v2398
    %vm2640 = vcmp.eq.s32.totalorder %v37, %v2398
    %vm2641 = vcmp.eq.s32.totalorder %v36, %v2414
    %vm2642 = vcmp.eq.s32.totalorder %v37, %v2414
    %vm2643 = vcmp.eq.s32.totalorder %v36, %v2430
    %vm2644 = vcmp.eq.s32.totalorder %v37, %v2430
    %vm2645 = vcmp.eq.s32.totalorder %v36, %v2446
    %vm2646 = vcmp.eq.s32.totalorder %v37, %v2446
    %vm2647 = vcmp.eq.s32.totalorder %v36, %v2462
    %vm2648 = vcmp.eq.s32.totalorder %v37, %v2462
    %vm2649 = vcmp.eq.s32.totalorder %v36, %v2478
    %vm2650 = vcmp.eq.s32.totalorder %v37, %v2478
    %vm2651 = vcmp.eq.s32.totalorder %v36, %v2494
    %vm2652 = vcmp.eq.s32.totalorder %v37, %v2494
    %vm2653 = vcmp.eq.s32.totalorder %v36, %v2510
    %vm2654 = vcmp.eq.s32.totalorder %v37, %v2510
    %vm2655 = vcmp.eq.s32.totalorder %v36, %v2526
    %vm2656 = vcmp.eq.s32.totalorder %v37, %v2526
    %vm2657 = vcmp.eq.s32.totalorder %v36, %v2542
    %vm2658 = vcmp.eq.s32.totalorder %v37, %v2542
    %vm2659 = vcmp.eq.s32.totalorder %v36, %v2558
    %vm2660 = vcmp.eq.s32.totalorder %v37, %v2558
    %vm2661 = vcmp.eq.s32.totalorder %v36, %v2574
    %vm2662 = vcmp.eq.s32.totalorder %v37, %v2574
    %vm2663 = vcmp.eq.s32.totalorder %v36, %v2590
    %vm2664 = vcmp.eq.s32.totalorder %v37, %v2590
    %vm2665 = vcmp.eq.s32.totalorder %v36, %v2606
    %vm2666 = vcmp.eq.s32.totalorder %v37, %v2606
    %vm2667 = vcmp.eq.s32.totalorder %v36, %v2622
    %vm2668 = vcmp.eq.s32.totalorder %v37, %v2622
    %vm2669 = vcmp.eq.s32.totalorder %v36, %v2638
    %vm2670 = vcmp.eq.s32.totalorder %v37, %v2638
    %v2671 = vsel %vm2639, 1, 0
    %v2672 = vsel %vm2640, 1, 0
    %v2673 = vsel %vm2641, 1, 0
    %v2674 = vsel %vm2642, 1, 0
    %v2675 = vsel %vm2643, 1, 0
    %v2676 = vsel %vm2644, 1, 0
    %v2677 = vsel %vm2645, 1, 0
    %v2678 = vsel %vm2646, 1, 0
    %v2679 = vsel %vm2647, 1, 0
    %v2680 = vsel %vm2648, 1, 0
    %v2681 = vsel %vm2649, 1, 0
    %v2682 = vsel %vm2650, 1, 0
    %v2683 = vsel %vm2651, 1, 0
    %v2684 = vsel %vm2652, 1, 0
    %v2685 = vsel %vm2653, 1, 0
    %v2686 = vsel %vm2654, 1, 0
    %v2687 = vsel %vm2655, 1, 0
    %v2688 = vsel %vm2656, 1, 0
    %v2689 = vsel %vm2657, 1, 0
    %v2690 = vsel %vm2658, 1, 0
    %v2691 = vsel %vm2659, 1, 0
    %v2692 = vsel %vm2660, 1, 0
    %v2693 = vsel %vm2661, 1, 0
    %v2694 = vsel %vm2662, 1, 0
    %v2695 = vsel %vm2663, 1, 0
    %v2696 = vsel %vm2664, 1, 0
    %v2697 = vsel %vm2665, 1, 0
    %v2698 = vsel %vm2666, 1, 0
    %v2699 = vsel %vm2667, 1, 0
    %v2700 = vsel %vm2668, 1, 0
    %v2701 = vsel %vm2669, 1, 0
    %v2702 = vsel %vm2670, 1, 0
    %v2703 = vcvt.s32.f32 %v2671
    %v2704 = vcvt.s32.f32 %v2672
    %v2705 = vcvt.s32.f32 %v2673
    %v2706 = vcvt.s32.f32 %v2674
    %v2707 = vcvt.s32.f32 %v2675
    %v2708 = vcvt.s32.f32 %v2676
    %v2709 = vcvt.s32.f32 %v2677
    %v2710 = vcvt.s32.f32 %v2678
    %v2711 = vcvt.s32.f32 %v2679
    %v2712 = vcvt.s32.f32 %v2680
    %v2713 = vcvt.s32.f32 %v2681
    %v2714 = vcvt.s32.f32 %v2682
    %v2715 = vcvt.s32.f32 %v2683
    %v2716 = vcvt.s32.f32 %v2684
    %v2717 = vcvt.s32.f32 %v2685
    %v2718 = vcvt.s32.f32 %v2686
    %v2719 = vcvt.s32.f32 %v2687
    %v2720 = vcvt.s32.f32 %v2688
    %v2721 = vcvt.s32.f32 %v2689
    %v2722 = vcvt.s32.f32 %v2690
    %v2723 = vcvt.s32.f32 %v2691
    %v2724 = vcvt.s32.f32 %v2692
    %v2725 = vcvt.s32.f32 %v2693
    %v2726 = vcvt.s32.f32 %v2694
    %v2727 = vcvt.s32.f32 %v2695
    %v2728 = vcvt.s32.f32 %v2696
    %v2729 = vcvt.s32.f32 %v2697
    %v2730 = vcvt.s32.f32 %v2698
    %v2731 = vcvt.s32.f32 %v2699
    %v2732 = vcvt.s32.f32 %v2700
    %v2733 = vcvt.s32.f32 %v2701
    %v2734 = vcvt.s32.f32 %v2702
    %2735 = vmatpush.xpose.msra.mxu0 0.0
    %2736 = vmatpush.xpose.msra.mxu0 0.0
    %2737 = vmatpush.xpose.msra.mxu0 0.0
    %2738 = vmatpush.xpose.msra.mxu0 0.0
    %2739 = vmatpush.xpose.msra.mxu0 0.0
    %2740 = vmatpush.xpose.msra.mxu0 0.0
    %2741 = vmatpush.xpose.msra.mxu0 0.0
    %2742 = vmatpush.xpose.msra.mxu0 0.0
    %2743 = vmatpush.xpose.msra.mxu0 0.0
    %2744 = vmatpush.xpose.msra.mxu0 0.0
    %2745 = vmatpush.xpose.msra.mxu0 0.0
    %2746 = vmatpush.xpose.msra.mxu0 0.0
    %2747 = vmatpush.xpose.msra.mxu0 %v2052
    %2748 = vmatpush.xpose.msra.mxu0 %v2050
    %2749 = vmatpush.xpose.msra.mxu0 %v2048
    %2750 = vmatpush.xpose.msra.mxu0 %v2046
    %2751 = vmatmul.f32.gmra.mxu0 %v2703
    %v2752 = vpop.f32.mrf.mxu0
    %v2753 = vadd.f32 0.0, %v2752
    %2754 = vmatmul.f32.gmra.mxu0 %v2705
    %v2755 = vpop.f32.mrf.mxu0
    %v2756 = vadd.f32 0.0, %v2755
    %2757 = vmatmul.f32.gmra.mxu0 %v2707
    %v2758 = vpop.f32.mrf.mxu0
    %v2759 = vadd.f32 0.0, %v2758
    %2760 = vmatmul.f32.gmra.mxu0 %v2709
    %v2761 = vpop.f32.mrf.mxu0
    %v2762 = vadd.f32 0.0, %v2761
    %2763 = vmatmul.f32.gmra.mxu0 %v2711
    %v2764 = vpop.f32.mrf.mxu0
    %v2765 = vadd.f32 0.0, %v2764
    %2766 = vmatmul.f32.gmra.mxu0 %v2713
    %v2767 = vpop.f32.mrf.mxu0
    %v2768 = vadd.f32 0.0, %v2767
    %2769 = vmatmul.f32.gmra.mxu0 %v2715
    %v2770 = vpop.f32.mrf.mxu0
    %v2771 = vadd.f32 0.0, %v2770
    %2772 = vmatmul.f32.gmra.mxu0 %v2717
    %v2773 = vpop.f32.mrf.mxu0
    %v2774 = vadd.f32 0.0, %v2773
    %2775 = vmatmul.f32.gmra.mxu0 %v2719
    %v2776 = vpop.f32.mrf.mxu0
    %v2777 = vadd.f32 0.0, %v2776
    %2778 = vmatmul.f32.gmra.mxu0 %v2721
    %v2779 = vpop.f32.mrf.mxu0
    %v2780 = vadd.f32 0.0, %v2779
    %2781 = vmatmul.f32.gmra.mxu0 %v2723
    %v2782 = vpop.f32.mrf.mxu0
    %v2783 = vadd.f32 0.0, %v2782
    %2784 = vmatmul.f32.gmra.mxu0 %v2725
    %v2785 = vpop.f32.mrf.mxu0
    %v2786 = vadd.f32 0.0, %v2785
    %2787 = vmatmul.f32.gmra.mxu0 %v2727
    %v2788 = vpop.f32.mrf.mxu0
    %v2789 = vadd.f32 0.0, %v2788
    %2790 = vmatmul.f32.gmra.mxu0 %v2729
    %v2791 = vpop.f32.mrf.mxu0
    %v2792 = vadd.f32 0.0, %v2791
    %2793 = vmatmul.f32.gmra.mxu0 %v2731
    %v2794 = vpop.f32.mrf.mxu0
    %v2795 = vadd.f32 0.0, %v2794
    %2796 = vmatmul.f32.gmra.mxu0 %v2733
    %v2797 = vpop.f32.mrf.mxu0
    %v2798 = vadd.f32 0.0, %v2797
    %2799 = vdwg.mxu0
    %2800 = vmatpush.xpose.msra.mxu0 0.0
    %2801 = vmatpush.xpose.msra.mxu0 0.0
    %2802 = vmatpush.xpose.msra.mxu0 0.0
    %2803 = vmatpush.xpose.msra.mxu0 0.0
    %2804 = vmatpush.xpose.msra.mxu0 0.0
    %2805 = vmatpush.xpose.msra.mxu0 0.0
    %2806 = vmatpush.xpose.msra.mxu0 0.0
    %2807 = vmatpush.xpose.msra.mxu0 0.0
    %2808 = vmatpush.xpose.msra.mxu0 0.0
    %2809 = vmatpush.xpose.msra.mxu0 0.0
    %2810 = vmatpush.xpose.msra.mxu0 0.0
    %2811 = vmatpush.xpose.msra.mxu0 0.0
    %2812 = vmatpush.xpose.msra.mxu0 %v2053
    %2813 = vmatpush.xpose.msra.mxu0 %v2051
    %2814 = vmatpush.xpose.msra.mxu0 %v2049
    %2815 = vmatpush.xpose.msra.mxu0 %v2047
    %2816 = vmatmul.f32.gmra.mxu0 %v2704
    %v2817 = vpop.f32.mrf.mxu0
    %v2818 = vadd.f32 %v2753, %v2817
    %2819 = vmatmul.f32.gmra.mxu0 %v2706
    %v2820 = vpop.f32.mrf.mxu0
    %v2821 = vadd.f32 %v2756, %v2820
    %2822 = vmatmul.f32.gmra.mxu0 %v2708
    %v2823 = vpop.f32.mrf.mxu0
    %v2824 = vadd.f32 %v2759, %v2823
    %2825 = vmatmul.f32.gmra.mxu0 %v2710
    %v2826 = vpop.f32.mrf.mxu0
    %v2827 = vadd.f32 %v2762, %v2826
    %2828 = vmatmul.f32.gmra.mxu0 %v2712
    %v2829 = vpop.f32.mrf.mxu0
    %v2830 = vadd.f32 %v2765, %v2829
    %2831 = vmatmul.f32.gmra.mxu0 %v2714
    %v2832 = vpop.f32.mrf.mxu0
    %v2833 = vadd.f32 %v2768, %v2832
    %2834 = vmatmul.f32.gmra.mxu0 %v2716
    %v2835 = vpop.f32.mrf.mxu0
    %v2836 = vadd.f32 %v2771, %v2835
    %2837 = vmatmul.f32.gmra.mxu0 %v2718
    %v2838 = vpop.f32.mrf.mxu0
    %v2839 = vadd.f32 %v2774, %v2838
    %2840 = vmatmul.f32.gmra.mxu0 %v2720
    %v2841 = vpop.f32.mrf.mxu0
    %v2842 = vadd.f32 %v2777, %v2841
    %2843 = vmatmul.f32.gmra.mxu0 %v2722
    %v2844 = vpop.f32.mrf.mxu0
    %v2845 = vadd.f32 %v2780, %v2844
    %2846 = vmatmul.f32.gmra.mxu0 %v2724
    %v2847 = vpop.f32.mrf.mxu0
    %v2848 = vadd.f32 %v2783, %v2847
    %2849 = vmatmul.f32.gmra.mxu0 %v2726
    %v2850 = vpop.f32.mrf.mxu0
    %v2851 = vadd.f32 %v2786, %v2850
    %2852 = vmatmul.f32.gmra.mxu0 %v2728
    %v2853 = vpop.f32.mrf.mxu0
    %v2854 = vadd.f32 %v2789, %v2853
    %2855 = vmatmul.f32.gmra.mxu0 %v2730
    %v2856 = vpop.f32.mrf.mxu0
    %v2857 = vadd.f32 %v2792, %v2856
    %2858 = vmatmul.f32.gmra.mxu0 %v2732
    %v2859 = vpop.f32.mrf.mxu0
    %v2860 = vadd.f32 %v2795, %v2859
    %2861 = vmatmul.f32.gmra.mxu0 %v2734
    %v2862 = vpop.f32.mrf.mxu0
    %v2863 = vadd.f32 %v2798, %v2862
    %2864 = vdwg.mxu0
    %v2865 = vsub.f32 %v1884, %v2818
    %v2866 = vsub.f32 %v1885, %v2821
    %v2867 = vsub.f32 %v1886, %v2824
    %v2868 = vsub.f32 %v1887, %v2827
    %v2869 = vsub.f32 %v1888, %v2830
    %v2870 = vsub.f32 %v1889, %v2833
    %v2871 = vsub.f32 %v1890, %v2836
    %v2872 = vsub.f32 %v1891, %v2839
    %v2873 = vsub.f32 %v1892, %v2842
    %v2874 = vsub.f32 %v1893, %v2845
    %v2875 = vsub.f32 %v1894, %v2848
    %v2876 = vsub.f32 %v1895, %v2851
    %v2877 = vsub.f32 %v1896, %v2854
    %v2878 = vsub.f32 %v1897, %v2857
    %v2879 = vsub.f32 %v1898, %v2860
    %v2880 = vsub.f32 %v1899, %v2863
    %v2881 = vmul.f32 %v2865, %v2865
    %v2882 = vmul.f32 %v2866, %v2866
    %v2883 = vmul.f32 %v2867, %v2867
    %v2884 = vmul.f32 %v2868, %v2868
    %v2885 = vmul.f32 %v2869, %v2869
    %v2886 = vmul.f32 %v2870, %v2870
    %v2887 = vmul.f32 %v2871, %v2871
    %v2888 = vmul.f32 %v2872, %v2872
    %v2889 = vmul.f32 %v2873, %v2873
    %v2890 = vmul.f32 %v2874, %v2874
    %v2891 = vmul.f32 %v2875, %v2875
    %v2892 = vmul.f32 %v2876, %v2876
    %v2893 = vmul.f32 %v2877, %v2877
    %v2894 = vmul.f32 %v2878, %v2878
    %v2895 = vmul.f32 %v2879, %v2879
    %v2896 = vmul.f32 %v2880, %v2880
    %v2897 = vsel %vm63, %v2881, 0.0
    %2898 = vadd.xlane.f32.xlu0 %v2897
    %v2899 = vpop.xlane.xlu0 %2898
    %v2900 = vsel %vm63, %v2882, 0.0
    %2901 = vadd.xlane.f32.xlu0 %v2900
    %v2902 = vpop.xlane.xlu0 %2901
    %v2903 = vsel %vm63, %v2883, 0.0
    %2904 = vadd.xlane.f32.xlu0 %v2903
    %v2905 = vpop.xlane.xlu0 %2904
    %v2906 = vsel %vm63, %v2884, 0.0
    %2907 = vadd.xlane.f32.xlu0 %v2906
    %v2908 = vpop.xlane.xlu0 %2907
    %v2909 = vsel %vm63, %v2885, 0.0
    %2910 = vadd.xlane.f32.xlu0 %v2909
    %v2911 = vpop.xlane.xlu0 %2910
    %v2912 = vsel %vm63, %v2886, 0.0
    %2913 = vadd.xlane.f32.xlu0 %v2912
    %v2914 = vpop.xlane.xlu0 %2913
    %v2915 = vsel %vm63, %v2887, 0.0
    %2916 = vadd.xlane.f32.xlu0 %v2915
    %v2917 = vpop.xlane.xlu0 %2916
    %v2918 = vsel %vm63, %v2888, 0.0
    %2919 = vadd.xlane.f32.xlu0 %v2918
    %v2920 = vpop.xlane.xlu0 %2919
    %v2921 = vsel %vm63, %v2889, 0.0
    %2922 = vadd.xlane.f32.xlu0 %v2921
    %v2923 = vpop.xlane.xlu0 %2922
    %v2924 = vsel %vm63, %v2890, 0.0
    %2925 = vadd.xlane.f32.xlu0 %v2924
    %v2926 = vpop.xlane.xlu0 %2925
    %v2927 = vsel %vm63, %v2891, 0.0
    %2928 = vadd.xlane.f32.xlu0 %v2927
    %v2929 = vpop.xlane.xlu0 %2928
    %v2930 = vsel %vm63, %v2892, 0.0
    %2931 = vadd.xlane.f32.xlu0 %v2930
    %v2932 = vpop.xlane.xlu0 %2931
    %v2933 = vsel %vm63, %v2893, 0.0
    %2934 = vadd.xlane.f32.xlu0 %v2933
    %v2935 = vpop.xlane.xlu0 %2934
    %v2936 = vsel %vm63, %v2894, 0.0
    %2937 = vadd.xlane.f32.xlu0 %v2936
    %v2938 = vpop.xlane.xlu0 %2937
    %v2939 = vsel %vm63, %v2895, 0.0
    %2940 = vadd.xlane.f32.xlu0 %v2939
    %v2941 = vpop.xlane.xlu0 %2940
    %v2942 = vsel %vm63, %v2896, 0.0
    %2943 = vadd.xlane.f32.xlu0 %v2942
    %v2944 = vpop.xlane.xlu0 %2943
    %v2945 = vperm.slane %v2398, %v36
    %v2946 = vperm.slane %v2414, %v954
    %v2947 = vsel %vm956, %v2946, %v2945
    %v2948 = vperm.slane %v2430, %v958
    %v2949 = vsel %vm960, %v2948, %v2947
    %v2950 = vperm.slane %v2446, %v962
    %v2951 = vsel %vm964, %v2950, %v2949
    %v2952 = vperm.slane %v2462, %v966
    %v2953 = vsel %vm968, %v2952, %v2951
    %v2954 = vperm.slane %v2478, %v970
    %v2955 = vsel %vm972, %v2954, %v2953
    %v2956 = vperm.slane %v2494, %v974
    %v2957 = vsel %vm976, %v2956, %v2955
    %v2958 = vperm.slane %v2510, %v978
    %v2959 = vsel %vm980, %v2958, %v2957
    %v2960 = vperm.slane %v2526, %v982
    %v2961 = vsel %vm984, %v2960, %v2959
    %v2962 = vperm.slane %v2542, %v986
    %v2963 = vsel %vm988, %v2962, %v2961
    %v2964 = vperm.slane %v2558, %v990
    %v2965 = vsel %vm992, %v2964, %v2963
    %v2966 = vperm.slane %v2574, %v994
    %v2967 = vsel %vm996, %v2966, %v2965
    %v2968 = vperm.slane %v2590, %v998
    %v2969 = vsel %vm1000, %v2968, %v2967
    %v2970 = vperm.slane %v2606, %v1002
    %v2971 = vsel %vm1004, %v2970, %v2969
    %v2972 = vperm.slane %v2622, %v1006
    %v2973 = vsel %vm1008, %v2972, %v2971
    %v2974 = vperm.slane %v2638, %v1010
    %v2975 = vsel %vm1012, %v2974, %v2973
    %2976 = vst [vmem:[#allocation5 + $0x2] sm:$0x1] %v2975
    %v2993 = vperm.slane %v2899, %v36
    %v2994 = vperm.slane %v2902, %v954
    %v2995 = vsel %vm956, %v2994, %v2993
    %v2996 = vperm.slane %v2905, %v958
    %v2997 = vsel %vm960, %v2996, %v2995
    %v2998 = vperm.slane %v2908, %v962
    %v2999 = vsel %vm964, %v2998, %v2997
    %v3000 = vperm.slane %v2911, %v966
    %v3001 = vsel %vm968, %v3000, %v2999
    %v3002 = vperm.slane %v2914, %v970
    %v3003 = vsel %vm972, %v3002, %v3001
    %v3004 = vperm.slane %v2917, %v974
    %v3005 = vsel %vm976, %v3004, %v3003
    %v3006 = vperm.slane %v2920, %v978
    %v3007 = vsel %vm980, %v3006, %v3005
    %v3008 = vperm.slane %v2923, %v982
    %v3009 = vsel %vm984, %v3008, %v3007
    %v3010 = vperm.slane %v2926, %v986
    %v3011 = vsel %vm988, %v3010, %v3009
    %v3012 = vperm.slane %v2929, %v990
    %v3013 = vsel %vm992, %v3012, %v3011
    %v3014 = vperm.slane %v2932, %v994
    %v3015 = vsel %vm996, %v3014, %v3013
    %v3016 = vperm.slane %v2935, %v998
    %v3017 = vsel %vm1000, %v3016, %v3015
    %v3018 = vperm.slane %v2938, %v1002
    %v3019 = vsel %vm1004, %v3018, %v3017
    %v3020 = vperm.slane %v2941, %v1006
    %v3021 = vsel %vm1008, %v3020, %v3019
    %v3022 = vperm.slane %v2944, %v1010
    %v3023 = vsel %vm1012, %v3022, %v3021
    %3025 = vst [vmem:[#allocation6 + $0x2] sm:$0x1] %v3023
    %s3026 = scalar_lea.vmem [#allocation2], 192
    %v3027 = vld [vmem:[%s3026] sm:$0xff]
    %v3028 = vld [vmem:[%s3026 + $0x8] sm:$0xff]
    %v3029 = vld [vmem:[%s3026 + $0x10] sm:$0xff]
    %v3030 = vld [vmem:[%s3026 + $0x18] sm:$0xff]
    %v3031 = vld [vmem:[%s3026 + $0x20] sm:$0xff]
    %v3032 = vld [vmem:[%s3026 + $0x28] sm:$0xff]
    %v3033 = vld [vmem:[%s3026 + $0x30] sm:$0xff]
    %v3034 = vld [vmem:[%s3026 + $0x38] sm:$0xff]
    %s3035 = scalar_lea.vmem %s2, 6
    %v3036 = vld [vmem:[%s3035] sm:$0x3]
    %v3038 = vsel %vm63, %v2865, 0
    %v3041 = vsel %vm63, %v2866, 0
    %v3044 = vsel %vm63, %v2867, 0
    %v3047 = vsel %vm63, %v2868, 0
    %v3050 = vsel %vm63, %v2869, 0
    %v3053 = vsel %vm63, %v2870, 0
    %v3056 = vsel %vm63, %v2871, 0
    %v3059 = vsel %vm63, %v2872, 0
    %v3062 = vsel %vm63, %v2873, 0
    %v3065 = vsel %vm63, %v2874, 0
    %v3068 = vsel %vm63, %v2875, 0
    %v3071 = vsel %vm63, %v2876, 0
    %v3074 = vsel %vm63, %v2877, 0
    %v3077 = vsel %vm63, %v2878, 0
    %v3080 = vsel %vm63, %v2879, 0
    %v3083 = vsel %vm63, %v2880, 0
    %3085 = vmatpush.msra.mxu0 0.0
    %3086 = vmatpush.msra.mxu0 0.0
    %3087 = vmatpush.msra.mxu0 0.0
    %3088 = vmatpush.msra.mxu0 0.0
    %3089 = vmatpush.msra.mxu0 0.0
    %3090 = vmatpush.msra.mxu0 0.0
    %3091 = vmatpush.msra.mxu0 0.0
    %3092 = vmatpush.msra.mxu0 0.0
    %3093 = vmatpush.msra.mxu0 0.0
    %3094 = vmatpush.msra.mxu0 0.0
    %3095 = vmatpush.msra.mxu0 0.0
    %3096 = vmatpush.msra.mxu0 0.0
    %3097 = vmatpush.msra.mxu0 %v3033
    %3098 = vmatpush.msra.mxu0 %v3031
    %3099 = vmatpush.msra.mxu0 %v3029
    %3100 = vmatpush.msra.mxu0 %v3027
    %3101 = vmatmul.f32.gmra.mxu0 %v3038
    %v3102 = vpop.f32.mrf.mxu0
    %v3103 = vadd.f32 0.0, %v3102
    %3104 = vmatmul.f32.gmra.mxu0 %v3041
    %v3105 = vpop.f32.mrf.mxu0
    %v3106 = vadd.f32 0.0, %v3105
    %3107 = vmatmul.f32.gmra.mxu0 %v3044
    %v3108 = vpop.f32.mrf.mxu0
    %v3109 = vadd.f32 0.0, %v3108
    %3110 = vmatmul.f32.gmra.mxu0 %v3047
    %v3111 = vpop.f32.mrf.mxu0
    %v3112 = vadd.f32 0.0, %v3111
    %3113 = vmatmul.f32.gmra.mxu0 %v3050
    %v3114 = vpop.f32.mrf.mxu0
    %v3115 = vadd.f32 0.0, %v3114
    %3116 = vmatmul.f32.gmra.mxu0 %v3053
    %v3117 = vpop.f32.mrf.mxu0
    %v3118 = vadd.f32 0.0, %v3117
    %3119 = vmatmul.f32.gmra.mxu0 %v3056
    %v3120 = vpop.f32.mrf.mxu0
    %v3121 = vadd.f32 0.0, %v3120
    %3122 = vmatmul.f32.gmra.mxu0 %v3059
    %v3123 = vpop.f32.mrf.mxu0
    %v3124 = vadd.f32 0.0, %v3123
    %3125 = vmatmul.f32.gmra.mxu0 %v3062
    %v3126 = vpop.f32.mrf.mxu0
    %v3127 = vadd.f32 0.0, %v3126
    %3128 = vmatmul.f32.gmra.mxu0 %v3065
    %v3129 = vpop.f32.mrf.mxu0
    %v3130 = vadd.f32 0.0, %v3129
    %3131 = vmatmul.f32.gmra.mxu0 %v3068
    %v3132 = vpop.f32.mrf.mxu0
    %v3133 = vadd.f32 0.0, %v3132
    %3134 = vmatmul.f32.gmra.mxu0 %v3071
    %v3135 = vpop.f32.mrf.mxu0
    %v3136 = vadd.f32 0.0, %v3135
    %3137 = vmatmul.f32.gmra.mxu0 %v3074
    %v3138 = vpop.f32.mrf.mxu0
    %v3139 = vadd.f32 0.0, %v3138
    %3140 = vmatmul.f32.gmra.mxu0 %v3077
    %v3141 = vpop.f32.mrf.mxu0
    %v3142 = vadd.f32 0.0, %v3141
    %3143 = vmatmul.f32.gmra.mxu0 %v3080
    %v3144 = vpop.f32.mrf.mxu0
    %v3145 = vadd.f32 0.0, %v3144
    %3146 = vmatmul.f32.gmra.mxu0 %v3083
    %v3147 = vpop.f32.mrf.mxu0
    %v3148 = vadd.f32 0.0, %v3147
    %3149 = vdwg.mxu0
    %3150 = vmatpush.msra.mxu0 0.0
    %3151 = vmatpush.msra.mxu0 0.0
    %3152 = vmatpush.msra.mxu0 0.0
    %3153 = vmatpush.msra.mxu0 0.0
    %3154 = vmatpush.msra.mxu0 0.0
    %3155 = vmatpush.msra.mxu0 0.0
    %3156 = vmatpush.msra.mxu0 0.0
    %3157 = vmatpush.msra.mxu0 0.0
    %3158 = vmatpush.msra.mxu0 0.0
    %3159 = vmatpush.msra.mxu0 0.0
    %3160 = vmatpush.msra.mxu0 0.0
    %3161 = vmatpush.msra.mxu0 0.0
    %3162 = vmatpush.msra.mxu0 %v3034
    %3163 = vmatpush.msra.mxu0 %v3032
    %3164 = vmatpush.msra.mxu0 %v3030
    %3165 = vmatpush.msra.mxu0 %v3028
    %3166 = vmatmul.f32.gmra.mxu0 %v3038
    %v3167 = vpop.f32.mrf.mxu0
    %v3168 = vadd.f32 0.0, %v3167
    %3169 = vmatmul.f32.gmra.mxu0 %v3041
    %v3170 = vpop.f32.mrf.mxu0
    %v3171 = vadd.f32 0.0, %v3170
    %3172 = vmatmul.f32.gmra.mxu0 %v3044
    %v3173 = vpop.f32.mrf.mxu0
    %v3174 = vadd.f32 0.0, %v3173
    %3175 = vmatmul.f32.gmra.mxu0 %v3047
    %v3176 = vpop.f32.mrf.mxu0
    %v3177 = vadd.f32 0.0, %v3176
    %3178 = vmatmul.f32.gmra.mxu0 %v3050
    %v3179 = vpop.f32.mrf.mxu0
    %v3180 = vadd.f32 0.0, %v3179
    %3181 = vmatmul.f32.gmra.mxu0 %v3053
    %v3182 = vpop.f32.mrf.mxu0
    %v3183 = vadd.f32 0.0, %v3182
    %3184 = vmatmul.f32.gmra.mxu0 %v3056
    %v3185 = vpop.f32.mrf.mxu0
    %v3186 = vadd.f32 0.0, %v3185
    %3187 = vmatmul.f32.gmra.mxu0 %v3059
    %v3188 = vpop.f32.mrf.mxu0
    %v3189 = vadd.f32 0.0, %v3188
    %3190 = vmatmul.f32.gmra.mxu0 %v3062
    %v3191 = vpop.f32.mrf.mxu0
    %v3192 = vadd.f32 0.0, %v3191
    %3193 = vmatmul.f32.gmra.mxu0 %v3065
    %v3194 = vpop.f32.mrf.mxu0
    %v3195 = vadd.f32 0.0, %v3194
    %3196 = vmatmul.f32.gmra.mxu0 %v3068
    %v3197 = vpop.f32.mrf.mxu0
    %v3198 = vadd.f32 0.0, %v3197
    %3199 = vmatmul.f32.gmra.mxu0 %v3071
    %v3200 = vpop.f32.mrf.mxu0
    %v3201 = vadd.f32 0.0, %v3200
    %3202 = vmatmul.f32.gmra.mxu0 %v3074
    %v3203 = vpop.f32.mrf.mxu0
    %v3204 = vadd.f32 0.0, %v3203
    %3205 = vmatmul.f32.gmra.mxu0 %v3077
    %v3206 = vpop.f32.mrf.mxu0
    %v3207 = vadd.f32 0.0, %v3206
    %3208 = vmatmul.f32.gmra.mxu0 %v3080
    %v3209 = vpop.f32.mrf.mxu0
    %v3210 = vadd.f32 0.0, %v3209
    %3211 = vmatmul.f32.gmra.mxu0 %v3083
    %v3212 = vpop.f32.mrf.mxu0
    %v3213 = vadd.f32 0.0, %v3212
    %3214 = vdwg.mxu0
    %v3216 = vperm.slane %v3036, 0
    %v3217 = vperm.slane %v3036, 1
    %v3220 = vsub.f32 %v3103, %v3216
    %v3221 = vsub.f32 %v3168, %v3217
    %v3222 = vsub.f32 %v3106, %v3216
    %v3223 = vsub.f32 %v3171, %v3217
    %v3224 = vsub.f32 %v3109, %v3216
    %v3225 = vsub.f32 %v3174, %v3217
    %v3226 = vsub.f32 %v3112, %v3216
    %v3227 = vsub.f32 %v3177, %v3217
    %v3228 = vsub.f32 %v3115, %v3216
    %v3229 = vsub.f32 %v3180, %v3217
    %v3230 = vsub.f32 %v3118, %v3216
    %v3231 = vsub.f32 %v3183, %v3217
    %v3232 = vsub.f32 %v3121, %v3216
    %v3233 = vsub.f32 %v3186, %v3217
    %v3234 = vsub.f32 %v3124, %v3216
    %v3235 = vsub.f32 %v3189, %v3217
    %v3236 = vsub.f32 %v3127, %v3216
    %v3237 = vsub.f32 %v3192, %v3217
    %v3238 = vsub.f32 %v3130, %v3216
    %v3239 = vsub.f32 %v3195, %v3217
    %v3240 = vsub.f32 %v3133, %v3216
    %v3241 = vsub.f32 %v3198, %v3217
    %v3242 = vsub.f32 %v3136, %v3216
    %v3243 = vsub.f32 %v3201, %v3217
    %v3244 = vsub.f32 %v3139, %v3216
    %v3245 = vsub.f32 %v3204, %v3217
    %v3246 = vsub.f32 %v3142, %v3216
    %v3247 = vsub.f32 %v3207, %v3217
    %v3248 = vsub.f32 %v3145, %v3216
    %v3249 = vsub.f32 %v3210, %v3217
    %v3250 = vsub.f32 %v3148, %v3216
    %v3251 = vsub.f32 %v3213, %v3217
    %v3252 = vmax.f32 %v3220, %v3221
    %3253 = vmax.xlane.f32.xlu0 %v3252
    %v3254 = vpop.xlane.xlu0 %3253
    %v3255 = vmax.f32 %v3222, %v3223
    %3256 = vmax.xlane.f32.xlu0 %v3255
    %v3257 = vpop.xlane.xlu0 %3256
    %v3258 = vmax.f32 %v3224, %v3225
    %3259 = vmax.xlane.f32.xlu0 %v3258
    %v3260 = vpop.xlane.xlu0 %3259
    %v3261 = vmax.f32 %v3226, %v3227
    %3262 = vmax.xlane.f32.xlu0 %v3261
    %v3263 = vpop.xlane.xlu0 %3262
    %v3264 = vmax.f32 %v3228, %v3229
    %3265 = vmax.xlane.f32.xlu0 %v3264
    %v3266 = vpop.xlane.xlu0 %3265
    %v3267 = vmax.f32 %v3230, %v3231
    %3268 = vmax.xlane.f32.xlu0 %v3267
    %v3269 = vpop.xlane.xlu0 %3268
    %v3270 = vmax.f32 %v3232, %v3233
    %3271 = vmax.xlane.f32.xlu0 %v3270
    %v3272 = vpop.xlane.xlu0 %3271
    %v3273 = vmax.f32 %v3234, %v3235
    %3274 = vmax.xlane.f32.xlu0 %v3273
    %v3275 = vpop.xlane.xlu0 %3274
    %v3276 = vmax.f32 %v3236, %v3237
    %3277 = vmax.xlane.f32.xlu0 %v3276
    %v3278 = vpop.xlane.xlu0 %3277
    %v3279 = vmax.f32 %v3238, %v3239
    %3280 = vmax.xlane.f32.xlu0 %v3279
    %v3281 = vpop.xlane.xlu0 %3280
    %v3282 = vmax.f32 %v3240, %v3241
    %3283 = vmax.xlane.f32.xlu0 %v3282
    %v3284 = vpop.xlane.xlu0 %3283
    %v3285 = vmax.f32 %v3242, %v3243
    %3286 = vmax.xlane.f32.xlu0 %v3285
    %v3287 = vpop.xlane.xlu0 %3286
    %v3288 = vmax.f32 %v3244, %v3245
    %3289 = vmax.xlane.f32.xlu0 %v3288
    %v3290 = vpop.xlane.xlu0 %3289
    %v3291 = vmax.f32 %v3246, %v3247
    %3292 = vmax.xlane.f32.xlu0 %v3291
    %v3293 = vpop.xlane.xlu0 %3292
    %v3294 = vmax.f32 %v3248, %v3249
    %3295 = vmax.xlane.f32.xlu0 %v3294
    %v3296 = vpop.xlane.xlu0 %3295
    %v3297 = vmax.f32 %v3250, %v3251
    %3298 = vmax.xlane.f32.xlu0 %v3297
    %v3299 = vpop.xlane.xlu0 %3298
    %vm3300 = vcmp.eq.f32.partialorder %v3220, %v3254
    %vm3301 = vcmp.eq.f32.partialorder %v3221, %v3254
    %vm3302 = vcmp.eq.f32.partialorder %v3222, %v3257
    %vm3303 = vcmp.eq.f32.partialorder %v3223, %v3257
    %vm3304 = vcmp.eq.f32.partialorder %v3224, %v3260
    %vm3305 = vcmp.eq.f32.partialorder %v3225, %v3260
    %vm3306 = vcmp.eq.f32.partialorder %v3226, %v3263
    %vm3307 = vcmp.eq.f32.partialorder %v3227, %v3263
    %vm3308 = vcmp.eq.f32.partialorder %v3228, %v3266
    %vm3309 = vcmp.eq.f32.partialorder %v3229, %v3266
    %vm3310 = vcmp.eq.f32.partialorder %v3230, %v3269
    %vm3311 = vcmp.eq.f32.partialorder %v3231, %v3269
    %vm3312 = vcmp.eq.f32.partialorder %v3232, %v3272
    %vm3313 = vcmp.eq.f32.partialorder %v3233, %v3272
    %vm3314 = vcmp.eq.f32.partialorder %v3234, %v3275
    %vm3315 = vcmp.eq.f32.partialorder %v3235, %v3275
    %vm3316 = vcmp.eq.f32.partialorder %v3236, %v3278
    %vm3317 = vcmp.eq.f32.partialorder %v3237, %v3278
    %vm3318 = vcmp.eq.f32.partialorder %v3238, %v3281
    %vm3319 = vcmp.eq.f32.partialorder %v3239, %v3281
    %vm3320 = vcmp.eq.f32.partialorder %v3240, %v3284
    %vm3321 = vcmp.eq.f32.partialorder %v3241, %v3284
    %vm3322 = vcmp.eq.f32.partialorder %v3242, %v3287
    %vm3323 = vcmp.eq.f32.partialorder %v3243, %v3287
    %vm3324 = vcmp.eq.f32.partialorder %v3244, %v3290
    %vm3325 = vcmp.eq.f32.partialorder %v3245, %v3290
    %vm3326 = vcmp.eq.f32.partialorder %v3246, %v3293
    %vm3327 = vcmp.eq.f32.partialorder %v3247, %v3293
    %vm3328 = vcmp.eq.f32.partialorder %v3248, %v3296
    %vm3329 = vcmp.eq.f32.partialorder %v3249, %v3296
    %vm3330 = vcmp.eq.f32.partialorder %v3250, %v3299
    %vm3331 = vcmp.eq.f32.partialorder %v3251, %v3299
    %v3332 = vsel %vm3300, %v36, 256
    %v3333 = vsel %vm3301, %v37, 256
    %v3334 = vsel %vm3302, %v36, 256
    %v3335 = vsel %vm3303, %v37, 256
    %v3336 = vsel %vm3304, %v36, 256
    %v3337 = vsel %vm3305, %v37, 256
    %v3338 = vsel %vm3306, %v36, 256
    %v3339 = vsel %vm3307, %v37, 256
    %v3340 = vsel %vm3308, %v36, 256
    %v3341 = vsel %vm3309, %v37, 256
    %v3342 = vsel %vm3310, %v36, 256
    %v3343 = vsel %vm3311, %v37, 256
    %v3344 = vsel %vm3312, %v36, 256
    %v3345 = vsel %vm3313, %v37, 256
    %v3346 = vsel %vm3314, %v36, 256
    %v3347 = vsel %vm3315, %v37, 256
    %v3348 = vsel %vm3316, %v36, 256
    %v3349 = vsel %vm3317, %v37, 256
    %v3350 = vsel %vm3318, %v36, 256
    %v3351 = vsel %vm3319, %v37, 256
    %v3352 = vsel %vm3320, %v36, 256
    %v3353 = vsel %vm3321, %v37, 256
    %v3354 = vsel %vm3322, %v36, 256
    %v3355 = vsel %vm3323, %v37, 256
    %v3356 = vsel %vm3324, %v36, 256
    %v3357 = vsel %vm3325, %v37, 256
    %v3358 = vsel %vm3326, %v36, 256
    %v3359 = vsel %vm3327, %v37, 256
    %v3360 = vsel %vm3328, %v36, 256
    %v3361 = vsel %vm3329, %v37, 256
    %v3362 = vsel %vm3330, %v36, 256
    %v3363 = vsel %vm3331, %v37, 256
    %vm3364 = vcmp.lt.s32.totalorder %v3332, %v3333
    %v3365 = vsel %vm3364, %v3332, %v3333
    %v3366 = vand.u32 %v3365, 65535
    %v3367 = vshra.s32 %v3365, 16
    %v3368 = vcvt.s32.f32 %v3366
    %v3369 = vcvt.s32.f32 %v3367
    %3370 = vmin.xlane.f32.xlu0 %v3369
    %v3371 = vpop.xlane.xlu0 %3370
    %vm3372 = vcmp.eq.f32.partialorder %v3369, %v3371
    %v3373 = vsel %vm3372, %v3368, inf
    %3374 = vmin.xlane.f32.xlu0 %v3373
    %v3375 = vpop.xlane.xlu0 %3374
    %v3376 = vcvt.f32.s32 %v3375
    %v3377 = vcvt.f32.s32 %v3371
    %v3378 = vshll.u32 %v3377, 16
    %v3379 = vadd.s32 %v3378, %v3376
    %vm3380 = vcmp.lt.s32.totalorder %v3334, %v3335
    %v3381 = vsel %vm3380, %v3334, %v3335
    %v3382 = vand.u32 %v3381, 65535
    %v3383 = vshra.s32 %v3381, 16
    %v3384 = vcvt.s32.f32 %v3382
    %v3385 = vcvt.s32.f32 %v3383
    %3386 = vmin.xlane.f32.xlu0 %v3385
    %v3387 = vpop.xlane.xlu0 %3386
    %vm3388 = vcmp.eq.f32.partialorder %v3385, %v3387
    %v3389 = vsel %vm3388, %v3384, inf
    %3390 = vmin.xlane.f32.xlu0 %v3389
    %v3391 = vpop.xlane.xlu0 %3390
    %v3392 = vcvt.f32.s32 %v3391
    %v3393 = vcvt.f32.s32 %v3387
    %v3394 = vshll.u32 %v3393, 16
    %v3395 = vadd.s32 %v3394, %v3392
    %vm3396 = vcmp.lt.s32.totalorder %v3336, %v3337
    %v3397 = vsel %vm3396, %v3336, %v3337
    %v3398 = vand.u32 %v3397, 65535
    %v3399 = vshra.s32 %v3397, 16
    %v3400 = vcvt.s32.f32 %v3398
    %v3401 = vcvt.s32.f32 %v3399
    %3402 = vmin.xlane.f32.xlu0 %v3401
    %v3403 = vpop.xlane.xlu0 %3402
    %vm3404 = vcmp.eq.f32.partialorder %v3401, %v3403
    %v3405 = vsel %vm3404, %v3400, inf
    %3406 = vmin.xlane.f32.xlu0 %v3405
    %v3407 = vpop.xlane.xlu0 %3406
    %v3408 = vcvt.f32.s32 %v3407
    %v3409 = vcvt.f32.s32 %v3403
    %v3410 = vshll.u32 %v3409, 16
    %v3411 = vadd.s32 %v3410, %v3408
    %vm3412 = vcmp.lt.s32.totalorder %v3338, %v3339
    %v3413 = vsel %vm3412, %v3338, %v3339
    %v3414 = vand.u32 %v3413, 65535
    %v3415 = vshra.s32 %v3413, 16
    %v3416 = vcvt.s32.f32 %v3414
    %v3417 = vcvt.s32.f32 %v3415
    %3418 = vmin.xlane.f32.xlu0 %v3417
    %v3419 = vpop.xlane.xlu0 %3418
    %vm3420 = vcmp.eq.f32.partialorder %v3417, %v3419
    %v3421 = vsel %vm3420, %v3416, inf
    %3422 = vmin.xlane.f32.xlu0 %v3421
    %v3423 = vpop.xlane.xlu0 %3422
    %v3424 = vcvt.f32.s32 %v3423
    %v3425 = vcvt.f32.s32 %v3419
    %v3426 = vshll.u32 %v3425, 16
    %v3427 = vadd.s32 %v3426, %v3424
    %vm3428 = vcmp.lt.s32.totalorder %v3340, %v3341
    %v3429 = vsel %vm3428, %v3340, %v3341
    %v3430 = vand.u32 %v3429, 65535
    %v3431 = vshra.s32 %v3429, 16
    %v3432 = vcvt.s32.f32 %v3430
    %v3433 = vcvt.s32.f32 %v3431
    %3434 = vmin.xlane.f32.xlu0 %v3433
    %v3435 = vpop.xlane.xlu0 %3434
    %vm3436 = vcmp.eq.f32.partialorder %v3433, %v3435
    %v3437 = vsel %vm3436, %v3432, inf
    %3438 = vmin.xlane.f32.xlu0 %v3437
    %v3439 = vpop.xlane.xlu0 %3438
    %v3440 = vcvt.f32.s32 %v3439
    %v3441 = vcvt.f32.s32 %v3435
    %v3442 = vshll.u32 %v3441, 16
    %v3443 = vadd.s32 %v3442, %v3440
    %vm3444 = vcmp.lt.s32.totalorder %v3342, %v3343
    %v3445 = vsel %vm3444, %v3342, %v3343
    %v3446 = vand.u32 %v3445, 65535
    %v3447 = vshra.s32 %v3445, 16
    %v3448 = vcvt.s32.f32 %v3446
    %v3449 = vcvt.s32.f32 %v3447
    %3450 = vmin.xlane.f32.xlu0 %v3449
    %v3451 = vpop.xlane.xlu0 %3450
    %vm3452 = vcmp.eq.f32.partialorder %v3449, %v3451
    %v3453 = vsel %vm3452, %v3448, inf
    %3454 = vmin.xlane.f32.xlu0 %v3453
    %v3455 = vpop.xlane.xlu0 %3454
    %v3456 = vcvt.f32.s32 %v3455
    %v3457 = vcvt.f32.s32 %v3451
    %v3458 = vshll.u32 %v3457, 16
    %v3459 = vadd.s32 %v3458, %v3456
    %vm3460 = vcmp.lt.s32.totalorder %v3344, %v3345
    %v3461 = vsel %vm3460, %v3344, %v3345
    %v3462 = vand.u32 %v3461, 65535
    %v3463 = vshra.s32 %v3461, 16
    %v3464 = vcvt.s32.f32 %v3462
    %v3465 = vcvt.s32.f32 %v3463
    %3466 = vmin.xlane.f32.xlu0 %v3465
    %v3467 = vpop.xlane.xlu0 %3466
    %vm3468 = vcmp.eq.f32.partialorder %v3465, %v3467
    %v3469 = vsel %vm3468, %v3464, inf
    %3470 = vmin.xlane.f32.xlu0 %v3469
    %v3471 = vpop.xlane.xlu0 %3470
    %v3472 = vcvt.f32.s32 %v3471
    %v3473 = vcvt.f32.s32 %v3467
    %v3474 = vshll.u32 %v3473, 16
    %v3475 = vadd.s32 %v3474, %v3472
    %vm3476 = vcmp.lt.s32.totalorder %v3346, %v3347
    %v3477 = vsel %vm3476, %v3346, %v3347
    %v3478 = vand.u32 %v3477, 65535
    %v3479 = vshra.s32 %v3477, 16
    %v3480 = vcvt.s32.f32 %v3478
    %v3481 = vcvt.s32.f32 %v3479
    %3482 = vmin.xlane.f32.xlu0 %v3481
    %v3483 = vpop.xlane.xlu0 %3482
    %vm3484 = vcmp.eq.f32.partialorder %v3481, %v3483
    %v3485 = vsel %vm3484, %v3480, inf
    %3486 = vmin.xlane.f32.xlu0 %v3485
    %v3487 = vpop.xlane.xlu0 %3486
    %v3488 = vcvt.f32.s32 %v3487
    %v3489 = vcvt.f32.s32 %v3483
    %v3490 = vshll.u32 %v3489, 16
    %v3491 = vadd.s32 %v3490, %v3488
    %vm3492 = vcmp.lt.s32.totalorder %v3348, %v3349
    %v3493 = vsel %vm3492, %v3348, %v3349
    %v3494 = vand.u32 %v3493, 65535
    %v3495 = vshra.s32 %v3493, 16
    %v3496 = vcvt.s32.f32 %v3494
    %v3497 = vcvt.s32.f32 %v3495
    %3498 = vmin.xlane.f32.xlu0 %v3497
    %v3499 = vpop.xlane.xlu0 %3498
    %vm3500 = vcmp.eq.f32.partialorder %v3497, %v3499
    %v3501 = vsel %vm3500, %v3496, inf
    %3502 = vmin.xlane.f32.xlu0 %v3501
    %v3503 = vpop.xlane.xlu0 %3502
    %v3504 = vcvt.f32.s32 %v3503
    %v3505 = vcvt.f32.s32 %v3499
    %v3506 = vshll.u32 %v3505, 16
    %v3507 = vadd.s32 %v3506, %v3504
    %vm3508 = vcmp.lt.s32.totalorder %v3350, %v3351
    %v3509 = vsel %vm3508, %v3350, %v3351
    %v3510 = vand.u32 %v3509, 65535
    %v3511 = vshra.s32 %v3509, 16
    %v3512 = vcvt.s32.f32 %v3510
    %v3513 = vcvt.s32.f32 %v3511
    %3514 = vmin.xlane.f32.xlu0 %v3513
    %v3515 = vpop.xlane.xlu0 %3514
    %vm3516 = vcmp.eq.f32.partialorder %v3513, %v3515
    %v3517 = vsel %vm3516, %v3512, inf
    %3518 = vmin.xlane.f32.xlu0 %v3517
    %v3519 = vpop.xlane.xlu0 %3518
    %v3520 = vcvt.f32.s32 %v3519
    %v3521 = vcvt.f32.s32 %v3515
    %v3522 = vshll.u32 %v3521, 16
    %v3523 = vadd.s32 %v3522, %v3520
    %vm3524 = vcmp.lt.s32.totalorder %v3352, %v3353
    %v3525 = vsel %vm3524, %v3352, %v3353
    %v3526 = vand.u32 %v3525, 65535
    %v3527 = vshra.s32 %v3525, 16
    %v3528 = vcvt.s32.f32 %v3526
    %v3529 = vcvt.s32.f32 %v3527
    %3530 = vmin.xlane.f32.xlu0 %v3529
    %v3531 = vpop.xlane.xlu0 %3530
    %vm3532 = vcmp.eq.f32.partialorder %v3529, %v3531
    %v3533 = vsel %vm3532, %v3528, inf
    %3534 = vmin.xlane.f32.xlu0 %v3533
    %v3535 = vpop.xlane.xlu0 %3534
    %v3536 = vcvt.f32.s32 %v3535
    %v3537 = vcvt.f32.s32 %v3531
    %v3538 = vshll.u32 %v3537, 16
    %v3539 = vadd.s32 %v3538, %v3536
    %vm3540 = vcmp.lt.s32.totalorder %v3354, %v3355
    %v3541 = vsel %vm3540, %v3354, %v3355
    %v3542 = vand.u32 %v3541, 65535
    %v3543 = vshra.s32 %v3541, 16
    %v3544 = vcvt.s32.f32 %v3542
    %v3545 = vcvt.s32.f32 %v3543
    %3546 = vmin.xlane.f32.xlu0 %v3545
    %v3547 = vpop.xlane.xlu0 %3546
    %vm3548 = vcmp.eq.f32.partialorder %v3545, %v3547
    %v3549 = vsel %vm3548, %v3544, inf
    %3550 = vmin.xlane.f32.xlu0 %v3549
    %v3551 = vpop.xlane.xlu0 %3550
    %v3552 = vcvt.f32.s32 %v3551
    %v3553 = vcvt.f32.s32 %v3547
    %v3554 = vshll.u32 %v3553, 16
    %v3555 = vadd.s32 %v3554, %v3552
    %vm3556 = vcmp.lt.s32.totalorder %v3356, %v3357
    %v3557 = vsel %vm3556, %v3356, %v3357
    %v3558 = vand.u32 %v3557, 65535
    %v3559 = vshra.s32 %v3557, 16
    %v3560 = vcvt.s32.f32 %v3558
    %v3561 = vcvt.s32.f32 %v3559
    %3562 = vmin.xlane.f32.xlu0 %v3561
    %v3563 = vpop.xlane.xlu0 %3562
    %vm3564 = vcmp.eq.f32.partialorder %v3561, %v3563
    %v3565 = vsel %vm3564, %v3560, inf
    %3566 = vmin.xlane.f32.xlu0 %v3565
    %v3567 = vpop.xlane.xlu0 %3566
    %v3568 = vcvt.f32.s32 %v3567
    %v3569 = vcvt.f32.s32 %v3563
    %v3570 = vshll.u32 %v3569, 16
    %v3571 = vadd.s32 %v3570, %v3568
    %vm3572 = vcmp.lt.s32.totalorder %v3358, %v3359
    %v3573 = vsel %vm3572, %v3358, %v3359
    %v3574 = vand.u32 %v3573, 65535
    %v3575 = vshra.s32 %v3573, 16
    %v3576 = vcvt.s32.f32 %v3574
    %v3577 = vcvt.s32.f32 %v3575
    %3578 = vmin.xlane.f32.xlu0 %v3577
    %v3579 = vpop.xlane.xlu0 %3578
    %vm3580 = vcmp.eq.f32.partialorder %v3577, %v3579
    %v3581 = vsel %vm3580, %v3576, inf
    %3582 = vmin.xlane.f32.xlu0 %v3581
    %v3583 = vpop.xlane.xlu0 %3582
    %v3584 = vcvt.f32.s32 %v3583
    %v3585 = vcvt.f32.s32 %v3579
    %v3586 = vshll.u32 %v3585, 16
    %v3587 = vadd.s32 %v3586, %v3584
    %vm3588 = vcmp.lt.s32.totalorder %v3360, %v3361
    %v3589 = vsel %vm3588, %v3360, %v3361
    %v3590 = vand.u32 %v3589, 65535
    %v3591 = vshra.s32 %v3589, 16
    %v3592 = vcvt.s32.f32 %v3590
    %v3593 = vcvt.s32.f32 %v3591
    %3594 = vmin.xlane.f32.xlu0 %v3593
    %v3595 = vpop.xlane.xlu0 %3594
    %vm3596 = vcmp.eq.f32.partialorder %v3593, %v3595
    %v3597 = vsel %vm3596, %v3592, inf
    %3598 = vmin.xlane.f32.xlu0 %v3597
    %v3599 = vpop.xlane.xlu0 %3598
    %v3600 = vcvt.f32.s32 %v3599
    %v3601 = vcvt.f32.s32 %v3595
    %v3602 = vshll.u32 %v3601, 16
    %v3603 = vadd.s32 %v3602, %v3600
    %vm3604 = vcmp.lt.s32.totalorder %v3362, %v3363
    %v3605 = vsel %vm3604, %v3362, %v3363
    %v3606 = vand.u32 %v3605, 65535
    %v3607 = vshra.s32 %v3605, 16
    %v3608 = vcvt.s32.f32 %v3606
    %v3609 = vcvt.s32.f32 %v3607
    %3610 = vmin.xlane.f32.xlu0 %v3609
    %v3611 = vpop.xlane.xlu0 %3610
    %vm3612 = vcmp.eq.f32.partialorder %v3609, %v3611
    %v3613 = vsel %vm3612, %v3608, inf
    %3614 = vmin.xlane.f32.xlu0 %v3613
    %v3615 = vpop.xlane.xlu0 %3614
    %v3616 = vcvt.f32.s32 %v3615
    %v3617 = vcvt.f32.s32 %v3611
    %v3618 = vshll.u32 %v3617, 16
    %v3619 = vadd.s32 %v3618, %v3616
    %vm3620 = vcmp.eq.s32.totalorder %v36, %v3379
    %vm3621 = vcmp.eq.s32.totalorder %v37, %v3379
    %vm3622 = vcmp.eq.s32.totalorder %v36, %v3395
    %vm3623 = vcmp.eq.s32.totalorder %v37, %v3395
    %vm3624 = vcmp.eq.s32.totalorder %v36, %v3411
    %vm3625 = vcmp.eq.s32.totalorder %v37, %v3411
    %vm3626 = vcmp.eq.s32.totalorder %v36, %v3427
    %vm3627 = vcmp.eq.s32.totalorder %v37, %v3427
    %vm3628 = vcmp.eq.s32.totalorder %v36, %v3443
    %vm3629 = vcmp.eq.s32.totalorder %v37, %v3443
    %vm3630 = vcmp.eq.s32.totalorder %v36, %v3459
    %vm3631 = vcmp.eq.s32.totalorder %v37, %v3459
    %vm3632 = vcmp.eq.s32.totalorder %v36, %v3475
    %vm3633 = vcmp.eq.s32.totalorder %v37, %v3475
    %vm3634 = vcmp.eq.s32.totalorder %v36, %v3491
    %vm3635 = vcmp.eq.s32.totalorder %v37, %v3491
    %vm3636 = vcmp.eq.s32.totalorder %v36, %v3507
    %vm3637 = vcmp.eq.s32.totalorder %v37, %v3507
    %vm3638 = vcmp.eq.s32.totalorder %v36, %v3523
    %vm3639 = vcmp.eq.s32.totalorder %v37, %v3523
    %vm3640 = vcmp.eq.s32.totalorder %v36, %v3539
    %vm3641 = vcmp.eq.s32.totalorder %v37, %v3539
    %vm3642 = vcmp.eq.s32.totalorder %v36, %v3555
    %vm3643 = vcmp.eq.s32.totalorder %v37, %v3555
    %vm3644 = vcmp.eq.s32.totalorder %v36, %v3571
    %vm3645 = vcmp.eq.s32.totalorder %v37, %v3571
    %vm3646 = vcmp.eq.s32.totalorder %v36, %v3587
    %vm3647 = vcmp.eq.s32.totalorder %v37, %v3587
    %vm3648 = vcmp.eq.s32.totalorder %v36, %v3603
    %vm3649 = vcmp.eq.s32.totalorder %v37, %v3603
    %vm3650 = vcmp.eq.s32.totalorder %v36, %v3619
    %vm3651 = vcmp.eq.s32.totalorder %v37, %v3619
    %v3652 = vsel %vm3620, 1, 0
    %v3653 = vsel %vm3621, 1, 0
    %v3654 = vsel %vm3622, 1, 0
    %v3655 = vsel %vm3623, 1, 0
    %v3656 = vsel %vm3624, 1, 0
    %v3657 = vsel %vm3625, 1, 0
    %v3658 = vsel %vm3626, 1, 0
    %v3659 = vsel %vm3627, 1, 0
    %v3660 = vsel %vm3628, 1, 0
    %v3661 = vsel %vm3629, 1, 0
    %v3662 = vsel %vm3630, 1, 0
    %v3663 = vsel %vm3631, 1, 0
    %v3664 = vsel %vm3632, 1, 0
    %v3665 = vsel %vm3633, 1, 0
    %v3666 = vsel %vm3634, 1, 0
    %v3667 = vsel %vm3635, 1, 0
    %v3668 = vsel %vm3636, 1, 0
    %v3669 = vsel %vm3637, 1, 0
    %v3670 = vsel %vm3638, 1, 0
    %v3671 = vsel %vm3639, 1, 0
    %v3672 = vsel %vm3640, 1, 0
    %v3673 = vsel %vm3641, 1, 0
    %v3674 = vsel %vm3642, 1, 0
    %v3675 = vsel %vm3643, 1, 0
    %v3676 = vsel %vm3644, 1, 0
    %v3677 = vsel %vm3645, 1, 0
    %v3678 = vsel %vm3646, 1, 0
    %v3679 = vsel %vm3647, 1, 0
    %v3680 = vsel %vm3648, 1, 0
    %v3681 = vsel %vm3649, 1, 0
    %v3682 = vsel %vm3650, 1, 0
    %v3683 = vsel %vm3651, 1, 0
    %v3684 = vcvt.s32.f32 %v3652
    %v3685 = vcvt.s32.f32 %v3653
    %v3686 = vcvt.s32.f32 %v3654
    %v3687 = vcvt.s32.f32 %v3655
    %v3688 = vcvt.s32.f32 %v3656
    %v3689 = vcvt.s32.f32 %v3657
    %v3690 = vcvt.s32.f32 %v3658
    %v3691 = vcvt.s32.f32 %v3659
    %v3692 = vcvt.s32.f32 %v3660
    %v3693 = vcvt.s32.f32 %v3661
    %v3694 = vcvt.s32.f32 %v3662
    %v3695 = vcvt.s32.f32 %v3663
    %v3696 = vcvt.s32.f32 %v3664
    %v3697 = vcvt.s32.f32 %v3665
    %v3698 = vcvt.s32.f32 %v3666
    %v3699 = vcvt.s32.f32 %v3667
    %v3700 = vcvt.s32.f32 %v3668
    %v3701 = vcvt.s32.f32 %v3669
    %v3702 = vcvt.s32.f32 %v3670
    %v3703 = vcvt.s32.f32 %v3671
    %v3704 = vcvt.s32.f32 %v3672
    %v3705 = vcvt.s32.f32 %v3673
    %v3706 = vcvt.s32.f32 %v3674
    %v3707 = vcvt.s32.f32 %v3675
    %v3708 = vcvt.s32.f32 %v3676
    %v3709 = vcvt.s32.f32 %v3677
    %v3710 = vcvt.s32.f32 %v3678
    %v3711 = vcvt.s32.f32 %v3679
    %v3712 = vcvt.s32.f32 %v3680
    %v3713 = vcvt.s32.f32 %v3681
    %v3714 = vcvt.s32.f32 %v3682
    %v3715 = vcvt.s32.f32 %v3683
    %3716 = vmatpush.xpose.msra.mxu0 0.0
    %3717 = vmatpush.xpose.msra.mxu0 0.0
    %3718 = vmatpush.xpose.msra.mxu0 0.0
    %3719 = vmatpush.xpose.msra.mxu0 0.0
    %3720 = vmatpush.xpose.msra.mxu0 0.0
    %3721 = vmatpush.xpose.msra.mxu0 0.0
    %3722 = vmatpush.xpose.msra.mxu0 0.0
    %3723 = vmatpush.xpose.msra.mxu0 0.0
    %3724 = vmatpush.xpose.msra.mxu0 0.0
    %3725 = vmatpush.xpose.msra.mxu0 0.0
    %3726 = vmatpush.xpose.msra.mxu0 0.0
    %3727 = vmatpush.xpose.msra.mxu0 0.0
    %3728 = vmatpush.xpose.msra.mxu0 %v3033
    %3729 = vmatpush.xpose.msra.mxu0 %v3031
    %3730 = vmatpush.xpose.msra.mxu0 %v3029
    %3731 = vmatpush.xpose.msra.mxu0 %v3027
    %3732 = vmatmul.f32.gmra.mxu0 %v3684
    %v3733 = vpop.f32.mrf.mxu0
    %v3734 = vadd.f32 0.0, %v3733
    %3735 = vmatmul.f32.gmra.mxu0 %v3686
    %v3736 = vpop.f32.mrf.mxu0
    %v3737 = vadd.f32 0.0, %v3736
    %3738 = vmatmul.f32.gmra.mxu0 %v3688
    %v3739 = vpop.f32.mrf.mxu0
    %v3740 = vadd.f32 0.0, %v3739
    %3741 = vmatmul.f32.gmra.mxu0 %v3690
    %v3742 = vpop.f32.mrf.mxu0
    %v3743 = vadd.f32 0.0, %v3742
    %3744 = vmatmul.f32.gmra.mxu0 %v3692
    %v3745 = vpop.f32.mrf.mxu0
    %v3746 = vadd.f32 0.0, %v3745
    %3747 = vmatmul.f32.gmra.mxu0 %v3694
    %v3748 = vpop.f32.mrf.mxu0
    %v3749 = vadd.f32 0.0, %v3748
    %3750 = vmatmul.f32.gmra.mxu0 %v3696
    %v3751 = vpop.f32.mrf.mxu0
    %v3752 = vadd.f32 0.0, %v3751
    %3753 = vmatmul.f32.gmra.mxu0 %v3698
    %v3754 = vpop.f32.mrf.mxu0
    %v3755 = vadd.f32 0.0, %v3754
    %3756 = vmatmul.f32.gmra.mxu0 %v3700
    %v3757 = vpop.f32.mrf.mxu0
    %v3758 = vadd.f32 0.0, %v3757
    %3759 = vmatmul.f32.gmra.mxu0 %v3702
    %v3760 = vpop.f32.mrf.mxu0
    %v3761 = vadd.f32 0.0, %v3760
    %3762 = vmatmul.f32.gmra.mxu0 %v3704
    %v3763 = vpop.f32.mrf.mxu0
    %v3764 = vadd.f32 0.0, %v3763
    %3765 = vmatmul.f32.gmra.mxu0 %v3706
    %v3766 = vpop.f32.mrf.mxu0
    %v3767 = vadd.f32 0.0, %v3766
    %3768 = vmatmul.f32.gmra.mxu0 %v3708
    %v3769 = vpop.f32.mrf.mxu0
    %v3770 = vadd.f32 0.0, %v3769
    %3771 = vmatmul.f32.gmra.mxu0 %v3710
    %v3772 = vpop.f32.mrf.mxu0
    %v3773 = vadd.f32 0.0, %v3772
    %3774 = vmatmul.f32.gmra.mxu0 %v3712
    %v3775 = vpop.f32.mrf.mxu0
    %v3776 = vadd.f32 0.0, %v3775
    %3777 = vmatmul.f32.gmra.mxu0 %v3714
    %v3778 = vpop.f32.mrf.mxu0
    %v3779 = vadd.f32 0.0, %v3778
    %3780 = vdwg.mxu0
    %3781 = vmatpush.xpose.msra.mxu0 0.0
    %3782 = vmatpush.xpose.msra.mxu0 0.0
    %3783 = vmatpush.xpose.msra.mxu0 0.0
    %3784 = vmatpush.xpose.msra.mxu0 0.0
    %3785 = vmatpush.xpose.msra.mxu0 0.0
    %3786 = vmatpush.xpose.msra.mxu0 0.0
    %3787 = vmatpush.xpose.msra.mxu0 0.0
    %3788 = vmatpush.xpose.msra.mxu0 0.0
    %3789 = vmatpush.xpose.msra.mxu0 0.0
    %3790 = vmatpush.xpose.msra.mxu0 0.0
    %3791 = vmatpush.xpose.msra.mxu0 0.0
    %3792 = vmatpush.xpose.msra.mxu0 0.0
    %3793 = vmatpush.xpose.msra.mxu0 %v3034
    %3794 = vmatpush.xpose.msra.mxu0 %v3032
    %3795 = vmatpush.xpose.msra.mxu0 %v3030
    %3796 = vmatpush.xpose.msra.mxu0 %v3028
    %3797 = vmatmul.f32.gmra.mxu0 %v3685
    %v3798 = vpop.f32.mrf.mxu0
    %v3799 = vadd.f32 %v3734, %v3798
    %3800 = vmatmul.f32.gmra.mxu0 %v3687
    %v3801 = vpop.f32.mrf.mxu0
    %v3802 = vadd.f32 %v3737, %v3801
    %3803 = vmatmul.f32.gmra.mxu0 %v3689
    %v3804 = vpop.f32.mrf.mxu0
    %v3805 = vadd.f32 %v3740, %v3804
    %3806 = vmatmul.f32.gmra.mxu0 %v3691
    %v3807 = vpop.f32.mrf.mxu0
    %v3808 = vadd.f32 %v3743, %v3807
    %3809 = vmatmul.f32.gmra.mxu0 %v3693
    %v3810 = vpop.f32.mrf.mxu0
    %v3811 = vadd.f32 %v3746, %v3810
    %3812 = vmatmul.f32.gmra.mxu0 %v3695
    %v3813 = vpop.f32.mrf.mxu0
    %v3814 = vadd.f32 %v3749, %v3813
    %3815 = vmatmul.f32.gmra.mxu0 %v3697
    %v3816 = vpop.f32.mrf.mxu0
    %v3817 = vadd.f32 %v3752, %v3816
    %3818 = vmatmul.f32.gmra.mxu0 %v3699
    %v3819 = vpop.f32.mrf.mxu0
    %v3820 = vadd.f32 %v3755, %v3819
    %3821 = vmatmul.f32.gmra.mxu0 %v3701
    %v3822 = vpop.f32.mrf.mxu0
    %v3823 = vadd.f32 %v3758, %v3822
    %3824 = vmatmul.f32.gmra.mxu0 %v3703
    %v3825 = vpop.f32.mrf.mxu0
    %v3826 = vadd.f32 %v3761, %v3825
    %3827 = vmatmul.f32.gmra.mxu0 %v3705
    %v3828 = vpop.f32.mrf.mxu0
    %v3829 = vadd.f32 %v3764, %v3828
    %3830 = vmatmul.f32.gmra.mxu0 %v3707
    %v3831 = vpop.f32.mrf.mxu0
    %v3832 = vadd.f32 %v3767, %v3831
    %3833 = vmatmul.f32.gmra.mxu0 %v3709
    %v3834 = vpop.f32.mrf.mxu0
    %v3835 = vadd.f32 %v3770, %v3834
    %3836 = vmatmul.f32.gmra.mxu0 %v3711
    %v3837 = vpop.f32.mrf.mxu0
    %v3838 = vadd.f32 %v3773, %v3837
    %3839 = vmatmul.f32.gmra.mxu0 %v3713
    %v3840 = vpop.f32.mrf.mxu0
    %v3841 = vadd.f32 %v3776, %v3840
    %3842 = vmatmul.f32.gmra.mxu0 %v3715
    %v3843 = vpop.f32.mrf.mxu0
    %v3844 = vadd.f32 %v3779, %v3843
    %3845 = vdwg.mxu0
    %v3846 = vsub.f32 %v2865, %v3799
    %v3847 = vsub.f32 %v2866, %v3802
    %v3848 = vsub.f32 %v2867, %v3805
    %v3849 = vsub.f32 %v2868, %v3808
    %v3850 = vsub.f32 %v2869, %v3811
    %v3851 = vsub.f32 %v2870, %v3814
    %v3852 = vsub.f32 %v2871, %v3817
    %v3853 = vsub.f32 %v2872, %v3820
    %v3854 = vsub.f32 %v2873, %v3823
    %v3855 = vsub.f32 %v2874, %v3826
    %v3856 = vsub.f32 %v2875, %v3829
    %v3857 = vsub.f32 %v2876, %v3832
    %v3858 = vsub.f32 %v2877, %v3835
    %v3859 = vsub.f32 %v2878, %v3838
    %v3860 = vsub.f32 %v2879, %v3841
    %v3861 = vsub.f32 %v2880, %v3844
    %v3862 = vmul.f32 %v3846, %v3846
    %v3863 = vmul.f32 %v3847, %v3847
    %v3864 = vmul.f32 %v3848, %v3848
    %v3865 = vmul.f32 %v3849, %v3849
    %v3866 = vmul.f32 %v3850, %v3850
    %v3867 = vmul.f32 %v3851, %v3851
    %v3868 = vmul.f32 %v3852, %v3852
    %v3869 = vmul.f32 %v3853, %v3853
    %v3870 = vmul.f32 %v3854, %v3854
    %v3871 = vmul.f32 %v3855, %v3855
    %v3872 = vmul.f32 %v3856, %v3856
    %v3873 = vmul.f32 %v3857, %v3857
    %v3874 = vmul.f32 %v3858, %v3858
    %v3875 = vmul.f32 %v3859, %v3859
    %v3876 = vmul.f32 %v3860, %v3860
    %v3877 = vmul.f32 %v3861, %v3861
    %v3878 = vsel %vm63, %v3862, 0.0
    %3879 = vadd.xlane.f32.xlu0 %v3878
    %v3880 = vpop.xlane.xlu0 %3879
    %v3881 = vsel %vm63, %v3863, 0.0
    %3882 = vadd.xlane.f32.xlu0 %v3881
    %v3883 = vpop.xlane.xlu0 %3882
    %v3884 = vsel %vm63, %v3864, 0.0
    %3885 = vadd.xlane.f32.xlu0 %v3884
    %v3886 = vpop.xlane.xlu0 %3885
    %v3887 = vsel %vm63, %v3865, 0.0
    %3888 = vadd.xlane.f32.xlu0 %v3887
    %v3889 = vpop.xlane.xlu0 %3888
    %v3890 = vsel %vm63, %v3866, 0.0
    %3891 = vadd.xlane.f32.xlu0 %v3890
    %v3892 = vpop.xlane.xlu0 %3891
    %v3893 = vsel %vm63, %v3867, 0.0
    %3894 = vadd.xlane.f32.xlu0 %v3893
    %v3895 = vpop.xlane.xlu0 %3894
    %v3896 = vsel %vm63, %v3868, 0.0
    %3897 = vadd.xlane.f32.xlu0 %v3896
    %v3898 = vpop.xlane.xlu0 %3897
    %v3899 = vsel %vm63, %v3869, 0.0
    %3900 = vadd.xlane.f32.xlu0 %v3899
    %v3901 = vpop.xlane.xlu0 %3900
    %v3902 = vsel %vm63, %v3870, 0.0
    %3903 = vadd.xlane.f32.xlu0 %v3902
    %v3904 = vpop.xlane.xlu0 %3903
    %v3905 = vsel %vm63, %v3871, 0.0
    %3906 = vadd.xlane.f32.xlu0 %v3905
    %v3907 = vpop.xlane.xlu0 %3906
    %v3908 = vsel %vm63, %v3872, 0.0
    %3909 = vadd.xlane.f32.xlu0 %v3908
    %v3910 = vpop.xlane.xlu0 %3909
    %v3911 = vsel %vm63, %v3873, 0.0
    %3912 = vadd.xlane.f32.xlu0 %v3911
    %v3913 = vpop.xlane.xlu0 %3912
    %v3914 = vsel %vm63, %v3874, 0.0
    %3915 = vadd.xlane.f32.xlu0 %v3914
    %v3916 = vpop.xlane.xlu0 %3915
    %v3917 = vsel %vm63, %v3875, 0.0
    %3918 = vadd.xlane.f32.xlu0 %v3917
    %v3919 = vpop.xlane.xlu0 %3918
    %v3920 = vsel %vm63, %v3876, 0.0
    %3921 = vadd.xlane.f32.xlu0 %v3920
    %v3922 = vpop.xlane.xlu0 %3921
    %v3923 = vsel %vm63, %v3877, 0.0
    %3924 = vadd.xlane.f32.xlu0 %v3923
    %v3925 = vpop.xlane.xlu0 %3924
    %v3926 = vperm.slane %v3379, %v36
    %v3927 = vperm.slane %v3395, %v954
    %v3928 = vsel %vm956, %v3927, %v3926
    %v3929 = vperm.slane %v3411, %v958
    %v3930 = vsel %vm960, %v3929, %v3928
    %v3931 = vperm.slane %v3427, %v962
    %v3932 = vsel %vm964, %v3931, %v3930
    %v3933 = vperm.slane %v3443, %v966
    %v3934 = vsel %vm968, %v3933, %v3932
    %v3935 = vperm.slane %v3459, %v970
    %v3936 = vsel %vm972, %v3935, %v3934
    %v3937 = vperm.slane %v3475, %v974
    %v3938 = vsel %vm976, %v3937, %v3936
    %v3939 = vperm.slane %v3491, %v978
    %v3940 = vsel %vm980, %v3939, %v3938
    %v3941 = vperm.slane %v3507, %v982
    %v3942 = vsel %vm984, %v3941, %v3940
    %v3943 = vperm.slane %v3523, %v986
    %v3944 = vsel %vm988, %v3943, %v3942
    %v3945 = vperm.slane %v3539, %v990
    %v3946 = vsel %vm992, %v3945, %v3944
    %v3947 = vperm.slane %v3555, %v994
    %v3948 = vsel %vm996, %v3947, %v3946
    %v3949 = vperm.slane %v3571, %v998
    %v3950 = vsel %vm1000, %v3949, %v3948
    %v3951 = vperm.slane %v3587, %v1002
    %v3952 = vsel %vm1004, %v3951, %v3950
    %v3953 = vperm.slane %v3603, %v1006
    %v3954 = vsel %vm1008, %v3953, %v3952
    %v3955 = vperm.slane %v3619, %v1010
    %v3956 = vsel %vm1012, %v3955, %v3954
    %3957 = vst [vmem:[#allocation5 + $0x3] sm:$0x1] %v3956
    %v3974 = vperm.slane %v3880, %v36
    %v3975 = vperm.slane %v3883, %v954
    %v3976 = vsel %vm956, %v3975, %v3974
    %v3977 = vperm.slane %v3886, %v958
    %v3978 = vsel %vm960, %v3977, %v3976
    %v3979 = vperm.slane %v3889, %v962
    %v3980 = vsel %vm964, %v3979, %v3978
    %v3981 = vperm.slane %v3892, %v966
    %v3982 = vsel %vm968, %v3981, %v3980
    %v3983 = vperm.slane %v3895, %v970
    %v3984 = vsel %vm972, %v3983, %v3982
    %v3985 = vperm.slane %v3898, %v974
    %v3986 = vsel %vm976, %v3985, %v3984
    %v3987 = vperm.slane %v3901, %v978
    %v3988 = vsel %vm980, %v3987, %v3986
    %v3989 = vperm.slane %v3904, %v982
    %v3990 = vsel %vm984, %v3989, %v3988
    %v3991 = vperm.slane %v3907, %v986
    %v3992 = vsel %vm988, %v3991, %v3990
    %v3993 = vperm.slane %v3910, %v990
    %v3994 = vsel %vm992, %v3993, %v3992
    %v3995 = vperm.slane %v3913, %v994
    %v3996 = vsel %vm996, %v3995, %v3994
    %v3997 = vperm.slane %v3916, %v998
    %v3998 = vsel %vm1000, %v3997, %v3996
    %v3999 = vperm.slane %v3919, %v1002
    %v4000 = vsel %vm1004, %v3999, %v3998
    %v4001 = vperm.slane %v3922, %v1006
    %v4002 = vsel %vm1008, %v4001, %v4000
    %v4003 = vperm.slane %v3925, %v1010
    %v4004 = vsel %vm1012, %v4003, %v4002
    %4006 = vst [vmem:[#allocation6 + $0x3] sm:$0x1] %v4004
    %v4007 = vsub.f32 %v38, %v3846
    %v4008 = vsub.f32 %v39, %v3847
    %v4009 = vsub.f32 %v40, %v3848
    %v4010 = vsub.f32 %v41, %v3849
    %v4011 = vsub.f32 %v42, %v3850
    %v4012 = vsub.f32 %v43, %v3851
    %v4013 = vsub.f32 %v44, %v3852
    %v4014 = vsub.f32 %v45, %v3853
    %v4015 = vsub.f32 %v46, %v3854
    %v4016 = vsub.f32 %v47, %v3855
    %v4017 = vsub.f32 %v48, %v3856
    %v4018 = vsub.f32 %v49, %v3857
    %v4019 = vsub.f32 %v50, %v3858
    %v4020 = vsub.f32 %v51, %v3859
    %v4021 = vsub.f32 %v52, %v3860
    %v4022 = vsub.f32 %v53, %v3861
    %4023 = vst.msk [vmem:[%s3] sm:$0xff] %vm63, %v4007
    %4024 = vst.msk [vmem:[%s3 + $0x8] sm:$0xff] %vm63, %v4008
    %4025 = vst.msk [vmem:[%s3 + $0x10] sm:$0xff] %vm63, %v4009
    %4026 = vst.msk [vmem:[%s3 + $0x18] sm:$0xff] %vm63, %v4010
    %4027 = vst.msk [vmem:[%s3 + $0x20] sm:$0xff] %vm63, %v4011
    %4028 = vst.msk [vmem:[%s3 + $0x28] sm:$0xff] %vm63, %v4012
    %4029 = vst.msk [vmem:[%s3 + $0x30] sm:$0xff] %vm63, %v4013
    %4030 = vst.msk [vmem:[%s3 + $0x38] sm:$0xff] %vm63, %v4014
    %4031 = vst.msk [vmem:[%s3 + $0x40] sm:$0xff] %vm63, %v4015
    %4032 = vst.msk [vmem:[%s3 + $0x48] sm:$0xff] %vm63, %v4016
    %4033 = vst.msk [vmem:[%s3 + $0x50] sm:$0xff] %vm63, %v4017
    %4034 = vst.msk [vmem:[%s3 + $0x58] sm:$0xff] %vm63, %v4018
    %4035 = vst.msk [vmem:[%s3 + $0x60] sm:$0xff] %vm63, %v4019
    %4036 = vst.msk [vmem:[%s3 + $0x68] sm:$0xff] %vm63, %v4020
    %4037 = vst.msk [vmem:[%s3 + $0x70] sm:$0xff] %vm63, %v4021
    %4038 = vst.msk [vmem:[%s3 + $0x78] sm:$0xff] %vm63, %v4022
    // Predicated region
    $region18: #{tpu_custom_call.1} parent=1 // pred_check
      _
    $region19: #{tpu_custom_call.1} parent=1 // pred_check_branch
      %4040 = sbr.rel (0) target = $region21
    $region20: #{tpu_custom_call.1} parent=1 // pred_region
      _
    $region21: #{tpu_custom_call.1} parent=1 // pred_fallthru
      _
    // Predicated region
    $region22: #{tpu_custom_call.1} parent=1 // pred_check
      _
    $region23: #{tpu_custom_call.1} parent=1 // pred_check_branch
      %4042 = sbr.rel (0) target = $region25
    $region24: #{tpu_custom_call.1} parent=1 // pred_region
      %4044 = vsyncadd [#allocation4], 0
      %s4046 = sshll.u32 [#allocation5], 4
      %s4047 = int_to_ptr.vmem [resolvable:$true] %s4046
      %s4048 = sshll.u32 %s4, 4
      %s4049 = int_to_ptr.hbm [resolvable:$true] %s4048
      %4051 = dma.vmem_to_hbm [thread:$0]  %s4047, 64, %s4049, [#allocation4]
    $region25: #{tpu_custom_call.1} parent=1 // pred_fallthru
      _
    // Predicated region
    $region26: #{tpu_custom_call.1} parent=1 // pred_check
      _
    $region27: #{tpu_custom_call.1} parent=1 // pred_check_branch
      %4053 = sbr.rel (0) target = $region29
    $region28: #{tpu_custom_call.1} parent=1 // pred_region
      %4055 = vsyncadd [#allocation7], 0
      %s4057 = sshll.u32 [#allocation6], 4
      %s4058 = int_to_ptr.vmem [resolvable:$true] %s4057
      %s4059 = sshll.u32 %s5, 4
      %s4060 = int_to_ptr.hbm [resolvable:$true] %s4059
      %4062 = dma.vmem_to_hbm [thread:$0]  %s4058, 64, %s4060, [#allocation7]
    $region29: #{tpu_custom_call.1} parent=1 // pred_fallthru
      _
    // Predicated region
    $region30: #{tpu_custom_call.1} parent=1 // pred_check
      _
    $region31: #{tpu_custom_call.1} parent=1 // pred_check_branch
      %4064 = sbr.rel (0) target = $region33
    $region32: #{tpu_custom_call.1} parent=1 // pred_region
      _
    $region33: #{tpu_custom_call.1} parent=1 // pred_fallthru
      _
    // Predicated region
    $region34: #{tpu_custom_call.1} parent=1 // pred_check
      _
    $region35: #{tpu_custom_call.1} parent=1 // pred_check_branch
      %4066 = sbr.rel (0) target = $region37
    $region36: #{tpu_custom_call.1} parent=1 // pred_region
      %4068 = dma.done [#allocation4], 64
    $region37: #{tpu_custom_call.1} parent=1 // pred_fallthru
      _
    // Predicated region
    $region38: #{tpu_custom_call.1} parent=1 // pred_check
      _
    $region39: #{tpu_custom_call.1} parent=1 // pred_check_branch
      %4070 = sbr.rel (0) target = $region41
    $region40: #{tpu_custom_call.1} parent=1 // pred_region
      %4072 = dma.done [#allocation7], 64
    $region41: #{tpu_custom_call.1} parent=1 // pred_fallthru
      _
    %4073 = vsyncpa [#allocation3], 1
    %4074 = vsyncpa [#allocation4], 1
    %4075 = vsyncpa [#allocation7], 1

</llo_original>
